<compile_context>
chip_gen: v7x
topology: tpu7x:2x2x1
jax: 0.10.0
libtpu: 0.0.40
codegen_flags: <defaults>
</compile_context>

<pallas_src>
import jax
import jax.numpy as jnp
from jax.experimental import pallas as pl
from jax.experimental.pallas import tpu as pltpu

VMEM = pltpu.MemorySpace.VMEM
BN_EPS = 1e-5


def _round_up(x, m):
    return (x + m - 1) // m * m


# ----------------------------------------------------------------------------
# Single fused kernel: Conv1d + BN(batch stats) + GRU stack + Linear + Sigmoid
# ----------------------------------------------------------------------------
def _make_fused_kernel(num_layers, T, B, Bp, Hp):
    n_in = 5 + 4 * num_layers + 2
    inv_n = 1.0 / float(B * T)          # true (unpadded) BN element count

    def kernel(*refs):
        x_ref, w_ref, gamma_ref, beta_ref, h0_ref = refs[0:5]
        layer_refs = refs[5:5 + 4 * num_layers]
        lw_ref, lb_ref = refs[n_in - 2], refs[n_in - 1]
        o_ref = refs[n_in]
        xp_scr = refs[n_in + 1]         # (T*Bp, 3*Hp) f32: hoisted input projections
        seq_scr = refs[n_in + 2]        # (T*Bp, Hp)   f32: inter-layer sequence

        # ---- Conv1d as ONE matmul over the pre-unfolded, time-major slab.
        #      Padded batch rows / padded KCp lanes are zero -> contribute 0.
        y = jnp.dot(x_ref[...], w_ref[...],
                    preferred_element_type=jnp.float32)        # (T*Bp, Coutp)

        # ---- BatchNorm1d, training-mode batch statistics (biased variance).
        mu = jnp.sum(y, axis=0, keepdims=True) * inv_n
        var = jnp.maximum(jnp.sum(y * y, axis=0, keepdims=True) * inv_n - mu * mu, 0.0)
        scale = gamma_ref[...] * jax.lax.rsqrt(var + BN_EPS)
        shift = beta_ref[...] - mu * scale
        # nn.LeakyReLU(True): slope == 1.0 -> identity (nothing to do).

        h_last = None
        for l in range(num_layers):
            wih_ref, whh_ref, brzn_ref, bhn_ref = layer_refs[4 * l:4 * l + 4]

            # Hoisted input projection for the whole sequence: one big matmul.
            if l == 0:
                xin_bf = (y * scale + shift).astype(jnp.bfloat16)
            else:
                xin_bf = seq_scr[...].astype(jnp.bfloat16)
            xp_scr[...] = (jnp.dot(xin_bf, wih_ref[...],
                                   preferred_element_type=jnp.float32)
                           + brzn_ref[...])

            bhn = bhn_ref[...]
            last = (l == num_layers - 1)

            # TODO(synk): W_hh could be held in MXU weight registers across the
            # time loop (pltpu.matmul_push_rhs / matmul_acc_lhs / matmul_pop) to
            # avoid re-streaming the RHS every step; kept as jnp.dot for robustness.
            def step(t, h, _whh_ref=whh_ref, _bhn=bhn, _last=last):
                row = pl.multiple_of(t * Bp, 8)
                xt = xp_scr[pl.ds(row, Bp), :]                       # aligned (8,128) tiles
                hp = jnp.dot(h.astype(jnp.bfloat16), _whh_ref[...],
                             preferred_element_type=jnp.float32)     # (Bp, 3*Hp)
                r = jax.nn.sigmoid(xt[:, 0:Hp] + hp[:, 0:Hp])
                z = jax.nn.sigmoid(xt[:, Hp:2 * Hp] + hp[:, Hp:2 * Hp])
                n = jnp.tanh(xt[:, 2 * Hp:3 * Hp] + r * (hp[:, 2 * Hp:3 * Hp] + _bhn))
                h_new = (1.0 - z) * n + z * h
                if not _last:
                    seq_scr[pl.ds(row, Bp), :] = h_new               # aligned store
                return h_new

            # T is small & static -> fully unroll so the LLO scheduler can
            # overlap neighbouring steps' loads / MXU / EUP latency.
            h_last = jax.lax.fori_loop(0, T, step, h0_ref[l], unroll=True)

        # ---- Linear + Sigmoid head: lane reduce on VPU/XLU (no 1-lane matmul).
        logits = jnp.sum(h_last * lw_ref[...], axis=-1, keepdims=True) + lb_ref[...]
        o_ref[...] = jax.nn.sigmoid(logits)[0:B, :]

    return kernel


def discriminator_fused(x_unf, conv_w, gamma, beta, h0p, gru_params, lin_w, lin_b,
                        *, T, B, Bp, Hp, num_layers):
    args = [x_unf, conv_w, gamma, beta, h0p]
    for lp in gru_params:
        args.extend(lp)                 # (wih, whh, b_rzn, b_hn) per layer
    args += [lin_w, lin_b]

    return pl.pallas_call(
        _make_fused_kernel(num_layers, T, B, Bp, Hp),
        out_shape=jax.ShapeDtypeStruct((B, 1), jnp.float32),
        in_specs=[pl.BlockSpec(memory_space=VMEM)] * len(args),
        out_specs=pl.BlockSpec(memory_space=VMEM),
        scratch_shapes=[
            pltpu.VMEM((T * Bp, 3 * Hp), jnp.float32),   # hoisted input projection
            pltpu.VMEM((T * Bp, Hp), jnp.float32),       # inter-layer sequence
        ],
        # No vmem_limit override: footprint < 1 MiB, defaults fine on v5e/v6e/v7x.
    )(*args)


# ----------------------------------------------------------------------------
# Parameter init (deterministic, PyTorch-like bounds, fused/padded layouts)
# ----------------------------------------------------------------------------
def init_params(key, input_dim, hidden_dim, num_layers, kernel_size):
    H = hidden_dim
    Cin = input_dim
    K = kernel_size
    Cout = 2 * H
    Hp = _round_up(H, 128)              # lane-pad hidden dim
    Coutp = _round_up(Cout, 128)        # lane-pad conv channels
    KCp = _round_up(K * Cin, 128)       # lane-pad unfold (contraction) dim

    keys = list(jax.random.split(key, 3 + 4 * num_layers))
    ki = iter(keys)

    def u(k, shape, bound):
        return jax.random.uniform(k, shape, jnp.float32, -bound, bound)

    # Conv1d weight (bias=False in the module), PyTorch layout (Cout, Cin, K),
    # rearranged to the unfold layout (K*Cin, Cout): row k*Cin + c, column o.
    conv_bound = (Cin * K) ** -0.5
    conv_w = u(next(ki), (Cout, Cin, K), conv_bound)
    w2 = jnp.transpose(conv_w, (2, 1, 0)).reshape(K * Cin, Cout)
    w_pad = jnp.zeros((KCp, Coutp), jnp.float32).at[:K * Cin, :Cout].set(w2)

    params = {
        "conv_w": w_pad.astype(jnp.bfloat16),
        "bn_gamma": jnp.zeros((1, Coutp), jnp.float32).at[:, :Cout].set(1.0),
        "bn_beta": jnp.zeros((1, Coutp), jnp.float32),
    }

    gb = H ** -0.5
    gru_layers = []
    for l in range(num_layers):
        in_size = Cout if l == 0 else H
        in_p = Coutp if l == 0 else Hp
        w_ih = u(next(ki), (3 * H, in_size), gb)    # PyTorch gate order r, z, n
        w_hh = u(next(ki), (3 * H, H), gb)
        b_ih = u(next(ki), (3 * H,), gb)
        b_hh = u(next(ki), (3 * H,), gb)

        wih_p = jnp.zeros((in_p, 3 * Hp), jnp.float32)
        whh_p = jnp.zeros((Hp, 3 * Hp), jnp.float32)
        for g in range(3):
            wih_p = wih_p.at[:in_size, g * Hp:g * Hp + H].set(w_ih[g * H:(g + 1) * H, :].T)
            whh_p = whh_p.at[:H, g * Hp:g * Hp + H].set(w_hh[g * H:(g + 1) * H, :].T)

        # Pre-combined biases: r,z gates get b_ih+b_hh; n gate only b_ih here,
        # b_hn stays separate (it sits inside r * (h@W_hn + b_hn)).
        b_rzn = jnp.zeros((1, 3 * Hp), jnp.float32)
        b_rzn = b_rzn.at[:, 0:H].set((b_ih[0:H] + b_hh[0:H])[None, :])
        b_rzn = b_rzn.at[:, Hp:Hp + H].set((b_ih[H:2 * H] + b_hh[H:2 * H])[None, :])
        b_rzn = b_rzn.at[:, 2 * Hp:2 * Hp + H].set(b_ih[2 * H:3 * H][None, :])
        b_hn = jnp.zeros((1, Hp), jnp.float32).at[:, :H].set(b_hh[2 * H:3 * H][None, :])

        gru_layers.append((wih_p.astype(jnp.bfloat16),
                           whh_p.astype(jnp.bfloat16),
                           b_rzn, b_hn))
    params["gru"] = gru_layers

    lbound = H ** -0.5
    lw = u(next(ki), (1, H), lbound)
    lbias = u(next(ki), (1,), lbound)
    params["lin_w"] = jnp.zeros((1, Hp), jnp.float32).at[0, :H].set(lw[0])
    params["lin_b"] = lbias.reshape(1, 1)

    meta = dict(input_dim=Cin, hidden_dim=H, num_layers=num_layers,
                kernel_size=K, Hp=Hp, Coutp=Coutp, KCp=KCp)
    return params, meta


# ----------------------------------------------------------------------------
# Forward pass: tiny host-side layout prep + ONE fused Pallas kernel
# ----------------------------------------------------------------------------
def discriminator_forward(params, meta, x, noise):
    B, Cin, L = x.shape
    K = meta["kernel_size"]
    H = meta["hidden_dim"]
    Hp, KCp = meta["Hp"], meta["KCp"]
    num_layers = meta["num_layers"]
    Lout = L - K + 1
    Bp = _round_up(B, 8)                # sublane-pad the batch

    # Pre-unfold the Conv1d input into a time-major (t-major, b-minor) slab so
    # the single in-kernel matmul performs the whole convolution and every
    # per-timestep GRU access is an (8,128)-aligned tile.  This is a handful
    # of tiny XLA ops (bytes of data) fused ahead of the single pallas_call.
    xt = jnp.transpose(x, (2, 0, 1))                                     # (L, B, Cin)
    slab = jnp.concatenate([xt[k:k + Lout] for k in range(K)], axis=-1)  # (Lout, B, K*Cin)
    x_unf = jnp.zeros((Lout, Bp, KCp), jnp.bfloat16)
    x_unf = x_unf.at[:, :B, :K * Cin].set(slab.astype(jnp.bfloat16))
    x_unf = x_unf.reshape(Lout * Bp, KCp)

    # GRU initial hidden state (the torch.randn noise), zero-padded to (Bp, Hp).
    h0p = jnp.zeros((num_layers, Bp, Hp), jnp.float32).at[:, :B, :H].set(noise)

    # TODO(synk): training-mode inter-layer GRU dropout not implemented
    # (example uses dropout=0.0, where PyTorch applies no dropout either).
    return discriminator_fused(x_unf, params["conv_w"], params["bn_gamma"],
                               params["bn_beta"], h0p, params["gru"],
                               params["lin_w"], params["lin_b"],
                               T=Lout, B=B, Bp=Bp, Hp=Hp, num_layers=num_layers)


if __name__ == "__main__":
    # Small, module-consistent shapes.
    input_dim, hidden_dim, num_layers, dropout, kernel_size = 4, 32, 2, 0.0, 3
    B, L = 2, 16

    key = jax.random.PRNGKey(0)
    k_x, k_noise, k_p = jax.random.split(key, 3)

    x = jax.random.normal(k_x, (B, input_dim, L), dtype=jnp.float32)   # NCW like PyTorch
    noise = jax.random.normal(k_noise, (num_layers, B, hidden_dim), jnp.float32)
    params, meta = init_params(k_p, input_dim, hidden_dim, num_layers, kernel_size)

    fwd = jax.jit(lambda p, xx, nz: discriminator_forward(p, meta, xx, nz))
    out = jax.block_until_ready(fwd(params, x, noise))

    assert out.shape == (B, 1), out.shape
    assert bool(jnp.all(jnp.isfinite(out)))
    assert bool(jnp.all((out >= 0.0) & (out <= 1.0)))
    print("KERNEL_OK")
</pallas_src>

<mosaic_0001>
module attributes {stable_mosaic.version = 11 : i64} {
  func.func @kernel(%arg0: memref<112x128xbf16, #tpu.memory_space<vmem>>, %arg1: memref<128x128xbf16, #tpu.memory_space<vmem>>, %arg2: memref<1x128xf32, #tpu.memory_space<vmem>>, %arg3: memref<1x128xf32, #tpu.memory_space<vmem>>, %arg4: memref<2x8x128xf32, #tpu.memory_space<vmem>>, %arg5: memref<128x384xbf16, #tpu.memory_space<vmem>>, %arg6: memref<128x384xbf16, #tpu.memory_space<vmem>>, %arg7: memref<1x384xf32, #tpu.memory_space<vmem>>, %arg8: memref<1x128xf32, #tpu.memory_space<vmem>>, %arg9: memref<128x384xbf16, #tpu.memory_space<vmem>>, %arg10: memref<128x384xbf16, #tpu.memory_space<vmem>>, %arg11: memref<1x384xf32, #tpu.memory_space<vmem>>, %arg12: memref<1x128xf32, #tpu.memory_space<vmem>>, %arg13: memref<1x128xf32, #tpu.memory_space<vmem>>, %arg14: memref<1x1xf32, #tpu.memory_space<vmem>>, %arg15: memref<2x1xf32, #tpu.memory_space<vmem>>, %arg16: memref<112x384xf32, #tpu.memory_space<vmem>>, %arg17: memref<112x128xf32, #tpu.memory_space<vmem>>) attributes {dimension_semantics = [], scalar_prefetch = 0 : i64, scratch_operands = 2 : i64, tpu.core_type = #tpu.core_type<tc>} {
    %c0 = arith.constant 0 : index
    %c0_0 = arith.constant 0 : index
    %0 = vector.load %arg0[%c0, %c0_0] : memref<112x128xbf16, #tpu.memory_space<vmem>>, vector<112x128xbf16>
    %c0_1 = arith.constant 0 : index
    %c0_2 = arith.constant 0 : index
    %1 = vector.load %arg1[%c0_1, %c0_2] : memref<128x128xbf16, #tpu.memory_space<vmem>>, vector<128x128xbf16>
    %cst = arith.constant dense<0.000000e+00> : vector<112x128xf32>
    %2 = tpu.matmul %0, %1, %cst {dimension_numbers = #tpu.dot_dimension_numbers<[1], [0], [0], [1], [0, 0, 1, 1], [], []>} : vector<112x128xbf16>, vector<128x128xbf16>, vector<112x128xf32> -> vector<112x128xf32>
    %cst_3 = arith.constant dense<0.000000e+00> : vector<128xf32>
    %3 = vector.multi_reduction <add>, %2, %cst_3 [0] : vector<112x128xf32> to vector<128xf32>
    %4 = vector.shape_cast %3 : vector<128xf32> to vector<1x128xf32>
    %cst_4 = arith.constant 0.0357142873 : f32
    %5 = vector.broadcast %cst_4 : f32 to vector<1x128xf32>
    %6 = arith.mulf %4, %5 : vector<1x128xf32>
    %7 = arith.mulf %2, %2 : vector<112x128xf32>
    %cst_5 = arith.constant dense<0.000000e+00> : vector<128xf32>
    %8 = vector.multi_reduction <add>, %7, %cst_5 [0] : vector<112x128xf32> to vector<128xf32>
    %9 = vector.shape_cast %8 : vector<128xf32> to vector<1x128xf32>
    %cst_6 = arith.constant 0.0357142873 : f32
    %10 = vector.broadcast %cst_6 : f32 to vector<1x128xf32>
    %11 = arith.mulf %9, %10 : vector<1x128xf32>
    %12 = arith.mulf %6, %6 : vector<1x128xf32>
    %13 = arith.subf %11, %12 : vector<1x128xf32>
    %cst_7 = arith.constant 0.000000e+00 : f32
    %14 = vector.broadcast %cst_7 : f32 to vector<1x128xf32>
    %15 = arith.maximumf %13, %14 : vector<1x128xf32>
    %c0_8 = arith.constant 0 : index
    %c0_9 = arith.constant 0 : index
    %16 = vector.load %arg2[%c0_8, %c0_9] : memref<1x128xf32, #tpu.memory_space<vmem>>, vector<1x128xf32>
    %cst_10 = arith.constant 9.99999974E-6 : f32
    %17 = vector.broadcast %cst_10 : f32 to vector<1x128xf32>
    %18 = arith.addf %15, %17 : vector<1x128xf32>
    %19 = math.rsqrt %18 : vector<1x128xf32>
    %20 = arith.mulf %16, %19 : vector<1x128xf32>
    %c0_11 = arith.constant 0 : index
    %c0_12 = arith.constant 0 : index
    %21 = vector.load %arg3[%c0_11, %c0_12] : memref<1x128xf32, #tpu.memory_space<vmem>>, vector<1x128xf32>
    %22 = arith.mulf %6, %20 : vector<1x128xf32>
    %23 = arith.subf %21, %22 : vector<1x128xf32>
    %24 = vector.broadcast %20 : vector<1x128xf32> to vector<112x128xf32>
    %25 = arith.mulf %2, %24 : vector<112x128xf32>
    %26 = vector.broadcast %23 : vector<1x128xf32> to vector<112x128xf32>
    %27 = arith.addf %25, %26 : vector<112x128xf32>
    %28 = arith.truncf %27 : vector<112x128xf32> to vector<112x128xbf16>
    %c0_13 = arith.constant 0 : index
    %c0_14 = arith.constant 0 : index
    %29 = vector.load %arg5[%c0_13, %c0_14] : memref<128x384xbf16, #tpu.memory_space<vmem>>, vector<128x384xbf16>
    %cst_15 = arith.constant dense<0.000000e+00> : vector<112x384xf32>
    %30 = tpu.matmul %28, %29, %cst_15 {dimension_numbers = #tpu.dot_dimension_numbers<[1], [0], [0], [1], [0, 0, 1, 1], [], []>} : vector<112x128xbf16>, vector<128x384xbf16>, vector<112x384xf32> -> vector<112x384xf32>
    %c0_16 = arith.constant 0 : index
    %c0_17 = arith.constant 0 : index
    %31 = vector.load %arg7[%c0_16, %c0_17] : memref<1x384xf32, #tpu.memory_space<vmem>>, vector<1x384xf32>
    %32 = vector.broadcast %31 : vector<1x384xf32> to vector<112x384xf32>
    %33 = arith.addf %30, %32 : vector<112x384xf32>
    %c0_18 = arith.constant 0 : index
    %c0_19 = arith.constant 0 : index
    %34 = vector.load %arg16[%c0_18, %c0_19] : memref<112x384xf32, #tpu.memory_space<vmem>>, vector<112x384xf32>
    tpu.vector_store %arg16[%c0_18, %c0_19], %33 {strides = array<i32>} : memref<112x384xf32, #tpu.memory_space<vmem>>, vector<112x384xf32>,
    %c0_20 = arith.constant 0 : index
    %c0_21 = arith.constant 0 : index
    %35 = vector.load %arg8[%c0_20, %c0_21] : memref<1x128xf32, #tpu.memory_space<vmem>>, vector<1x128xf32>
    %c0_22 = arith.constant 0 : index
    %c0_23 = arith.constant 0 : index
    %c0_24 = arith.constant 0 : index
    %36 = vector.load %arg4[%c0_22, %c0_23, %c0_24] : memref<2x8x128xf32, #tpu.memory_space<vmem>>, vector<1x8x128xf32>
    %37 = vector.shape_cast %36 : vector<1x8x128xf32> to vector<8x128xf32>
    %c0_i32 = arith.constant 0 : i32
    %c8_i32 = arith.constant 8 : i32
    %38 = arith.muli %c0_i32, %c8_i32 : i32
    %39 = tpu.assume_multiple %38, 8 : i32
    %40 = arith.index_cast %39 : i32 to index
    %c0_25 = arith.constant 0 : index
    %41 = vector.load %arg16[%40, %c0_25] : memref<112x384xf32, #tpu.memory_space<vmem>>, vector<8x384xf32>
    %42 = arith.truncf %37 : vector<8x128xf32> to vector<8x128xbf16>
    %c0_26 = arith.constant 0 : index
    %c0_27 = arith.constant 0 : index
    %43 = vector.load %arg6[%c0_26, %c0_27] : memref<128x384xbf16, #tpu.memory_space<vmem>>, vector<128x384xbf16>
    %cst_28 = arith.constant dense<0.000000e+00> : vector<8x384xf32>
    %44 = tpu.matmul %42, %43, %cst_28 {dimension_numbers = #tpu.dot_dimension_numbers<[1], [0], [0], [1], [0, 0, 1, 1], [], []>} : vector<8x128xbf16>, vector<128x384xbf16>, vector<8x384xf32> -> vector<8x384xf32>
    %45 = vector.extract_strided_slice %41 {offsets = [0, 0], sizes = [8, 128], strides = [1, 1]} : vector<8x384xf32> to vector<8x128xf32>
    %46 = vector.extract_strided_slice %44 {offsets = [0, 0], sizes = [8, 128], strides = [1, 1]} : vector<8x384xf32> to vector<8x128xf32>
    %47 = arith.addf %45, %46 : vector<8x128xf32>
    %48 = arith.negf %47 : vector<8x128xf32>
    %49 = math.exp %48 : vector<8x128xf32>
    %cst_29 = arith.constant 1.000000e+00 : f32
    %50 = vector.broadcast %cst_29 : f32 to vector<8x128xf32>
    %51 = arith.addf %50, %49 : vector<8x128xf32>
    %52 = arith.divf %50, %51 : vector<8x128xf32>
    %53 = vector.extract_strided_slice %41 {offsets = [0, 128], sizes = [8, 128], strides = [1, 1]} : vector<8x384xf32> to vector<8x128xf32>
    %54 = vector.extract_strided_slice %44 {offsets = [0, 128], sizes = [8, 128], strides = [1, 1]} : vector<8x384xf32> to vector<8x128xf32>
    %55 = arith.addf %53, %54 : vector<8x128xf32>
    %56 = arith.negf %55 : vector<8x128xf32>
    %57 = math.exp %56 : vector<8x128xf32>
    %cst_30 = arith.constant 1.000000e+00 : f32
    %58 = vector.broadcast %cst_30 : f32 to vector<8x128xf32>
    %59 = arith.addf %58, %57 : vector<8x128xf32>
    %60 = arith.divf %58, %59 : vector<8x128xf32>
    %61 = vector.extract_strided_slice %41 {offsets = [0, 256], sizes = [8, 128], strides = [1, 1]} : vector<8x384xf32> to vector<8x128xf32>
    %62 = vector.extract_strided_slice %44 {offsets = [0, 256], sizes = [8, 128], strides = [1, 1]} : vector<8x384xf32> to vector<8x128xf32>
    %63 = vector.broadcast %35 : vector<1x128xf32> to vector<8x128xf32>
    %64 = arith.addf %62, %63 : vector<8x128xf32>
    %65 = arith.mulf %52, %64 : vector<8x128xf32>
    %66 = arith.addf %61, %65 : vector<8x128xf32>
    %67 = math.tanh %66 : vector<8x128xf32>
    %cst_31 = arith.constant 1.000000e+00 : f32
    %68 = vector.broadcast %cst_31 : f32 to vector<8x128xf32>
    %69 = arith.subf %68, %60 : vector<8x128xf32>
    %70 = arith.mulf %69, %67 : vector<8x128xf32>
    %71 = arith.mulf %60, %37 : vector<8x128xf32>
    %72 = arith.addf %70, %71 : vector<8x128xf32>
    %73 = arith.index_cast %39 : i32 to index
    %c0_32 = arith.constant 0 : index
    %74 = vector.load %arg17[%73, %c0_32] : memref<112x128xf32, #tpu.memory_space<vmem>>, vector<8x128xf32>
    tpu.vector_store %arg17[%73, %c0_32], %72 {strides = array<i32>} : memref<112x128xf32, #tpu.memory_space<vmem>>, vector<8x128xf32>,
    %c1_i32 = arith.constant 1 : i32
    %c8_i32_33 = arith.constant 8 : i32
    %75 = arith.muli %c1_i32, %c8_i32_33 : i32
    %76 = tpu.assume_multiple %75, 8 : i32
    %77 = arith.index_cast %76 : i32 to index
    %c0_34 = arith.constant 0 : index
    %78 = vector.load %arg16[%77, %c0_34] : memref<112x384xf32, #tpu.memory_space<vmem>>, vector<8x384xf32>
    %79 = arith.truncf %72 : vector<8x128xf32> to vector<8x128xbf16>
    %c0_35 = arith.constant 0 : index
    %c0_36 = arith.constant 0 : index
    %80 = vector.load %arg6[%c0_35, %c0_36] : memref<128x384xbf16, #tpu.memory_space<vmem>>, vector<128x384xbf16>
    %cst_37 = arith.constant dense<0.000000e+00> : vector<8x384xf32>
    %81 = tpu.matmul %79, %80, %cst_37 {dimension_numbers = #tpu.dot_dimension_numbers<[1], [0], [0], [1], [0, 0, 1, 1], [], []>} : vector<8x128xbf16>, vector<128x384xbf16>, vector<8x384xf32> -> vector<8x384xf32>
    %82 = vector.extract_strided_slice %78 {offsets = [0, 0], sizes = [8, 128], strides = [1, 1]} : vector<8x384xf32> to vector<8x128xf32>
    %83 = vector.extract_strided_slice %81 {offsets = [0, 0], sizes = [8, 128], strides = [1, 1]} : vector<8x384xf32> to vector<8x128xf32>
    %84 = arith.addf %82, %83 : vector<8x128xf32>
    %85 = arith.negf %84 : vector<8x128xf32>
    %86 = math.exp %85 : vector<8x128xf32>
    %cst_38 = arith.constant 1.000000e+00 : f32
    %87 = vector.broadcast %cst_38 : f32 to vector<8x128xf32>
    %88 = arith.addf %87, %86 : vector<8x128xf32>
    %89 = arith.divf %87, %88 : vector<8x128xf32>
    %90 = vector.extract_strided_slice %78 {offsets = [0, 128], sizes = [8, 128], strides = [1, 1]} : vector<8x384xf32> to vector<8x128xf32>
    %91 = vector.extract_strided_slice %81 {offsets = [0, 128], sizes = [8, 128], strides = [1, 1]} : vector<8x384xf32> to vector<8x128xf32>
    %92 = arith.addf %90, %91 : vector<8x128xf32>
    %93 = arith.negf %92 : vector<8x128xf32>
    %94 = math.exp %93 : vector<8x128xf32>
    %cst_39 = arith.constant 1.000000e+00 : f32
    %95 = vector.broadcast %cst_39 : f32 to vector<8x128xf32>
    %96 = arith.addf %95, %94 : vector<8x128xf32>
    %97 = arith.divf %95, %96 : vector<8x128xf32>
    %98 = vector.extract_strided_slice %78 {offsets = [0, 256], sizes = [8, 128], strides = [1, 1]} : vector<8x384xf32> to vector<8x128xf32>
    %99 = vector.extract_strided_slice %81 {offsets = [0, 256], sizes = [8, 128], strides = [1, 1]} : vector<8x384xf32> to vector<8x128xf32>
    %100 = vector.broadcast %35 : vector<1x128xf32> to vector<8x128xf32>
    %101 = arith.addf %99, %100 : vector<8x128xf32>
    %102 = arith.mulf %89, %101 : vector<8x128xf32>
    %103 = arith.addf %98, %102 : vector<8x128xf32>
    %104 = math.tanh %103 : vector<8x128xf32>
    %cst_40 = arith.constant 1.000000e+00 : f32
    %105 = vector.broadcast %cst_40 : f32 to vector<8x128xf32>
    %106 = arith.subf %105, %97 : vector<8x128xf32>
    %107 = arith.mulf %106, %104 : vector<8x128xf32>
    %108 = arith.mulf %97, %72 : vector<8x128xf32>
    %109 = arith.addf %107, %108 : vector<8x128xf32>
    %110 = arith.index_cast %76 : i32 to index
    %c0_41 = arith.constant 0 : index
    %111 = vector.load %arg17[%110, %c0_41] : memref<112x128xf32, #tpu.memory_space<vmem>>, vector<8x128xf32>
    tpu.vector_store %arg17[%110, %c0_41], %109 {strides = array<i32>} : memref<112x128xf32, #tpu.memory_space<vmem>>, vector<8x128xf32>,
    %c2_i32 = arith.constant 2 : i32
    %c8_i32_42 = arith.constant 8 : i32
    %112 = arith.muli %c2_i32, %c8_i32_42 : i32
    %113 = tpu.assume_multiple %112, 8 : i32
    %114 = arith.index_cast %113 : i32 to index
    %c0_43 = arith.constant 0 : index
    %115 = vector.load %arg16[%114, %c0_43] : memref<112x384xf32, #tpu.memory_space<vmem>>, vector<8x384xf32>
    %116 = arith.truncf %109 : vector<8x128xf32> to vector<8x128xbf16>
    %c0_44 = arith.constant 0 : index
    %c0_45 = arith.constant 0 : index
    %117 = vector.load %arg6[%c0_44, %c0_45] : memref<128x384xbf16, #tpu.memory_space<vmem>>, vector<128x384xbf16>
    %cst_46 = arith.constant dense<0.000000e+00> : vector<8x384xf32>
    %118 = tpu.matmul %116, %117, %cst_46 {dimension_numbers = #tpu.dot_dimension_numbers<[1], [0], [0], [1], [0, 0, 1, 1], [], []>} : vector<8x128xbf16>, vector<128x384xbf16>, vector<8x384xf32> -> vector<8x384xf32>
    %119 = vector.extract_strided_slice %115 {offsets = [0, 0], sizes = [8, 128], strides = [1, 1]} : vector<8x384xf32> to vector<8x128xf32>
    %120 = vector.extract_strided_slice %118 {offsets = [0, 0], sizes = [8, 128], strides = [1, 1]} : vector<8x384xf32> to vector<8x128xf32>
    %121 = arith.addf %119, %120 : vector<8x128xf32>
    %122 = arith.negf %121 : vector<8x128xf32>
    %123 = math.exp %122 : vector<8x128xf32>
    %cst_47 = arith.constant 1.000000e+00 : f32
    %124 = vector.broadcast %cst_47 : f32 to vector<8x128xf32>
    %125 = arith.addf %124, %123 : vector<8x128xf32>
    %126 = arith.divf %124, %125 : vector<8x128xf32>
    %127 = vector.extract_strided_slice %115 {offsets = [0, 128], sizes = [8, 128], strides = [1, 1]} : vector<8x384xf32> to vector<8x128xf32>
    %128 = vector.extract_strided_slice %118 {offsets = [0, 128], sizes = [8, 128], strides = [1, 1]} : vector<8x384xf32> to vector<8x128xf32>
    %129 = arith.addf %127, %128 : vector<8x128xf32>
    %130 = arith.negf %129 : vector<8x128xf32>
    %131 = math.exp %130 : vector<8x128xf32>
    %cst_48 = arith.constant 1.000000e+00 : f32
    %132 = vector.broadcast %cst_48 : f32 to vector<8x128xf32>
    %133 = arith.addf %132, %131 : vector<8x128xf32>
    %134 = arith.divf %132, %133 : vector<8x128xf32>
    %135 = vector.extract_strided_slice %115 {offsets = [0, 256], sizes = [8, 128], strides = [1, 1]} : vector<8x384xf32> to vector<8x128xf32>
    %136 = vector.extract_strided_slice %118 {offsets = [0, 256], sizes = [8, 128], strides = [1, 1]} : vector<8x384xf32> to vector<8x128xf32>
    %137 = vector.broadcast %35 : vector<1x128xf32> to vector<8x128xf32>
    %138 = arith.addf %136, %137 : vector<8x128xf32>
    %139 = arith.mulf %126, %138 : vector<8x128xf32>
    %140 = arith.addf %135, %139 : vector<8x128xf32>
    %141 = math.tanh %140 : vector<8x128xf32>
    %cst_49 = arith.constant 1.000000e+00 : f32
    %142 = vector.broadcast %cst_49 : f32 to vector<8x128xf32>
    %143 = arith.subf %142, %134 : vector<8x128xf32>
    %144 = arith.mulf %143, %141 : vector<8x128xf32>
    %145 = arith.mulf %134, %109 : vector<8x128xf32>
    %146 = arith.addf %144, %145 : vector<8x128xf32>
    %147 = arith.index_cast %113 : i32 to index
    %c0_50 = arith.constant 0 : index
    %148 = vector.load %arg17[%147, %c0_50] : memref<112x128xf32, #tpu.memory_space<vmem>>, vector<8x128xf32>
    tpu.vector_store %arg17[%147, %c0_50], %146 {strides = array<i32>} : memref<112x128xf32, #tpu.memory_space<vmem>>, vector<8x128xf32>,
    %c3_i32 = arith.constant 3 : i32
    %c8_i32_51 = arith.constant 8 : i32
    %149 = arith.muli %c3_i32, %c8_i32_51 : i32
    %150 = tpu.assume_multiple %149, 8 : i32
    %151 = arith.index_cast %150 : i32 to index
    %c0_52 = arith.constant 0 : index
    %152 = vector.load %arg16[%151, %c0_52] : memref<112x384xf32, #tpu.memory_space<vmem>>, vector<8x384xf32>
    %153 = arith.truncf %146 : vector<8x128xf32> to vector<8x128xbf16>
    %c0_53 = arith.constant 0 : index
    %c0_54 = arith.constant 0 : index
    %154 = vector.load %arg6[%c0_53, %c0_54] : memref<128x384xbf16, #tpu.memory_space<vmem>>, vector<128x384xbf16>
    %cst_55 = arith.constant dense<0.000000e+00> : vector<8x384xf32>
    %155 = tpu.matmul %153, %154, %cst_55 {dimension_numbers = #tpu.dot_dimension_numbers<[1], [0], [0], [1], [0, 0, 1, 1], [], []>} : vector<8x128xbf16>, vector<128x384xbf16>, vector<8x384xf32> -> vector<8x384xf32>
    %156 = vector.extract_strided_slice %152 {offsets = [0, 0], sizes = [8, 128], strides = [1, 1]} : vector<8x384xf32> to vector<8x128xf32>
    %157 = vector.extract_strided_slice %155 {offsets = [0, 0], sizes = [8, 128], strides = [1, 1]} : vector<8x384xf32> to vector<8x128xf32>
    %158 = arith.addf %156, %157 : vector<8x128xf32>
    %159 = arith.negf %158 : vector<8x128xf32>
    %160 = math.exp %159 : vector<8x128xf32>
    %cst_56 = arith.constant 1.000000e+00 : f32
    %161 = vector.broadcast %cst_56 : f32 to vector<8x128xf32>
    %162 = arith.addf %161, %160 : vector<8x128xf32>
    %163 = arith.divf %161, %162 : vector<8x128xf32>
    %164 = vector.extract_strided_slice %152 {offsets = [0, 128], sizes = [8, 128], strides = [1, 1]} : vector<8x384xf32> to vector<8x128xf32>
    %165 = vector.extract_strided_slice %155 {offsets = [0, 128], sizes = [8, 128], strides = [1, 1]} : vector<8x384xf32> to vector<8x128xf32>
    %166 = arith.addf %164, %165 : vector<8x128xf32>
    %167 = arith.negf %166 : vector<8x128xf32>
    %168 = math.exp %167 : vector<8x128xf32>
    %cst_57 = arith.constant 1.000000e+00 : f32
    %169 = vector.broadcast %cst_57 : f32 to vector<8x128xf32>
    %170 = arith.addf %169, %168 : vector<8x128xf32>
    %171 = arith.divf %169, %170 : vector<8x128xf32>
    %172 = vector.extract_strided_slice %152 {offsets = [0, 256], sizes = [8, 128], strides = [1, 1]} : vector<8x384xf32> to vector<8x128xf32>
    %173 = vector.extract_strided_slice %155 {offsets = [0, 256], sizes = [8, 128], strides = [1, 1]} : vector<8x384xf32> to vector<8x128xf32>
    %174 = vector.broadcast %35 : vector<1x128xf32> to vector<8x128xf32>
    %175 = arith.addf %173, %174 : vector<8x128xf32>
    %176 = arith.mulf %163, %175 : vector<8x128xf32>
    %177 = arith.addf %172, %176 : vector<8x128xf32>
    %178 = math.tanh %177 : vector<8x128xf32>
    %cst_58 = arith.constant 1.000000e+00 : f32
    %179 = vector.broadcast %cst_58 : f32 to vector<8x128xf32>
    %180 = arith.subf %179, %171 : vector<8x128xf32>
    %181 = arith.mulf %180, %178 : vector<8x128xf32>
    %182 = arith.mulf %171, %146 : vector<8x128xf32>
    %183 = arith.addf %181, %182 : vector<8x128xf32>
    %184 = arith.index_cast %150 : i32 to index
    %c0_59 = arith.constant 0 : index
    %185 = vector.load %arg17[%184, %c0_59] : memref<112x128xf32, #tpu.memory_space<vmem>>, vector<8x128xf32>
    tpu.vector_store %arg17[%184, %c0_59], %183 {strides = array<i32>} : memref<112x128xf32, #tpu.memory_space<vmem>>, vector<8x128xf32>,
    %c4_i32 = arith.constant 4 : i32
    %c8_i32_60 = arith.constant 8 : i32
    %186 = arith.muli %c4_i32, %c8_i32_60 : i32
    %187 = tpu.assume_multiple %186, 8 : i32
    %188 = arith.index_cast %187 : i32 to index
    %c0_61 = arith.constant 0 : index
    %189 = vector.load %arg16[%188, %c0_61] : memref<112x384xf32, #tpu.memory_space<vmem>>, vector<8x384xf32>
    %190 = arith.truncf %183 : vector<8x128xf32> to vector<8x128xbf16>
    %c0_62 = arith.constant 0 : index
    %c0_63 = arith.constant 0 : index
    %191 = vector.load %arg6[%c0_62, %c0_63] : memref<128x384xbf16, #tpu.memory_space<vmem>>, vector<128x384xbf16>
    %cst_64 = arith.constant dense<0.000000e+00> : vector<8x384xf32>
    %192 = tpu.matmul %190, %191, %cst_64 {dimension_numbers = #tpu.dot_dimension_numbers<[1], [0], [0], [1], [0, 0, 1, 1], [], []>} : vector<8x128xbf16>, vector<128x384xbf16>, vector<8x384xf32> -> vector<8x384xf32>
    %193 = vector.extract_strided_slice %189 {offsets = [0, 0], sizes = [8, 128], strides = [1, 1]} : vector<8x384xf32> to vector<8x128xf32>
    %194 = vector.extract_strided_slice %192 {offsets = [0, 0], sizes = [8, 128], strides = [1, 1]} : vector<8x384xf32> to vector<8x128xf32>
    %195 = arith.addf %193, %194 : vector<8x128xf32>
    %196 = arith.negf %195 : vector<8x128xf32>
    %197 = math.exp %196 : vector<8x128xf32>
    %cst_65 = arith.constant 1.000000e+00 : f32
    %198 = vector.broadcast %cst_65 : f32 to vector<8x128xf32>
    %199 = arith.addf %198, %197 : vector<8x128xf32>
    %200 = arith.divf %198, %199 : vector<8x128xf32>
    %201 = vector.extract_strided_slice %189 {offsets = [0, 128], sizes = [8, 128], strides = [1, 1]} : vector<8x384xf32> to vector<8x128xf32>
    %202 = vector.extract_strided_slice %192 {offsets = [0, 128], sizes = [8, 128], strides = [1, 1]} : vector<8x384xf32> to vector<8x128xf32>
    %203 = arith.addf %201, %202 : vector<8x128xf32>
    %204 = arith.negf %203 : vector<8x128xf32>
    %205 = math.exp %204 : vector<8x128xf32>
    %cst_66 = arith.constant 1.000000e+00 : f32
    %206 = vector.broadcast %cst_66 : f32 to vector<8x128xf32>
    %207 = arith.addf %206, %205 : vector<8x128xf32>
    %208 = arith.divf %206, %207 : vector<8x128xf32>
    %209 = vector.extract_strided_slice %189 {offsets = [0, 256], sizes = [8, 128], strides = [1, 1]} : vector<8x384xf32> to vector<8x128xf32>
    %210 = vector.extract_strided_slice %192 {offsets = [0, 256], sizes = [8, 128], strides = [1, 1]} : vector<8x384xf32> to vector<8x128xf32>
    %211 = vector.broadcast %35 : vector<1x128xf32> to vector<8x128xf32>
    %212 = arith.addf %210, %211 : vector<8x128xf32>
    %213 = arith.mulf %200, %212 : vector<8x128xf32>
    %214 = arith.addf %209, %213 : vector<8x128xf32>
    %215 = math.tanh %214 : vector<8x128xf32>
    %cst_67 = arith.constant 1.000000e+00 : f32
    %216 = vector.broadcast %cst_67 : f32 to vector<8x128xf32>
    %217 = arith.subf %216, %208 : vector<8x128xf32>
    %218 = arith.mulf %217, %215 : vector<8x128xf32>
    %219 = arith.mulf %208, %183 : vector<8x128xf32>
    %220 = arith.addf %218, %219 : vector<8x128xf32>
    %221 = arith.index_cast %187 : i32 to index
    %c0_68 = arith.constant 0 : index
    %222 = vector.load %arg17[%221, %c0_68] : memref<112x128xf32, #tpu.memory_space<vmem>>, vector<8x128xf32>
    tpu.vector_store %arg17[%221, %c0_68], %220 {strides = array<i32>} : memref<112x128xf32, #tpu.memory_space<vmem>>, vector<8x128xf32>,
    %c5_i32 = arith.constant 5 : i32
    %c8_i32_69 = arith.constant 8 : i32
    %223 = arith.muli %c5_i32, %c8_i32_69 : i32
    %224 = tpu.assume_multiple %223, 8 : i32
    %225 = arith.index_cast %224 : i32 to index
    %c0_70 = arith.constant 0 : index
    %226 = vector.load %arg16[%225, %c0_70] : memref<112x384xf32, #tpu.memory_space<vmem>>, vector<8x384xf32>
    %227 = arith.truncf %220 : vector<8x128xf32> to vector<8x128xbf16>
    %c0_71 = arith.constant 0 : index
    %c0_72 = arith.constant 0 : index
    %228 = vector.load %arg6[%c0_71, %c0_72] : memref<128x384xbf16, #tpu.memory_space<vmem>>, vector<128x384xbf16>
    %cst_73 = arith.constant dense<0.000000e+00> : vector<8x384xf32>
    %229 = tpu.matmul %227, %228, %cst_73 {dimension_numbers = #tpu.dot_dimension_numbers<[1], [0], [0], [1], [0, 0, 1, 1], [], []>} : vector<8x128xbf16>, vector<128x384xbf16>, vector<8x384xf32> -> vector<8x384xf32>
    %230 = vector.extract_strided_slice %226 {offsets = [0, 0], sizes = [8, 128], strides = [1, 1]} : vector<8x384xf32> to vector<8x128xf32>
    %231 = vector.extract_strided_slice %229 {offsets = [0, 0], sizes = [8, 128], strides = [1, 1]} : vector<8x384xf32> to vector<8x128xf32>
    %232 = arith.addf %230, %231 : vector<8x128xf32>
    %233 = arith.negf %232 : vector<8x128xf32>
    %234 = math.exp %233 : vector<8x128xf32>
    %cst_74 = arith.constant 1.000000e+00 : f32
    %235 = vector.broadcast %cst_74 : f32 to vector<8x128xf32>
    %236 = arith.addf %235, %234 : vector<8x128xf32>
    %237 = arith.divf %235, %236 : vector<8x128xf32>
    %238 = vector.extract_strided_slice %226 {offsets = [0, 128], sizes = [8, 128], strides = [1, 1]} : vector<8x384xf32> to vector<8x128xf32>
    %239 = vector.extract_strided_slice %229 {offsets = [0, 128], sizes = [8, 128], strides = [1, 1]} : vector<8x384xf32> to vector<8x128xf32>
    %240 = arith.addf %238, %239 : vector<8x128xf32>
    %241 = arith.negf %240 : vector<8x128xf32>
    %242 = math.exp %241 : vector<8x128xf32>
    %cst_75 = arith.constant 1.000000e+00 : f32
    %243 = vector.broadcast %cst_75 : f32 to vector<8x128xf32>
    %244 = arith.addf %243, %242 : vector<8x128xf32>
    %245 = arith.divf %243, %244 : vector<8x128xf32>
    %246 = vector.extract_strided_slice %226 {offsets = [0, 256], sizes = [8, 128], strides = [1, 1]} : vector<8x384xf32> to vector<8x128xf32>
    %247 = vector.extract_strided_slice %229 {offsets = [0, 256], sizes = [8, 128], strides = [1, 1]} : vector<8x384xf32> to vector<8x128xf32>
    %248 = vector.broadcast %35 : vector<1x128xf32> to vector<8x128xf32>
    %249 = arith.addf %247, %248 : vector<8x128xf32>
    %250 = arith.mulf %237, %249 : vector<8x128xf32>
    %251 = arith.addf %246, %250 : vector<8x128xf32>
    %252 = math.tanh %251 : vector<8x128xf32>
    %cst_76 = arith.constant 1.000000e+00 : f32
    %253 = vector.broadcast %cst_76 : f32 to vector<8x128xf32>
    %254 = arith.subf %253, %245 : vector<8x128xf32>
    %255 = arith.mulf %254, %252 : vector<8x128xf32>
    %256 = arith.mulf %245, %220 : vector<8x128xf32>
    %257 = arith.addf %255, %256 : vector<8x128xf32>
    %258 = arith.index_cast %224 : i32 to index
    %c0_77 = arith.constant 0 : index
    %259 = vector.load %arg17[%258, %c0_77] : memref<112x128xf32, #tpu.memory_space<vmem>>, vector<8x128xf32>
    tpu.vector_store %arg17[%258, %c0_77], %257 {strides = array<i32>} : memref<112x128xf32, #tpu.memory_space<vmem>>, vector<8x128xf32>,
    %c6_i32 = arith.constant 6 : i32
    %c8_i32_78 = arith.constant 8 : i32
    %260 = arith.muli %c6_i32, %c8_i32_78 : i32
    %261 = tpu.assume_multiple %260, 8 : i32
    %262 = arith.index_cast %261 : i32 to index
    %c0_79 = arith.constant 0 : index
    %263 = vector.load %arg16[%262, %c0_79] : memref<112x384xf32, #tpu.memory_space<vmem>>, vector<8x384xf32>
    %264 = arith.truncf %257 : vector<8x128xf32> to vector<8x128xbf16>
    %c0_80 = arith.constant 0 : index
    %c0_81 = arith.constant 0 : index
    %265 = vector.load %arg6[%c0_80, %c0_81] : memref<128x384xbf16, #tpu.memory_space<vmem>>, vector<128x384xbf16>
    %cst_82 = arith.constant dense<0.000000e+00> : vector<8x384xf32>
    %266 = tpu.matmul %264, %265, %cst_82 {dimension_numbers = #tpu.dot_dimension_numbers<[1], [0], [0], [1], [0, 0, 1, 1], [], []>} : vector<8x128xbf16>, vector<128x384xbf16>, vector<8x384xf32> -> vector<8x384xf32>
    %267 = vector.extract_strided_slice %263 {offsets = [0, 0], sizes = [8, 128], strides = [1, 1]} : vector<8x384xf32> to vector<8x128xf32>
    %268 = vector.extract_strided_slice %266 {offsets = [0, 0], sizes = [8, 128], strides = [1, 1]} : vector<8x384xf32> to vector<8x128xf32>
    %269 = arith.addf %267, %268 : vector<8x128xf32>
    %270 = arith.negf %269 : vector<8x128xf32>
    %271 = math.exp %270 : vector<8x128xf32>
    %cst_83 = arith.constant 1.000000e+00 : f32
    %272 = vector.broadcast %cst_83 : f32 to vector<8x128xf32>
    %273 = arith.addf %272, %271 : vector<8x128xf32>
    %274 = arith.divf %272, %273 : vector<8x128xf32>
    %275 = vector.extract_strided_slice %263 {offsets = [0, 128], sizes = [8, 128], strides = [1, 1]} : vector<8x384xf32> to vector<8x128xf32>
    %276 = vector.extract_strided_slice %266 {offsets = [0, 128], sizes = [8, 128], strides = [1, 1]} : vector<8x384xf32> to vector<8x128xf32>
    %277 = arith.addf %275, %276 : vector<8x128xf32>
    %278 = arith.negf %277 : vector<8x128xf32>
    %279 = math.exp %278 : vector<8x128xf32>
    %cst_84 = arith.constant 1.000000e+00 : f32
    %280 = vector.broadcast %cst_84 : f32 to vector<8x128xf32>
    %281 = arith.addf %280, %279 : vector<8x128xf32>
    %282 = arith.divf %280, %281 : vector<8x128xf32>
    %283 = vector.extract_strided_slice %263 {offsets = [0, 256], sizes = [8, 128], strides = [1, 1]} : vector<8x384xf32> to vector<8x128xf32>
    %284 = vector.extract_strided_slice %266 {offsets = [0, 256], sizes = [8, 128], strides = [1, 1]} : vector<8x384xf32> to vector<8x128xf32>
    %285 = vector.broadcast %35 : vector<1x128xf32> to vector<8x128xf32>
    %286 = arith.addf %284, %285 : vector<8x128xf32>
    %287 = arith.mulf %274, %286 : vector<8x128xf32>
    %288 = arith.addf %283, %287 : vector<8x128xf32>
    %289 = math.tanh %288 : vector<8x128xf32>
    %cst_85 = arith.constant 1.000000e+00 : f32
    %290 = vector.broadcast %cst_85 : f32 to vector<8x128xf32>
    %291 = arith.subf %290, %282 : vector<8x128xf32>
    %292 = arith.mulf %291, %289 : vector<8x128xf32>
    %293 = arith.mulf %282, %257 : vector<8x128xf32>
    %294 = arith.addf %292, %293 : vector<8x128xf32>
    %295 = arith.index_cast %261 : i32 to index
    %c0_86 = arith.constant 0 : index
    %296 = vector.load %arg17[%295, %c0_86] : memref<112x128xf32, #tpu.memory_space<vmem>>, vector<8x128xf32>
    tpu.vector_store %arg17[%295, %c0_86], %294 {strides = array<i32>} : memref<112x128xf32, #tpu.memory_space<vmem>>, vector<8x128xf32>,
    %c7_i32 = arith.constant 7 : i32
    %c8_i32_87 = arith.constant 8 : i32
    %297 = arith.muli %c7_i32, %c8_i32_87 : i32
    %298 = tpu.assume_multiple %297, 8 : i32
    %299 = arith.index_cast %298 : i32 to index
    %c0_88 = arith.constant 0 : index
    %300 = vector.load %arg16[%299, %c0_88] : memref<112x384xf32, #tpu.memory_space<vmem>>, vector<8x384xf32>
    %301 = arith.truncf %294 : vector<8x128xf32> to vector<8x128xbf16>
    %c0_89 = arith.constant 0 : index
    %c0_90 = arith.constant 0 : index
    %302 = vector.load %arg6[%c0_89, %c0_90] : memref<128x384xbf16, #tpu.memory_space<vmem>>, vector<128x384xbf16>
    %cst_91 = arith.constant dense<0.000000e+00> : vector<8x384xf32>
    %303 = tpu.matmul %301, %302, %cst_91 {dimension_numbers = #tpu.dot_dimension_numbers<[1], [0], [0], [1], [0, 0, 1, 1], [], []>} : vector<8x128xbf16>, vector<128x384xbf16>, vector<8x384xf32> -> vector<8x384xf32>
    %304 = vector.extract_strided_slice %300 {offsets = [0, 0], sizes = [8, 128], strides = [1, 1]} : vector<8x384xf32> to vector<8x128xf32>
    %305 = vector.extract_strided_slice %303 {offsets = [0, 0], sizes = [8, 128], strides = [1, 1]} : vector<8x384xf32> to vector<8x128xf32>
    %306 = arith.addf %304, %305 : vector<8x128xf32>
    %307 = arith.negf %306 : vector<8x128xf32>
    %308 = math.exp %307 : vector<8x128xf32>
    %cst_92 = arith.constant 1.000000e+00 : f32
    %309 = vector.broadcast %cst_92 : f32 to vector<8x128xf32>
    %310 = arith.addf %309, %308 : vector<8x128xf32>
    %311 = arith.divf %309, %310 : vector<8x128xf32>
    %312 = vector.extract_strided_slice %300 {offsets = [0, 128], sizes = [8, 128], strides = [1, 1]} : vector<8x384xf32> to vector<8x128xf32>
    %313 = vector.extract_strided_slice %303 {offsets = [0, 128], sizes = [8, 128], strides = [1, 1]} : vector<8x384xf32> to vector<8x128xf32>
    %314 = arith.addf %312, %313 : vector<8x128xf32>
    %315 = arith.negf %314 : vector<8x128xf32>
    %316 = math.exp %315 : vector<8x128xf32>
    %cst_93 = arith.constant 1.000000e+00 : f32
    %317 = vector.broadcast %cst_93 : f32 to vector<8x128xf32>
    %318 = arith.addf %317, %316 : vector<8x128xf32>
    %319 = arith.divf %317, %318 : vector<8x128xf32>
    %320 = vector.extract_strided_slice %300 {offsets = [0, 256], sizes = [8, 128], strides = [1, 1]} : vector<8x384xf32> to vector<8x128xf32>
    %321 = vector.extract_strided_slice %303 {offsets = [0, 256], sizes = [8, 128], strides = [1, 1]} : vector<8x384xf32> to vector<8x128xf32>
    %322 = vector.broadcast %35 : vector<1x128xf32> to vector<8x128xf32>
    %323 = arith.addf %321, %322 : vector<8x128xf32>
    %324 = arith.mulf %311, %323 : vector<8x128xf32>
    %325 = arith.addf %320, %324 : vector<8x128xf32>
    %326 = math.tanh %325 : vector<8x128xf32>
    %cst_94 = arith.constant 1.000000e+00 : f32
    %327 = vector.broadcast %cst_94 : f32 to vector<8x128xf32>
    %328 = arith.subf %327, %319 : vector<8x128xf32>
    %329 = arith.mulf %328, %326 : vector<8x128xf32>
    %330 = arith.mulf %319, %294 : vector<8x128xf32>
    %331 = arith.addf %329, %330 : vector<8x128xf32>
    %332 = arith.index_cast %298 : i32 to index
    %c0_95 = arith.constant 0 : index
    %333 = vector.load %arg17[%332, %c0_95] : memref<112x128xf32, #tpu.memory_space<vmem>>, vector<8x128xf32>
    tpu.vector_store %arg17[%332, %c0_95], %331 {strides = array<i32>} : memref<112x128xf32, #tpu.memory_space<vmem>>, vector<8x128xf32>,
    %c8_i32_96 = arith.constant 8 : i32
    %c8_i32_97 = arith.constant 8 : i32
    %334 = arith.muli %c8_i32_96, %c8_i32_97 : i32
    %335 = tpu.assume_multiple %334, 8 : i32
    %336 = arith.index_cast %335 : i32 to index
    %c0_98 = arith.constant 0 : index
    %337 = vector.load %arg16[%336, %c0_98] : memref<112x384xf32, #tpu.memory_space<vmem>>, vector<8x384xf32>
    %338 = arith.truncf %331 : vector<8x128xf32> to vector<8x128xbf16>
    %c0_99 = arith.constant 0 : index
    %c0_100 = arith.constant 0 : index
    %339 = vector.load %arg6[%c0_99, %c0_100] : memref<128x384xbf16, #tpu.memory_space<vmem>>, vector<128x384xbf16>
    %cst_101 = arith.constant dense<0.000000e+00> : vector<8x384xf32>
    %340 = tpu.matmul %338, %339, %cst_101 {dimension_numbers = #tpu.dot_dimension_numbers<[1], [0], [0], [1], [0, 0, 1, 1], [], []>} : vector<8x128xbf16>, vector<128x384xbf16>, vector<8x384xf32> -> vector<8x384xf32>
    %341 = vector.extract_strided_slice %337 {offsets = [0, 0], sizes = [8, 128], strides = [1, 1]} : vector<8x384xf32> to vector<8x128xf32>
    %342 = vector.extract_strided_slice %340 {offsets = [0, 0], sizes = [8, 128], strides = [1, 1]} : vector<8x384xf32> to vector<8x128xf32>
    %343 = arith.addf %341, %342 : vector<8x128xf32>
    %344 = arith.negf %343 : vector<8x128xf32>
    %345 = math.exp %344 : vector<8x128xf32>
    %cst_102 = arith.constant 1.000000e+00 : f32
    %346 = vector.broadcast %cst_102 : f32 to vector<8x128xf32>
    %347 = arith.addf %346, %345 : vector<8x128xf32>
    %348 = arith.divf %346, %347 : vector<8x128xf32>
    %349 = vector.extract_strided_slice %337 {offsets = [0, 128], sizes = [8, 128], strides = [1, 1]} : vector<8x384xf32> to vector<8x128xf32>
    %350 = vector.extract_strided_slice %340 {offsets = [0, 128], sizes = [8, 128], strides = [1, 1]} : vector<8x384xf32> to vector<8x128xf32>
    %351 = arith.addf %349, %350 : vector<8x128xf32>
    %352 = arith.negf %351 : vector<8x128xf32>
    %353 = math.exp %352 : vector<8x128xf32>
    %cst_103 = arith.constant 1.000000e+00 : f32
    %354 = vector.broadcast %cst_103 : f32 to vector<8x128xf32>
    %355 = arith.addf %354, %353 : vector<8x128xf32>
    %356 = arith.divf %354, %355 : vector<8x128xf32>
    %357 = vector.extract_strided_slice %337 {offsets = [0, 256], sizes = [8, 128], strides = [1, 1]} : vector<8x384xf32> to vector<8x128xf32>
    %358 = vector.extract_strided_slice %340 {offsets = [0, 256], sizes = [8, 128], strides = [1, 1]} : vector<8x384xf32> to vector<8x128xf32>
    %359 = vector.broadcast %35 : vector<1x128xf32> to vector<8x128xf32>
    %360 = arith.addf %358, %359 : vector<8x128xf32>
    %361 = arith.mulf %348, %360 : vector<8x128xf32>
    %362 = arith.addf %357, %361 : vector<8x128xf32>
    %363 = math.tanh %362 : vector<8x128xf32>
    %cst_104 = arith.constant 1.000000e+00 : f32
    %364 = vector.broadcast %cst_104 : f32 to vector<8x128xf32>
    %365 = arith.subf %364, %356 : vector<8x128xf32>
    %366 = arith.mulf %365, %363 : vector<8x128xf32>
    %367 = arith.mulf %356, %331 : vector<8x128xf32>
    %368 = arith.addf %366, %367 : vector<8x128xf32>
    %369 = arith.index_cast %335 : i32 to index
    %c0_105 = arith.constant 0 : index
    %370 = vector.load %arg17[%369, %c0_105] : memref<112x128xf32, #tpu.memory_space<vmem>>, vector<8x128xf32>
    tpu.vector_store %arg17[%369, %c0_105], %368 {strides = array<i32>} : memref<112x128xf32, #tpu.memory_space<vmem>>, vector<8x128xf32>,
    %c9_i32 = arith.constant 9 : i32
    %c8_i32_106 = arith.constant 8 : i32
    %371 = arith.muli %c9_i32, %c8_i32_106 : i32
    %372 = tpu.assume_multiple %371, 8 : i32
    %373 = arith.index_cast %372 : i32 to index
    %c0_107 = arith.constant 0 : index
    %374 = vector.load %arg16[%373, %c0_107] : memref<112x384xf32, #tpu.memory_space<vmem>>, vector<8x384xf32>
    %375 = arith.truncf %368 : vector<8x128xf32> to vector<8x128xbf16>
    %c0_108 = arith.constant 0 : index
    %c0_109 = arith.constant 0 : index
    %376 = vector.load %arg6[%c0_108, %c0_109] : memref<128x384xbf16, #tpu.memory_space<vmem>>, vector<128x384xbf16>
    %cst_110 = arith.constant dense<0.000000e+00> : vector<8x384xf32>
    %377 = tpu.matmul %375, %376, %cst_110 {dimension_numbers = #tpu.dot_dimension_numbers<[1], [0], [0], [1], [0, 0, 1, 1], [], []>} : vector<8x128xbf16>, vector<128x384xbf16>, vector<8x384xf32> -> vector<8x384xf32>
    %378 = vector.extract_strided_slice %374 {offsets = [0, 0], sizes = [8, 128], strides = [1, 1]} : vector<8x384xf32> to vector<8x128xf32>
    %379 = vector.extract_strided_slice %377 {offsets = [0, 0], sizes = [8, 128], strides = [1, 1]} : vector<8x384xf32> to vector<8x128xf32>
    %380 = arith.addf %378, %379 : vector<8x128xf32>
    %381 = arith.negf %380 : vector<8x128xf32>
    %382 = math.exp %381 : vector<8x128xf32>
    %cst_111 = arith.constant 1.000000e+00 : f32
    %383 = vector.broadcast %cst_111 : f32 to vector<8x128xf32>
    %384 = arith.addf %383, %382 : vector<8x128xf32>
    %385 = arith.divf %383, %384 : vector<8x128xf32>
    %386 = vector.extract_strided_slice %374 {offsets = [0, 128], sizes = [8, 128], strides = [1, 1]} : vector<8x384xf32> to vector<8x128xf32>
    %387 = vector.extract_strided_slice %377 {offsets = [0, 128], sizes = [8, 128], strides = [1, 1]} : vector<8x384xf32> to vector<8x128xf32>
    %388 = arith.addf %386, %387 : vector<8x128xf32>
    %389 = arith.negf %388 : vector<8x128xf32>
    %390 = math.exp %389 : vector<8x128xf32>
    %cst_112 = arith.constant 1.000000e+00 : f32
    %391 = vector.broadcast %cst_112 : f32 to vector<8x128xf32>
    %392 = arith.addf %391, %390 : vector<8x128xf32>
    %393 = arith.divf %391, %392 : vector<8x128xf32>
    %394 = vector.extract_strided_slice %374 {offsets = [0, 256], sizes = [8, 128], strides = [1, 1]} : vector<8x384xf32> to vector<8x128xf32>
    %395 = vector.extract_strided_slice %377 {offsets = [0, 256], sizes = [8, 128], strides = [1, 1]} : vector<8x384xf32> to vector<8x128xf32>
    %396 = vector.broadcast %35 : vector<1x128xf32> to vector<8x128xf32>
    %397 = arith.addf %395, %396 : vector<8x128xf32>
    %398 = arith.mulf %385, %397 : vector<8x128xf32>
    %399 = arith.addf %394, %398 : vector<8x128xf32>
    %400 = math.tanh %399 : vector<8x128xf32>
    %cst_113 = arith.constant 1.000000e+00 : f32
    %401 = vector.broadcast %cst_113 : f32 to vector<8x128xf32>
    %402 = arith.subf %401, %393 : vector<8x128xf32>
    %403 = arith.mulf %402, %400 : vector<8x128xf32>
    %404 = arith.mulf %393, %368 : vector<8x128xf32>
    %405 = arith.addf %403, %404 : vector<8x128xf32>
    %406 = arith.index_cast %372 : i32 to index
    %c0_114 = arith.constant 0 : index
    %407 = vector.load %arg17[%406, %c0_114] : memref<112x128xf32, #tpu.memory_space<vmem>>, vector<8x128xf32>
    tpu.vector_store %arg17[%406, %c0_114], %405 {strides = array<i32>} : memref<112x128xf32, #tpu.memory_space<vmem>>, vector<8x128xf32>,
    %c10_i32 = arith.constant 10 : i32
    %c8_i32_115 = arith.constant 8 : i32
    %408 = arith.muli %c10_i32, %c8_i32_115 : i32
    %409 = tpu.assume_multiple %408, 8 : i32
    %410 = arith.index_cast %409 : i32 to index
    %c0_116 = arith.constant 0 : index
    %411 = vector.load %arg16[%410, %c0_116] : memref<112x384xf32, #tpu.memory_space<vmem>>, vector<8x384xf32>
    %412 = arith.truncf %405 : vector<8x128xf32> to vector<8x128xbf16>
    %c0_117 = arith.constant 0 : index
    %c0_118 = arith.constant 0 : index
    %413 = vector.load %arg6[%c0_117, %c0_118] : memref<128x384xbf16, #tpu.memory_space<vmem>>, vector<128x384xbf16>
    %cst_119 = arith.constant dense<0.000000e+00> : vector<8x384xf32>
    %414 = tpu.matmul %412, %413, %cst_119 {dimension_numbers = #tpu.dot_dimension_numbers<[1], [0], [0], [1], [0, 0, 1, 1], [], []>} : vector<8x128xbf16>, vector<128x384xbf16>, vector<8x384xf32> -> vector<8x384xf32>
    %415 = vector.extract_strided_slice %411 {offsets = [0, 0], sizes = [8, 128], strides = [1, 1]} : vector<8x384xf32> to vector<8x128xf32>
    %416 = vector.extract_strided_slice %414 {offsets = [0, 0], sizes = [8, 128], strides = [1, 1]} : vector<8x384xf32> to vector<8x128xf32>
    %417 = arith.addf %415, %416 : vector<8x128xf32>
    %418 = arith.negf %417 : vector<8x128xf32>
    %419 = math.exp %418 : vector<8x128xf32>
    %cst_120 = arith.constant 1.000000e+00 : f32
    %420 = vector.broadcast %cst_120 : f32 to vector<8x128xf32>
    %421 = arith.addf %420, %419 : vector<8x128xf32>
    %422 = arith.divf %420, %421 : vector<8x128xf32>
    %423 = vector.extract_strided_slice %411 {offsets = [0, 128], sizes = [8, 128], strides = [1, 1]} : vector<8x384xf32> to vector<8x128xf32>
    %424 = vector.extract_strided_slice %414 {offsets = [0, 128], sizes = [8, 128], strides = [1, 1]} : vector<8x384xf32> to vector<8x128xf32>
    %425 = arith.addf %423, %424 : vector<8x128xf32>
    %426 = arith.negf %425 : vector<8x128xf32>
    %427 = math.exp %426 : vector<8x128xf32>
    %cst_121 = arith.constant 1.000000e+00 : f32
    %428 = vector.broadcast %cst_121 : f32 to vector<8x128xf32>
    %429 = arith.addf %428, %427 : vector<8x128xf32>
    %430 = arith.divf %428, %429 : vector<8x128xf32>
    %431 = vector.extract_strided_slice %411 {offsets = [0, 256], sizes = [8, 128], strides = [1, 1]} : vector<8x384xf32> to vector<8x128xf32>
    %432 = vector.extract_strided_slice %414 {offsets = [0, 256], sizes = [8, 128], strides = [1, 1]} : vector<8x384xf32> to vector<8x128xf32>
    %433 = vector.broadcast %35 : vector<1x128xf32> to vector<8x128xf32>
    %434 = arith.addf %432, %433 : vector<8x128xf32>
    %435 = arith.mulf %422, %434 : vector<8x128xf32>
    %436 = arith.addf %431, %435 : vector<8x128xf32>
    %437 = math.tanh %436 : vector<8x128xf32>
    %cst_122 = arith.constant 1.000000e+00 : f32
    %438 = vector.broadcast %cst_122 : f32 to vector<8x128xf32>
    %439 = arith.subf %438, %430 : vector<8x128xf32>
    %440 = arith.mulf %439, %437 : vector<8x128xf32>
    %441 = arith.mulf %430, %405 : vector<8x128xf32>
    %442 = arith.addf %440, %441 : vector<8x128xf32>
    %443 = arith.index_cast %409 : i32 to index
    %c0_123 = arith.constant 0 : index
    %444 = vector.load %arg17[%443, %c0_123] : memref<112x128xf32, #tpu.memory_space<vmem>>, vector<8x128xf32>
    tpu.vector_store %arg17[%443, %c0_123], %442 {strides = array<i32>} : memref<112x128xf32, #tpu.memory_space<vmem>>, vector<8x128xf32>,
    %c11_i32 = arith.constant 11 : i32
    %c8_i32_124 = arith.constant 8 : i32
    %445 = arith.muli %c11_i32, %c8_i32_124 : i32
    %446 = tpu.assume_multiple %445, 8 : i32
    %447 = arith.index_cast %446 : i32 to index
    %c0_125 = arith.constant 0 : index
    %448 = vector.load %arg16[%447, %c0_125] : memref<112x384xf32, #tpu.memory_space<vmem>>, vector<8x384xf32>
    %449 = arith.truncf %442 : vector<8x128xf32> to vector<8x128xbf16>
    %c0_126 = arith.constant 0 : index
    %c0_127 = arith.constant 0 : index
    %450 = vector.load %arg6[%c0_126, %c0_127] : memref<128x384xbf16, #tpu.memory_space<vmem>>, vector<128x384xbf16>
    %cst_128 = arith.constant dense<0.000000e+00> : vector<8x384xf32>
    %451 = tpu.matmul %449, %450, %cst_128 {dimension_numbers = #tpu.dot_dimension_numbers<[1], [0], [0], [1], [0, 0, 1, 1], [], []>} : vector<8x128xbf16>, vector<128x384xbf16>, vector<8x384xf32> -> vector<8x384xf32>
    %452 = vector.extract_strided_slice %448 {offsets = [0, 0], sizes = [8, 128], strides = [1, 1]} : vector<8x384xf32> to vector<8x128xf32>
    %453 = vector.extract_strided_slice %451 {offsets = [0, 0], sizes = [8, 128], strides = [1, 1]} : vector<8x384xf32> to vector<8x128xf32>
    %454 = arith.addf %452, %453 : vector<8x128xf32>
    %455 = arith.negf %454 : vector<8x128xf32>
    %456 = math.exp %455 : vector<8x128xf32>
    %cst_129 = arith.constant 1.000000e+00 : f32
    %457 = vector.broadcast %cst_129 : f32 to vector<8x128xf32>
    %458 = arith.addf %457, %456 : vector<8x128xf32>
    %459 = arith.divf %457, %458 : vector<8x128xf32>
    %460 = vector.extract_strided_slice %448 {offsets = [0, 128], sizes = [8, 128], strides = [1, 1]} : vector<8x384xf32> to vector<8x128xf32>
    %461 = vector.extract_strided_slice %451 {offsets = [0, 128], sizes = [8, 128], strides = [1, 1]} : vector<8x384xf32> to vector<8x128xf32>
    %462 = arith.addf %460, %461 : vector<8x128xf32>
    %463 = arith.negf %462 : vector<8x128xf32>
    %464 = math.exp %463 : vector<8x128xf32>
    %cst_130 = arith.constant 1.000000e+00 : f32
    %465 = vector.broadcast %cst_130 : f32 to vector<8x128xf32>
    %466 = arith.addf %465, %464 : vector<8x128xf32>
    %467 = arith.divf %465, %466 : vector<8x128xf32>
    %468 = vector.extract_strided_slice %448 {offsets = [0, 256], sizes = [8, 128], strides = [1, 1]} : vector<8x384xf32> to vector<8x128xf32>
    %469 = vector.extract_strided_slice %451 {offsets = [0, 256], sizes = [8, 128], strides = [1, 1]} : vector<8x384xf32> to vector<8x128xf32>
    %470 = vector.broadcast %35 : vector<1x128xf32> to vector<8x128xf32>
    %471 = arith.addf %469, %470 : vector<8x128xf32>
    %472 = arith.mulf %459, %471 : vector<8x128xf32>
    %473 = arith.addf %468, %472 : vector<8x128xf32>
    %474 = math.tanh %473 : vector<8x128xf32>
    %cst_131 = arith.constant 1.000000e+00 : f32
    %475 = vector.broadcast %cst_131 : f32 to vector<8x128xf32>
    %476 = arith.subf %475, %467 : vector<8x128xf32>
    %477 = arith.mulf %476, %474 : vector<8x128xf32>
    %478 = arith.mulf %467, %442 : vector<8x128xf32>
    %479 = arith.addf %477, %478 : vector<8x128xf32>
    %480 = arith.index_cast %446 : i32 to index
    %c0_132 = arith.constant 0 : index
    %481 = vector.load %arg17[%480, %c0_132] : memref<112x128xf32, #tpu.memory_space<vmem>>, vector<8x128xf32>
    tpu.vector_store %arg17[%480, %c0_132], %479 {strides = array<i32>} : memref<112x128xf32, #tpu.memory_space<vmem>>, vector<8x128xf32>,
    %c12_i32 = arith.constant 12 : i32
    %c8_i32_133 = arith.constant 8 : i32
    %482 = arith.muli %c12_i32, %c8_i32_133 : i32
    %483 = tpu.assume_multiple %482, 8 : i32
    %484 = arith.index_cast %483 : i32 to index
    %c0_134 = arith.constant 0 : index
    %485 = vector.load %arg16[%484, %c0_134] : memref<112x384xf32, #tpu.memory_space<vmem>>, vector<8x384xf32>
    %486 = arith.truncf %479 : vector<8x128xf32> to vector<8x128xbf16>
    %c0_135 = arith.constant 0 : index
    %c0_136 = arith.constant 0 : index
    %487 = vector.load %arg6[%c0_135, %c0_136] : memref<128x384xbf16, #tpu.memory_space<vmem>>, vector<128x384xbf16>
    %cst_137 = arith.constant dense<0.000000e+00> : vector<8x384xf32>
    %488 = tpu.matmul %486, %487, %cst_137 {dimension_numbers = #tpu.dot_dimension_numbers<[1], [0], [0], [1], [0, 0, 1, 1], [], []>} : vector<8x128xbf16>, vector<128x384xbf16>, vector<8x384xf32> -> vector<8x384xf32>
    %489 = vector.extract_strided_slice %485 {offsets = [0, 0], sizes = [8, 128], strides = [1, 1]} : vector<8x384xf32> to vector<8x128xf32>
    %490 = vector.extract_strided_slice %488 {offsets = [0, 0], sizes = [8, 128], strides = [1, 1]} : vector<8x384xf32> to vector<8x128xf32>
    %491 = arith.addf %489, %490 : vector<8x128xf32>
    %492 = arith.negf %491 : vector<8x128xf32>
    %493 = math.exp %492 : vector<8x128xf32>
    %cst_138 = arith.constant 1.000000e+00 : f32
    %494 = vector.broadcast %cst_138 : f32 to vector<8x128xf32>
    %495 = arith.addf %494, %493 : vector<8x128xf32>
    %496 = arith.divf %494, %495 : vector<8x128xf32>
    %497 = vector.extract_strided_slice %485 {offsets = [0, 128], sizes = [8, 128], strides = [1, 1]} : vector<8x384xf32> to vector<8x128xf32>
    %498 = vector.extract_strided_slice %488 {offsets = [0, 128], sizes = [8, 128], strides = [1, 1]} : vector<8x384xf32> to vector<8x128xf32>
    %499 = arith.addf %497, %498 : vector<8x128xf32>
    %500 = arith.negf %499 : vector<8x128xf32>
    %501 = math.exp %500 : vector<8x128xf32>
    %cst_139 = arith.constant 1.000000e+00 : f32
    %502 = vector.broadcast %cst_139 : f32 to vector<8x128xf32>
    %503 = arith.addf %502, %501 : vector<8x128xf32>
    %504 = arith.divf %502, %503 : vector<8x128xf32>
    %505 = vector.extract_strided_slice %485 {offsets = [0, 256], sizes = [8, 128], strides = [1, 1]} : vector<8x384xf32> to vector<8x128xf32>
    %506 = vector.extract_strided_slice %488 {offsets = [0, 256], sizes = [8, 128], strides = [1, 1]} : vector<8x384xf32> to vector<8x128xf32>
    %507 = vector.broadcast %35 : vector<1x128xf32> to vector<8x128xf32>
    %508 = arith.addf %506, %507 : vector<8x128xf32>
    %509 = arith.mulf %496, %508 : vector<8x128xf32>
    %510 = arith.addf %505, %509 : vector<8x128xf32>
    %511 = math.tanh %510 : vector<8x128xf32>
    %cst_140 = arith.constant 1.000000e+00 : f32
    %512 = vector.broadcast %cst_140 : f32 to vector<8x128xf32>
    %513 = arith.subf %512, %504 : vector<8x128xf32>
    %514 = arith.mulf %513, %511 : vector<8x128xf32>
    %515 = arith.mulf %504, %479 : vector<8x128xf32>
    %516 = arith.addf %514, %515 : vector<8x128xf32>
    %517 = arith.index_cast %483 : i32 to index
    %c0_141 = arith.constant 0 : index
    %518 = vector.load %arg17[%517, %c0_141] : memref<112x128xf32, #tpu.memory_space<vmem>>, vector<8x128xf32>
    tpu.vector_store %arg17[%517, %c0_141], %516 {strides = array<i32>} : memref<112x128xf32, #tpu.memory_space<vmem>>, vector<8x128xf32>,
    %c13_i32 = arith.constant 13 : i32
    %c8_i32_142 = arith.constant 8 : i32
    %519 = arith.muli %c13_i32, %c8_i32_142 : i32
    %520 = tpu.assume_multiple %519, 8 : i32
    %521 = arith.index_cast %520 : i32 to index
    %c0_143 = arith.constant 0 : index
    %522 = vector.load %arg16[%521, %c0_143] : memref<112x384xf32, #tpu.memory_space<vmem>>, vector<8x384xf32>
    %523 = arith.truncf %516 : vector<8x128xf32> to vector<8x128xbf16>
    %c0_144 = arith.constant 0 : index
    %c0_145 = arith.constant 0 : index
    %524 = vector.load %arg6[%c0_144, %c0_145] : memref<128x384xbf16, #tpu.memory_space<vmem>>, vector<128x384xbf16>
    %cst_146 = arith.constant dense<0.000000e+00> : vector<8x384xf32>
    %525 = tpu.matmul %523, %524, %cst_146 {dimension_numbers = #tpu.dot_dimension_numbers<[1], [0], [0], [1], [0, 0, 1, 1], [], []>} : vector<8x128xbf16>, vector<128x384xbf16>, vector<8x384xf32> -> vector<8x384xf32>
    %526 = vector.extract_strided_slice %522 {offsets = [0, 0], sizes = [8, 128], strides = [1, 1]} : vector<8x384xf32> to vector<8x128xf32>
    %527 = vector.extract_strided_slice %525 {offsets = [0, 0], sizes = [8, 128], strides = [1, 1]} : vector<8x384xf32> to vector<8x128xf32>
    %528 = arith.addf %526, %527 : vector<8x128xf32>
    %529 = arith.negf %528 : vector<8x128xf32>
    %530 = math.exp %529 : vector<8x128xf32>
    %cst_147 = arith.constant 1.000000e+00 : f32
    %531 = vector.broadcast %cst_147 : f32 to vector<8x128xf32>
    %532 = arith.addf %531, %530 : vector<8x128xf32>
    %533 = arith.divf %531, %532 : vector<8x128xf32>
    %534 = vector.extract_strided_slice %522 {offsets = [0, 128], sizes = [8, 128], strides = [1, 1]} : vector<8x384xf32> to vector<8x128xf32>
    %535 = vector.extract_strided_slice %525 {offsets = [0, 128], sizes = [8, 128], strides = [1, 1]} : vector<8x384xf32> to vector<8x128xf32>
    %536 = arith.addf %534, %535 : vector<8x128xf32>
    %537 = arith.negf %536 : vector<8x128xf32>
    %538 = math.exp %537 : vector<8x128xf32>
    %cst_148 = arith.constant 1.000000e+00 : f32
    %539 = vector.broadcast %cst_148 : f32 to vector<8x128xf32>
    %540 = arith.addf %539, %538 : vector<8x128xf32>
    %541 = arith.divf %539, %540 : vector<8x128xf32>
    %542 = vector.extract_strided_slice %522 {offsets = [0, 256], sizes = [8, 128], strides = [1, 1]} : vector<8x384xf32> to vector<8x128xf32>
    %543 = vector.extract_strided_slice %525 {offsets = [0, 256], sizes = [8, 128], strides = [1, 1]} : vector<8x384xf32> to vector<8x128xf32>
    %544 = vector.broadcast %35 : vector<1x128xf32> to vector<8x128xf32>
    %545 = arith.addf %543, %544 : vector<8x128xf32>
    %546 = arith.mulf %533, %545 : vector<8x128xf32>
    %547 = arith.addf %542, %546 : vector<8x128xf32>
    %548 = math.tanh %547 : vector<8x128xf32>
    %cst_149 = arith.constant 1.000000e+00 : f32
    %549 = vector.broadcast %cst_149 : f32 to vector<8x128xf32>
    %550 = arith.subf %549, %541 : vector<8x128xf32>
    %551 = arith.mulf %550, %548 : vector<8x128xf32>
    %552 = arith.mulf %541, %516 : vector<8x128xf32>
    %553 = arith.addf %551, %552 : vector<8x128xf32>
    %554 = arith.index_cast %520 : i32 to index
    %c0_150 = arith.constant 0 : index
    %555 = vector.load %arg17[%554, %c0_150] : memref<112x128xf32, #tpu.memory_space<vmem>>, vector<8x128xf32>
    tpu.vector_store %arg17[%554, %c0_150], %553 {strides = array<i32>} : memref<112x128xf32, #tpu.memory_space<vmem>>, vector<8x128xf32>,
    %c14_i32 = arith.constant 14 : i32
    %c0_151 = arith.constant 0 : index
    %c0_152 = arith.constant 0 : index
    %556 = vector.load %arg17[%c0_151, %c0_152] : memref<112x128xf32, #tpu.memory_space<vmem>>, vector<112x128xf32>
    %557 = arith.truncf %556 : vector<112x128xf32> to vector<112x128xbf16>
    %c0_153 = arith.constant 0 : index
    %c0_154 = arith.constant 0 : index
    %558 = vector.load %arg9[%c0_153, %c0_154] : memref<128x384xbf16, #tpu.memory_space<vmem>>, vector<128x384xbf16>
    %cst_155 = arith.constant dense<0.000000e+00> : vector<112x384xf32>
    %559 = tpu.matmul %557, %558, %cst_155 {dimension_numbers = #tpu.dot_dimension_numbers<[1], [0], [0], [1], [0, 0, 1, 1], [], []>} : vector<112x128xbf16>, vector<128x384xbf16>, vector<112x384xf32> -> vector<112x384xf32>
    %c0_156 = arith.constant 0 : index
    %c0_157 = arith.constant 0 : index
    %560 = vector.load %arg11[%c0_156, %c0_157] : memref<1x384xf32, #tpu.memory_space<vmem>>, vector<1x384xf32>
    %561 = vector.broadcast %560 : vector<1x384xf32> to vector<112x384xf32>
    %562 = arith.addf %559, %561 : vector<112x384xf32>
    %c0_158 = arith.constant 0 : index
    %c0_159 = arith.constant 0 : index
    %563 = vector.load %arg16[%c0_158, %c0_159] : memref<112x384xf32, #tpu.memory_space<vmem>>, vector<112x384xf32>
    tpu.vector_store %arg16[%c0_158, %c0_159], %562 {strides = array<i32>} : memref<112x384xf32, #tpu.memory_space<vmem>>, vector<112x384xf32>,
    %c0_160 = arith.constant 0 : index
    %c0_161 = arith.constant 0 : index
    %564 = vector.load %arg12[%c0_160, %c0_161] : memref<1x128xf32, #tpu.memory_space<vmem>>, vector<1x128xf32>
    %c1 = arith.constant 1 : index
    %c0_162 = arith.constant 0 : index
    %c0_163 = arith.constant 0 : index
    %565 = vector.load %arg4[%c1, %c0_162, %c0_163] : memref<2x8x128xf32, #tpu.memory_space<vmem>>, vector<1x8x128xf32>
    %566 = vector.shape_cast %565 : vector<1x8x128xf32> to vector<8x128xf32>
    %c0_i32_164 = arith.constant 0 : i32
    %c8_i32_165 = arith.constant 8 : i32
    %567 = arith.muli %c0_i32_164, %c8_i32_165 : i32
    %568 = tpu.assume_multiple %567, 8 : i32
    %569 = arith.index_cast %568 : i32 to index
    %c0_166 = arith.constant 0 : index
    %570 = vector.load %arg16[%569, %c0_166] : memref<112x384xf32, #tpu.memory_space<vmem>>, vector<8x384xf32>
    %571 = arith.truncf %566 : vector<8x128xf32> to vector<8x128xbf16>
    %c0_167 = arith.constant 0 : index
    %c0_168 = arith.constant 0 : index
    %572 = vector.load %arg10[%c0_167, %c0_168] : memref<128x384xbf16, #tpu.memory_space<vmem>>, vector<128x384xbf16>
    %cst_169 = arith.constant dense<0.000000e+00> : vector<8x384xf32>
    %573 = tpu.matmul %571, %572, %cst_169 {dimension_numbers = #tpu.dot_dimension_numbers<[1], [0], [0], [1], [0, 0, 1, 1], [], []>} : vector<8x128xbf16>, vector<128x384xbf16>, vector<8x384xf32> -> vector<8x384xf32>
    %574 = vector.extract_strided_slice %570 {offsets = [0, 0], sizes = [8, 128], strides = [1, 1]} : vector<8x384xf32> to vector<8x128xf32>
    %575 = vector.extract_strided_slice %573 {offsets = [0, 0], sizes = [8, 128], strides = [1, 1]} : vector<8x384xf32> to vector<8x128xf32>
    %576 = arith.addf %574, %575 : vector<8x128xf32>
    %577 = arith.negf %576 : vector<8x128xf32>
    %578 = math.exp %577 : vector<8x128xf32>
    %cst_170 = arith.constant 1.000000e+00 : f32
    %579 = vector.broadcast %cst_170 : f32 to vector<8x128xf32>
    %580 = arith.addf %579, %578 : vector<8x128xf32>
    %581 = arith.divf %579, %580 : vector<8x128xf32>
    %582 = vector.extract_strided_slice %570 {offsets = [0, 128], sizes = [8, 128], strides = [1, 1]} : vector<8x384xf32> to vector<8x128xf32>
    %583 = vector.extract_strided_slice %573 {offsets = [0, 128], sizes = [8, 128], strides = [1, 1]} : vector<8x384xf32> to vector<8x128xf32>
    %584 = arith.addf %582, %583 : vector<8x128xf32>
    %585 = arith.negf %584 : vector<8x128xf32>
    %586 = math.exp %585 : vector<8x128xf32>
    %cst_171 = arith.constant 1.000000e+00 : f32
    %587 = vector.broadcast %cst_171 : f32 to vector<8x128xf32>
    %588 = arith.addf %587, %586 : vector<8x128xf32>
    %589 = arith.divf %587, %588 : vector<8x128xf32>
    %590 = vector.extract_strided_slice %570 {offsets = [0, 256], sizes = [8, 128], strides = [1, 1]} : vector<8x384xf32> to vector<8x128xf32>
    %591 = vector.extract_strided_slice %573 {offsets = [0, 256], sizes = [8, 128], strides = [1, 1]} : vector<8x384xf32> to vector<8x128xf32>
    %592 = vector.broadcast %564 : vector<1x128xf32> to vector<8x128xf32>
    %593 = arith.addf %591, %592 : vector<8x128xf32>
    %594 = arith.mulf %581, %593 : vector<8x128xf32>
    %595 = arith.addf %590, %594 : vector<8x128xf32>
    %596 = math.tanh %595 : vector<8x128xf32>
    %cst_172 = arith.constant 1.000000e+00 : f32
    %597 = vector.broadcast %cst_172 : f32 to vector<8x128xf32>
    %598 = arith.subf %597, %589 : vector<8x128xf32>
    %599 = arith.mulf %598, %596 : vector<8x128xf32>
    %600 = arith.mulf %589, %566 : vector<8x128xf32>
    %601 = arith.addf %599, %600 : vector<8x128xf32>
    %c1_i32_173 = arith.constant 1 : i32
    %c8_i32_174 = arith.constant 8 : i32
    %602 = arith.muli %c1_i32_173, %c8_i32_174 : i32
    %603 = tpu.assume_multiple %602, 8 : i32
    %604 = arith.index_cast %603 : i32 to index
    %c0_175 = arith.constant 0 : index
    %605 = vector.load %arg16[%604, %c0_175] : memref<112x384xf32, #tpu.memory_space<vmem>>, vector<8x384xf32>
    %606 = arith.truncf %601 : vector<8x128xf32> to vector<8x128xbf16>
    %c0_176 = arith.constant 0 : index
    %c0_177 = arith.constant 0 : index
    %607 = vector.load %arg10[%c0_176, %c0_177] : memref<128x384xbf16, #tpu.memory_space<vmem>>, vector<128x384xbf16>
    %cst_178 = arith.constant dense<0.000000e+00> : vector<8x384xf32>
    %608 = tpu.matmul %606, %607, %cst_178 {dimension_numbers = #tpu.dot_dimension_numbers<[1], [0], [0], [1], [0, 0, 1, 1], [], []>} : vector<8x128xbf16>, vector<128x384xbf16>, vector<8x384xf32> -> vector<8x384xf32>
    %609 = vector.extract_strided_slice %605 {offsets = [0, 0], sizes = [8, 128], strides = [1, 1]} : vector<8x384xf32> to vector<8x128xf32>
    %610 = vector.extract_strided_slice %608 {offsets = [0, 0], sizes = [8, 128], strides = [1, 1]} : vector<8x384xf32> to vector<8x128xf32>
    %611 = arith.addf %609, %610 : vector<8x128xf32>
    %612 = arith.negf %611 : vector<8x128xf32>
    %613 = math.exp %612 : vector<8x128xf32>
    %cst_179 = arith.constant 1.000000e+00 : f32
    %614 = vector.broadcast %cst_179 : f32 to vector<8x128xf32>
    %615 = arith.addf %614, %613 : vector<8x128xf32>
    %616 = arith.divf %614, %615 : vector<8x128xf32>
    %617 = vector.extract_strided_slice %605 {offsets = [0, 128], sizes = [8, 128], strides = [1, 1]} : vector<8x384xf32> to vector<8x128xf32>
    %618 = vector.extract_strided_slice %608 {offsets = [0, 128], sizes = [8, 128], strides = [1, 1]} : vector<8x384xf32> to vector<8x128xf32>
    %619 = arith.addf %617, %618 : vector<8x128xf32>
    %620 = arith.negf %619 : vector<8x128xf32>
    %621 = math.exp %620 : vector<8x128xf32>
    %cst_180 = arith.constant 1.000000e+00 : f32
    %622 = vector.broadcast %cst_180 : f32 to vector<8x128xf32>
    %623 = arith.addf %622, %621 : vector<8x128xf32>
    %624 = arith.divf %622, %623 : vector<8x128xf32>
    %625 = vector.extract_strided_slice %605 {offsets = [0, 256], sizes = [8, 128], strides = [1, 1]} : vector<8x384xf32> to vector<8x128xf32>
    %626 = vector.extract_strided_slice %608 {offsets = [0, 256], sizes = [8, 128], strides = [1, 1]} : vector<8x384xf32> to vector<8x128xf32>
    %627 = vector.broadcast %564 : vector<1x128xf32> to vector<8x128xf32>
    %628 = arith.addf %626, %627 : vector<8x128xf32>
    %629 = arith.mulf %616, %628 : vector<8x128xf32>
    %630 = arith.addf %625, %629 : vector<8x128xf32>
    %631 = math.tanh %630 : vector<8x128xf32>
    %cst_181 = arith.constant 1.000000e+00 : f32
    %632 = vector.broadcast %cst_181 : f32 to vector<8x128xf32>
    %633 = arith.subf %632, %624 : vector<8x128xf32>
    %634 = arith.mulf %633, %631 : vector<8x128xf32>
    %635 = arith.mulf %624, %601 : vector<8x128xf32>
    %636 = arith.addf %634, %635 : vector<8x128xf32>
    %c2_i32_182 = arith.constant 2 : i32
    %c8_i32_183 = arith.constant 8 : i32
    %637 = arith.muli %c2_i32_182, %c8_i32_183 : i32
    %638 = tpu.assume_multiple %637, 8 : i32
    %639 = arith.index_cast %638 : i32 to index
    %c0_184 = arith.constant 0 : index
    %640 = vector.load %arg16[%639, %c0_184] : memref<112x384xf32, #tpu.memory_space<vmem>>, vector<8x384xf32>
    %641 = arith.truncf %636 : vector<8x128xf32> to vector<8x128xbf16>
    %c0_185 = arith.constant 0 : index
    %c0_186 = arith.constant 0 : index
    %642 = vector.load %arg10[%c0_185, %c0_186] : memref<128x384xbf16, #tpu.memory_space<vmem>>, vector<128x384xbf16>
    %cst_187 = arith.constant dense<0.000000e+00> : vector<8x384xf32>
    %643 = tpu.matmul %641, %642, %cst_187 {dimension_numbers = #tpu.dot_dimension_numbers<[1], [0], [0], [1], [0, 0, 1, 1], [], []>} : vector<8x128xbf16>, vector<128x384xbf16>, vector<8x384xf32> -> vector<8x384xf32>
    %644 = vector.extract_strided_slice %640 {offsets = [0, 0], sizes = [8, 128], strides = [1, 1]} : vector<8x384xf32> to vector<8x128xf32>
    %645 = vector.extract_strided_slice %643 {offsets = [0, 0], sizes = [8, 128], strides = [1, 1]} : vector<8x384xf32> to vector<8x128xf32>
    %646 = arith.addf %644, %645 : vector<8x128xf32>
    %647 = arith.negf %646 : vector<8x128xf32>
    %648 = math.exp %647 : vector<8x128xf32>
    %cst_188 = arith.constant 1.000000e+00 : f32
    %649 = vector.broadcast %cst_188 : f32 to vector<8x128xf32>
    %650 = arith.addf %649, %648 : vector<8x128xf32>
    %651 = arith.divf %649, %650 : vector<8x128xf32>
    %652 = vector.extract_strided_slice %640 {offsets = [0, 128], sizes = [8, 128], strides = [1, 1]} : vector<8x384xf32> to vector<8x128xf32>
    %653 = vector.extract_strided_slice %643 {offsets = [0, 128], sizes = [8, 128], strides = [1, 1]} : vector<8x384xf32> to vector<8x128xf32>
    %654 = arith.addf %652, %653 : vector<8x128xf32>
    %655 = arith.negf %654 : vector<8x128xf32>
    %656 = math.exp %655 : vector<8x128xf32>
    %cst_189 = arith.constant 1.000000e+00 : f32
    %657 = vector.broadcast %cst_189 : f32 to vector<8x128xf32>
    %658 = arith.addf %657, %656 : vector<8x128xf32>
    %659 = arith.divf %657, %658 : vector<8x128xf32>
    %660 = vector.extract_strided_slice %640 {offsets = [0, 256], sizes = [8, 128], strides = [1, 1]} : vector<8x384xf32> to vector<8x128xf32>
    %661 = vector.extract_strided_slice %643 {offsets = [0, 256], sizes = [8, 128], strides = [1, 1]} : vector<8x384xf32> to vector<8x128xf32>
    %662 = vector.broadcast %564 : vector<1x128xf32> to vector<8x128xf32>
    %663 = arith.addf %661, %662 : vector<8x128xf32>
    %664 = arith.mulf %651, %663 : vector<8x128xf32>
    %665 = arith.addf %660, %664 : vector<8x128xf32>
    %666 = math.tanh %665 : vector<8x128xf32>
    %cst_190 = arith.constant 1.000000e+00 : f32
    %667 = vector.broadcast %cst_190 : f32 to vector<8x128xf32>
    %668 = arith.subf %667, %659 : vector<8x128xf32>
    %669 = arith.mulf %668, %666 : vector<8x128xf32>
    %670 = arith.mulf %659, %636 : vector<8x128xf32>
    %671 = arith.addf %669, %670 : vector<8x128xf32>
    %c3_i32_191 = arith.constant 3 : i32
    %c8_i32_192 = arith.constant 8 : i32
    %672 = arith.muli %c3_i32_191, %c8_i32_192 : i32
    %673 = tpu.assume_multiple %672, 8 : i32
    %674 = arith.index_cast %673 : i32 to index
    %c0_193 = arith.constant 0 : index
    %675 = vector.load %arg16[%674, %c0_193] : memref<112x384xf32, #tpu.memory_space<vmem>>, vector<8x384xf32>
    %676 = arith.truncf %671 : vector<8x128xf32> to vector<8x128xbf16>
    %c0_194 = arith.constant 0 : index
    %c0_195 = arith.constant 0 : index
    %677 = vector.load %arg10[%c0_194, %c0_195] : memref<128x384xbf16, #tpu.memory_space<vmem>>, vector<128x384xbf16>
    %cst_196 = arith.constant dense<0.000000e+00> : vector<8x384xf32>
    %678 = tpu.matmul %676, %677, %cst_196 {dimension_numbers = #tpu.dot_dimension_numbers<[1], [0], [0], [1], [0, 0, 1, 1], [], []>} : vector<8x128xbf16>, vector<128x384xbf16>, vector<8x384xf32> -> vector<8x384xf32>
    %679 = vector.extract_strided_slice %675 {offsets = [0, 0], sizes = [8, 128], strides = [1, 1]} : vector<8x384xf32> to vector<8x128xf32>
    %680 = vector.extract_strided_slice %678 {offsets = [0, 0], sizes = [8, 128], strides = [1, 1]} : vector<8x384xf32> to vector<8x128xf32>
    %681 = arith.addf %679, %680 : vector<8x128xf32>
    %682 = arith.negf %681 : vector<8x128xf32>
    %683 = math.exp %682 : vector<8x128xf32>
    %cst_197 = arith.constant 1.000000e+00 : f32
    %684 = vector.broadcast %cst_197 : f32 to vector<8x128xf32>
    %685 = arith.addf %684, %683 : vector<8x128xf32>
    %686 = arith.divf %684, %685 : vector<8x128xf32>
    %687 = vector.extract_strided_slice %675 {offsets = [0, 128], sizes = [8, 128], strides = [1, 1]} : vector<8x384xf32> to vector<8x128xf32>
    %688 = vector.extract_strided_slice %678 {offsets = [0, 128], sizes = [8, 128], strides = [1, 1]} : vector<8x384xf32> to vector<8x128xf32>
    %689 = arith.addf %687, %688 : vector<8x128xf32>
    %690 = arith.negf %689 : vector<8x128xf32>
    %691 = math.exp %690 : vector<8x128xf32>
    %cst_198 = arith.constant 1.000000e+00 : f32
    %692 = vector.broadcast %cst_198 : f32 to vector<8x128xf32>
    %693 = arith.addf %692, %691 : vector<8x128xf32>
    %694 = arith.divf %692, %693 : vector<8x128xf32>
    %695 = vector.extract_strided_slice %675 {offsets = [0, 256], sizes = [8, 128], strides = [1, 1]} : vector<8x384xf32> to vector<8x128xf32>
    %696 = vector.extract_strided_slice %678 {offsets = [0, 256], sizes = [8, 128], strides = [1, 1]} : vector<8x384xf32> to vector<8x128xf32>
    %697 = vector.broadcast %564 : vector<1x128xf32> to vector<8x128xf32>
    %698 = arith.addf %696, %697 : vector<8x128xf32>
    %699 = arith.mulf %686, %698 : vector<8x128xf32>
    %700 = arith.addf %695, %699 : vector<8x128xf32>
    %701 = math.tanh %700 : vector<8x128xf32>
    %cst_199 = arith.constant 1.000000e+00 : f32
    %702 = vector.broadcast %cst_199 : f32 to vector<8x128xf32>
    %703 = arith.subf %702, %694 : vector<8x128xf32>
    %704 = arith.mulf %703, %701 : vector<8x128xf32>
    %705 = arith.mulf %694, %671 : vector<8x128xf32>
    %706 = arith.addf %704, %705 : vector<8x128xf32>
    %c4_i32_200 = arith.constant 4 : i32
    %c8_i32_201 = arith.constant 8 : i32
    %707 = arith.muli %c4_i32_200, %c8_i32_201 : i32
    %708 = tpu.assume_multiple %707, 8 : i32
    %709 = arith.index_cast %708 : i32 to index
    %c0_202 = arith.constant 0 : index
    %710 = vector.load %arg16[%709, %c0_202] : memref<112x384xf32, #tpu.memory_space<vmem>>, vector<8x384xf32>
    %711 = arith.truncf %706 : vector<8x128xf32> to vector<8x128xbf16>
    %c0_203 = arith.constant 0 : index
    %c0_204 = arith.constant 0 : index
    %712 = vector.load %arg10[%c0_203, %c0_204] : memref<128x384xbf16, #tpu.memory_space<vmem>>, vector<128x384xbf16>
    %cst_205 = arith.constant dense<0.000000e+00> : vector<8x384xf32>
    %713 = tpu.matmul %711, %712, %cst_205 {dimension_numbers = #tpu.dot_dimension_numbers<[1], [0], [0], [1], [0, 0, 1, 1], [], []>} : vector<8x128xbf16>, vector<128x384xbf16>, vector<8x384xf32> -> vector<8x384xf32>
    %714 = vector.extract_strided_slice %710 {offsets = [0, 0], sizes = [8, 128], strides = [1, 1]} : vector<8x384xf32> to vector<8x128xf32>
    %715 = vector.extract_strided_slice %713 {offsets = [0, 0], sizes = [8, 128], strides = [1, 1]} : vector<8x384xf32> to vector<8x128xf32>
    %716 = arith.addf %714, %715 : vector<8x128xf32>
    %717 = arith.negf %716 : vector<8x128xf32>
    %718 = math.exp %717 : vector<8x128xf32>
    %cst_206 = arith.constant 1.000000e+00 : f32
    %719 = vector.broadcast %cst_206 : f32 to vector<8x128xf32>
    %720 = arith.addf %719, %718 : vector<8x128xf32>
    %721 = arith.divf %719, %720 : vector<8x128xf32>
    %722 = vector.extract_strided_slice %710 {offsets = [0, 128], sizes = [8, 128], strides = [1, 1]} : vector<8x384xf32> to vector<8x128xf32>
    %723 = vector.extract_strided_slice %713 {offsets = [0, 128], sizes = [8, 128], strides = [1, 1]} : vector<8x384xf32> to vector<8x128xf32>
    %724 = arith.addf %722, %723 : vector<8x128xf32>
    %725 = arith.negf %724 : vector<8x128xf32>
    %726 = math.exp %725 : vector<8x128xf32>
    %cst_207 = arith.constant 1.000000e+00 : f32
    %727 = vector.broadcast %cst_207 : f32 to vector<8x128xf32>
    %728 = arith.addf %727, %726 : vector<8x128xf32>
    %729 = arith.divf %727, %728 : vector<8x128xf32>
    %730 = vector.extract_strided_slice %710 {offsets = [0, 256], sizes = [8, 128], strides = [1, 1]} : vector<8x384xf32> to vector<8x128xf32>
    %731 = vector.extract_strided_slice %713 {offsets = [0, 256], sizes = [8, 128], strides = [1, 1]} : vector<8x384xf32> to vector<8x128xf32>
    %732 = vector.broadcast %564 : vector<1x128xf32> to vector<8x128xf32>
    %733 = arith.addf %731, %732 : vector<8x128xf32>
    %734 = arith.mulf %721, %733 : vector<8x128xf32>
    %735 = arith.addf %730, %734 : vector<8x128xf32>
    %736 = math.tanh %735 : vector<8x128xf32>
    %cst_208 = arith.constant 1.000000e+00 : f32
    %737 = vector.broadcast %cst_208 : f32 to vector<8x128xf32>
    %738 = arith.subf %737, %729 : vector<8x128xf32>
    %739 = arith.mulf %738, %736 : vector<8x128xf32>
    %740 = arith.mulf %729, %706 : vector<8x128xf32>
    %741 = arith.addf %739, %740 : vector<8x128xf32>
    %c5_i32_209 = arith.constant 5 : i32
    %c8_i32_210 = arith.constant 8 : i32
    %742 = arith.muli %c5_i32_209, %c8_i32_210 : i32
    %743 = tpu.assume_multiple %742, 8 : i32
    %744 = arith.index_cast %743 : i32 to index
    %c0_211 = arith.constant 0 : index
    %745 = vector.load %arg16[%744, %c0_211] : memref<112x384xf32, #tpu.memory_space<vmem>>, vector<8x384xf32>
    %746 = arith.truncf %741 : vector<8x128xf32> to vector<8x128xbf16>
    %c0_212 = arith.constant 0 : index
    %c0_213 = arith.constant 0 : index
    %747 = vector.load %arg10[%c0_212, %c0_213] : memref<128x384xbf16, #tpu.memory_space<vmem>>, vector<128x384xbf16>
    %cst_214 = arith.constant dense<0.000000e+00> : vector<8x384xf32>
    %748 = tpu.matmul %746, %747, %cst_214 {dimension_numbers = #tpu.dot_dimension_numbers<[1], [0], [0], [1], [0, 0, 1, 1], [], []>} : vector<8x128xbf16>, vector<128x384xbf16>, vector<8x384xf32> -> vector<8x384xf32>
    %749 = vector.extract_strided_slice %745 {offsets = [0, 0], sizes = [8, 128], strides = [1, 1]} : vector<8x384xf32> to vector<8x128xf32>
    %750 = vector.extract_strided_slice %748 {offsets = [0, 0], sizes = [8, 128], strides = [1, 1]} : vector<8x384xf32> to vector<8x128xf32>
    %751 = arith.addf %749, %750 : vector<8x128xf32>
    %752 = arith.negf %751 : vector<8x128xf32>
    %753 = math.exp %752 : vector<8x128xf32>
    %cst_215 = arith.constant 1.000000e+00 : f32
    %754 = vector.broadcast %cst_215 : f32 to vector<8x128xf32>
    %755 = arith.addf %754, %753 : vector<8x128xf32>
    %756 = arith.divf %754, %755 : vector<8x128xf32>
    %757 = vector.extract_strided_slice %745 {offsets = [0, 128], sizes = [8, 128], strides = [1, 1]} : vector<8x384xf32> to vector<8x128xf32>
    %758 = vector.extract_strided_slice %748 {offsets = [0, 128], sizes = [8, 128], strides = [1, 1]} : vector<8x384xf32> to vector<8x128xf32>
    %759 = arith.addf %757, %758 : vector<8x128xf32>
    %760 = arith.negf %759 : vector<8x128xf32>
    %761 = math.exp %760 : vector<8x128xf32>
    %cst_216 = arith.constant 1.000000e+00 : f32
    %762 = vector.broadcast %cst_216 : f32 to vector<8x128xf32>
    %763 = arith.addf %762, %761 : vector<8x128xf32>
    %764 = arith.divf %762, %763 : vector<8x128xf32>
    %765 = vector.extract_strided_slice %745 {offsets = [0, 256], sizes = [8, 128], strides = [1, 1]} : vector<8x384xf32> to vector<8x128xf32>
    %766 = vector.extract_strided_slice %748 {offsets = [0, 256], sizes = [8, 128], strides = [1, 1]} : vector<8x384xf32> to vector<8x128xf32>
    %767 = vector.broadcast %564 : vector<1x128xf32> to vector<8x128xf32>
    %768 = arith.addf %766, %767 : vector<8x128xf32>
    %769 = arith.mulf %756, %768 : vector<8x128xf32>
    %770 = arith.addf %765, %769 : vector<8x128xf32>
    %771 = math.tanh %770 : vector<8x128xf32>
    %cst_217 = arith.constant 1.000000e+00 : f32
    %772 = vector.broadcast %cst_217 : f32 to vector<8x128xf32>
    %773 = arith.subf %772, %764 : vector<8x128xf32>
    %774 = arith.mulf %773, %771 : vector<8x128xf32>
    %775 = arith.mulf %764, %741 : vector<8x128xf32>
    %776 = arith.addf %774, %775 : vector<8x128xf32>
    %c6_i32_218 = arith.constant 6 : i32
    %c8_i32_219 = arith.constant 8 : i32
    %777 = arith.muli %c6_i32_218, %c8_i32_219 : i32
    %778 = tpu.assume_multiple %777, 8 : i32
    %779 = arith.index_cast %778 : i32 to index
    %c0_220 = arith.constant 0 : index
    %780 = vector.load %arg16[%779, %c0_220] : memref<112x384xf32, #tpu.memory_space<vmem>>, vector<8x384xf32>
    %781 = arith.truncf %776 : vector<8x128xf32> to vector<8x128xbf16>
    %c0_221 = arith.constant 0 : index
    %c0_222 = arith.constant 0 : index
    %782 = vector.load %arg10[%c0_221, %c0_222] : memref<128x384xbf16, #tpu.memory_space<vmem>>, vector<128x384xbf16>
    %cst_223 = arith.constant dense<0.000000e+00> : vector<8x384xf32>
    %783 = tpu.matmul %781, %782, %cst_223 {dimension_numbers = #tpu.dot_dimension_numbers<[1], [0], [0], [1], [0, 0, 1, 1], [], []>} : vector<8x128xbf16>, vector<128x384xbf16>, vector<8x384xf32> -> vector<8x384xf32>
    %784 = vector.extract_strided_slice %780 {offsets = [0, 0], sizes = [8, 128], strides = [1, 1]} : vector<8x384xf32> to vector<8x128xf32>
    %785 = vector.extract_strided_slice %783 {offsets = [0, 0], sizes = [8, 128], strides = [1, 1]} : vector<8x384xf32> to vector<8x128xf32>
    %786 = arith.addf %784, %785 : vector<8x128xf32>
    %787 = arith.negf %786 : vector<8x128xf32>
    %788 = math.exp %787 : vector<8x128xf32>
    %cst_224 = arith.constant 1.000000e+00 : f32
    %789 = vector.broadcast %cst_224 : f32 to vector<8x128xf32>
    %790 = arith.addf %789, %788 : vector<8x128xf32>
    %791 = arith.divf %789, %790 : vector<8x128xf32>
    %792 = vector.extract_strided_slice %780 {offsets = [0, 128], sizes = [8, 128], strides = [1, 1]} : vector<8x384xf32> to vector<8x128xf32>
    %793 = vector.extract_strided_slice %783 {offsets = [0, 128], sizes = [8, 128], strides = [1, 1]} : vector<8x384xf32> to vector<8x128xf32>
    %794 = arith.addf %792, %793 : vector<8x128xf32>
    %795 = arith.negf %794 : vector<8x128xf32>
    %796 = math.exp %795 : vector<8x128xf32>
    %cst_225 = arith.constant 1.000000e+00 : f32
    %797 = vector.broadcast %cst_225 : f32 to vector<8x128xf32>
    %798 = arith.addf %797, %796 : vector<8x128xf32>
    %799 = arith.divf %797, %798 : vector<8x128xf32>
    %800 = vector.extract_strided_slice %780 {offsets = [0, 256], sizes = [8, 128], strides = [1, 1]} : vector<8x384xf32> to vector<8x128xf32>
    %801 = vector.extract_strided_slice %783 {offsets = [0, 256], sizes = [8, 128], strides = [1, 1]} : vector<8x384xf32> to vector<8x128xf32>
    %802 = vector.broadcast %564 : vector<1x128xf32> to vector<8x128xf32>
    %803 = arith.addf %801, %802 : vector<8x128xf32>
    %804 = arith.mulf %791, %803 : vector<8x128xf32>
    %805 = arith.addf %800, %804 : vector<8x128xf32>
    %806 = math.tanh %805 : vector<8x128xf32>
    %cst_226 = arith.constant 1.000000e+00 : f32
    %807 = vector.broadcast %cst_226 : f32 to vector<8x128xf32>
    %808 = arith.subf %807, %799 : vector<8x128xf32>
    %809 = arith.mulf %808, %806 : vector<8x128xf32>
    %810 = arith.mulf %799, %776 : vector<8x128xf32>
    %811 = arith.addf %809, %810 : vector<8x128xf32>
    %c7_i32_227 = arith.constant 7 : i32
    %c8_i32_228 = arith.constant 8 : i32
    %812 = arith.muli %c7_i32_227, %c8_i32_228 : i32
    %813 = tpu.assume_multiple %812, 8 : i32
    %814 = arith.index_cast %813 : i32 to index
    %c0_229 = arith.constant 0 : index
    %815 = vector.load %arg16[%814, %c0_229] : memref<112x384xf32, #tpu.memory_space<vmem>>, vector<8x384xf32>
    %816 = arith.truncf %811 : vector<8x128xf32> to vector<8x128xbf16>
    %c0_230 = arith.constant 0 : index
    %c0_231 = arith.constant 0 : index
    %817 = vector.load %arg10[%c0_230, %c0_231] : memref<128x384xbf16, #tpu.memory_space<vmem>>, vector<128x384xbf16>
    %cst_232 = arith.constant dense<0.000000e+00> : vector<8x384xf32>
    %818 = tpu.matmul %816, %817, %cst_232 {dimension_numbers = #tpu.dot_dimension_numbers<[1], [0], [0], [1], [0, 0, 1, 1], [], []>} : vector<8x128xbf16>, vector<128x384xbf16>, vector<8x384xf32> -> vector<8x384xf32>
    %819 = vector.extract_strided_slice %815 {offsets = [0, 0], sizes = [8, 128], strides = [1, 1]} : vector<8x384xf32> to vector<8x128xf32>
    %820 = vector.extract_strided_slice %818 {offsets = [0, 0], sizes = [8, 128], strides = [1, 1]} : vector<8x384xf32> to vector<8x128xf32>
    %821 = arith.addf %819, %820 : vector<8x128xf32>
    %822 = arith.negf %821 : vector<8x128xf32>
    %823 = math.exp %822 : vector<8x128xf32>
    %cst_233 = arith.constant 1.000000e+00 : f32
    %824 = vector.broadcast %cst_233 : f32 to vector<8x128xf32>
    %825 = arith.addf %824, %823 : vector<8x128xf32>
    %826 = arith.divf %824, %825 : vector<8x128xf32>
    %827 = vector.extract_strided_slice %815 {offsets = [0, 128], sizes = [8, 128], strides = [1, 1]} : vector<8x384xf32> to vector<8x128xf32>
    %828 = vector.extract_strided_slice %818 {offsets = [0, 128], sizes = [8, 128], strides = [1, 1]} : vector<8x384xf32> to vector<8x128xf32>
    %829 = arith.addf %827, %828 : vector<8x128xf32>
    %830 = arith.negf %829 : vector<8x128xf32>
    %831 = math.exp %830 : vector<8x128xf32>
    %cst_234 = arith.constant 1.000000e+00 : f32
    %832 = vector.broadcast %cst_234 : f32 to vector<8x128xf32>
    %833 = arith.addf %832, %831 : vector<8x128xf32>
    %834 = arith.divf %832, %833 : vector<8x128xf32>
    %835 = vector.extract_strided_slice %815 {offsets = [0, 256], sizes = [8, 128], strides = [1, 1]} : vector<8x384xf32> to vector<8x128xf32>
    %836 = vector.extract_strided_slice %818 {offsets = [0, 256], sizes = [8, 128], strides = [1, 1]} : vector<8x384xf32> to vector<8x128xf32>
    %837 = vector.broadcast %564 : vector<1x128xf32> to vector<8x128xf32>
    %838 = arith.addf %836, %837 : vector<8x128xf32>
    %839 = arith.mulf %826, %838 : vector<8x128xf32>
    %840 = arith.addf %835, %839 : vector<8x128xf32>
    %841 = math.tanh %840 : vector<8x128xf32>
    %cst_235 = arith.constant 1.000000e+00 : f32
    %842 = vector.broadcast %cst_235 : f32 to vector<8x128xf32>
    %843 = arith.subf %842, %834 : vector<8x128xf32>
    %844 = arith.mulf %843, %841 : vector<8x128xf32>
    %845 = arith.mulf %834, %811 : vector<8x128xf32>
    %846 = arith.addf %844, %845 : vector<8x128xf32>
    %c8_i32_236 = arith.constant 8 : i32
    %c8_i32_237 = arith.constant 8 : i32
    %847 = arith.muli %c8_i32_236, %c8_i32_237 : i32
    %848 = tpu.assume_multiple %847, 8 : i32
    %849 = arith.index_cast %848 : i32 to index
    %c0_238 = arith.constant 0 : index
    %850 = vector.load %arg16[%849, %c0_238] : memref<112x384xf32, #tpu.memory_space<vmem>>, vector<8x384xf32>
    %851 = arith.truncf %846 : vector<8x128xf32> to vector<8x128xbf16>
    %c0_239 = arith.constant 0 : index
    %c0_240 = arith.constant 0 : index
    %852 = vector.load %arg10[%c0_239, %c0_240] : memref<128x384xbf16, #tpu.memory_space<vmem>>, vector<128x384xbf16>
    %cst_241 = arith.constant dense<0.000000e+00> : vector<8x384xf32>
    %853 = tpu.matmul %851, %852, %cst_241 {dimension_numbers = #tpu.dot_dimension_numbers<[1], [0], [0], [1], [0, 0, 1, 1], [], []>} : vector<8x128xbf16>, vector<128x384xbf16>, vector<8x384xf32> -> vector<8x384xf32>
    %854 = vector.extract_strided_slice %850 {offsets = [0, 0], sizes = [8, 128], strides = [1, 1]} : vector<8x384xf32> to vector<8x128xf32>
    %855 = vector.extract_strided_slice %853 {offsets = [0, 0], sizes = [8, 128], strides = [1, 1]} : vector<8x384xf32> to vector<8x128xf32>
    %856 = arith.addf %854, %855 : vector<8x128xf32>
    %857 = arith.negf %856 : vector<8x128xf32>
    %858 = math.exp %857 : vector<8x128xf32>
    %cst_242 = arith.constant 1.000000e+00 : f32
    %859 = vector.broadcast %cst_242 : f32 to vector<8x128xf32>
    %860 = arith.addf %859, %858 : vector<8x128xf32>
    %861 = arith.divf %859, %860 : vector<8x128xf32>
    %862 = vector.extract_strided_slice %850 {offsets = [0, 128], sizes = [8, 128], strides = [1, 1]} : vector<8x384xf32> to vector<8x128xf32>
    %863 = vector.extract_strided_slice %853 {offsets = [0, 128], sizes = [8, 128], strides = [1, 1]} : vector<8x384xf32> to vector<8x128xf32>
    %864 = arith.addf %862, %863 : vector<8x128xf32>
    %865 = arith.negf %864 : vector<8x128xf32>
    %866 = math.exp %865 : vector<8x128xf32>
    %cst_243 = arith.constant 1.000000e+00 : f32
    %867 = vector.broadcast %cst_243 : f32 to vector<8x128xf32>
    %868 = arith.addf %867, %866 : vector<8x128xf32>
    %869 = arith.divf %867, %868 : vector<8x128xf32>
    %870 = vector.extract_strided_slice %850 {offsets = [0, 256], sizes = [8, 128], strides = [1, 1]} : vector<8x384xf32> to vector<8x128xf32>
    %871 = vector.extract_strided_slice %853 {offsets = [0, 256], sizes = [8, 128], strides = [1, 1]} : vector<8x384xf32> to vector<8x128xf32>
    %872 = vector.broadcast %564 : vector<1x128xf32> to vector<8x128xf32>
    %873 = arith.addf %871, %872 : vector<8x128xf32>
    %874 = arith.mulf %861, %873 : vector<8x128xf32>
    %875 = arith.addf %870, %874 : vector<8x128xf32>
    %876 = math.tanh %875 : vector<8x128xf32>
    %cst_244 = arith.constant 1.000000e+00 : f32
    %877 = vector.broadcast %cst_244 : f32 to vector<8x128xf32>
    %878 = arith.subf %877, %869 : vector<8x128xf32>
    %879 = arith.mulf %878, %876 : vector<8x128xf32>
    %880 = arith.mulf %869, %846 : vector<8x128xf32>
    %881 = arith.addf %879, %880 : vector<8x128xf32>
    %c9_i32_245 = arith.constant 9 : i32
    %c8_i32_246 = arith.constant 8 : i32
    %882 = arith.muli %c9_i32_245, %c8_i32_246 : i32
    %883 = tpu.assume_multiple %882, 8 : i32
    %884 = arith.index_cast %883 : i32 to index
    %c0_247 = arith.constant 0 : index
    %885 = vector.load %arg16[%884, %c0_247] : memref<112x384xf32, #tpu.memory_space<vmem>>, vector<8x384xf32>
    %886 = arith.truncf %881 : vector<8x128xf32> to vector<8x128xbf16>
    %c0_248 = arith.constant 0 : index
    %c0_249 = arith.constant 0 : index
    %887 = vector.load %arg10[%c0_248, %c0_249] : memref<128x384xbf16, #tpu.memory_space<vmem>>, vector<128x384xbf16>
    %cst_250 = arith.constant dense<0.000000e+00> : vector<8x384xf32>
    %888 = tpu.matmul %886, %887, %cst_250 {dimension_numbers = #tpu.dot_dimension_numbers<[1], [0], [0], [1], [0, 0, 1, 1], [], []>} : vector<8x128xbf16>, vector<128x384xbf16>, vector<8x384xf32> -> vector<8x384xf32>
    %889 = vector.extract_strided_slice %885 {offsets = [0, 0], sizes = [8, 128], strides = [1, 1]} : vector<8x384xf32> to vector<8x128xf32>
    %890 = vector.extract_strided_slice %888 {offsets = [0, 0], sizes = [8, 128], strides = [1, 1]} : vector<8x384xf32> to vector<8x128xf32>
    %891 = arith.addf %889, %890 : vector<8x128xf32>
    %892 = arith.negf %891 : vector<8x128xf32>
    %893 = math.exp %892 : vector<8x128xf32>
    %cst_251 = arith.constant 1.000000e+00 : f32
    %894 = vector.broadcast %cst_251 : f32 to vector<8x128xf32>
    %895 = arith.addf %894, %893 : vector<8x128xf32>
    %896 = arith.divf %894, %895 : vector<8x128xf32>
    %897 = vector.extract_strided_slice %885 {offsets = [0, 128], sizes = [8, 128], strides = [1, 1]} : vector<8x384xf32> to vector<8x128xf32>
    %898 = vector.extract_strided_slice %888 {offsets = [0, 128], sizes = [8, 128], strides = [1, 1]} : vector<8x384xf32> to vector<8x128xf32>
    %899 = arith.addf %897, %898 : vector<8x128xf32>
    %900 = arith.negf %899 : vector<8x128xf32>
    %901 = math.exp %900 : vector<8x128xf32>
    %cst_252 = arith.constant 1.000000e+00 : f32
    %902 = vector.broadcast %cst_252 : f32 to vector<8x128xf32>
    %903 = arith.addf %902, %901 : vector<8x128xf32>
    %904 = arith.divf %902, %903 : vector<8x128xf32>
    %905 = vector.extract_strided_slice %885 {offsets = [0, 256], sizes = [8, 128], strides = [1, 1]} : vector<8x384xf32> to vector<8x128xf32>
    %906 = vector.extract_strided_slice %888 {offsets = [0, 256], sizes = [8, 128], strides = [1, 1]} : vector<8x384xf32> to vector<8x128xf32>
    %907 = vector.broadcast %564 : vector<1x128xf32> to vector<8x128xf32>
    %908 = arith.addf %906, %907 : vector<8x128xf32>
    %909 = arith.mulf %896, %908 : vector<8x128xf32>
    %910 = arith.addf %905, %909 : vector<8x128xf32>
    %911 = math.tanh %910 : vector<8x128xf32>
    %cst_253 = arith.constant 1.000000e+00 : f32
    %912 = vector.broadcast %cst_253 : f32 to vector<8x128xf32>
    %913 = arith.subf %912, %904 : vector<8x128xf32>
    %914 = arith.mulf %913, %911 : vector<8x128xf32>
    %915 = arith.mulf %904, %881 : vector<8x128xf32>
    %916 = arith.addf %914, %915 : vector<8x128xf32>
    %c10_i32_254 = arith.constant 10 : i32
    %c8_i32_255 = arith.constant 8 : i32
    %917 = arith.muli %c10_i32_254, %c8_i32_255 : i32
    %918 = tpu.assume_multiple %917, 8 : i32
    %919 = arith.index_cast %918 : i32 to index
    %c0_256 = arith.constant 0 : index
    %920 = vector.load %arg16[%919, %c0_256] : memref<112x384xf32, #tpu.memory_space<vmem>>, vector<8x384xf32>
    %921 = arith.truncf %916 : vector<8x128xf32> to vector<8x128xbf16>
    %c0_257 = arith.constant 0 : index
    %c0_258 = arith.constant 0 : index
    %922 = vector.load %arg10[%c0_257, %c0_258] : memref<128x384xbf16, #tpu.memory_space<vmem>>, vector<128x384xbf16>
    %cst_259 = arith.constant dense<0.000000e+00> : vector<8x384xf32>
    %923 = tpu.matmul %921, %922, %cst_259 {dimension_numbers = #tpu.dot_dimension_numbers<[1], [0], [0], [1], [0, 0, 1, 1], [], []>} : vector<8x128xbf16>, vector<128x384xbf16>, vector<8x384xf32> -> vector<8x384xf32>
    %924 = vector.extract_strided_slice %920 {offsets = [0, 0], sizes = [8, 128], strides = [1, 1]} : vector<8x384xf32> to vector<8x128xf32>
    %925 = vector.extract_strided_slice %923 {offsets = [0, 0], sizes = [8, 128], strides = [1, 1]} : vector<8x384xf32> to vector<8x128xf32>
    %926 = arith.addf %924, %925 : vector<8x128xf32>
    %927 = arith.negf %926 : vector<8x128xf32>
    %928 = math.exp %927 : vector<8x128xf32>
    %cst_260 = arith.constant 1.000000e+00 : f32
    %929 = vector.broadcast %cst_260 : f32 to vector<8x128xf32>
    %930 = arith.addf %929, %928 : vector<8x128xf32>
    %931 = arith.divf %929, %930 : vector<8x128xf32>
    %932 = vector.extract_strided_slice %920 {offsets = [0, 128], sizes = [8, 128], strides = [1, 1]} : vector<8x384xf32> to vector<8x128xf32>
    %933 = vector.extract_strided_slice %923 {offsets = [0, 128], sizes = [8, 128], strides = [1, 1]} : vector<8x384xf32> to vector<8x128xf32>
    %934 = arith.addf %932, %933 : vector<8x128xf32>
    %935 = arith.negf %934 : vector<8x128xf32>
    %936 = math.exp %935 : vector<8x128xf32>
    %cst_261 = arith.constant 1.000000e+00 : f32
    %937 = vector.broadcast %cst_261 : f32 to vector<8x128xf32>
    %938 = arith.addf %937, %936 : vector<8x128xf32>
    %939 = arith.divf %937, %938 : vector<8x128xf32>
    %940 = vector.extract_strided_slice %920 {offsets = [0, 256], sizes = [8, 128], strides = [1, 1]} : vector<8x384xf32> to vector<8x128xf32>
    %941 = vector.extract_strided_slice %923 {offsets = [0, 256], sizes = [8, 128], strides = [1, 1]} : vector<8x384xf32> to vector<8x128xf32>
    %942 = vector.broadcast %564 : vector<1x128xf32> to vector<8x128xf32>
    %943 = arith.addf %941, %942 : vector<8x128xf32>
    %944 = arith.mulf %931, %943 : vector<8x128xf32>
    %945 = arith.addf %940, %944 : vector<8x128xf32>
    %946 = math.tanh %945 : vector<8x128xf32>
    %cst_262 = arith.constant 1.000000e+00 : f32
    %947 = vector.broadcast %cst_262 : f32 to vector<8x128xf32>
    %948 = arith.subf %947, %939 : vector<8x128xf32>
    %949 = arith.mulf %948, %946 : vector<8x128xf32>
    %950 = arith.mulf %939, %916 : vector<8x128xf32>
    %951 = arith.addf %949, %950 : vector<8x128xf32>
    %c11_i32_263 = arith.constant 11 : i32
    %c8_i32_264 = arith.constant 8 : i32
    %952 = arith.muli %c11_i32_263, %c8_i32_264 : i32
    %953 = tpu.assume_multiple %952, 8 : i32
    %954 = arith.index_cast %953 : i32 to index
    %c0_265 = arith.constant 0 : index
    %955 = vector.load %arg16[%954, %c0_265] : memref<112x384xf32, #tpu.memory_space<vmem>>, vector<8x384xf32>
    %956 = arith.truncf %951 : vector<8x128xf32> to vector<8x128xbf16>
    %c0_266 = arith.constant 0 : index
    %c0_267 = arith.constant 0 : index
    %957 = vector.load %arg10[%c0_266, %c0_267] : memref<128x384xbf16, #tpu.memory_space<vmem>>, vector<128x384xbf16>
    %cst_268 = arith.constant dense<0.000000e+00> : vector<8x384xf32>
    %958 = tpu.matmul %956, %957, %cst_268 {dimension_numbers = #tpu.dot_dimension_numbers<[1], [0], [0], [1], [0, 0, 1, 1], [], []>} : vector<8x128xbf16>, vector<128x384xbf16>, vector<8x384xf32> -> vector<8x384xf32>
    %959 = vector.extract_strided_slice %955 {offsets = [0, 0], sizes = [8, 128], strides = [1, 1]} : vector<8x384xf32> to vector<8x128xf32>
    %960 = vector.extract_strided_slice %958 {offsets = [0, 0], sizes = [8, 128], strides = [1, 1]} : vector<8x384xf32> to vector<8x128xf32>
    %961 = arith.addf %959, %960 : vector<8x128xf32>
    %962 = arith.negf %961 : vector<8x128xf32>
    %963 = math.exp %962 : vector<8x128xf32>
    %cst_269 = arith.constant 1.000000e+00 : f32
    %964 = vector.broadcast %cst_269 : f32 to vector<8x128xf32>
    %965 = arith.addf %964, %963 : vector<8x128xf32>
    %966 = arith.divf %964, %965 : vector<8x128xf32>
    %967 = vector.extract_strided_slice %955 {offsets = [0, 128], sizes = [8, 128], strides = [1, 1]} : vector<8x384xf32> to vector<8x128xf32>
    %968 = vector.extract_strided_slice %958 {offsets = [0, 128], sizes = [8, 128], strides = [1, 1]} : vector<8x384xf32> to vector<8x128xf32>
    %969 = arith.addf %967, %968 : vector<8x128xf32>
    %970 = arith.negf %969 : vector<8x128xf32>
    %971 = math.exp %970 : vector<8x128xf32>
    %cst_270 = arith.constant 1.000000e+00 : f32
    %972 = vector.broadcast %cst_270 : f32 to vector<8x128xf32>
    %973 = arith.addf %972, %971 : vector<8x128xf32>
    %974 = arith.divf %972, %973 : vector<8x128xf32>
    %975 = vector.extract_strided_slice %955 {offsets = [0, 256], sizes = [8, 128], strides = [1, 1]} : vector<8x384xf32> to vector<8x128xf32>
    %976 = vector.extract_strided_slice %958 {offsets = [0, 256], sizes = [8, 128], strides = [1, 1]} : vector<8x384xf32> to vector<8x128xf32>
    %977 = vector.broadcast %564 : vector<1x128xf32> to vector<8x128xf32>
    %978 = arith.addf %976, %977 : vector<8x128xf32>
    %979 = arith.mulf %966, %978 : vector<8x128xf32>
    %980 = arith.addf %975, %979 : vector<8x128xf32>
    %981 = math.tanh %980 : vector<8x128xf32>
    %cst_271 = arith.constant 1.000000e+00 : f32
    %982 = vector.broadcast %cst_271 : f32 to vector<8x128xf32>
    %983 = arith.subf %982, %974 : vector<8x128xf32>
    %984 = arith.mulf %983, %981 : vector<8x128xf32>
    %985 = arith.mulf %974, %951 : vector<8x128xf32>
    %986 = arith.addf %984, %985 : vector<8x128xf32>
    %c12_i32_272 = arith.constant 12 : i32
    %c8_i32_273 = arith.constant 8 : i32
    %987 = arith.muli %c12_i32_272, %c8_i32_273 : i32
    %988 = tpu.assume_multiple %987, 8 : i32
    %989 = arith.index_cast %988 : i32 to index
    %c0_274 = arith.constant 0 : index
    %990 = vector.load %arg16[%989, %c0_274] : memref<112x384xf32, #tpu.memory_space<vmem>>, vector<8x384xf32>
    %991 = arith.truncf %986 : vector<8x128xf32> to vector<8x128xbf16>
    %c0_275 = arith.constant 0 : index
    %c0_276 = arith.constant 0 : index
    %992 = vector.load %arg10[%c0_275, %c0_276] : memref<128x384xbf16, #tpu.memory_space<vmem>>, vector<128x384xbf16>
    %cst_277 = arith.constant dense<0.000000e+00> : vector<8x384xf32>
    %993 = tpu.matmul %991, %992, %cst_277 {dimension_numbers = #tpu.dot_dimension_numbers<[1], [0], [0], [1], [0, 0, 1, 1], [], []>} : vector<8x128xbf16>, vector<128x384xbf16>, vector<8x384xf32> -> vector<8x384xf32>
    %994 = vector.extract_strided_slice %990 {offsets = [0, 0], sizes = [8, 128], strides = [1, 1]} : vector<8x384xf32> to vector<8x128xf32>
    %995 = vector.extract_strided_slice %993 {offsets = [0, 0], sizes = [8, 128], strides = [1, 1]} : vector<8x384xf32> to vector<8x128xf32>
    %996 = arith.addf %994, %995 : vector<8x128xf32>
    %997 = arith.negf %996 : vector<8x128xf32>
    %998 = math.exp %997 : vector<8x128xf32>
    %cst_278 = arith.constant 1.000000e+00 : f32
    %999 = vector.broadcast %cst_278 : f32 to vector<8x128xf32>
    %1000 = arith.addf %999, %998 : vector<8x128xf32>
    %1001 = arith.divf %999, %1000 : vector<8x128xf32>
    %1002 = vector.extract_strided_slice %990 {offsets = [0, 128], sizes = [8, 128], strides = [1, 1]} : vector<8x384xf32> to vector<8x128xf32>
    %1003 = vector.extract_strided_slice %993 {offsets = [0, 128], sizes = [8, 128], strides = [1, 1]} : vector<8x384xf32> to vector<8x128xf32>
    %1004 = arith.addf %1002, %1003 : vector<8x128xf32>
    %1005 = arith.negf %1004 : vector<8x128xf32>
    %1006 = math.exp %1005 : vector<8x128xf32>
    %cst_279 = arith.constant 1.000000e+00 : f32
    %1007 = vector.broadcast %cst_279 : f32 to vector<8x128xf32>
    %1008 = arith.addf %1007, %1006 : vector<8x128xf32>
    %1009 = arith.divf %1007, %1008 : vector<8x128xf32>
    %1010 = vector.extract_strided_slice %990 {offsets = [0, 256], sizes = [8, 128], strides = [1, 1]} : vector<8x384xf32> to vector<8x128xf32>
    %1011 = vector.extract_strided_slice %993 {offsets = [0, 256], sizes = [8, 128], strides = [1, 1]} : vector<8x384xf32> to vector<8x128xf32>
    %1012 = vector.broadcast %564 : vector<1x128xf32> to vector<8x128xf32>
    %1013 = arith.addf %1011, %1012 : vector<8x128xf32>
    %1014 = arith.mulf %1001, %1013 : vector<8x128xf32>
    %1015 = arith.addf %1010, %1014 : vector<8x128xf32>
    %1016 = math.tanh %1015 : vector<8x128xf32>
    %cst_280 = arith.constant 1.000000e+00 : f32
    %1017 = vector.broadcast %cst_280 : f32 to vector<8x128xf32>
    %1018 = arith.subf %1017, %1009 : vector<8x128xf32>
    %1019 = arith.mulf %1018, %1016 : vector<8x128xf32>
    %1020 = arith.mulf %1009, %986 : vector<8x128xf32>
    %1021 = arith.addf %1019, %1020 : vector<8x128xf32>
    %c13_i32_281 = arith.constant 13 : i32
    %c8_i32_282 = arith.constant 8 : i32
    %1022 = arith.muli %c13_i32_281, %c8_i32_282 : i32
    %1023 = tpu.assume_multiple %1022, 8 : i32
    %1024 = arith.index_cast %1023 : i32 to index
    %c0_283 = arith.constant 0 : index
    %1025 = vector.load %arg16[%1024, %c0_283] : memref<112x384xf32, #tpu.memory_space<vmem>>, vector<8x384xf32>
    %1026 = arith.truncf %1021 : vector<8x128xf32> to vector<8x128xbf16>
    %c0_284 = arith.constant 0 : index
    %c0_285 = arith.constant 0 : index
    %1027 = vector.load %arg10[%c0_284, %c0_285] : memref<128x384xbf16, #tpu.memory_space<vmem>>, vector<128x384xbf16>
    %cst_286 = arith.constant dense<0.000000e+00> : vector<8x384xf32>
    %1028 = tpu.matmul %1026, %1027, %cst_286 {dimension_numbers = #tpu.dot_dimension_numbers<[1], [0], [0], [1], [0, 0, 1, 1], [], []>} : vector<8x128xbf16>, vector<128x384xbf16>, vector<8x384xf32> -> vector<8x384xf32>
    %1029 = vector.extract_strided_slice %1025 {offsets = [0, 0], sizes = [8, 128], strides = [1, 1]} : vector<8x384xf32> to vector<8x128xf32>
    %1030 = vector.extract_strided_slice %1028 {offsets = [0, 0], sizes = [8, 128], strides = [1, 1]} : vector<8x384xf32> to vector<8x128xf32>
    %1031 = arith.addf %1029, %1030 : vector<8x128xf32>
    %1032 = arith.negf %1031 : vector<8x128xf32>
    %1033 = math.exp %1032 : vector<8x128xf32>
    %cst_287 = arith.constant 1.000000e+00 : f32
    %1034 = vector.broadcast %cst_287 : f32 to vector<8x128xf32>
    %1035 = arith.addf %1034, %1033 : vector<8x128xf32>
    %1036 = arith.divf %1034, %1035 : vector<8x128xf32>
    %1037 = vector.extract_strided_slice %1025 {offsets = [0, 128], sizes = [8, 128], strides = [1, 1]} : vector<8x384xf32> to vector<8x128xf32>
    %1038 = vector.extract_strided_slice %1028 {offsets = [0, 128], sizes = [8, 128], strides = [1, 1]} : vector<8x384xf32> to vector<8x128xf32>
    %1039 = arith.addf %1037, %1038 : vector<8x128xf32>
    %1040 = arith.negf %1039 : vector<8x128xf32>
    %1041 = math.exp %1040 : vector<8x128xf32>
    %cst_288 = arith.constant 1.000000e+00 : f32
    %1042 = vector.broadcast %cst_288 : f32 to vector<8x128xf32>
    %1043 = arith.addf %1042, %1041 : vector<8x128xf32>
    %1044 = arith.divf %1042, %1043 : vector<8x128xf32>
    %1045 = vector.extract_strided_slice %1025 {offsets = [0, 256], sizes = [8, 128], strides = [1, 1]} : vector<8x384xf32> to vector<8x128xf32>
    %1046 = vector.extract_strided_slice %1028 {offsets = [0, 256], sizes = [8, 128], strides = [1, 1]} : vector<8x384xf32> to vector<8x128xf32>
    %1047 = vector.broadcast %564 : vector<1x128xf32> to vector<8x128xf32>
    %1048 = arith.addf %1046, %1047 : vector<8x128xf32>
    %1049 = arith.mulf %1036, %1048 : vector<8x128xf32>
    %1050 = arith.addf %1045, %1049 : vector<8x128xf32>
    %1051 = math.tanh %1050 : vector<8x128xf32>
    %cst_289 = arith.constant 1.000000e+00 : f32
    %1052 = vector.broadcast %cst_289 : f32 to vector<8x128xf32>
    %1053 = arith.subf %1052, %1044 : vector<8x128xf32>
    %1054 = arith.mulf %1053, %1051 : vector<8x128xf32>
    %1055 = arith.mulf %1044, %1021 : vector<8x128xf32>
    %1056 = arith.addf %1054, %1055 : vector<8x128xf32>
    %c14_i32_290 = arith.constant 14 : i32
    %c0_291 = arith.constant 0 : index
    %c0_292 = arith.constant 0 : index
    %1057 = vector.load %arg13[%c0_291, %c0_292] : memref<1x128xf32, #tpu.memory_space<vmem>>, vector<1x128xf32>
    %1058 = vector.broadcast %1057 : vector<1x128xf32> to vector<8x128xf32>
    %1059 = arith.mulf %1056, %1058 : vector<8x128xf32>
    %cst_293 = arith.constant dense<0.000000e+00> : vector<8xf32>
    %1060 = vector.multi_reduction <add>, %1059, %cst_293 [1] : vector<8x128xf32> to vector<8xf32>
    %1061 = vector.shape_cast %1060 : vector<8xf32> to vector<8x1xf32>
    %c0_294 = arith.constant 0 : index
    %c0_295 = arith.constant 0 : index
    %1062 = vector.load %arg14[%c0_294, %c0_295] : memref<1x1xf32, #tpu.memory_space<vmem>>, vector<1x1xf32>
    %1063 = vector.broadcast %1062 : vector<1x1xf32> to vector<8x1xf32>
    %1064 = arith.addf %1061, %1063 : vector<8x1xf32>
    %1065 = arith.negf %1064 : vector<8x1xf32>
    %1066 = math.exp %1065 : vector<8x1xf32>
    %cst_296 = arith.constant 1.000000e+00 : f32
    %1067 = vector.broadcast %cst_296 : f32 to vector<8x1xf32>
    %1068 = arith.addf %1067, %1066 : vector<8x1xf32>
    %1069 = arith.divf %1067, %1068 : vector<8x1xf32>
    %1070 = vector.extract_strided_slice %1069 {offsets = [0, 0], sizes = [2, 1], strides = [1, 1]} : vector<8x1xf32> to vector<2x1xf32>
    %c0_297 = arith.constant 0 : index
    %c0_298 = arith.constant 0 : index
    %1071 = vector.load %arg15[%c0_297, %c0_298] : memref<2x1xf32, #tpu.memory_space<vmem>>, vector<2x1xf32>
    tpu.vector_store %arg15[%c0_297, %c0_298], %1070 {strides = array<i32>} : memref<2x1xf32, #tpu.memory_space<vmem>>, vector<2x1xf32>,
    return
  }
}

</mosaic_0001>

<llo_original>
// kernel: _lambda_.1
$region0: #{_lambda_.1}
  #allocation0 [shape = 'u32[]', space=smem, size = 0x4, offset = 0x4, fixed_abs, tag = 'smem constant byte address 0x4 - core index']
  #allocation1 [shape = 'u32[144,128]{1,0:T(1,128)}', space=vmem, size = 0x12000, scoped, tag = 'internal scratch']
  #allocation2 [shape = 'f32[112,384]{1,0:T(8,128)}', space=vmem, size = 0x2a000, scoped, tag = 'scratch operand']
  #allocation3 [shape = 'f32[112,128]{1,0:T(8,128)}', space=vmem, size = 0xe000, scoped, tag = 'scratch operand']
  #allocation4 [shape = 'f32[1,1]{1,0:T(1,128)S(1)}', space=vmem, size = 0x200, scoped, tag = 'scoped memory for _lambda_.1']
  %s0 = inlined_call_operand.vmem [shape: bf16[112,128], index: 0, kind: input, shape index: {}]
  %s1 = inlined_call_operand.hbm [shape: bf16[128,128], index: 1, kind: input, shape index: {}]
  %s2 = inlined_call_operand.vmem [shape: f32[1,128], index: 2, kind: input, shape index: {}]
  %s3 = inlined_call_operand.vmem [shape: f32[1,128], index: 3, kind: input, shape index: {}]
  %s4 = inlined_call_operand.vmem [shape: f32[2,8,128], index: 4, kind: input, shape index: {}]
  %s5 = inlined_call_operand.vmem [shape: bf16[128,384], index: 5, kind: input, shape index: {}]
  %s6 = inlined_call_operand.hbm [shape: bf16[128,384], index: 6, kind: input, shape index: {}]
  %s7 = inlined_call_operand.vmem [shape: f32[1,384], index: 7, kind: input, shape index: {}]
  %s8 = inlined_call_operand.vmem [shape: f32[1,128], index: 8, kind: input, shape index: {}]
  %s9 = inlined_call_operand.hbm [shape: bf16[128,384], index: 9, kind: input, shape index: {}]
  %s10 = inlined_call_operand.hbm [shape: bf16[128,384], index: 10, kind: input, shape index: {}]
  %s11 = inlined_call_operand.vmem [shape: f32[1,384], index: 11, kind: input, shape index: {}]
  %s12 = inlined_call_operand.vmem [shape: f32[1,128], index: 12, kind: input, shape index: {}]
  %s13 = inlined_call_operand.vmem [shape: f32[1,128], index: 13, kind: input, shape index: {}]
  %s14 = inlined_call_operand.<no memory space> [shape: f32[1,1], index: 14, kind: input, shape index: {}]
  %s15 = inlined_call_operand.vmem [shape: f32[2,1], index: 15, kind: output, shape index: {}]
  %s16 = sld [smem:[#allocation0]]
  $region86: #{_lambda_.1} parent=0
    _
  %s18 = ssub.s32 1, %s16
  %s19 = scalar_select 0, %s18, %s16
  %v20 = vstv %s14
  %21 = vst [vmem:[#allocation4] sm:$0x1] %v20
  $region1: #{_lambda_.1} parent=0
    #allocation5 [shape = 'u8[32768]{0}', space=vmem, size = 0x8000, scoped, tag = 'input window, operand 1, single buffered']
    #allocation6 [shape = 's32[1]{0}', space=sflag, size = 0x4, scoped, tag = 'scoped memory for _lambda_.1']
    #allocation7 [shape = 'u8[98304]{0}', space=vmem, size = 0x18000, scoped, tag = 'input window, operand 6, single buffered']
    #allocation8 [shape = 's32[1]{0}', space=sflag, size = 0x4, scoped, tag = 'scoped memory for _lambda_.1']
    #allocation9 [shape = 'u8[98304]{0}', space=vmem, size = 0x18000, scoped, tag = 'input window, operand 9, single buffered']
    #allocation10 [shape = 'u8[98304]{0}', space=vmem, size = 0x18000, scoped, tag = 'input window, operand 10, single buffered']
    #allocation11 [shape = 's32[1]{0}', space=sflag, size = 0x4, scoped, tag = 'scoped memory for _lambda_.1']
    %22 = vsyncpa [#allocation6], 0
    %23 = vsyncpa [#allocation8], 0
    %24 = vsyncpa [#allocation11], 0
    // Predicated region
    $region2: #{_lambda_.1} parent=1 // pred_check
      _
    $region3: #{_lambda_.1} parent=1 // pred_check_branch
      %26 = sbr.rel (0) target = $region5
    $region4: #{_lambda_.1} parent=1 // pred_region
      _
    $region5: #{_lambda_.1} parent=1 // pred_fallthru
      _
    // Predicated region
    $region6: #{_lambda_.1} parent=1 // pred_check
      _
    $region7: #{_lambda_.1} parent=1 // pred_check_branch
      %28 = sbr.rel (0) target = $region9
    $region8: #{_lambda_.1} parent=1 // pred_region
      %s30 = ssub.s32 1024, 1024
      %31 = vsyncadd [#allocation6], %s30
      %s32 = sshll.u32 [#allocation5], 4
      %s33 = int_to_ptr.vmem [resolvable:$true] %s32
      %38 = dma.hbm_to_vmem [thread:$0]  %s1, 1024, %s33, [#allocation6], 64, 64, 4
    $region9: #{_lambda_.1} parent=1 // pred_fallthru
      _
    // Predicated region
    $region10: #{_lambda_.1} parent=1 // pred_check
      _
    $region11: #{_lambda_.1} parent=1 // pred_check_branch
      %40 = sbr.rel (0) target = $region13
    $region12: #{_lambda_.1} parent=1 // pred_region
      _
    $region13: #{_lambda_.1} parent=1 // pred_fallthru
      _
    // Predicated region
    $region14: #{_lambda_.1} parent=1 // pred_check
      _
    $region15: #{_lambda_.1} parent=1 // pred_check_branch
      %42 = sbr.rel (0) target = $region17
    $region16: #{_lambda_.1} parent=1 // pred_region
      _
    $region17: #{_lambda_.1} parent=1 // pred_fallthru
      _
    // Predicated region
    $region18: #{_lambda_.1} parent=1 // pred_check
      _
    $region19: #{_lambda_.1} parent=1 // pred_check_branch
      %44 = sbr.rel (0) target = $region21
    $region20: #{_lambda_.1} parent=1 // pred_region
      _
    $region21: #{_lambda_.1} parent=1 // pred_fallthru
      _
    // Predicated region
    $region22: #{_lambda_.1} parent=1 // pred_check
      _
    $region23: #{_lambda_.1} parent=1 // pred_check_branch
      %46 = sbr.rel (0) target = $region25
    $region24: #{_lambda_.1} parent=1 // pred_region
      _
    $region25: #{_lambda_.1} parent=1 // pred_fallthru
      _
    // Predicated region
    $region26: #{_lambda_.1} parent=1 // pred_check
      _
    $region27: #{_lambda_.1} parent=1 // pred_check_branch
      %48 = sbr.rel (0) target = $region29
    $region28: #{_lambda_.1} parent=1 // pred_region
      %s50 = ssub.s32 3072, 3072
      %51 = vsyncadd [#allocation8], %s50
      %s52 = sshll.u32 [#allocation7], 4
      %s53 = int_to_ptr.vmem [resolvable:$true] %s52
      %58 = dma.hbm_to_vmem [thread:$0]  %s6, 3072, %s53, [#allocation8], 192, 192, 12
    $region29: #{_lambda_.1} parent=1 // pred_fallthru
      _
    // Predicated region
    $region30: #{_lambda_.1} parent=1 // pred_check
      _
    $region31: #{_lambda_.1} parent=1 // pred_check_branch
      %60 = sbr.rel (0) target = $region33
    $region32: #{_lambda_.1} parent=1 // pred_region
      _
    $region33: #{_lambda_.1} parent=1 // pred_fallthru
      _
    // Predicated region
    $region34: #{_lambda_.1} parent=1 // pred_check
      _
    $region35: #{_lambda_.1} parent=1 // pred_check_branch
      %62 = sbr.rel (0) target = $region37
    $region36: #{_lambda_.1} parent=1 // pred_region
      _
    $region37: #{_lambda_.1} parent=1 // pred_fallthru
      _
    // Predicated region
    $region38: #{_lambda_.1} parent=1 // pred_check
      _
    $region39: #{_lambda_.1} parent=1 // pred_check_branch
      %64 = sbr.rel (0) target = $region41
    $region40: #{_lambda_.1} parent=1 // pred_region
      %s66 = ssub.s32 3072, 3072
      %67 = vsyncadd [#allocation8], %s66
      %s68 = sshll.u32 [#allocation9], 4
      %s69 = int_to_ptr.vmem [resolvable:$true] %s68
      %74 = dma.hbm_to_vmem [thread:$0]  %s9, 3072, %s69, [#allocation8], 192, 192, 12
    $region41: #{_lambda_.1} parent=1 // pred_fallthru
      _
    // Predicated region
    $region42: #{_lambda_.1} parent=1 // pred_check
      _
    $region43: #{_lambda_.1} parent=1 // pred_check_branch
      %76 = sbr.rel (0) target = $region45
    $region44: #{_lambda_.1} parent=1 // pred_region
      %s78 = ssub.s32 3072, 3072
      %79 = vsyncadd [#allocation11], %s78
      %s80 = sshll.u32 [#allocation10], 4
      %s81 = int_to_ptr.vmem [resolvable:$true] %s80
      %86 = dma.hbm_to_vmem [thread:$0]  %s10, 3072, %s81, [#allocation11], 192, 192, 12
    $region45: #{_lambda_.1} parent=1 // pred_fallthru
      _
    // Predicated region
    $region46: #{_lambda_.1} parent=1 // pred_check
      _
    $region47: #{_lambda_.1} parent=1 // pred_check_branch
      %88 = sbr.rel (0) target = $region49
    $region48: #{_lambda_.1} parent=1 // pred_region
      _
    $region49: #{_lambda_.1} parent=1 // pred_fallthru
      _
    // Predicated region
    $region50: #{_lambda_.1} parent=1 // pred_check
      _
    $region51: #{_lambda_.1} parent=1 // pred_check_branch
      %90 = sbr.rel (0) target = $region53
    $region52: #{_lambda_.1} parent=1 // pred_region
      _
    $region53: #{_lambda_.1} parent=1 // pred_fallthru
      _
    // Predicated region
    $region54: #{_lambda_.1} parent=1 // pred_check
      _
    $region55: #{_lambda_.1} parent=1 // pred_check_branch
      %92 = sbr.rel (0) target = $region57
    $region56: #{_lambda_.1} parent=1 // pred_region
      _
    $region57: #{_lambda_.1} parent=1 // pred_fallthru
      _
    // Predicated region
    $region58: #{_lambda_.1} parent=1 // pred_check
      _
    $region59: #{_lambda_.1} parent=1 // pred_check_branch
      %94 = sbr.rel (0) target = $region61
    $region60: #{_lambda_.1} parent=1 // pred_region
      _
    $region61: #{_lambda_.1} parent=1 // pred_fallthru
      _
    // Predicated region
    $region62: #{_lambda_.1} parent=1 // pred_check
      _
    $region63: #{_lambda_.1} parent=1 // pred_check_branch
      %96 = sbr.rel (0) target = $region65
    $region64: #{_lambda_.1} parent=1 // pred_region
      %97 = dma.done [#allocation6], 1024
    $region65: #{_lambda_.1} parent=1 // pred_fallthru
      _
    // Predicated region
    $region66: #{_lambda_.1} parent=1 // pred_check
      _
    $region67: #{_lambda_.1} parent=1 // pred_check_branch
      %99 = sbr.rel (0) target = $region69
    $region68: #{_lambda_.1} parent=1 // pred_region
      %100 = dma.done [#allocation8], 3072
    $region69: #{_lambda_.1} parent=1 // pred_fallthru
      _
    // Predicated region
    $region70: #{_lambda_.1} parent=1 // pred_check
      _
    $region71: #{_lambda_.1} parent=1 // pred_check_branch
      %102 = sbr.rel (0) target = $region73
    $region72: #{_lambda_.1} parent=1 // pred_region
      %103 = dma.done [#allocation8], 3072
    $region73: #{_lambda_.1} parent=1 // pred_fallthru
      _
    // Predicated region
    $region74: #{_lambda_.1} parent=1 // pred_check
      _
    $region75: #{_lambda_.1} parent=1 // pred_check_branch
      %105 = sbr.rel (0) target = $region77
    $region76: #{_lambda_.1} parent=1 // pred_region
      %106 = dma.done [#allocation11], 3072
    $region77: #{_lambda_.1} parent=1 // pred_fallthru
      _
    %v108 = vld [vmem:[%s0] sm:$0xf]
    %v109 = vld [vmem:[%s0 + $0x4] sm:$0xf]
    %v110 = vld [vmem:[%s0 + $0x8] sm:$0xf]
    %v111 = vld [vmem:[%s0 + $0xc] sm:$0xf]
    %v112 = vld [vmem:[%s0 + $0x10] sm:$0xf]
    %v113 = vld [vmem:[%s0 + $0x14] sm:$0xf]
    %v114 = vld [vmem:[%s0 + $0x18] sm:$0xf]
    %v115 = vld [vmem:[%s0 + $0x1c] sm:$0xf]
    %v116 = vld [vmem:[%s0 + $0x20] sm:$0xf]
    %v117 = vld [vmem:[%s0 + $0x24] sm:$0xf]
    %v118 = vld [vmem:[%s0 + $0x28] sm:$0xf]
    %v119 = vld [vmem:[%s0 + $0x2c] sm:$0xf]
    %v120 = vld [vmem:[%s0 + $0x30] sm:$0xf]
    %v121 = vld [vmem:[%s0 + $0x34] sm:$0xf]
    %v122 = vld [vmem:[#allocation5] sm:$0xf]
    %v123 = vld [vmem:[#allocation5 + $0x4] sm:$0xf]
    %v124 = vld [vmem:[#allocation5 + $0x8] sm:$0xf]
    %v125 = vld [vmem:[#allocation5 + $0xc] sm:$0xf]
    %v126 = vld [vmem:[#allocation5 + $0x10] sm:$0xf]
    %v127 = vld [vmem:[#allocation5 + $0x14] sm:$0xf]
    %v128 = vld [vmem:[#allocation5 + $0x18] sm:$0xf]
    %v129 = vld [vmem:[#allocation5 + $0x1c] sm:$0xf]
    %v130 = vld [vmem:[#allocation5 + $0x20] sm:$0xf]
    %v131 = vld [vmem:[#allocation5 + $0x24] sm:$0xf]
    %v132 = vld [vmem:[#allocation5 + $0x28] sm:$0xf]
    %v133 = vld [vmem:[#allocation5 + $0x2c] sm:$0xf]
    %v134 = vld [vmem:[#allocation5 + $0x30] sm:$0xf]
    %v135 = vld [vmem:[#allocation5 + $0x34] sm:$0xf]
    %v136 = vld [vmem:[#allocation5 + $0x38] sm:$0xf]
    %v137 = vld [vmem:[#allocation5 + $0x3c] sm:$0xf]
    %v152 = vunpack.c.l.b16 %v108
    %v153 = vunpack.c.l.b16 %v109
    %v154 = vunpack.c.l.b16 %v110
    %v155 = vunpack.c.l.b16 %v111
    %v156 = vunpack.c.l.b16 %v112
    %v157 = vunpack.c.l.b16 %v113
    %v158 = vunpack.c.l.b16 %v114
    %v159 = vunpack.c.l.b16 %v115
    %v160 = vunpack.c.l.b16 %v116
    %v161 = vunpack.c.l.b16 %v117
    %v162 = vunpack.c.l.b16 %v118
    %v163 = vunpack.c.l.b16 %v119
    %v164 = vunpack.c.l.b16 %v120
    %v165 = vunpack.c.l.b16 %v121
    %v166 = vpack.c.b16 %v153, %v152
    %v167 = vpack.c.b16 %v155, %v154
    %v168 = vpack.c.b16 %v157, %v156
    %v169 = vpack.c.b16 %v159, %v158
    %v170 = vpack.c.b16 %v161, %v160
    %v171 = vpack.c.b16 %v163, %v162
    %v172 = vpack.c.b16 %v165, %v164
    %v196 = vunpack.c.l.b16 %v122
    %v197 = vunpack.c.l.b16 %v123
    %v198 = vunpack.c.l.b16 %v124
    %v199 = vunpack.c.l.b16 %v125
    %v200 = vunpack.c.l.b16 %v126
    %v201 = vunpack.c.l.b16 %v127
    %v202 = vunpack.c.l.b16 %v128
    %v203 = vunpack.c.l.b16 %v129
    %v204 = vunpack.c.l.b16 %v130
    %v205 = vunpack.c.l.b16 %v131
    %v206 = vunpack.c.l.b16 %v132
    %v207 = vunpack.c.l.b16 %v133
    %v208 = vunpack.c.l.b16 %v134
    %v209 = vunpack.c.l.b16 %v135
    %v210 = vunpack.c.l.b16 %v136
    %v211 = vunpack.c.l.b16 %v137
    %v212 = vpack.c.b16 %v197, %v196
    %v213 = vpack.c.b16 %v199, %v198
    %v214 = vpack.c.b16 %v201, %v200
    %v215 = vpack.c.b16 %v203, %v202
    %v216 = vpack.c.b16 %v205, %v204
    %v217 = vpack.c.b16 %v207, %v206
    %v218 = vpack.c.b16 %v209, %v208
    %v219 = vpack.c.b16 %v211, %v210
    %228 = vmatprep.subr.bf16.mxu0 0
    %229 = vmatpush1.bf16.msra.mxu0 %v212
    %230 = vmatprep.subr.bf16.mxu0 0
    %231 = vmatpush1.bf16.msra.mxu0 %v213
    %232 = vmatprep.subr.bf16.mxu0 0
    %233 = vmatpush1.bf16.msra.mxu0 %v214
    %234 = vmatprep.subr.bf16.mxu0 0
    %235 = vmatpush1.bf16.msra.mxu0 %v215
    %236 = vmatprep.subr.bf16.mxu0 0
    %237 = vmatpush1.bf16.msra.mxu0 %v216
    %238 = vmatprep.subr.bf16.mxu0 0
    %239 = vmatpush1.bf16.msra.mxu0 %v217
    %240 = vmatprep.subr.bf16.mxu0 0
    %241 = vmatpush1.bf16.msra.mxu0 %v218
    %242 = vmatprep.subr.bf16.mxu0 0
    %243 = vmatpush1.bf16.msra.mxu0 %v219
    %244 = vmatprep.subr.bf16.mxu0 0
    %245 = vmatpush1.bf16.msra.mxu0 0
    %246 = vmatprep.subr.bf16.mxu0 0
    %247 = vmatpush1.bf16.msra.mxu0 0
    %248 = vmatprep.subr.bf16.mxu0 0
    %249 = vmatpush1.bf16.msra.mxu0 0
    %250 = vmatprep.subr.bf16.mxu0 0
    %251 = vmatpush1.bf16.msra.mxu0 0
    %252 = vmatprep.subr.bf16.mxu0 0
    %253 = vmatpush1.bf16.msra.mxu0 0
    %254 = vmatprep.subr.bf16.mxu0 0
    %255 = vmatpush1.bf16.msra.mxu0 0
    %256 = vmatprep.subr.bf16.mxu0 0
    %257 = vmatpush1.bf16.msra.mxu0 0
    %258 = vmatprep.subr.bf16.mxu0 0
    %259 = vmatpush1.bf16.msra.mxu0 0
    %260 = vmatprep.mubr.bf16.mxu0 0
    %261 = vmatmul.mubr.bf16.gmra.mrb[0].mxu0 %v166
    %v262 = vpop.f32.mrb[0].mxu0
    %v263 = vadd.f32 0.0, %v262
    %v264 = vpop.f32.mrb[0].mxu0
    %v265 = vpop.f32.mrb[0].mxu0
    %v266 = vadd.f32 0.0, %v265
    %v267 = vpop.f32.mrb[0].mxu0
    %268 = vmatprep.mubr.bf16.mxu0 0
    %269 = vmatmul.mubr.bf16.gmra.mrb[0].mxu0 %v167
    %v270 = vpop.f32.mrb[0].mxu0
    %v271 = vadd.f32 0.0, %v270
    %v272 = vpop.f32.mrb[0].mxu0
    %v273 = vpop.f32.mrb[0].mxu0
    %v274 = vadd.f32 0.0, %v273
    %v275 = vpop.f32.mrb[0].mxu0
    %276 = vmatprep.mubr.bf16.mxu0 0
    %277 = vmatmul.mubr.bf16.gmra.mrb[0].mxu0 %v168
    %v278 = vpop.f32.mrb[0].mxu0
    %v279 = vadd.f32 0.0, %v278
    %v280 = vpop.f32.mrb[0].mxu0
    %v281 = vpop.f32.mrb[0].mxu0
    %v282 = vadd.f32 0.0, %v281
    %v283 = vpop.f32.mrb[0].mxu0
    %284 = vmatprep.mubr.bf16.mxu0 0
    %285 = vmatmul.mubr.bf16.gmra.mrb[0].mxu0 %v169
    %v286 = vpop.f32.mrb[0].mxu0
    %v287 = vadd.f32 0.0, %v286
    %v288 = vpop.f32.mrb[0].mxu0
    %v289 = vpop.f32.mrb[0].mxu0
    %v290 = vadd.f32 0.0, %v289
    %v291 = vpop.f32.mrb[0].mxu0
    %292 = vmatprep.mubr.bf16.mxu0 0
    %293 = vmatmul.mubr.bf16.gmra.mrb[0].mxu0 %v170
    %v294 = vpop.f32.mrb[0].mxu0
    %v295 = vadd.f32 0.0, %v294
    %v296 = vpop.f32.mrb[0].mxu0
    %v297 = vpop.f32.mrb[0].mxu0
    %v298 = vadd.f32 0.0, %v297
    %v299 = vpop.f32.mrb[0].mxu0
    %300 = vmatprep.mubr.bf16.mxu0 0
    %301 = vmatmul.mubr.bf16.gmra.mrb[0].mxu0 %v171
    %v302 = vpop.f32.mrb[0].mxu0
    %v303 = vadd.f32 0.0, %v302
    %v304 = vpop.f32.mrb[0].mxu0
    %v305 = vpop.f32.mrb[0].mxu0
    %v306 = vadd.f32 0.0, %v305
    %v307 = vpop.f32.mrb[0].mxu0
    %308 = vmatprep.mubr.bf16.mxu0 0
    %309 = vmatmul.mubr.bf16.gmra.mrb[0].mxu0 %v172
    %v310 = vpop.f32.mrb[0].mxu0
    %v311 = vadd.f32 0.0, %v310
    %v312 = vpop.f32.mrb[0].mxu0
    %v313 = vpop.f32.mrb[0].mxu0
    %v314 = vadd.f32 0.0, %v313
    %v315 = vpop.f32.mrb[0].mxu0
    %316 = vdwg.mxu0
    %v317 = vadd.f32 %v263, %v266
    %v318 = vadd.f32 %v317, %v271
    %v319 = vadd.f32 %v318, %v274
    %v320 = vadd.f32 %v319, %v279
    %v321 = vadd.f32 %v320, %v282
    %v322 = vadd.f32 %v321, %v287
    %v323 = vadd.f32 %v322, %v290
    %v324 = vadd.f32 %v323, %v295
    %v325 = vadd.f32 %v324, %v298
    %v326 = vadd.f32 %v325, %v303
    %v327 = vadd.f32 %v326, %v306
    %v328 = vadd.f32 %v327, %v311
    %v329 = vadd.f32 %v328, %v314
    %v330 = vrot.slane %v329, 4
    %v331 = vadd.f32 %v329, %v330
    %v332 = vrot.slane %v331, 2
    %v333 = vadd.f32 %v331, %v332
    %v334 = vrot.slane %v333, 1
    %v335 = vadd.f32 %v333, %v334
    %v336 = vmul.f32 %v335, 0.035714287
    %v337 = vmul.f32 %v263, %v263
    %v338 = vmul.f32 %v266, %v266
    %v339 = vmul.f32 %v271, %v271
    %v340 = vmul.f32 %v274, %v274
    %v341 = vmul.f32 %v279, %v279
    %v342 = vmul.f32 %v282, %v282
    %v343 = vmul.f32 %v287, %v287
    %v344 = vmul.f32 %v290, %v290
    %v345 = vmul.f32 %v295, %v295
    %v346 = vmul.f32 %v298, %v298
    %v347 = vmul.f32 %v303, %v303
    %v348 = vmul.f32 %v306, %v306
    %v349 = vmul.f32 %v311, %v311
    %v350 = vmul.f32 %v314, %v314
    %v351 = vadd.f32 %v337, %v338
    %v352 = vadd.f32 %v351, %v339
    %v353 = vadd.f32 %v352, %v340
    %v354 = vadd.f32 %v353, %v341
    %v355 = vadd.f32 %v354, %v342
    %v356 = vadd.f32 %v355, %v343
    %v357 = vadd.f32 %v356, %v344
    %v358 = vadd.f32 %v357, %v345
    %v359 = vadd.f32 %v358, %v346
    %v360 = vadd.f32 %v359, %v347
    %v361 = vadd.f32 %v360, %v348
    %v362 = vadd.f32 %v361, %v349
    %v363 = vadd.f32 %v362, %v350
    %v364 = vrot.slane %v363, 4
    %v365 = vadd.f32 %v363, %v364
    %v366 = vrot.slane %v365, 2
    %v367 = vadd.f32 %v365, %v366
    %v368 = vrot.slane %v367, 1
    %v369 = vadd.f32 %v367, %v368
    %v370 = vmul.f32 %v369, 0.035714287
    %v371 = vmul.f32 %v336, %v336
    %v372 = vsub.f32 %v370, %v371
    %v373 = vmax.f32 %v372, 0.0
    %v374 = vld [vmem:[%s2] sm:$0x1]
    %v375 = vadd.f32 %v373, 1e-05
    %v376 = vrsqrt.pop %v375
    %v377 = vmul.f32 %v374, %v376
    %v378 = vld [vmem:[%s3] sm:$0x1]
    %v379 = vmul.f32 %v336, %v377
    %v380 = vsub.f32 %v378, %v379
    %v382 = vlaneseq
    %v383 = vshrl.u32 %v382, 7
    %v384 = vsub.s32 0, %v383
    %v385 = vrot.slane %v377, %v384
    %v387 = vmul.f32 %v263, %v385
    %v388 = vmul.f32 %v266, %v385
    %v389 = vmul.f32 %v271, %v385
    %v390 = vmul.f32 %v274, %v385
    %v391 = vmul.f32 %v279, %v385
    %v392 = vmul.f32 %v282, %v385
    %v393 = vmul.f32 %v287, %v385
    %v394 = vmul.f32 %v290, %v385
    %v395 = vmul.f32 %v295, %v385
    %v396 = vmul.f32 %v298, %v385
    %v397 = vmul.f32 %v303, %v385
    %v398 = vmul.f32 %v306, %v385
    %v399 = vmul.f32 %v311, %v385
    %v400 = vmul.f32 %v314, %v385
    %v402 = vlaneseq
    %v403 = vshrl.u32 %v402, 7
    %v404 = vsub.s32 0, %v403
    %v405 = vrot.slane %v380, %v404
    %v407 = vadd.f32 %v387, %v405
    %v408 = vadd.f32 %v388, %v405
    %v409 = vadd.f32 %v389, %v405
    %v410 = vadd.f32 %v390, %v405
    %v411 = vadd.f32 %v391, %v405
    %v412 = vadd.f32 %v392, %v405
    %v413 = vadd.f32 %v393, %v405
    %v414 = vadd.f32 %v394, %v405
    %v415 = vadd.f32 %v395, %v405
    %v416 = vadd.f32 %v396, %v405
    %v417 = vadd.f32 %v397, %v405
    %v418 = vadd.f32 %v398, %v405
    %v419 = vadd.f32 %v399, %v405
    %v420 = vadd.f32 %v400, %v405
    %v421 = vpack.c.bf16 %v408, %v407
    %v422 = vpack.c.bf16 %v410, %v409
    %v423 = vpack.c.bf16 %v412, %v411
    %v424 = vpack.c.bf16 %v414, %v413
    %v425 = vpack.c.bf16 %v416, %v415
    %v426 = vpack.c.bf16 %v418, %v417
    %v427 = vpack.c.bf16 %v420, %v419
    %v428 = vld [vmem:[%s5] sm:$0xff]
    %v429 = vld [vmem:[%s5 + $0x8] sm:$0xf]
    %v430 = vld [vmem:[%s5 + $0xc] sm:$0xff]
    %v431 = vld [vmem:[%s5 + $0x14] sm:$0xf]
    %v432 = vld [vmem:[%s5 + $0x18] sm:$0xff]
    %v433 = vld [vmem:[%s5 + $0x20] sm:$0xf]
    %v434 = vld [vmem:[%s5 + $0x24] sm:$0xff]
    %v435 = vld [vmem:[%s5 + $0x2c] sm:$0xf]
    %v436 = vld [vmem:[%s5 + $0x30] sm:$0xff]
    %v437 = vld [vmem:[%s5 + $0x38] sm:$0xf]
    %v438 = vld [vmem:[%s5 + $0x3c] sm:$0xff]
    %v439 = vld [vmem:[%s5 + $0x44] sm:$0xf]
    %v440 = vld [vmem:[%s5 + $0x48] sm:$0xff]
    %v441 = vld [vmem:[%s5 + $0x50] sm:$0xf]
    %v442 = vld [vmem:[%s5 + $0x54] sm:$0xff]
    %v443 = vld [vmem:[%s5 + $0x5c] sm:$0xf]
    %v444 = vld [vmem:[%s5 + $0x60] sm:$0xff]
    %v445 = vld [vmem:[%s5 + $0x68] sm:$0xf]
    %v446 = vld [vmem:[%s5 + $0x6c] sm:$0xff]
    %v447 = vld [vmem:[%s5 + $0x74] sm:$0xf]
    %v448 = vld [vmem:[%s5 + $0x78] sm:$0xff]
    %v449 = vld [vmem:[%s5 + $0x80] sm:$0xf]
    %v450 = vld [vmem:[%s5 + $0x84] sm:$0xff]
    %v451 = vld [vmem:[%s5 + $0x8c] sm:$0xf]
    %v452 = vld [vmem:[%s5 + $0x90] sm:$0xff]
    %v453 = vld [vmem:[%s5 + $0x98] sm:$0xf]
    %v454 = vld [vmem:[%s5 + $0x9c] sm:$0xff]
    %v455 = vld [vmem:[%s5 + $0xa4] sm:$0xf]
    %v456 = vld [vmem:[%s5 + $0xa8] sm:$0xff]
    %v457 = vld [vmem:[%s5 + $0xb0] sm:$0xf]
    %v458 = vld [vmem:[%s5 + $0xb4] sm:$0xff]
    %v459 = vld [vmem:[%s5 + $0xbc] sm:$0xf]
    %v460 = vld [vmem:[%s7] sm:$0x7]
    %v462 = vlaneseq
    %v463 = vshrl.u32 %v462, 7
    %v464 = vsub.s32 0, %v463
    %v465 = vrot.slane %v460, %v464
    %v466 = vlaneseq
    %v467 = vshrl.u32 %v466, 7
    %v468 = vsub.s32 1, %v467
    %v469 = vrot.slane %v460, %v468
    %v470 = vlaneseq
    %v471 = vshrl.u32 %v470, 7
    %v472 = vsub.s32 2, %v471
    %v473 = vrot.slane %v460, %v472
    %v509 = vunpack.c.l.b16 %v428
    %v510 = vunpack.c.h.b16 %v428
    %v511 = vunpack.c.l.b16 %v429
    %v512 = vunpack.c.l.b16 %v430
    %v513 = vunpack.c.h.b16 %v430
    %v514 = vunpack.c.l.b16 %v431
    %v515 = vunpack.c.l.b16 %v432
    %v516 = vunpack.c.h.b16 %v432
    %v517 = vunpack.c.l.b16 %v433
    %v518 = vunpack.c.l.b16 %v434
    %v519 = vunpack.c.h.b16 %v434
    %v520 = vunpack.c.l.b16 %v435
    %v521 = vunpack.c.l.b16 %v436
    %v522 = vunpack.c.h.b16 %v436
    %v523 = vunpack.c.l.b16 %v437
    %v524 = vunpack.c.l.b16 %v438
    %v525 = vunpack.c.h.b16 %v438
    %v526 = vunpack.c.l.b16 %v439
    %v527 = vunpack.c.l.b16 %v440
    %v528 = vunpack.c.h.b16 %v440
    %v529 = vunpack.c.l.b16 %v441
    %v530 = vunpack.c.l.b16 %v442
    %v531 = vunpack.c.h.b16 %v442
    %v532 = vunpack.c.l.b16 %v443
    %v533 = vunpack.c.l.b16 %v444
    %v534 = vunpack.c.h.b16 %v444
    %v535 = vunpack.c.l.b16 %v445
    %v536 = vunpack.c.l.b16 %v446
    %v537 = vunpack.c.h.b16 %v446
    %v538 = vunpack.c.l.b16 %v447
    %v539 = vunpack.c.l.b16 %v448
    %v540 = vunpack.c.h.b16 %v448
    %v541 = vunpack.c.l.b16 %v449
    %v542 = vunpack.c.l.b16 %v450
    %v543 = vunpack.c.h.b16 %v450
    %v544 = vunpack.c.l.b16 %v451
    %v545 = vunpack.c.l.b16 %v452
    %v546 = vunpack.c.h.b16 %v452
    %v547 = vunpack.c.l.b16 %v453
    %v548 = vunpack.c.l.b16 %v454
    %v549 = vunpack.c.h.b16 %v454
    %v550 = vunpack.c.l.b16 %v455
    %v551 = vunpack.c.l.b16 %v456
    %v552 = vunpack.c.h.b16 %v456
    %v553 = vunpack.c.l.b16 %v457
    %v554 = vunpack.c.l.b16 %v458
    %v555 = vunpack.c.h.b16 %v458
    %v556 = vunpack.c.l.b16 %v459
    %v557 = vpack.c.b16 %v512, %v509
    %v558 = vpack.c.b16 %v513, %v510
    %v559 = vpack.c.b16 %v514, %v511
    %v560 = vpack.c.b16 %v518, %v515
    %v561 = vpack.c.b16 %v519, %v516
    %v562 = vpack.c.b16 %v520, %v517
    %v563 = vpack.c.b16 %v524, %v521
    %v564 = vpack.c.b16 %v525, %v522
    %v565 = vpack.c.b16 %v526, %v523
    %v566 = vpack.c.b16 %v530, %v527
    %v567 = vpack.c.b16 %v531, %v528
    %v568 = vpack.c.b16 %v532, %v529
    %v569 = vpack.c.b16 %v536, %v533
    %v570 = vpack.c.b16 %v537, %v534
    %v571 = vpack.c.b16 %v538, %v535
    %v572 = vpack.c.b16 %v542, %v539
    %v573 = vpack.c.b16 %v543, %v540
    %v574 = vpack.c.b16 %v544, %v541
    %v575 = vpack.c.b16 %v548, %v545
    %v576 = vpack.c.b16 %v549, %v546
    %v577 = vpack.c.b16 %v550, %v547
    %v578 = vpack.c.b16 %v554, %v551
    %v579 = vpack.c.b16 %v555, %v552
    %v580 = vpack.c.b16 %v556, %v553
    %605 = vmatprep.subr.bf16.mxu0 %v558
    %606 = vmatpush1.bf16.msra.mxu0 %v557
    %607 = vmatprep.subr.bf16.mxu0 %v561
    %608 = vmatpush1.bf16.msra.mxu0 %v560
    %609 = vmatprep.subr.bf16.mxu0 %v564
    %610 = vmatpush1.bf16.msra.mxu0 %v563
    %611 = vmatprep.subr.bf16.mxu0 %v567
    %612 = vmatpush1.bf16.msra.mxu0 %v566
    %613 = vmatprep.subr.bf16.mxu0 %v570
    %614 = vmatpush1.bf16.msra.mxu0 %v569
    %615 = vmatprep.subr.bf16.mxu0 %v573
    %616 = vmatpush1.bf16.msra.mxu0 %v572
    %617 = vmatprep.subr.bf16.mxu0 %v576
    %618 = vmatpush1.bf16.msra.mxu0 %v575
    %619 = vmatprep.subr.bf16.mxu0 %v579
    %620 = vmatpush1.bf16.msra.mxu0 %v578
    %621 = vmatprep.subr.bf16.mxu0 0
    %622 = vmatpush1.bf16.msra.mxu0 0
    %623 = vmatprep.subr.bf16.mxu0 0
    %624 = vmatpush1.bf16.msra.mxu0 0
    %625 = vmatprep.subr.bf16.mxu0 0
    %626 = vmatpush1.bf16.msra.mxu0 0
    %627 = vmatprep.subr.bf16.mxu0 0
    %628 = vmatpush1.bf16.msra.mxu0 0
    %629 = vmatprep.subr.bf16.mxu0 0
    %630 = vmatpush1.bf16.msra.mxu0 0
    %631 = vmatprep.subr.bf16.mxu0 0
    %632 = vmatpush1.bf16.msra.mxu0 0
    %633 = vmatprep.subr.bf16.mxu0 0
    %634 = vmatpush1.bf16.msra.mxu0 0
    %635 = vmatprep.subr.bf16.mxu0 0
    %636 = vmatpush1.bf16.msra.mxu0 0
    %637 = vmatprep.mubr.bf16.mxu0 0
    %638 = vmatmul.mubr.bf16.gmra.mrb[0].mxu0 %v421
    %v639 = vpop.f32.mrb[0].mxu0
    %v640 = vadd.f32 %v465, %v639
    %v641 = vpop.f32.mrb[0].mxu0
    %v642 = vadd.f32 %v469, %v641
    %v643 = vpop.f32.mrb[0].mxu0
    %v644 = vadd.f32 %v465, %v643
    %v645 = vpop.f32.mrb[0].mxu0
    %v646 = vadd.f32 %v469, %v645
    %647 = vmatprep.mubr.bf16.mxu0 0
    %648 = vmatmul.mubr.bf16.gmra.mrb[0].mxu0 %v422
    %v649 = vpop.f32.mrb[0].mxu0
    %v650 = vadd.f32 %v465, %v649
    %v651 = vpop.f32.mrb[0].mxu0
    %v652 = vadd.f32 %v469, %v651
    %v653 = vpop.f32.mrb[0].mxu0
    %v654 = vadd.f32 %v465, %v653
    %v655 = vpop.f32.mrb[0].mxu0
    %v656 = vadd.f32 %v469, %v655
    %657 = vmatprep.mubr.bf16.mxu0 0
    %658 = vmatmul.mubr.bf16.gmra.mrb[0].mxu0 %v423
    %v659 = vpop.f32.mrb[0].mxu0
    %v660 = vadd.f32 %v465, %v659
    %v661 = vpop.f32.mrb[0].mxu0
    %v662 = vadd.f32 %v469, %v661
    %v663 = vpop.f32.mrb[0].mxu0
    %v664 = vadd.f32 %v465, %v663
    %v665 = vpop.f32.mrb[0].mxu0
    %v666 = vadd.f32 %v469, %v665
    %667 = vmatprep.mubr.bf16.mxu0 0
    %668 = vmatmul.mubr.bf16.gmra.mrb[0].mxu0 %v424
    %v669 = vpop.f32.mrb[0].mxu0
    %v670 = vadd.f32 %v465, %v669
    %v671 = vpop.f32.mrb[0].mxu0
    %v672 = vadd.f32 %v469, %v671
    %v673 = vpop.f32.mrb[0].mxu0
    %v674 = vadd.f32 %v465, %v673
    %v675 = vpop.f32.mrb[0].mxu0
    %v676 = vadd.f32 %v469, %v675
    %677 = vmatprep.mubr.bf16.mxu0 0
    %678 = vmatmul.mubr.bf16.gmra.mrb[0].mxu0 %v425
    %v679 = vpop.f32.mrb[0].mxu0
    %v680 = vadd.f32 %v465, %v679
    %v681 = vpop.f32.mrb[0].mxu0
    %v682 = vadd.f32 %v469, %v681
    %v683 = vpop.f32.mrb[0].mxu0
    %v684 = vadd.f32 %v465, %v683
    %v685 = vpop.f32.mrb[0].mxu0
    %v686 = vadd.f32 %v469, %v685
    %687 = vmatprep.mubr.bf16.mxu0 0
    %688 = vmatmul.mubr.bf16.gmra.mrb[0].mxu0 %v426
    %v689 = vpop.f32.mrb[0].mxu0
    %v690 = vadd.f32 %v465, %v689
    %v691 = vpop.f32.mrb[0].mxu0
    %v692 = vadd.f32 %v469, %v691
    %v693 = vpop.f32.mrb[0].mxu0
    %v694 = vadd.f32 %v465, %v693
    %v695 = vpop.f32.mrb[0].mxu0
    %v696 = vadd.f32 %v469, %v695
    %697 = vmatprep.mubr.bf16.mxu0 0
    %698 = vmatmul.mubr.bf16.gmra.mrb[0].mxu0 %v427
    %v699 = vpop.f32.mrb[0].mxu0
    %v700 = vadd.f32 %v465, %v699
    %v701 = vpop.f32.mrb[0].mxu0
    %v702 = vadd.f32 %v469, %v701
    %v703 = vpop.f32.mrb[0].mxu0
    %v704 = vadd.f32 %v465, %v703
    %v705 = vpop.f32.mrb[0].mxu0
    %v706 = vadd.f32 %v469, %v705
    %707 = vdwg.mxu0
    %708 = vmatprep.subr.bf16.mxu0 0
    %709 = vmatpush1.bf16.msra.mxu0 %v559
    %710 = vmatprep.subr.bf16.mxu0 0
    %711 = vmatpush1.bf16.msra.mxu0 %v562
    %712 = vmatprep.subr.bf16.mxu0 0
    %713 = vmatpush1.bf16.msra.mxu0 %v565
    %714 = vmatprep.subr.bf16.mxu0 0
    %715 = vmatpush1.bf16.msra.mxu0 %v568
    %716 = vmatprep.subr.bf16.mxu0 0
    %717 = vmatpush1.bf16.msra.mxu0 %v571
    %718 = vmatprep.subr.bf16.mxu0 0
    %719 = vmatpush1.bf16.msra.mxu0 %v574
    %720 = vmatprep.subr.bf16.mxu0 0
    %721 = vmatpush1.bf16.msra.mxu0 %v577
    %722 = vmatprep.subr.bf16.mxu0 0
    %723 = vmatpush1.bf16.msra.mxu0 %v580
    %724 = vmatprep.subr.bf16.mxu0 0
    %725 = vmatpush1.bf16.msra.mxu0 0
    %726 = vmatprep.subr.bf16.mxu0 0
    %727 = vmatpush1.bf16.msra.mxu0 0
    %728 = vmatprep.subr.bf16.mxu0 0
    %729 = vmatpush1.bf16.msra.mxu0 0
    %730 = vmatprep.subr.bf16.mxu0 0
    %731 = vmatpush1.bf16.msra.mxu0 0
    %732 = vmatprep.subr.bf16.mxu0 0
    %733 = vmatpush1.bf16.msra.mxu0 0
    %734 = vmatprep.subr.bf16.mxu0 0
    %735 = vmatpush1.bf16.msra.mxu0 0
    %736 = vmatprep.subr.bf16.mxu0 0
    %737 = vmatpush1.bf16.msra.mxu0 0
    %738 = vmatprep.subr.bf16.mxu0 0
    %739 = vmatpush1.bf16.msra.mxu0 0
    %740 = vmatprep.mubr.bf16.mxu0 0
    %741 = vmatmul.mubr.bf16.gmra.mrb[0].mxu0 %v421
    %v742 = vpop.f32.mrb[0].mxu0
    %v743 = vadd.f32 %v473, %v742
    %v744 = vpop.f32.mrb[0].mxu0
    %v745 = vpop.f32.mrb[0].mxu0
    %v746 = vadd.f32 %v473, %v745
    %v747 = vpop.f32.mrb[0].mxu0
    %748 = vmatprep.mubr.bf16.mxu0 0
    %749 = vmatmul.mubr.bf16.gmra.mrb[0].mxu0 %v422
    %v750 = vpop.f32.mrb[0].mxu0
    %v751 = vadd.f32 %v473, %v750
    %v752 = vpop.f32.mrb[0].mxu0
    %v753 = vpop.f32.mrb[0].mxu0
    %v754 = vadd.f32 %v473, %v753
    %v755 = vpop.f32.mrb[0].mxu0
    %756 = vmatprep.mubr.bf16.mxu0 0
    %757 = vmatmul.mubr.bf16.gmra.mrb[0].mxu0 %v423
    %v758 = vpop.f32.mrb[0].mxu0
    %v759 = vadd.f32 %v473, %v758
    %v760 = vpop.f32.mrb[0].mxu0
    %v761 = vpop.f32.mrb[0].mxu0
    %v762 = vadd.f32 %v473, %v761
    %v763 = vpop.f32.mrb[0].mxu0
    %764 = vmatprep.mubr.bf16.mxu0 0
    %765 = vmatmul.mubr.bf16.gmra.mrb[0].mxu0 %v424
    %v766 = vpop.f32.mrb[0].mxu0
    %v767 = vadd.f32 %v473, %v766
    %v768 = vpop.f32.mrb[0].mxu0
    %v769 = vpop.f32.mrb[0].mxu0
    %v770 = vadd.f32 %v473, %v769
    %v771 = vpop.f32.mrb[0].mxu0
    %772 = vmatprep.mubr.bf16.mxu0 0
    %773 = vmatmul.mubr.bf16.gmra.mrb[0].mxu0 %v425
    %v774 = vpop.f32.mrb[0].mxu0
    %v775 = vadd.f32 %v473, %v774
    %v776 = vpop.f32.mrb[0].mxu0
    %v777 = vpop.f32.mrb[0].mxu0
    %v778 = vadd.f32 %v473, %v777
    %v779 = vpop.f32.mrb[0].mxu0
    %780 = vmatprep.mubr.bf16.mxu0 0
    %781 = vmatmul.mubr.bf16.gmra.mrb[0].mxu0 %v426
    %v782 = vpop.f32.mrb[0].mxu0
    %v783 = vadd.f32 %v473, %v782
    %v784 = vpop.f32.mrb[0].mxu0
    %v785 = vpop.f32.mrb[0].mxu0
    %v786 = vadd.f32 %v473, %v785
    %v787 = vpop.f32.mrb[0].mxu0
    %788 = vmatprep.mubr.bf16.mxu0 0
    %789 = vmatmul.mubr.bf16.gmra.mrb[0].mxu0 %v427
    %v790 = vpop.f32.mrb[0].mxu0
    %v791 = vadd.f32 %v473, %v790
    %v792 = vpop.f32.mrb[0].mxu0
    %v793 = vpop.f32.mrb[0].mxu0
    %v794 = vadd.f32 %v473, %v793
    %v795 = vpop.f32.mrb[0].mxu0
    %796 = vdwg.mxu0
    %797 = vst [vmem:[#allocation2] sm:$0xff] %v640
    %798 = vst [vmem:[#allocation2 + $0x8] sm:$0xff] %v642
    %799 = vst [vmem:[#allocation2 + $0x10] sm:$0xff] %v743
    %800 = vst [vmem:[#allocation2 + $0x18] sm:$0xff] %v644
    %801 = vst [vmem:[#allocation2 + $0x20] sm:$0xff] %v646
    %802 = vst [vmem:[#allocation2 + $0x28] sm:$0xff] %v746
    %803 = vst [vmem:[#allocation2 + $0x30] sm:$0xff] %v650
    %804 = vst [vmem:[#allocation2 + $0x38] sm:$0xff] %v652
    %805 = vst [vmem:[#allocation2 + $0x40] sm:$0xff] %v751
    %806 = vst [vmem:[#allocation2 + $0x48] sm:$0xff] %v654
    %807 = vst [vmem:[#allocation2 + $0x50] sm:$0xff] %v656
    %808 = vst [vmem:[#allocation2 + $0x58] sm:$0xff] %v754
    %809 = vst [vmem:[#allocation2 + $0x60] sm:$0xff] %v660
    %810 = vst [vmem:[#allocation2 + $0x68] sm:$0xff] %v662
    %811 = vst [vmem:[#allocation2 + $0x70] sm:$0xff] %v759
    %812 = vst [vmem:[#allocation2 + $0x78] sm:$0xff] %v664
    %813 = vst [vmem:[#allocation2 + $0x80] sm:$0xff] %v666
    %814 = vst [vmem:[#allocation2 + $0x88] sm:$0xff] %v762
    %815 = vst [vmem:[#allocation2 + $0x90] sm:$0xff] %v670
    %816 = vst [vmem:[#allocation2 + $0x98] sm:$0xff] %v672
    %817 = vst [vmem:[#allocation2 + $0xa0] sm:$0xff] %v767
    %818 = vst [vmem:[#allocation2 + $0xa8] sm:$0xff] %v674
    %819 = vst [vmem:[#allocation2 + $0xb0] sm:$0xff] %v676
    %820 = vst [vmem:[#allocation2 + $0xb8] sm:$0xff] %v770
    %821 = vst [vmem:[#allocation2 + $0xc0] sm:$0xff] %v680
    %822 = vst [vmem:[#allocation2 + $0xc8] sm:$0xff] %v682
    %823 = vst [vmem:[#allocation2 + $0xd0] sm:$0xff] %v775
    %824 = vst [vmem:[#allocation2 + $0xd8] sm:$0xff] %v684
    %825 = vst [vmem:[#allocation2 + $0xe0] sm:$0xff] %v686
    %826 = vst [vmem:[#allocation2 + $0xe8] sm:$0xff] %v778
    %827 = vst [vmem:[#allocation2 + $0xf0] sm:$0xff] %v690
    %828 = vst [vmem:[#allocation2 + $0xf8] sm:$0xff] %v692
    %829 = vst [vmem:[#allocation2 + $0x100] sm:$0xff] %v783
    %830 = vst [vmem:[#allocation2 + $0x108] sm:$0xff] %v694
    %831 = vst [vmem:[#allocation2 + $0x110] sm:$0xff] %v696
    %832 = vst [vmem:[#allocation2 + $0x118] sm:$0xff] %v786
    %833 = vst [vmem:[#allocation2 + $0x120] sm:$0xff] %v700
    %834 = vst [vmem:[#allocation2 + $0x128] sm:$0xff] %v702
    %835 = vst [vmem:[#allocation2 + $0x130] sm:$0xff] %v791
    %836 = vst [vmem:[#allocation2 + $0x138] sm:$0xff] %v704
    %837 = vst [vmem:[#allocation2 + $0x140] sm:$0xff] %v706
    %838 = vst [vmem:[#allocation2 + $0x148] sm:$0xff] %v794
    %v839 = vld [vmem:[%s8] sm:$0x1]
    %v840 = vld [vmem:[%s4] sm:$0xff]
    %s841 = smul.u32 0, 3
    %s842 = smul.addr %s841, 8
    %s843 = scalar_lea.vmem [#allocation2], %s842
    %v844 = vld [vmem:[%s843] sm:$0xff]
    %v845 = vld [vmem:[%s843 + $0x8] sm:$0xff]
    %v846 = vld [vmem:[%s843 + $0x10] sm:$0xff]
    %v847 = vpack.c.bf16 %v840, %v840
    %v848 = vld [vmem:[#allocation7] sm:$0xff]
    %v849 = vld [vmem:[#allocation7 + $0x8] sm:$0xf]
    %v850 = vld [vmem:[#allocation7 + $0xc] sm:$0xff]
    %v851 = vld [vmem:[#allocation7 + $0x14] sm:$0xf]
    %v852 = vld [vmem:[#allocation7 + $0x18] sm:$0xff]
    %v853 = vld [vmem:[#allocation7 + $0x20] sm:$0xf]
    %v854 = vld [vmem:[#allocation7 + $0x24] sm:$0xff]
    %v855 = vld [vmem:[#allocation7 + $0x2c] sm:$0xf]
    %v856 = vld [vmem:[#allocation7 + $0x30] sm:$0xff]
    %v857 = vld [vmem:[#allocation7 + $0x38] sm:$0xf]
    %v858 = vld [vmem:[#allocation7 + $0x3c] sm:$0xff]
    %v859 = vld [vmem:[#allocation7 + $0x44] sm:$0xf]
    %v860 = vld [vmem:[#allocation7 + $0x48] sm:$0xff]
    %v861 = vld [vmem:[#allocation7 + $0x50] sm:$0xf]
    %v862 = vld [vmem:[#allocation7 + $0x54] sm:$0xff]
    %v863 = vld [vmem:[#allocation7 + $0x5c] sm:$0xf]
    %v864 = vld [vmem:[#allocation7 + $0x60] sm:$0xff]
    %v865 = vld [vmem:[#allocation7 + $0x68] sm:$0xf]
    %v866 = vld [vmem:[#allocation7 + $0x6c] sm:$0xff]
    %v867 = vld [vmem:[#allocation7 + $0x74] sm:$0xf]
    %v868 = vld [vmem:[#allocation7 + $0x78] sm:$0xff]
    %v869 = vld [vmem:[#allocation7 + $0x80] sm:$0xf]
    %v870 = vld [vmem:[#allocation7 + $0x84] sm:$0xff]
    %v871 = vld [vmem:[#allocation7 + $0x8c] sm:$0xf]
    %v872 = vld [vmem:[#allocation7 + $0x90] sm:$0xff]
    %v873 = vld [vmem:[#allocation7 + $0x98] sm:$0xf]
    %v874 = vld [vmem:[#allocation7 + $0x9c] sm:$0xff]
    %v875 = vld [vmem:[#allocation7 + $0xa4] sm:$0xf]
    %v876 = vld [vmem:[#allocation7 + $0xa8] sm:$0xff]
    %v877 = vld [vmem:[#allocation7 + $0xb0] sm:$0xf]
    %v878 = vld [vmem:[#allocation7 + $0xb4] sm:$0xff]
    %v879 = vld [vmem:[#allocation7 + $0xbc] sm:$0xf]
    %v912 = vunpack.c.l.b16 %v848
    %v913 = vunpack.c.h.b16 %v848
    %v914 = vunpack.c.l.b16 %v849
    %v915 = vunpack.c.l.b16 %v850
    %v916 = vunpack.c.h.b16 %v850
    %v917 = vunpack.c.l.b16 %v851
    %v918 = vunpack.c.l.b16 %v852
    %v919 = vunpack.c.h.b16 %v852
    %v920 = vunpack.c.l.b16 %v853
    %v921 = vunpack.c.l.b16 %v854
    %v922 = vunpack.c.h.b16 %v854
    %v923 = vunpack.c.l.b16 %v855
    %v924 = vunpack.c.l.b16 %v856
    %v925 = vunpack.c.h.b16 %v856
    %v926 = vunpack.c.l.b16 %v857
    %v927 = vunpack.c.l.b16 %v858
    %v928 = vunpack.c.h.b16 %v858
    %v929 = vunpack.c.l.b16 %v859
    %v930 = vunpack.c.l.b16 %v860
    %v931 = vunpack.c.h.b16 %v860
    %v932 = vunpack.c.l.b16 %v861
    %v933 = vunpack.c.l.b16 %v862
    %v934 = vunpack.c.h.b16 %v862
    %v935 = vunpack.c.l.b16 %v863
    %v936 = vunpack.c.l.b16 %v864
    %v937 = vunpack.c.h.b16 %v864
    %v938 = vunpack.c.l.b16 %v865
    %v939 = vunpack.c.l.b16 %v866
    %v940 = vunpack.c.h.b16 %v866
    %v941 = vunpack.c.l.b16 %v867
    %v942 = vunpack.c.l.b16 %v868
    %v943 = vunpack.c.h.b16 %v868
    %v944 = vunpack.c.l.b16 %v869
    %v945 = vunpack.c.l.b16 %v870
    %v946 = vunpack.c.h.b16 %v870
    %v947 = vunpack.c.l.b16 %v871
    %v948 = vunpack.c.l.b16 %v872
    %v949 = vunpack.c.h.b16 %v872
    %v950 = vunpack.c.l.b16 %v873
    %v951 = vunpack.c.l.b16 %v874
    %v952 = vunpack.c.h.b16 %v874
    %v953 = vunpack.c.l.b16 %v875
    %v954 = vunpack.c.l.b16 %v876
    %v955 = vunpack.c.h.b16 %v876
    %v956 = vunpack.c.l.b16 %v877
    %v957 = vunpack.c.l.b16 %v878
    %v958 = vunpack.c.h.b16 %v878
    %v959 = vunpack.c.l.b16 %v879
    %v960 = vpack.c.b16 %v915, %v912
    %v961 = vpack.c.b16 %v916, %v913
    %v962 = vpack.c.b16 %v917, %v914
    %v963 = vpack.c.b16 %v921, %v918
    %v964 = vpack.c.b16 %v922, %v919
    %v965 = vpack.c.b16 %v923, %v920
    %v966 = vpack.c.b16 %v927, %v924
    %v967 = vpack.c.b16 %v928, %v925
    %v968 = vpack.c.b16 %v929, %v926
    %v969 = vpack.c.b16 %v933, %v930
    %v970 = vpack.c.b16 %v934, %v931
    %v971 = vpack.c.b16 %v935, %v932
    %v972 = vpack.c.b16 %v939, %v936
    %v973 = vpack.c.b16 %v940, %v937
    %v974 = vpack.c.b16 %v941, %v938
    %v975 = vpack.c.b16 %v945, %v942
    %v976 = vpack.c.b16 %v946, %v943
    %v977 = vpack.c.b16 %v947, %v944
    %v978 = vpack.c.b16 %v951, %v948
    %v979 = vpack.c.b16 %v952, %v949
    %v980 = vpack.c.b16 %v953, %v950
    %v981 = vpack.c.b16 %v957, %v954
    %v982 = vpack.c.b16 %v958, %v955
    %v983 = vpack.c.b16 %v959, %v956
    %1008 = vmatprep.subr.bf16.mxu0 %v961
    %1009 = vmatpush1.bf16.msra.mxu0 %v960
    %1010 = vmatprep.subr.bf16.mxu0 %v964
    %1011 = vmatpush1.bf16.msra.mxu0 %v963
    %1012 = vmatprep.subr.bf16.mxu0 %v967
    %1013 = vmatpush1.bf16.msra.mxu0 %v966
    %1014 = vmatprep.subr.bf16.mxu0 %v970
    %1015 = vmatpush1.bf16.msra.mxu0 %v969
    %1016 = vmatprep.subr.bf16.mxu0 %v973
    %1017 = vmatpush1.bf16.msra.mxu0 %v972
    %1018 = vmatprep.subr.bf16.mxu0 %v976
    %1019 = vmatpush1.bf16.msra.mxu0 %v975
    %1020 = vmatprep.subr.bf16.mxu0 %v979
    %1021 = vmatpush1.bf16.msra.mxu0 %v978
    %1022 = vmatprep.subr.bf16.mxu0 %v982
    %1023 = vmatpush1.bf16.msra.mxu0 %v981
    %1024 = vmatprep.subr.bf16.mxu0 0
    %1025 = vmatpush1.bf16.msra.mxu0 0
    %1026 = vmatprep.subr.bf16.mxu0 0
    %1027 = vmatpush1.bf16.msra.mxu0 0
    %1028 = vmatprep.subr.bf16.mxu0 0
    %1029 = vmatpush1.bf16.msra.mxu0 0
    %1030 = vmatprep.subr.bf16.mxu0 0
    %1031 = vmatpush1.bf16.msra.mxu0 0
    %1032 = vmatprep.subr.bf16.mxu0 0
    %1033 = vmatpush1.bf16.msra.mxu0 0
    %1034 = vmatprep.subr.bf16.mxu0 0
    %1035 = vmatpush1.bf16.msra.mxu0 0
    %1036 = vmatprep.subr.bf16.mxu0 0
    %1037 = vmatpush1.bf16.msra.mxu0 0
    %1038 = vmatprep.subr.bf16.mxu0 0
    %1039 = vmatpush1.bf16.msra.mxu0 0
    %1040 = vmatprep.mubr.bf16.mxu0 0
    %1041 = vmatmul.mubr.bf16.gmra.mrb[0].mxu0 %v847
    %v1042 = vpop.f32.mrb[0].mxu0
    %v1043 = vadd.f32 0.0, %v1042
    %v1044 = vpop.f32.mrb[0].mxu0
    %v1045 = vadd.f32 0.0, %v1044
    %v1046 = vpop.f32.mrb[0].mxu0
    %v1047 = vpop.f32.mrb[0].mxu0
    %1048 = vdwg.mxu0
    %1049 = vmatprep.subr.bf16.mxu0 0
    %1050 = vmatpush1.bf16.msra.mxu0 %v962
    %1051 = vmatprep.subr.bf16.mxu0 0
    %1052 = vmatpush1.bf16.msra.mxu0 %v965
    %1053 = vmatprep.subr.bf16.mxu0 0
    %1054 = vmatpush1.bf16.msra.mxu0 %v968
    %1055 = vmatprep.subr.bf16.mxu0 0
    %1056 = vmatpush1.bf16.msra.mxu0 %v971
    %1057 = vmatprep.subr.bf16.mxu0 0
    %1058 = vmatpush1.bf16.msra.mxu0 %v974
    %1059 = vmatprep.subr.bf16.mxu0 0
    %1060 = vmatpush1.bf16.msra.mxu0 %v977
    %1061 = vmatprep.subr.bf16.mxu0 0
    %1062 = vmatpush1.bf16.msra.mxu0 %v980
    %1063 = vmatprep.subr.bf16.mxu0 0
    %1064 = vmatpush1.bf16.msra.mxu0 %v983
    %1065 = vmatprep.subr.bf16.mxu0 0
    %1066 = vmatpush1.bf16.msra.mxu0 0
    %1067 = vmatprep.subr.bf16.mxu0 0
    %1068 = vmatpush1.bf16.msra.mxu0 0
    %1069 = vmatprep.subr.bf16.mxu0 0
    %1070 = vmatpush1.bf16.msra.mxu0 0
    %1071 = vmatprep.subr.bf16.mxu0 0
    %1072 = vmatpush1.bf16.msra.mxu0 0
    %1073 = vmatprep.subr.bf16.mxu0 0
    %1074 = vmatpush1.bf16.msra.mxu0 0
    %1075 = vmatprep.subr.bf16.mxu0 0
    %1076 = vmatpush1.bf16.msra.mxu0 0
    %1077 = vmatprep.subr.bf16.mxu0 0
    %1078 = vmatpush1.bf16.msra.mxu0 0
    %1079 = vmatprep.subr.bf16.mxu0 0
    %1080 = vmatpush1.bf16.msra.mxu0 0
    %1081 = vmatprep.mubr.bf16.mxu0 0
    %1082 = vmatmul.mubr.bf16.gmra.mrb[0].mxu0 %v847
    %v1083 = vpop.f32.mrb[0].mxu0
    %v1084 = vadd.f32 0.0, %v1083
    %v1085 = vpop.f32.mrb[0].mxu0
    %v1086 = vpop.f32.mrb[0].mxu0
    %v1087 = vpop.f32.mrb[0].mxu0
    %1088 = vdwg.mxu0
    %v1089 = vadd.f32 %v844, %v1043
    %v1090 = vxor.u32 %v1089, 2147483648
    %v1091 = vmul.f32 %v1090, 1.442695
    %v1092 = vpow.pop %v1091
    %v1093 = vadd.f32 %v1092, 1.0
    %v1094 = vrcp.pop %v1093
    %v1095 = vmul.f32 1.0, %v1094
    %v1096 = vadd.f32 %v845, %v1045
    %v1097 = vxor.u32 %v1096, 2147483648
    %v1098 = vmul.f32 %v1097, 1.442695
    %v1099 = vpow.pop %v1098
    %v1100 = vadd.f32 %v1099, 1.0
    %v1101 = vrcp.pop %v1100
    %v1102 = vmul.f32 1.0, %v1101
    %v1104 = vlaneseq
    %v1105 = vshrl.u32 %v1104, 7
    %v1106 = vsub.s32 0, %v1105
    %v1107 = vrot.slane %v839, %v1106
    %v1109 = vadd.f32 %v1084, %v1107
    %v1110 = vmul.f32 %v1095, %v1109
    %v1111 = vadd.f32 %v846, %v1110
    %v1112 = vtanh.pop %v1111
    %v1113 = vsub.f32 1.0, %v1102
    %v1114 = vmul.f32 %v1113, %v1112
    %v1115 = vmul.f32 %v1102, %v840
    %v1116 = vadd.f32 %v1114, %v1115
    %1117 = vst [vmem:[#allocation3] sm:$0xff] %v1116
    %s1118 = smul.u32 1, 3
    %s1119 = smul.addr %s1118, 8
    %s1120 = scalar_lea.vmem [#allocation2], %s1119
    %v1121 = vld [vmem:[%s1120] sm:$0xff]
    %v1122 = vld [vmem:[%s1120 + $0x8] sm:$0xff]
    %v1123 = vld [vmem:[%s1120 + $0x10] sm:$0xff]
    %v1124 = vpack.c.bf16 %v1116, %v1116
    %v1125 = vld [vmem:[#allocation7] sm:$0xff]
    %v1126 = vld [vmem:[#allocation7 + $0x8] sm:$0xf]
    %v1127 = vld [vmem:[#allocation7 + $0xc] sm:$0xff]
    %v1128 = vld [vmem:[#allocation7 + $0x14] sm:$0xf]
    %v1129 = vld [vmem:[#allocation7 + $0x18] sm:$0xff]
    %v1130 = vld [vmem:[#allocation7 + $0x20] sm:$0xf]
    %v1131 = vld [vmem:[#allocation7 + $0x24] sm:$0xff]
    %v1132 = vld [vmem:[#allocation7 + $0x2c] sm:$0xf]
    %v1133 = vld [vmem:[#allocation7 + $0x30] sm:$0xff]
    %v1134 = vld [vmem:[#allocation7 + $0x38] sm:$0xf]
    %v1135 = vld [vmem:[#allocation7 + $0x3c] sm:$0xff]
    %v1136 = vld [vmem:[#allocation7 + $0x44] sm:$0xf]
    %v1137 = vld [vmem:[#allocation7 + $0x48] sm:$0xff]
    %v1138 = vld [vmem:[#allocation7 + $0x50] sm:$0xf]
    %v1139 = vld [vmem:[#allocation7 + $0x54] sm:$0xff]
    %v1140 = vld [vmem:[#allocation7 + $0x5c] sm:$0xf]
    %v1141 = vld [vmem:[#allocation7 + $0x60] sm:$0xff]
    %v1142 = vld [vmem:[#allocation7 + $0x68] sm:$0xf]
    %v1143 = vld [vmem:[#allocation7 + $0x6c] sm:$0xff]
    %v1144 = vld [vmem:[#allocation7 + $0x74] sm:$0xf]
    %v1145 = vld [vmem:[#allocation7 + $0x78] sm:$0xff]
    %v1146 = vld [vmem:[#allocation7 + $0x80] sm:$0xf]
    %v1147 = vld [vmem:[#allocation7 + $0x84] sm:$0xff]
    %v1148 = vld [vmem:[#allocation7 + $0x8c] sm:$0xf]
    %v1149 = vld [vmem:[#allocation7 + $0x90] sm:$0xff]
    %v1150 = vld [vmem:[#allocation7 + $0x98] sm:$0xf]
    %v1151 = vld [vmem:[#allocation7 + $0x9c] sm:$0xff]
    %v1152 = vld [vmem:[#allocation7 + $0xa4] sm:$0xf]
    %v1153 = vld [vmem:[#allocation7 + $0xa8] sm:$0xff]
    %v1154 = vld [vmem:[#allocation7 + $0xb0] sm:$0xf]
    %v1155 = vld [vmem:[#allocation7 + $0xb4] sm:$0xff]
    %v1156 = vld [vmem:[#allocation7 + $0xbc] sm:$0xf]
    %v1189 = vunpack.c.l.b16 %v1125
    %v1190 = vunpack.c.h.b16 %v1125
    %v1191 = vunpack.c.l.b16 %v1126
    %v1192 = vunpack.c.l.b16 %v1127
    %v1193 = vunpack.c.h.b16 %v1127
    %v1194 = vunpack.c.l.b16 %v1128
    %v1195 = vunpack.c.l.b16 %v1129
    %v1196 = vunpack.c.h.b16 %v1129
    %v1197 = vunpack.c.l.b16 %v1130
    %v1198 = vunpack.c.l.b16 %v1131
    %v1199 = vunpack.c.h.b16 %v1131
    %v1200 = vunpack.c.l.b16 %v1132
    %v1201 = vunpack.c.l.b16 %v1133
    %v1202 = vunpack.c.h.b16 %v1133
    %v1203 = vunpack.c.l.b16 %v1134
    %v1204 = vunpack.c.l.b16 %v1135
    %v1205 = vunpack.c.h.b16 %v1135
    %v1206 = vunpack.c.l.b16 %v1136
    %v1207 = vunpack.c.l.b16 %v1137
    %v1208 = vunpack.c.h.b16 %v1137
    %v1209 = vunpack.c.l.b16 %v1138
    %v1210 = vunpack.c.l.b16 %v1139
    %v1211 = vunpack.c.h.b16 %v1139
    %v1212 = vunpack.c.l.b16 %v1140
    %v1213 = vunpack.c.l.b16 %v1141
    %v1214 = vunpack.c.h.b16 %v1141
    %v1215 = vunpack.c.l.b16 %v1142
    %v1216 = vunpack.c.l.b16 %v1143
    %v1217 = vunpack.c.h.b16 %v1143
    %v1218 = vunpack.c.l.b16 %v1144
    %v1219 = vunpack.c.l.b16 %v1145
    %v1220 = vunpack.c.h.b16 %v1145
    %v1221 = vunpack.c.l.b16 %v1146
    %v1222 = vunpack.c.l.b16 %v1147
    %v1223 = vunpack.c.h.b16 %v1147
    %v1224 = vunpack.c.l.b16 %v1148
    %v1225 = vunpack.c.l.b16 %v1149
    %v1226 = vunpack.c.h.b16 %v1149
    %v1227 = vunpack.c.l.b16 %v1150
    %v1228 = vunpack.c.l.b16 %v1151
    %v1229 = vunpack.c.h.b16 %v1151
    %v1230 = vunpack.c.l.b16 %v1152
    %v1231 = vunpack.c.l.b16 %v1153
    %v1232 = vunpack.c.h.b16 %v1153
    %v1233 = vunpack.c.l.b16 %v1154
    %v1234 = vunpack.c.l.b16 %v1155
    %v1235 = vunpack.c.h.b16 %v1155
    %v1236 = vunpack.c.l.b16 %v1156
    %v1237 = vpack.c.b16 %v1192, %v1189
    %v1238 = vpack.c.b16 %v1193, %v1190
    %v1239 = vpack.c.b16 %v1194, %v1191
    %v1240 = vpack.c.b16 %v1198, %v1195
    %v1241 = vpack.c.b16 %v1199, %v1196
    %v1242 = vpack.c.b16 %v1200, %v1197
    %v1243 = vpack.c.b16 %v1204, %v1201
    %v1244 = vpack.c.b16 %v1205, %v1202
    %v1245 = vpack.c.b16 %v1206, %v1203
    %v1246 = vpack.c.b16 %v1210, %v1207
    %v1247 = vpack.c.b16 %v1211, %v1208
    %v1248 = vpack.c.b16 %v1212, %v1209
    %v1249 = vpack.c.b16 %v1216, %v1213
    %v1250 = vpack.c.b16 %v1217, %v1214
    %v1251 = vpack.c.b16 %v1218, %v1215
    %v1252 = vpack.c.b16 %v1222, %v1219
    %v1253 = vpack.c.b16 %v1223, %v1220
    %v1254 = vpack.c.b16 %v1224, %v1221
    %v1255 = vpack.c.b16 %v1228, %v1225
    %v1256 = vpack.c.b16 %v1229, %v1226
    %v1257 = vpack.c.b16 %v1230, %v1227
    %v1258 = vpack.c.b16 %v1234, %v1231
    %v1259 = vpack.c.b16 %v1235, %v1232
    %v1260 = vpack.c.b16 %v1236, %v1233
    %1285 = vmatprep.subr.bf16.mxu0 %v1238
    %1286 = vmatpush1.bf16.msra.mxu0 %v1237
    %1287 = vmatprep.subr.bf16.mxu0 %v1241
    %1288 = vmatpush1.bf16.msra.mxu0 %v1240
    %1289 = vmatprep.subr.bf16.mxu0 %v1244
    %1290 = vmatpush1.bf16.msra.mxu0 %v1243
    %1291 = vmatprep.subr.bf16.mxu0 %v1247
    %1292 = vmatpush1.bf16.msra.mxu0 %v1246
    %1293 = vmatprep.subr.bf16.mxu0 %v1250
    %1294 = vmatpush1.bf16.msra.mxu0 %v1249
    %1295 = vmatprep.subr.bf16.mxu0 %v1253
    %1296 = vmatpush1.bf16.msra.mxu0 %v1252
    %1297 = vmatprep.subr.bf16.mxu0 %v1256
    %1298 = vmatpush1.bf16.msra.mxu0 %v1255
    %1299 = vmatprep.subr.bf16.mxu0 %v1259
    %1300 = vmatpush1.bf16.msra.mxu0 %v1258
    %1301 = vmatprep.subr.bf16.mxu0 0
    %1302 = vmatpush1.bf16.msra.mxu0 0
    %1303 = vmatprep.subr.bf16.mxu0 0
    %1304 = vmatpush1.bf16.msra.mxu0 0
    %1305 = vmatprep.subr.bf16.mxu0 0
    %1306 = vmatpush1.bf16.msra.mxu0 0
    %1307 = vmatprep.subr.bf16.mxu0 0
    %1308 = vmatpush1.bf16.msra.mxu0 0
    %1309 = vmatprep.subr.bf16.mxu0 0
    %1310 = vmatpush1.bf16.msra.mxu0 0
    %1311 = vmatprep.subr.bf16.mxu0 0
    %1312 = vmatpush1.bf16.msra.mxu0 0
    %1313 = vmatprep.subr.bf16.mxu0 0
    %1314 = vmatpush1.bf16.msra.mxu0 0
    %1315 = vmatprep.subr.bf16.mxu0 0
    %1316 = vmatpush1.bf16.msra.mxu0 0
    %1317 = vmatprep.mubr.bf16.mxu0 0
    %1318 = vmatmul.mubr.bf16.gmra.mrb[0].mxu0 %v1124
    %v1319 = vpop.f32.mrb[0].mxu0
    %v1320 = vadd.f32 0.0, %v1319
    %v1321 = vpop.f32.mrb[0].mxu0
    %v1322 = vadd.f32 0.0, %v1321
    %v1323 = vpop.f32.mrb[0].mxu0
    %v1324 = vpop.f32.mrb[0].mxu0
    %1325 = vdwg.mxu0
    %1326 = vmatprep.subr.bf16.mxu0 0
    %1327 = vmatpush1.bf16.msra.mxu0 %v1239
    %1328 = vmatprep.subr.bf16.mxu0 0
    %1329 = vmatpush1.bf16.msra.mxu0 %v1242
    %1330 = vmatprep.subr.bf16.mxu0 0
    %1331 = vmatpush1.bf16.msra.mxu0 %v1245
    %1332 = vmatprep.subr.bf16.mxu0 0
    %1333 = vmatpush1.bf16.msra.mxu0 %v1248
    %1334 = vmatprep.subr.bf16.mxu0 0
    %1335 = vmatpush1.bf16.msra.mxu0 %v1251
    %1336 = vmatprep.subr.bf16.mxu0 0
    %1337 = vmatpush1.bf16.msra.mxu0 %v1254
    %1338 = vmatprep.subr.bf16.mxu0 0
    %1339 = vmatpush1.bf16.msra.mxu0 %v1257
    %1340 = vmatprep.subr.bf16.mxu0 0
    %1341 = vmatpush1.bf16.msra.mxu0 %v1260
    %1342 = vmatprep.subr.bf16.mxu0 0
    %1343 = vmatpush1.bf16.msra.mxu0 0
    %1344 = vmatprep.subr.bf16.mxu0 0
    %1345 = vmatpush1.bf16.msra.mxu0 0
    %1346 = vmatprep.subr.bf16.mxu0 0
    %1347 = vmatpush1.bf16.msra.mxu0 0
    %1348 = vmatprep.subr.bf16.mxu0 0
    %1349 = vmatpush1.bf16.msra.mxu0 0
    %1350 = vmatprep.subr.bf16.mxu0 0
    %1351 = vmatpush1.bf16.msra.mxu0 0
    %1352 = vmatprep.subr.bf16.mxu0 0
    %1353 = vmatpush1.bf16.msra.mxu0 0
    %1354 = vmatprep.subr.bf16.mxu0 0
    %1355 = vmatpush1.bf16.msra.mxu0 0
    %1356 = vmatprep.subr.bf16.mxu0 0
    %1357 = vmatpush1.bf16.msra.mxu0 0
    %1358 = vmatprep.mubr.bf16.mxu0 0
    %1359 = vmatmul.mubr.bf16.gmra.mrb[0].mxu0 %v1124
    %v1360 = vpop.f32.mrb[0].mxu0
    %v1361 = vadd.f32 0.0, %v1360
    %v1362 = vpop.f32.mrb[0].mxu0
    %v1363 = vpop.f32.mrb[0].mxu0
    %v1364 = vpop.f32.mrb[0].mxu0
    %1365 = vdwg.mxu0
    %v1366 = vadd.f32 %v1121, %v1320
    %v1367 = vxor.u32 %v1366, 2147483648
    %v1368 = vmul.f32 %v1367, 1.442695
    %v1369 = vpow.pop %v1368
    %v1370 = vadd.f32 %v1369, 1.0
    %v1371 = vrcp.pop %v1370
    %v1372 = vmul.f32 1.0, %v1371
    %v1373 = vadd.f32 %v1122, %v1322
    %v1374 = vxor.u32 %v1373, 2147483648
    %v1375 = vmul.f32 %v1374, 1.442695
    %v1376 = vpow.pop %v1375
    %v1377 = vadd.f32 %v1376, 1.0
    %v1378 = vrcp.pop %v1377
    %v1379 = vmul.f32 1.0, %v1378
    %v1380 = vadd.f32 %v1361, %v1107
    %v1381 = vmul.f32 %v1372, %v1380
    %v1382 = vadd.f32 %v1123, %v1381
    %v1383 = vtanh.pop %v1382
    %v1384 = vsub.f32 1.0, %v1379
    %v1385 = vmul.f32 %v1384, %v1383
    %v1386 = vmul.f32 %v1379, %v1116
    %v1387 = vadd.f32 %v1385, %v1386
    %s1388 = scalar_lea.vmem [#allocation3], 8
    %1389 = vst [vmem:[%s1388] sm:$0xff] %v1387
    %s1390 = smul.u32 2, 3
    %s1391 = smul.addr %s1390, 8
    %s1392 = scalar_lea.vmem [#allocation2], %s1391
    %v1393 = vld [vmem:[%s1392] sm:$0xff]
    %v1394 = vld [vmem:[%s1392 + $0x8] sm:$0xff]
    %v1395 = vld [vmem:[%s1392 + $0x10] sm:$0xff]
    %v1396 = vpack.c.bf16 %v1387, %v1387
    %v1397 = vld [vmem:[#allocation7] sm:$0xff]
    %v1398 = vld [vmem:[#allocation7 + $0x8] sm:$0xf]
    %v1399 = vld [vmem:[#allocation7 + $0xc] sm:$0xff]
    %v1400 = vld [vmem:[#allocation7 + $0x14] sm:$0xf]
    %v1401 = vld [vmem:[#allocation7 + $0x18] sm:$0xff]
    %v1402 = vld [vmem:[#allocation7 + $0x20] sm:$0xf]
    %v1403 = vld [vmem:[#allocation7 + $0x24] sm:$0xff]
    %v1404 = vld [vmem:[#allocation7 + $0x2c] sm:$0xf]
    %v1405 = vld [vmem:[#allocation7 + $0x30] sm:$0xff]
    %v1406 = vld [vmem:[#allocation7 + $0x38] sm:$0xf]
    %v1407 = vld [vmem:[#allocation7 + $0x3c] sm:$0xff]
    %v1408 = vld [vmem:[#allocation7 + $0x44] sm:$0xf]
    %v1409 = vld [vmem:[#allocation7 + $0x48] sm:$0xff]
    %v1410 = vld [vmem:[#allocation7 + $0x50] sm:$0xf]
    %v1411 = vld [vmem:[#allocation7 + $0x54] sm:$0xff]
    %v1412 = vld [vmem:[#allocation7 + $0x5c] sm:$0xf]
    %v1413 = vld [vmem:[#allocation7 + $0x60] sm:$0xff]
    %v1414 = vld [vmem:[#allocation7 + $0x68] sm:$0xf]
    %v1415 = vld [vmem:[#allocation7 + $0x6c] sm:$0xff]
    %v1416 = vld [vmem:[#allocation7 + $0x74] sm:$0xf]
    %v1417 = vld [vmem:[#allocation7 + $0x78] sm:$0xff]
    %v1418 = vld [vmem:[#allocation7 + $0x80] sm:$0xf]
    %v1419 = vld [vmem:[#allocation7 + $0x84] sm:$0xff]
    %v1420 = vld [vmem:[#allocation7 + $0x8c] sm:$0xf]
    %v1421 = vld [vmem:[#allocation7 + $0x90] sm:$0xff]
    %v1422 = vld [vmem:[#allocation7 + $0x98] sm:$0xf]
    %v1423 = vld [vmem:[#allocation7 + $0x9c] sm:$0xff]
    %v1424 = vld [vmem:[#allocation7 + $0xa4] sm:$0xf]
    %v1425 = vld [vmem:[#allocation7 + $0xa8] sm:$0xff]
    %v1426 = vld [vmem:[#allocation7 + $0xb0] sm:$0xf]
    %v1427 = vld [vmem:[#allocation7 + $0xb4] sm:$0xff]
    %v1428 = vld [vmem:[#allocation7 + $0xbc] sm:$0xf]
    %v1461 = vunpack.c.l.b16 %v1397
    %v1462 = vunpack.c.h.b16 %v1397
    %v1463 = vunpack.c.l.b16 %v1398
    %v1464 = vunpack.c.l.b16 %v1399
    %v1465 = vunpack.c.h.b16 %v1399
    %v1466 = vunpack.c.l.b16 %v1400
    %v1467 = vunpack.c.l.b16 %v1401
    %v1468 = vunpack.c.h.b16 %v1401
    %v1469 = vunpack.c.l.b16 %v1402
    %v1470 = vunpack.c.l.b16 %v1403
    %v1471 = vunpack.c.h.b16 %v1403
    %v1472 = vunpack.c.l.b16 %v1404
    %v1473 = vunpack.c.l.b16 %v1405
    %v1474 = vunpack.c.h.b16 %v1405
    %v1475 = vunpack.c.l.b16 %v1406
    %v1476 = vunpack.c.l.b16 %v1407
    %v1477 = vunpack.c.h.b16 %v1407
    %v1478 = vunpack.c.l.b16 %v1408
    %v1479 = vunpack.c.l.b16 %v1409
    %v1480 = vunpack.c.h.b16 %v1409
    %v1481 = vunpack.c.l.b16 %v1410
    %v1482 = vunpack.c.l.b16 %v1411
    %v1483 = vunpack.c.h.b16 %v1411
    %v1484 = vunpack.c.l.b16 %v1412
    %v1485 = vunpack.c.l.b16 %v1413
    %v1486 = vunpack.c.h.b16 %v1413
    %v1487 = vunpack.c.l.b16 %v1414
    %v1488 = vunpack.c.l.b16 %v1415
    %v1489 = vunpack.c.h.b16 %v1415
    %v1490 = vunpack.c.l.b16 %v1416
    %v1491 = vunpack.c.l.b16 %v1417
    %v1492 = vunpack.c.h.b16 %v1417
    %v1493 = vunpack.c.l.b16 %v1418
    %v1494 = vunpack.c.l.b16 %v1419
    %v1495 = vunpack.c.h.b16 %v1419
    %v1496 = vunpack.c.l.b16 %v1420
    %v1497 = vunpack.c.l.b16 %v1421
    %v1498 = vunpack.c.h.b16 %v1421
    %v1499 = vunpack.c.l.b16 %v1422
    %v1500 = vunpack.c.l.b16 %v1423
    %v1501 = vunpack.c.h.b16 %v1423
    %v1502 = vunpack.c.l.b16 %v1424
    %v1503 = vunpack.c.l.b16 %v1425
    %v1504 = vunpack.c.h.b16 %v1425
    %v1505 = vunpack.c.l.b16 %v1426
    %v1506 = vunpack.c.l.b16 %v1427
    %v1507 = vunpack.c.h.b16 %v1427
    %v1508 = vunpack.c.l.b16 %v1428
    %v1509 = vpack.c.b16 %v1464, %v1461
    %v1510 = vpack.c.b16 %v1465, %v1462
    %v1511 = vpack.c.b16 %v1466, %v1463
    %v1512 = vpack.c.b16 %v1470, %v1467
    %v1513 = vpack.c.b16 %v1471, %v1468
    %v1514 = vpack.c.b16 %v1472, %v1469
    %v1515 = vpack.c.b16 %v1476, %v1473
    %v1516 = vpack.c.b16 %v1477, %v1474
    %v1517 = vpack.c.b16 %v1478, %v1475
    %v1518 = vpack.c.b16 %v1482, %v1479
    %v1519 = vpack.c.b16 %v1483, %v1480
    %v1520 = vpack.c.b16 %v1484, %v1481
    %v1521 = vpack.c.b16 %v1488, %v1485
    %v1522 = vpack.c.b16 %v1489, %v1486
    %v1523 = vpack.c.b16 %v1490, %v1487
    %v1524 = vpack.c.b16 %v1494, %v1491
    %v1525 = vpack.c.b16 %v1495, %v1492
    %v1526 = vpack.c.b16 %v1496, %v1493
    %v1527 = vpack.c.b16 %v1500, %v1497
    %v1528 = vpack.c.b16 %v1501, %v1498
    %v1529 = vpack.c.b16 %v1502, %v1499
    %v1530 = vpack.c.b16 %v1506, %v1503
    %v1531 = vpack.c.b16 %v1507, %v1504
    %v1532 = vpack.c.b16 %v1508, %v1505
    %1557 = vmatprep.subr.bf16.mxu0 %v1510
    %1558 = vmatpush1.bf16.msra.mxu0 %v1509
    %1559 = vmatprep.subr.bf16.mxu0 %v1513
    %1560 = vmatpush1.bf16.msra.mxu0 %v1512
    %1561 = vmatprep.subr.bf16.mxu0 %v1516
    %1562 = vmatpush1.bf16.msra.mxu0 %v1515
    %1563 = vmatprep.subr.bf16.mxu0 %v1519
    %1564 = vmatpush1.bf16.msra.mxu0 %v1518
    %1565 = vmatprep.subr.bf16.mxu0 %v1522
    %1566 = vmatpush1.bf16.msra.mxu0 %v1521
    %1567 = vmatprep.subr.bf16.mxu0 %v1525
    %1568 = vmatpush1.bf16.msra.mxu0 %v1524
    %1569 = vmatprep.subr.bf16.mxu0 %v1528
    %1570 = vmatpush1.bf16.msra.mxu0 %v1527
    %1571 = vmatprep.subr.bf16.mxu0 %v1531
    %1572 = vmatpush1.bf16.msra.mxu0 %v1530
    %1573 = vmatprep.subr.bf16.mxu0 0
    %1574 = vmatpush1.bf16.msra.mxu0 0
    %1575 = vmatprep.subr.bf16.mxu0 0
    %1576 = vmatpush1.bf16.msra.mxu0 0
    %1577 = vmatprep.subr.bf16.mxu0 0
    %1578 = vmatpush1.bf16.msra.mxu0 0
    %1579 = vmatprep.subr.bf16.mxu0 0
    %1580 = vmatpush1.bf16.msra.mxu0 0
    %1581 = vmatprep.subr.bf16.mxu0 0
    %1582 = vmatpush1.bf16.msra.mxu0 0
    %1583 = vmatprep.subr.bf16.mxu0 0
    %1584 = vmatpush1.bf16.msra.mxu0 0
    %1585 = vmatprep.subr.bf16.mxu0 0
    %1586 = vmatpush1.bf16.msra.mxu0 0
    %1587 = vmatprep.subr.bf16.mxu0 0
    %1588 = vmatpush1.bf16.msra.mxu0 0
    %1589 = vmatprep.mubr.bf16.mxu0 0
    %1590 = vmatmul.mubr.bf16.gmra.mrb[0].mxu0 %v1396
    %v1591 = vpop.f32.mrb[0].mxu0
    %v1592 = vadd.f32 0.0, %v1591
    %v1593 = vpop.f32.mrb[0].mxu0
    %v1594 = vadd.f32 0.0, %v1593
    %v1595 = vpop.f32.mrb[0].mxu0
    %v1596 = vpop.f32.mrb[0].mxu0
    %1597 = vdwg.mxu0
    %1598 = vmatprep.subr.bf16.mxu0 0
    %1599 = vmatpush1.bf16.msra.mxu0 %v1511
    %1600 = vmatprep.subr.bf16.mxu0 0
    %1601 = vmatpush1.bf16.msra.mxu0 %v1514
    %1602 = vmatprep.subr.bf16.mxu0 0
    %1603 = vmatpush1.bf16.msra.mxu0 %v1517
    %1604 = vmatprep.subr.bf16.mxu0 0
    %1605 = vmatpush1.bf16.msra.mxu0 %v1520
    %1606 = vmatprep.subr.bf16.mxu0 0
    %1607 = vmatpush1.bf16.msra.mxu0 %v1523
    %1608 = vmatprep.subr.bf16.mxu0 0
    %1609 = vmatpush1.bf16.msra.mxu0 %v1526
    %1610 = vmatprep.subr.bf16.mxu0 0
    %1611 = vmatpush1.bf16.msra.mxu0 %v1529
    %1612 = vmatprep.subr.bf16.mxu0 0
    %1613 = vmatpush1.bf16.msra.mxu0 %v1532
    %1614 = vmatprep.subr.bf16.mxu0 0
    %1615 = vmatpush1.bf16.msra.mxu0 0
    %1616 = vmatprep.subr.bf16.mxu0 0
    %1617 = vmatpush1.bf16.msra.mxu0 0
    %1618 = vmatprep.subr.bf16.mxu0 0
    %1619 = vmatpush1.bf16.msra.mxu0 0
    %1620 = vmatprep.subr.bf16.mxu0 0
    %1621 = vmatpush1.bf16.msra.mxu0 0
    %1622 = vmatprep.subr.bf16.mxu0 0
    %1623 = vmatpush1.bf16.msra.mxu0 0
    %1624 = vmatprep.subr.bf16.mxu0 0
    %1625 = vmatpush1.bf16.msra.mxu0 0
    %1626 = vmatprep.subr.bf16.mxu0 0
    %1627 = vmatpush1.bf16.msra.mxu0 0
    %1628 = vmatprep.subr.bf16.mxu0 0
    %1629 = vmatpush1.bf16.msra.mxu0 0
    %1630 = vmatprep.mubr.bf16.mxu0 0
    %1631 = vmatmul.mubr.bf16.gmra.mrb[0].mxu0 %v1396
    %v1632 = vpop.f32.mrb[0].mxu0
    %v1633 = vadd.f32 0.0, %v1632
    %v1634 = vpop.f32.mrb[0].mxu0
    %v1635 = vpop.f32.mrb[0].mxu0
    %v1636 = vpop.f32.mrb[0].mxu0
    %1637 = vdwg.mxu0
    %v1638 = vadd.f32 %v1393, %v1592
    %v1639 = vxor.u32 %v1638, 2147483648
    %v1640 = vmul.f32 %v1639, 1.442695
    %v1641 = vpow.pop %v1640
    %v1642 = vadd.f32 %v1641, 1.0
    %v1643 = vrcp.pop %v1642
    %v1644 = vmul.f32 1.0, %v1643
    %v1645 = vadd.f32 %v1394, %v1594
    %v1646 = vxor.u32 %v1645, 2147483648
    %v1647 = vmul.f32 %v1646, 1.442695
    %v1648 = vpow.pop %v1647
    %v1649 = vadd.f32 %v1648, 1.0
    %v1650 = vrcp.pop %v1649
    %v1651 = vmul.f32 1.0, %v1650
    %v1652 = vadd.f32 %v1633, %v1107
    %v1653 = vmul.f32 %v1644, %v1652
    %v1654 = vadd.f32 %v1395, %v1653
    %v1655 = vtanh.pop %v1654
    %v1656 = vsub.f32 1.0, %v1651
    %v1657 = vmul.f32 %v1656, %v1655
    %v1658 = vmul.f32 %v1651, %v1387
    %v1659 = vadd.f32 %v1657, %v1658
    %s1660 = scalar_lea.vmem [#allocation3], 16
    %1661 = vst [vmem:[%s1660] sm:$0xff] %v1659
    %s1662 = smul.u32 3, 3
    %s1663 = smul.addr %s1662, 8
    %s1664 = scalar_lea.vmem [#allocation2], %s1663
    %v1665 = vld [vmem:[%s1664] sm:$0xff]
    %v1666 = vld [vmem:[%s1664 + $0x8] sm:$0xff]
    %v1667 = vld [vmem:[%s1664 + $0x10] sm:$0xff]
    %v1668 = vpack.c.bf16 %v1659, %v1659
    %v1669 = vld [vmem:[#allocation7] sm:$0xff]
    %v1670 = vld [vmem:[#allocation7 + $0x8] sm:$0xf]
    %v1671 = vld [vmem:[#allocation7 + $0xc] sm:$0xff]
    %v1672 = vld [vmem:[#allocation7 + $0x14] sm:$0xf]
    %v1673 = vld [vmem:[#allocation7 + $0x18] sm:$0xff]
    %v1674 = vld [vmem:[#allocation7 + $0x20] sm:$0xf]
    %v1675 = vld [vmem:[#allocation7 + $0x24] sm:$0xff]
    %v1676 = vld [vmem:[#allocation7 + $0x2c] sm:$0xf]
    %v1677 = vld [vmem:[#allocation7 + $0x30] sm:$0xff]
    %v1678 = vld [vmem:[#allocation7 + $0x38] sm:$0xf]
    %v1679 = vld [vmem:[#allocation7 + $0x3c] sm:$0xff]
    %v1680 = vld [vmem:[#allocation7 + $0x44] sm:$0xf]
    %v1681 = vld [vmem:[#allocation7 + $0x48] sm:$0xff]
    %v1682 = vld [vmem:[#allocation7 + $0x50] sm:$0xf]
    %v1683 = vld [vmem:[#allocation7 + $0x54] sm:$0xff]
    %v1684 = vld [vmem:[#allocation7 + $0x5c] sm:$0xf]
    %v1685 = vld [vmem:[#allocation7 + $0x60] sm:$0xff]
    %v1686 = vld [vmem:[#allocation7 + $0x68] sm:$0xf]
    %v1687 = vld [vmem:[#allocation7 + $0x6c] sm:$0xff]
    %v1688 = vld [vmem:[#allocation7 + $0x74] sm:$0xf]
    %v1689 = vld [vmem:[#allocation7 + $0x78] sm:$0xff]
    %v1690 = vld [vmem:[#allocation7 + $0x80] sm:$0xf]
    %v1691 = vld [vmem:[#allocation7 + $0x84] sm:$0xff]
    %v1692 = vld [vmem:[#allocation7 + $0x8c] sm:$0xf]
    %v1693 = vld [vmem:[#allocation7 + $0x90] sm:$0xff]
    %v1694 = vld [vmem:[#allocation7 + $0x98] sm:$0xf]
    %v1695 = vld [vmem:[#allocation7 + $0x9c] sm:$0xff]
    %v1696 = vld [vmem:[#allocation7 + $0xa4] sm:$0xf]
    %v1697 = vld [vmem:[#allocation7 + $0xa8] sm:$0xff]
    %v1698 = vld [vmem:[#allocation7 + $0xb0] sm:$0xf]
    %v1699 = vld [vmem:[#allocation7 + $0xb4] sm:$0xff]
    %v1700 = vld [vmem:[#allocation7 + $0xbc] sm:$0xf]
    %v1733 = vunpack.c.l.b16 %v1669
    %v1734 = vunpack.c.h.b16 %v1669
    %v1735 = vunpack.c.l.b16 %v1670
    %v1736 = vunpack.c.l.b16 %v1671
    %v1737 = vunpack.c.h.b16 %v1671
    %v1738 = vunpack.c.l.b16 %v1672
    %v1739 = vunpack.c.l.b16 %v1673
    %v1740 = vunpack.c.h.b16 %v1673
    %v1741 = vunpack.c.l.b16 %v1674
    %v1742 = vunpack.c.l.b16 %v1675
    %v1743 = vunpack.c.h.b16 %v1675
    %v1744 = vunpack.c.l.b16 %v1676
    %v1745 = vunpack.c.l.b16 %v1677
    %v1746 = vunpack.c.h.b16 %v1677
    %v1747 = vunpack.c.l.b16 %v1678
    %v1748 = vunpack.c.l.b16 %v1679
    %v1749 = vunpack.c.h.b16 %v1679
    %v1750 = vunpack.c.l.b16 %v1680
    %v1751 = vunpack.c.l.b16 %v1681
    %v1752 = vunpack.c.h.b16 %v1681
    %v1753 = vunpack.c.l.b16 %v1682
    %v1754 = vunpack.c.l.b16 %v1683
    %v1755 = vunpack.c.h.b16 %v1683
    %v1756 = vunpack.c.l.b16 %v1684
    %v1757 = vunpack.c.l.b16 %v1685
    %v1758 = vunpack.c.h.b16 %v1685
    %v1759 = vunpack.c.l.b16 %v1686
    %v1760 = vunpack.c.l.b16 %v1687
    %v1761 = vunpack.c.h.b16 %v1687
    %v1762 = vunpack.c.l.b16 %v1688
    %v1763 = vunpack.c.l.b16 %v1689
    %v1764 = vunpack.c.h.b16 %v1689
    %v1765 = vunpack.c.l.b16 %v1690
    %v1766 = vunpack.c.l.b16 %v1691
    %v1767 = vunpack.c.h.b16 %v1691
    %v1768 = vunpack.c.l.b16 %v1692
    %v1769 = vunpack.c.l.b16 %v1693
    %v1770 = vunpack.c.h.b16 %v1693
    %v1771 = vunpack.c.l.b16 %v1694
    %v1772 = vunpack.c.l.b16 %v1695
    %v1773 = vunpack.c.h.b16 %v1695
    %v1774 = vunpack.c.l.b16 %v1696
    %v1775 = vunpack.c.l.b16 %v1697
    %v1776 = vunpack.c.h.b16 %v1697
    %v1777 = vunpack.c.l.b16 %v1698
    %v1778 = vunpack.c.l.b16 %v1699
    %v1779 = vunpack.c.h.b16 %v1699
    %v1780 = vunpack.c.l.b16 %v1700
    %v1781 = vpack.c.b16 %v1736, %v1733
    %v1782 = vpack.c.b16 %v1737, %v1734
    %v1783 = vpack.c.b16 %v1738, %v1735
    %v1784 = vpack.c.b16 %v1742, %v1739
    %v1785 = vpack.c.b16 %v1743, %v1740
    %v1786 = vpack.c.b16 %v1744, %v1741
    %v1787 = vpack.c.b16 %v1748, %v1745
    %v1788 = vpack.c.b16 %v1749, %v1746
    %v1789 = vpack.c.b16 %v1750, %v1747
    %v1790 = vpack.c.b16 %v1754, %v1751
    %v1791 = vpack.c.b16 %v1755, %v1752
    %v1792 = vpack.c.b16 %v1756, %v1753
    %v1793 = vpack.c.b16 %v1760, %v1757
    %v1794 = vpack.c.b16 %v1761, %v1758
    %v1795 = vpack.c.b16 %v1762, %v1759
    %v1796 = vpack.c.b16 %v1766, %v1763
    %v1797 = vpack.c.b16 %v1767, %v1764
    %v1798 = vpack.c.b16 %v1768, %v1765
    %v1799 = vpack.c.b16 %v1772, %v1769
    %v1800 = vpack.c.b16 %v1773, %v1770
    %v1801 = vpack.c.b16 %v1774, %v1771
    %v1802 = vpack.c.b16 %v1778, %v1775
    %v1803 = vpack.c.b16 %v1779, %v1776
    %v1804 = vpack.c.b16 %v1780, %v1777
    %1829 = vmatprep.subr.bf16.mxu0 %v1782
    %1830 = vmatpush1.bf16.msra.mxu0 %v1781
    %1831 = vmatprep.subr.bf16.mxu0 %v1785
    %1832 = vmatpush1.bf16.msra.mxu0 %v1784
    %1833 = vmatprep.subr.bf16.mxu0 %v1788
    %1834 = vmatpush1.bf16.msra.mxu0 %v1787
    %1835 = vmatprep.subr.bf16.mxu0 %v1791
    %1836 = vmatpush1.bf16.msra.mxu0 %v1790
    %1837 = vmatprep.subr.bf16.mxu0 %v1794
    %1838 = vmatpush1.bf16.msra.mxu0 %v1793
    %1839 = vmatprep.subr.bf16.mxu0 %v1797
    %1840 = vmatpush1.bf16.msra.mxu0 %v1796
    %1841 = vmatprep.subr.bf16.mxu0 %v1800
    %1842 = vmatpush1.bf16.msra.mxu0 %v1799
    %1843 = vmatprep.subr.bf16.mxu0 %v1803
    %1844 = vmatpush1.bf16.msra.mxu0 %v1802
    %1845 = vmatprep.subr.bf16.mxu0 0
    %1846 = vmatpush1.bf16.msra.mxu0 0
    %1847 = vmatprep.subr.bf16.mxu0 0
    %1848 = vmatpush1.bf16.msra.mxu0 0
    %1849 = vmatprep.subr.bf16.mxu0 0
    %1850 = vmatpush1.bf16.msra.mxu0 0
    %1851 = vmatprep.subr.bf16.mxu0 0
    %1852 = vmatpush1.bf16.msra.mxu0 0
    %1853 = vmatprep.subr.bf16.mxu0 0
    %1854 = vmatpush1.bf16.msra.mxu0 0
    %1855 = vmatprep.subr.bf16.mxu0 0
    %1856 = vmatpush1.bf16.msra.mxu0 0
    %1857 = vmatprep.subr.bf16.mxu0 0
    %1858 = vmatpush1.bf16.msra.mxu0 0
    %1859 = vmatprep.subr.bf16.mxu0 0
    %1860 = vmatpush1.bf16.msra.mxu0 0
    %1861 = vmatprep.mubr.bf16.mxu0 0
    %1862 = vmatmul.mubr.bf16.gmra.mrb[0].mxu0 %v1668
    %v1863 = vpop.f32.mrb[0].mxu0
    %v1864 = vadd.f32 0.0, %v1863
    %v1865 = vpop.f32.mrb[0].mxu0
    %v1866 = vadd.f32 0.0, %v1865
    %v1867 = vpop.f32.mrb[0].mxu0
    %v1868 = vpop.f32.mrb[0].mxu0
    %1869 = vdwg.mxu0
    %1870 = vmatprep.subr.bf16.mxu0 0
    %1871 = vmatpush1.bf16.msra.mxu0 %v1783
    %1872 = vmatprep.subr.bf16.mxu0 0
    %1873 = vmatpush1.bf16.msra.mxu0 %v1786
    %1874 = vmatprep.subr.bf16.mxu0 0
    %1875 = vmatpush1.bf16.msra.mxu0 %v1789
    %1876 = vmatprep.subr.bf16.mxu0 0
    %1877 = vmatpush1.bf16.msra.mxu0 %v1792
    %1878 = vmatprep.subr.bf16.mxu0 0
    %1879 = vmatpush1.bf16.msra.mxu0 %v1795
    %1880 = vmatprep.subr.bf16.mxu0 0
    %1881 = vmatpush1.bf16.msra.mxu0 %v1798
    %1882 = vmatprep.subr.bf16.mxu0 0
    %1883 = vmatpush1.bf16.msra.mxu0 %v1801
    %1884 = vmatprep.subr.bf16.mxu0 0
    %1885 = vmatpush1.bf16.msra.mxu0 %v1804
    %1886 = vmatprep.subr.bf16.mxu0 0
    %1887 = vmatpush1.bf16.msra.mxu0 0
    %1888 = vmatprep.subr.bf16.mxu0 0
    %1889 = vmatpush1.bf16.msra.mxu0 0
    %1890 = vmatprep.subr.bf16.mxu0 0
    %1891 = vmatpush1.bf16.msra.mxu0 0
    %1892 = vmatprep.subr.bf16.mxu0 0
    %1893 = vmatpush1.bf16.msra.mxu0 0
    %1894 = vmatprep.subr.bf16.mxu0 0
    %1895 = vmatpush1.bf16.msra.mxu0 0
    %1896 = vmatprep.subr.bf16.mxu0 0
    %1897 = vmatpush1.bf16.msra.mxu0 0
    %1898 = vmatprep.subr.bf16.mxu0 0
    %1899 = vmatpush1.bf16.msra.mxu0 0
    %1900 = vmatprep.subr.bf16.mxu0 0
    %1901 = vmatpush1.bf16.msra.mxu0 0
    %1902 = vmatprep.mubr.bf16.mxu0 0
    %1903 = vmatmul.mubr.bf16.gmra.mrb[0].mxu0 %v1668
    %v1904 = vpop.f32.mrb[0].mxu0
    %v1905 = vadd.f32 0.0, %v1904
    %v1906 = vpop.f32.mrb[0].mxu0
    %v1907 = vpop.f32.mrb[0].mxu0
    %v1908 = vpop.f32.mrb[0].mxu0
    %1909 = vdwg.mxu0
    %v1910 = vadd.f32 %v1665, %v1864
    %v1911 = vxor.u32 %v1910, 2147483648
    %v1912 = vmul.f32 %v1911, 1.442695
    %v1913 = vpow.pop %v1912
    %v1914 = vadd.f32 %v1913, 1.0
    %v1915 = vrcp.pop %v1914
    %v1916 = vmul.f32 1.0, %v1915
    %v1917 = vadd.f32 %v1666, %v1866
    %v1918 = vxor.u32 %v1917, 2147483648
    %v1919 = vmul.f32 %v1918, 1.442695
    %v1920 = vpow.pop %v1919
    %v1921 = vadd.f32 %v1920, 1.0
    %v1922 = vrcp.pop %v1921
    %v1923 = vmul.f32 1.0, %v1922
    %v1924 = vadd.f32 %v1905, %v1107
    %v1925 = vmul.f32 %v1916, %v1924
    %v1926 = vadd.f32 %v1667, %v1925
    %v1927 = vtanh.pop %v1926
    %v1928 = vsub.f32 1.0, %v1923
    %v1929 = vmul.f32 %v1928, %v1927
    %v1930 = vmul.f32 %v1923, %v1659
    %v1931 = vadd.f32 %v1929, %v1930
    %s1932 = scalar_lea.vmem [#allocation3], 24
    %1933 = vst [vmem:[%s1932] sm:$0xff] %v1931
    %s1934 = smul.u32 4, 3
    %s1935 = smul.addr %s1934, 8
    %s1936 = scalar_lea.vmem [#allocation2], %s1935
    %v1937 = vld [vmem:[%s1936] sm:$0xff]
    %v1938 = vld [vmem:[%s1936 + $0x8] sm:$0xff]
    %v1939 = vld [vmem:[%s1936 + $0x10] sm:$0xff]
    %v1940 = vpack.c.bf16 %v1931, %v1931
    %v1941 = vld [vmem:[#allocation7] sm:$0xff]
    %v1942 = vld [vmem:[#allocation7 + $0x8] sm:$0xf]
    %v1943 = vld [vmem:[#allocation7 + $0xc] sm:$0xff]
    %v1944 = vld [vmem:[#allocation7 + $0x14] sm:$0xf]
    %v1945 = vld [vmem:[#allocation7 + $0x18] sm:$0xff]
    %v1946 = vld [vmem:[#allocation7 + $0x20] sm:$0xf]
    %v1947 = vld [vmem:[#allocation7 + $0x24] sm:$0xff]
    %v1948 = vld [vmem:[#allocation7 + $0x2c] sm:$0xf]
    %v1949 = vld [vmem:[#allocation7 + $0x30] sm:$0xff]
    %v1950 = vld [vmem:[#allocation7 + $0x38] sm:$0xf]
    %v1951 = vld [vmem:[#allocation7 + $0x3c] sm:$0xff]
    %v1952 = vld [vmem:[#allocation7 + $0x44] sm:$0xf]
    %v1953 = vld [vmem:[#allocation7 + $0x48] sm:$0xff]
    %v1954 = vld [vmem:[#allocation7 + $0x50] sm:$0xf]
    %v1955 = vld [vmem:[#allocation7 + $0x54] sm:$0xff]
    %v1956 = vld [vmem:[#allocation7 + $0x5c] sm:$0xf]
    %v1957 = vld [vmem:[#allocation7 + $0x60] sm:$0xff]
    %v1958 = vld [vmem:[#allocation7 + $0x68] sm:$0xf]
    %v1959 = vld [vmem:[#allocation7 + $0x6c] sm:$0xff]
    %v1960 = vld [vmem:[#allocation7 + $0x74] sm:$0xf]
    %v1961 = vld [vmem:[#allocation7 + $0x78] sm:$0xff]
    %v1962 = vld [vmem:[#allocation7 + $0x80] sm:$0xf]
    %v1963 = vld [vmem:[#allocation7 + $0x84] sm:$0xff]
    %v1964 = vld [vmem:[#allocation7 + $0x8c] sm:$0xf]
    %v1965 = vld [vmem:[#allocation7 + $0x90] sm:$0xff]
    %v1966 = vld [vmem:[#allocation7 + $0x98] sm:$0xf]
    %v1967 = vld [vmem:[#allocation7 + $0x9c] sm:$0xff]
    %v1968 = vld [vmem:[#allocation7 + $0xa4] sm:$0xf]
    %v1969 = vld [vmem:[#allocation7 + $0xa8] sm:$0xff]
    %v1970 = vld [vmem:[#allocation7 + $0xb0] sm:$0xf]
    %v1971 = vld [vmem:[#allocation7 + $0xb4] sm:$0xff]
    %v1972 = vld [vmem:[#allocation7 + $0xbc] sm:$0xf]
    %v2005 = vunpack.c.l.b16 %v1941
    %v2006 = vunpack.c.h.b16 %v1941
    %v2007 = vunpack.c.l.b16 %v1942
    %v2008 = vunpack.c.l.b16 %v1943
    %v2009 = vunpack.c.h.b16 %v1943
    %v2010 = vunpack.c.l.b16 %v1944
    %v2011 = vunpack.c.l.b16 %v1945
    %v2012 = vunpack.c.h.b16 %v1945
    %v2013 = vunpack.c.l.b16 %v1946
    %v2014 = vunpack.c.l.b16 %v1947
    %v2015 = vunpack.c.h.b16 %v1947
    %v2016 = vunpack.c.l.b16 %v1948
    %v2017 = vunpack.c.l.b16 %v1949
    %v2018 = vunpack.c.h.b16 %v1949
    %v2019 = vunpack.c.l.b16 %v1950
    %v2020 = vunpack.c.l.b16 %v1951
    %v2021 = vunpack.c.h.b16 %v1951
    %v2022 = vunpack.c.l.b16 %v1952
    %v2023 = vunpack.c.l.b16 %v1953
    %v2024 = vunpack.c.h.b16 %v1953
    %v2025 = vunpack.c.l.b16 %v1954
    %v2026 = vunpack.c.l.b16 %v1955
    %v2027 = vunpack.c.h.b16 %v1955
    %v2028 = vunpack.c.l.b16 %v1956
    %v2029 = vunpack.c.l.b16 %v1957
    %v2030 = vunpack.c.h.b16 %v1957
    %v2031 = vunpack.c.l.b16 %v1958
    %v2032 = vunpack.c.l.b16 %v1959
    %v2033 = vunpack.c.h.b16 %v1959
    %v2034 = vunpack.c.l.b16 %v1960
    %v2035 = vunpack.c.l.b16 %v1961
    %v2036 = vunpack.c.h.b16 %v1961
    %v2037 = vunpack.c.l.b16 %v1962
    %v2038 = vunpack.c.l.b16 %v1963
    %v2039 = vunpack.c.h.b16 %v1963
    %v2040 = vunpack.c.l.b16 %v1964
    %v2041 = vunpack.c.l.b16 %v1965
    %v2042 = vunpack.c.h.b16 %v1965
    %v2043 = vunpack.c.l.b16 %v1966
    %v2044 = vunpack.c.l.b16 %v1967
    %v2045 = vunpack.c.h.b16 %v1967
    %v2046 = vunpack.c.l.b16 %v1968
    %v2047 = vunpack.c.l.b16 %v1969
    %v2048 = vunpack.c.h.b16 %v1969
    %v2049 = vunpack.c.l.b16 %v1970
    %v2050 = vunpack.c.l.b16 %v1971
    %v2051 = vunpack.c.h.b16 %v1971
    %v2052 = vunpack.c.l.b16 %v1972
    %v2053 = vpack.c.b16 %v2008, %v2005
    %v2054 = vpack.c.b16 %v2009, %v2006
    %v2055 = vpack.c.b16 %v2010, %v2007
    %v2056 = vpack.c.b16 %v2014, %v2011
    %v2057 = vpack.c.b16 %v2015, %v2012
    %v2058 = vpack.c.b16 %v2016, %v2013
    %v2059 = vpack.c.b16 %v2020, %v2017
    %v2060 = vpack.c.b16 %v2021, %v2018
    %v2061 = vpack.c.b16 %v2022, %v2019
    %v2062 = vpack.c.b16 %v2026, %v2023
    %v2063 = vpack.c.b16 %v2027, %v2024
    %v2064 = vpack.c.b16 %v2028, %v2025
    %v2065 = vpack.c.b16 %v2032, %v2029
    %v2066 = vpack.c.b16 %v2033, %v2030
    %v2067 = vpack.c.b16 %v2034, %v2031
    %v2068 = vpack.c.b16 %v2038, %v2035
    %v2069 = vpack.c.b16 %v2039, %v2036
    %v2070 = vpack.c.b16 %v2040, %v2037
    %v2071 = vpack.c.b16 %v2044, %v2041
    %v2072 = vpack.c.b16 %v2045, %v2042
    %v2073 = vpack.c.b16 %v2046, %v2043
    %v2074 = vpack.c.b16 %v2050, %v2047
    %v2075 = vpack.c.b16 %v2051, %v2048
    %v2076 = vpack.c.b16 %v2052, %v2049
    %2101 = vmatprep.subr.bf16.mxu0 %v2054
    %2102 = vmatpush1.bf16.msra.mxu0 %v2053
    %2103 = vmatprep.subr.bf16.mxu0 %v2057
    %2104 = vmatpush1.bf16.msra.mxu0 %v2056
    %2105 = vmatprep.subr.bf16.mxu0 %v2060
    %2106 = vmatpush1.bf16.msra.mxu0 %v2059
    %2107 = vmatprep.subr.bf16.mxu0 %v2063
    %2108 = vmatpush1.bf16.msra.mxu0 %v2062
    %2109 = vmatprep.subr.bf16.mxu0 %v2066
    %2110 = vmatpush1.bf16.msra.mxu0 %v2065
    %2111 = vmatprep.subr.bf16.mxu0 %v2069
    %2112 = vmatpush1.bf16.msra.mxu0 %v2068
    %2113 = vmatprep.subr.bf16.mxu0 %v2072
    %2114 = vmatpush1.bf16.msra.mxu0 %v2071
    %2115 = vmatprep.subr.bf16.mxu0 %v2075
    %2116 = vmatpush1.bf16.msra.mxu0 %v2074
    %2117 = vmatprep.subr.bf16.mxu0 0
    %2118 = vmatpush1.bf16.msra.mxu0 0
    %2119 = vmatprep.subr.bf16.mxu0 0
    %2120 = vmatpush1.bf16.msra.mxu0 0
    %2121 = vmatprep.subr.bf16.mxu0 0
    %2122 = vmatpush1.bf16.msra.mxu0 0
    %2123 = vmatprep.subr.bf16.mxu0 0
    %2124 = vmatpush1.bf16.msra.mxu0 0
    %2125 = vmatprep.subr.bf16.mxu0 0
    %2126 = vmatpush1.bf16.msra.mxu0 0
    %2127 = vmatprep.subr.bf16.mxu0 0
    %2128 = vmatpush1.bf16.msra.mxu0 0
    %2129 = vmatprep.subr.bf16.mxu0 0
    %2130 = vmatpush1.bf16.msra.mxu0 0
    %2131 = vmatprep.subr.bf16.mxu0 0
    %2132 = vmatpush1.bf16.msra.mxu0 0
    %2133 = vmatprep.mubr.bf16.mxu0 0
    %2134 = vmatmul.mubr.bf16.gmra.mrb[0].mxu0 %v1940
    %v2135 = vpop.f32.mrb[0].mxu0
    %v2136 = vadd.f32 0.0, %v2135
    %v2137 = vpop.f32.mrb[0].mxu0
    %v2138 = vadd.f32 0.0, %v2137
    %v2139 = vpop.f32.mrb[0].mxu0
    %v2140 = vpop.f32.mrb[0].mxu0
    %2141 = vdwg.mxu0
    %2142 = vmatprep.subr.bf16.mxu0 0
    %2143 = vmatpush1.bf16.msra.mxu0 %v2055
    %2144 = vmatprep.subr.bf16.mxu0 0
    %2145 = vmatpush1.bf16.msra.mxu0 %v2058
    %2146 = vmatprep.subr.bf16.mxu0 0
    %2147 = vmatpush1.bf16.msra.mxu0 %v2061
    %2148 = vmatprep.subr.bf16.mxu0 0
    %2149 = vmatpush1.bf16.msra.mxu0 %v2064
    %2150 = vmatprep.subr.bf16.mxu0 0
    %2151 = vmatpush1.bf16.msra.mxu0 %v2067
    %2152 = vmatprep.subr.bf16.mxu0 0
    %2153 = vmatpush1.bf16.msra.mxu0 %v2070
    %2154 = vmatprep.subr.bf16.mxu0 0
    %2155 = vmatpush1.bf16.msra.mxu0 %v2073
    %2156 = vmatprep.subr.bf16.mxu0 0
    %2157 = vmatpush1.bf16.msra.mxu0 %v2076
    %2158 = vmatprep.subr.bf16.mxu0 0
    %2159 = vmatpush1.bf16.msra.mxu0 0
    %2160 = vmatprep.subr.bf16.mxu0 0
    %2161 = vmatpush1.bf16.msra.mxu0 0
    %2162 = vmatprep.subr.bf16.mxu0 0
    %2163 = vmatpush1.bf16.msra.mxu0 0
    %2164 = vmatprep.subr.bf16.mxu0 0
    %2165 = vmatpush1.bf16.msra.mxu0 0
    %2166 = vmatprep.subr.bf16.mxu0 0
    %2167 = vmatpush1.bf16.msra.mxu0 0
    %2168 = vmatprep.subr.bf16.mxu0 0
    %2169 = vmatpush1.bf16.msra.mxu0 0
    %2170 = vmatprep.subr.bf16.mxu0 0
    %2171 = vmatpush1.bf16.msra.mxu0 0
    %2172 = vmatprep.subr.bf16.mxu0 0
    %2173 = vmatpush1.bf16.msra.mxu0 0
    %2174 = vmatprep.mubr.bf16.mxu0 0
    %2175 = vmatmul.mubr.bf16.gmra.mrb[0].mxu0 %v1940
    %v2176 = vpop.f32.mrb[0].mxu0
    %v2177 = vadd.f32 0.0, %v2176
    %v2178 = vpop.f32.mrb[0].mxu0
    %v2179 = vpop.f32.mrb[0].mxu0
    %v2180 = vpop.f32.mrb[0].mxu0
    %2181 = vdwg.mxu0
    %v2182 = vadd.f32 %v1937, %v2136
    %v2183 = vxor.u32 %v2182, 2147483648
    %v2184 = vmul.f32 %v2183, 1.442695
    %v2185 = vpow.pop %v2184
    %v2186 = vadd.f32 %v2185, 1.0
    %v2187 = vrcp.pop %v2186
    %v2188 = vmul.f32 1.0, %v2187
    %v2189 = vadd.f32 %v1938, %v2138
    %v2190 = vxor.u32 %v2189, 2147483648
    %v2191 = vmul.f32 %v2190, 1.442695
    %v2192 = vpow.pop %v2191
    %v2193 = vadd.f32 %v2192, 1.0
    %v2194 = vrcp.pop %v2193
    %v2195 = vmul.f32 1.0, %v2194
    %v2196 = vadd.f32 %v2177, %v1107
    %v2197 = vmul.f32 %v2188, %v2196
    %v2198 = vadd.f32 %v1939, %v2197
    %v2199 = vtanh.pop %v2198
    %v2200 = vsub.f32 1.0, %v2195
    %v2201 = vmul.f32 %v2200, %v2199
    %v2202 = vmul.f32 %v2195, %v1931
    %v2203 = vadd.f32 %v2201, %v2202
    %s2204 = scalar_lea.vmem [#allocation3], 32
    %2205 = vst [vmem:[%s2204] sm:$0xff] %v2203
    %s2206 = smul.u32 5, 3
    %s2207 = smul.addr %s2206, 8
    %s2208 = scalar_lea.vmem [#allocation2], %s2207
    %v2209 = vld [vmem:[%s2208] sm:$0xff]
    %v2210 = vld [vmem:[%s2208 + $0x8] sm:$0xff]
    %v2211 = vld [vmem:[%s2208 + $0x10] sm:$0xff]
    %v2212 = vpack.c.bf16 %v2203, %v2203
    %v2213 = vld [vmem:[#allocation7] sm:$0xff]
    %v2214 = vld [vmem:[#allocation7 + $0x8] sm:$0xf]
    %v2215 = vld [vmem:[#allocation7 + $0xc] sm:$0xff]
    %v2216 = vld [vmem:[#allocation7 + $0x14] sm:$0xf]
    %v2217 = vld [vmem:[#allocation7 + $0x18] sm:$0xff]
    %v2218 = vld [vmem:[#allocation7 + $0x20] sm:$0xf]
    %v2219 = vld [vmem:[#allocation7 + $0x24] sm:$0xff]
    %v2220 = vld [vmem:[#allocation7 + $0x2c] sm:$0xf]
    %v2221 = vld [vmem:[#allocation7 + $0x30] sm:$0xff]
    %v2222 = vld [vmem:[#allocation7 + $0x38] sm:$0xf]
    %v2223 = vld [vmem:[#allocation7 + $0x3c] sm:$0xff]
    %v2224 = vld [vmem:[#allocation7 + $0x44] sm:$0xf]
    %v2225 = vld [vmem:[#allocation7 + $0x48] sm:$0xff]
    %v2226 = vld [vmem:[#allocation7 + $0x50] sm:$0xf]
    %v2227 = vld [vmem:[#allocation7 + $0x54] sm:$0xff]
    %v2228 = vld [vmem:[#allocation7 + $0x5c] sm:$0xf]
    %v2229 = vld [vmem:[#allocation7 + $0x60] sm:$0xff]
    %v2230 = vld [vmem:[#allocation7 + $0x68] sm:$0xf]
    %v2231 = vld [vmem:[#allocation7 + $0x6c] sm:$0xff]
    %v2232 = vld [vmem:[#allocation7 + $0x74] sm:$0xf]
    %v2233 = vld [vmem:[#allocation7 + $0x78] sm:$0xff]
    %v2234 = vld [vmem:[#allocation7 + $0x80] sm:$0xf]
    %v2235 = vld [vmem:[#allocation7 + $0x84] sm:$0xff]
    %v2236 = vld [vmem:[#allocation7 + $0x8c] sm:$0xf]
    %v2237 = vld [vmem:[#allocation7 + $0x90] sm:$0xff]
    %v2238 = vld [vmem:[#allocation7 + $0x98] sm:$0xf]
    %v2239 = vld [vmem:[#allocation7 + $0x9c] sm:$0xff]
    %v2240 = vld [vmem:[#allocation7 + $0xa4] sm:$0xf]
    %v2241 = vld [vmem:[#allocation7 + $0xa8] sm:$0xff]
    %v2242 = vld [vmem:[#allocation7 + $0xb0] sm:$0xf]
    %v2243 = vld [vmem:[#allocation7 + $0xb4] sm:$0xff]
    %v2244 = vld [vmem:[#allocation7 + $0xbc] sm:$0xf]
    %v2277 = vunpack.c.l.b16 %v2213
    %v2278 = vunpack.c.h.b16 %v2213
    %v2279 = vunpack.c.l.b16 %v2214
    %v2280 = vunpack.c.l.b16 %v2215
    %v2281 = vunpack.c.h.b16 %v2215
    %v2282 = vunpack.c.l.b16 %v2216
    %v2283 = vunpack.c.l.b16 %v2217
    %v2284 = vunpack.c.h.b16 %v2217
    %v2285 = vunpack.c.l.b16 %v2218
    %v2286 = vunpack.c.l.b16 %v2219
    %v2287 = vunpack.c.h.b16 %v2219
    %v2288 = vunpack.c.l.b16 %v2220
    %v2289 = vunpack.c.l.b16 %v2221
    %v2290 = vunpack.c.h.b16 %v2221
    %v2291 = vunpack.c.l.b16 %v2222
    %v2292 = vunpack.c.l.b16 %v2223
    %v2293 = vunpack.c.h.b16 %v2223
    %v2294 = vunpack.c.l.b16 %v2224
    %v2295 = vunpack.c.l.b16 %v2225
    %v2296 = vunpack.c.h.b16 %v2225
    %v2297 = vunpack.c.l.b16 %v2226
    %v2298 = vunpack.c.l.b16 %v2227
    %v2299 = vunpack.c.h.b16 %v2227
    %v2300 = vunpack.c.l.b16 %v2228
    %v2301 = vunpack.c.l.b16 %v2229
    %v2302 = vunpack.c.h.b16 %v2229
    %v2303 = vunpack.c.l.b16 %v2230
    %v2304 = vunpack.c.l.b16 %v2231
    %v2305 = vunpack.c.h.b16 %v2231
    %v2306 = vunpack.c.l.b16 %v2232
    %v2307 = vunpack.c.l.b16 %v2233
    %v2308 = vunpack.c.h.b16 %v2233
    %v2309 = vunpack.c.l.b16 %v2234
    %v2310 = vunpack.c.l.b16 %v2235
    %v2311 = vunpack.c.h.b16 %v2235
    %v2312 = vunpack.c.l.b16 %v2236
    %v2313 = vunpack.c.l.b16 %v2237
    %v2314 = vunpack.c.h.b16 %v2237
    %v2315 = vunpack.c.l.b16 %v2238
    %v2316 = vunpack.c.l.b16 %v2239
    %v2317 = vunpack.c.h.b16 %v2239
    %v2318 = vunpack.c.l.b16 %v2240
    %v2319 = vunpack.c.l.b16 %v2241
    %v2320 = vunpack.c.h.b16 %v2241
    %v2321 = vunpack.c.l.b16 %v2242
    %v2322 = vunpack.c.l.b16 %v2243
    %v2323 = vunpack.c.h.b16 %v2243
    %v2324 = vunpack.c.l.b16 %v2244
    %v2325 = vpack.c.b16 %v2280, %v2277
    %v2326 = vpack.c.b16 %v2281, %v2278
    %v2327 = vpack.c.b16 %v2282, %v2279
    %v2328 = vpack.c.b16 %v2286, %v2283
    %v2329 = vpack.c.b16 %v2287, %v2284
    %v2330 = vpack.c.b16 %v2288, %v2285
    %v2331 = vpack.c.b16 %v2292, %v2289
    %v2332 = vpack.c.b16 %v2293, %v2290
    %v2333 = vpack.c.b16 %v2294, %v2291
    %v2334 = vpack.c.b16 %v2298, %v2295
    %v2335 = vpack.c.b16 %v2299, %v2296
    %v2336 = vpack.c.b16 %v2300, %v2297
    %v2337 = vpack.c.b16 %v2304, %v2301
    %v2338 = vpack.c.b16 %v2305, %v2302
    %v2339 = vpack.c.b16 %v2306, %v2303
    %v2340 = vpack.c.b16 %v2310, %v2307
    %v2341 = vpack.c.b16 %v2311, %v2308
    %v2342 = vpack.c.b16 %v2312, %v2309
    %v2343 = vpack.c.b16 %v2316, %v2313
    %v2344 = vpack.c.b16 %v2317, %v2314
    %v2345 = vpack.c.b16 %v2318, %v2315
    %v2346 = vpack.c.b16 %v2322, %v2319
    %v2347 = vpack.c.b16 %v2323, %v2320
    %v2348 = vpack.c.b16 %v2324, %v2321
    %2373 = vmatprep.subr.bf16.mxu0 %v2326
    %2374 = vmatpush1.bf16.msra.mxu0 %v2325
    %2375 = vmatprep.subr.bf16.mxu0 %v2329
    %2376 = vmatpush1.bf16.msra.mxu0 %v2328
    %2377 = vmatprep.subr.bf16.mxu0 %v2332
    %2378 = vmatpush1.bf16.msra.mxu0 %v2331
    %2379 = vmatprep.subr.bf16.mxu0 %v2335
    %2380 = vmatpush1.bf16.msra.mxu0 %v2334
    %2381 = vmatprep.subr.bf16.mxu0 %v2338
    %2382 = vmatpush1.bf16.msra.mxu0 %v2337
    %2383 = vmatprep.subr.bf16.mxu0 %v2341
    %2384 = vmatpush1.bf16.msra.mxu0 %v2340
    %2385 = vmatprep.subr.bf16.mxu0 %v2344
    %2386 = vmatpush1.bf16.msra.mxu0 %v2343
    %2387 = vmatprep.subr.bf16.mxu0 %v2347
    %2388 = vmatpush1.bf16.msra.mxu0 %v2346
    %2389 = vmatprep.subr.bf16.mxu0 0
    %2390 = vmatpush1.bf16.msra.mxu0 0
    %2391 = vmatprep.subr.bf16.mxu0 0
    %2392 = vmatpush1.bf16.msra.mxu0 0
    %2393 = vmatprep.subr.bf16.mxu0 0
    %2394 = vmatpush1.bf16.msra.mxu0 0
    %2395 = vmatprep.subr.bf16.mxu0 0
    %2396 = vmatpush1.bf16.msra.mxu0 0
    %2397 = vmatprep.subr.bf16.mxu0 0
    %2398 = vmatpush1.bf16.msra.mxu0 0
    %2399 = vmatprep.subr.bf16.mxu0 0
    %2400 = vmatpush1.bf16.msra.mxu0 0
    %2401 = vmatprep.subr.bf16.mxu0 0
    %2402 = vmatpush1.bf16.msra.mxu0 0
    %2403 = vmatprep.subr.bf16.mxu0 0
    %2404 = vmatpush1.bf16.msra.mxu0 0
    %2405 = vmatprep.mubr.bf16.mxu0 0
    %2406 = vmatmul.mubr.bf16.gmra.mrb[0].mxu0 %v2212
    %v2407 = vpop.f32.mrb[0].mxu0
    %v2408 = vadd.f32 0.0, %v2407
    %v2409 = vpop.f32.mrb[0].mxu0
    %v2410 = vadd.f32 0.0, %v2409
    %v2411 = vpop.f32.mrb[0].mxu0
    %v2412 = vpop.f32.mrb[0].mxu0
    %2413 = vdwg.mxu0
    %2414 = vmatprep.subr.bf16.mxu0 0
    %2415 = vmatpush1.bf16.msra.mxu0 %v2327
    %2416 = vmatprep.subr.bf16.mxu0 0
    %2417 = vmatpush1.bf16.msra.mxu0 %v2330
    %2418 = vmatprep.subr.bf16.mxu0 0
    %2419 = vmatpush1.bf16.msra.mxu0 %v2333
    %2420 = vmatprep.subr.bf16.mxu0 0
    %2421 = vmatpush1.bf16.msra.mxu0 %v2336
    %2422 = vmatprep.subr.bf16.mxu0 0
    %2423 = vmatpush1.bf16.msra.mxu0 %v2339
    %2424 = vmatprep.subr.bf16.mxu0 0
    %2425 = vmatpush1.bf16.msra.mxu0 %v2342
    %2426 = vmatprep.subr.bf16.mxu0 0
    %2427 = vmatpush1.bf16.msra.mxu0 %v2345
    %2428 = vmatprep.subr.bf16.mxu0 0
    %2429 = vmatpush1.bf16.msra.mxu0 %v2348
    %2430 = vmatprep.subr.bf16.mxu0 0
    %2431 = vmatpush1.bf16.msra.mxu0 0
    %2432 = vmatprep.subr.bf16.mxu0 0
    %2433 = vmatpush1.bf16.msra.mxu0 0
    %2434 = vmatprep.subr.bf16.mxu0 0
    %2435 = vmatpush1.bf16.msra.mxu0 0
    %2436 = vmatprep.subr.bf16.mxu0 0
    %2437 = vmatpush1.bf16.msra.mxu0 0
    %2438 = vmatprep.subr.bf16.mxu0 0
    %2439 = vmatpush1.bf16.msra.mxu0 0
    %2440 = vmatprep.subr.bf16.mxu0 0
    %2441 = vmatpush1.bf16.msra.mxu0 0
    %2442 = vmatprep.subr.bf16.mxu0 0
    %2443 = vmatpush1.bf16.msra.mxu0 0
    %2444 = vmatprep.subr.bf16.mxu0 0
    %2445 = vmatpush1.bf16.msra.mxu0 0
    %2446 = vmatprep.mubr.bf16.mxu0 0
    %2447 = vmatmul.mubr.bf16.gmra.mrb[0].mxu0 %v2212
    %v2448 = vpop.f32.mrb[0].mxu0
    %v2449 = vadd.f32 0.0, %v2448
    %v2450 = vpop.f32.mrb[0].mxu0
    %v2451 = vpop.f32.mrb[0].mxu0
    %v2452 = vpop.f32.mrb[0].mxu0
    %2453 = vdwg.mxu0
    %v2454 = vadd.f32 %v2209, %v2408
    %v2455 = vxor.u32 %v2454, 2147483648
    %v2456 = vmul.f32 %v2455, 1.442695
    %v2457 = vpow.pop %v2456
    %v2458 = vadd.f32 %v2457, 1.0
    %v2459 = vrcp.pop %v2458
    %v2460 = vmul.f32 1.0, %v2459
    %v2461 = vadd.f32 %v2210, %v2410
    %v2462 = vxor.u32 %v2461, 2147483648
    %v2463 = vmul.f32 %v2462, 1.442695
    %v2464 = vpow.pop %v2463
    %v2465 = vadd.f32 %v2464, 1.0
    %v2466 = vrcp.pop %v2465
    %v2467 = vmul.f32 1.0, %v2466
    %v2468 = vadd.f32 %v2449, %v1107
    %v2469 = vmul.f32 %v2460, %v2468
    %v2470 = vadd.f32 %v2211, %v2469
    %v2471 = vtanh.pop %v2470
    %v2472 = vsub.f32 1.0, %v2467
    %v2473 = vmul.f32 %v2472, %v2471
    %v2474 = vmul.f32 %v2467, %v2203
    %v2475 = vadd.f32 %v2473, %v2474
    %s2476 = scalar_lea.vmem [#allocation3], 40
    %2477 = vst [vmem:[%s2476] sm:$0xff] %v2475
    %s2478 = smul.u32 6, 3
    %s2479 = smul.addr %s2478, 8
    %s2480 = scalar_lea.vmem [#allocation2], %s2479
    %v2481 = vld [vmem:[%s2480] sm:$0xff]
    %v2482 = vld [vmem:[%s2480 + $0x8] sm:$0xff]
    %v2483 = vld [vmem:[%s2480 + $0x10] sm:$0xff]
    %v2484 = vpack.c.bf16 %v2475, %v2475
    %v2485 = vld [vmem:[#allocation7] sm:$0xff]
    %v2486 = vld [vmem:[#allocation7 + $0x8] sm:$0xf]
    %v2487 = vld [vmem:[#allocation7 + $0xc] sm:$0xff]
    %v2488 = vld [vmem:[#allocation7 + $0x14] sm:$0xf]
    %v2489 = vld [vmem:[#allocation7 + $0x18] sm:$0xff]
    %v2490 = vld [vmem:[#allocation7 + $0x20] sm:$0xf]
    %v2491 = vld [vmem:[#allocation7 + $0x24] sm:$0xff]
    %v2492 = vld [vmem:[#allocation7 + $0x2c] sm:$0xf]
    %v2493 = vld [vmem:[#allocation7 + $0x30] sm:$0xff]
    %v2494 = vld [vmem:[#allocation7 + $0x38] sm:$0xf]
    %v2495 = vld [vmem:[#allocation7 + $0x3c] sm:$0xff]
    %v2496 = vld [vmem:[#allocation7 + $0x44] sm:$0xf]
    %v2497 = vld [vmem:[#allocation7 + $0x48] sm:$0xff]
    %v2498 = vld [vmem:[#allocation7 + $0x50] sm:$0xf]
    %v2499 = vld [vmem:[#allocation7 + $0x54] sm:$0xff]
    %v2500 = vld [vmem:[#allocation7 + $0x5c] sm:$0xf]
    %v2501 = vld [vmem:[#allocation7 + $0x60] sm:$0xff]
    %v2502 = vld [vmem:[#allocation7 + $0x68] sm:$0xf]
    %v2503 = vld [vmem:[#allocation7 + $0x6c] sm:$0xff]
    %v2504 = vld [vmem:[#allocation7 + $0x74] sm:$0xf]
    %v2505 = vld [vmem:[#allocation7 + $0x78] sm:$0xff]
    %v2506 = vld [vmem:[#allocation7 + $0x80] sm:$0xf]
    %v2507 = vld [vmem:[#allocation7 + $0x84] sm:$0xff]
    %v2508 = vld [vmem:[#allocation7 + $0x8c] sm:$0xf]
    %v2509 = vld [vmem:[#allocation7 + $0x90] sm:$0xff]
    %v2510 = vld [vmem:[#allocation7 + $0x98] sm:$0xf]
    %v2511 = vld [vmem:[#allocation7 + $0x9c] sm:$0xff]
    %v2512 = vld [vmem:[#allocation7 + $0xa4] sm:$0xf]
    %v2513 = vld [vmem:[#allocation7 + $0xa8] sm:$0xff]
    %v2514 = vld [vmem:[#allocation7 + $0xb0] sm:$0xf]
    %v2515 = vld [vmem:[#allocation7 + $0xb4] sm:$0xff]
    %v2516 = vld [vmem:[#allocation7 + $0xbc] sm:$0xf]
    %v2549 = vunpack.c.l.b16 %v2485
    %v2550 = vunpack.c.h.b16 %v2485
    %v2551 = vunpack.c.l.b16 %v2486
    %v2552 = vunpack.c.l.b16 %v2487
    %v2553 = vunpack.c.h.b16 %v2487
    %v2554 = vunpack.c.l.b16 %v2488
    %v2555 = vunpack.c.l.b16 %v2489
    %v2556 = vunpack.c.h.b16 %v2489
    %v2557 = vunpack.c.l.b16 %v2490
    %v2558 = vunpack.c.l.b16 %v2491
    %v2559 = vunpack.c.h.b16 %v2491
    %v2560 = vunpack.c.l.b16 %v2492
    %v2561 = vunpack.c.l.b16 %v2493
    %v2562 = vunpack.c.h.b16 %v2493
    %v2563 = vunpack.c.l.b16 %v2494
    %v2564 = vunpack.c.l.b16 %v2495
    %v2565 = vunpack.c.h.b16 %v2495
    %v2566 = vunpack.c.l.b16 %v2496
    %v2567 = vunpack.c.l.b16 %v2497
    %v2568 = vunpack.c.h.b16 %v2497
    %v2569 = vunpack.c.l.b16 %v2498
    %v2570 = vunpack.c.l.b16 %v2499
    %v2571 = vunpack.c.h.b16 %v2499
    %v2572 = vunpack.c.l.b16 %v2500
    %v2573 = vunpack.c.l.b16 %v2501
    %v2574 = vunpack.c.h.b16 %v2501
    %v2575 = vunpack.c.l.b16 %v2502
    %v2576 = vunpack.c.l.b16 %v2503
    %v2577 = vunpack.c.h.b16 %v2503
    %v2578 = vunpack.c.l.b16 %v2504
    %v2579 = vunpack.c.l.b16 %v2505
    %v2580 = vunpack.c.h.b16 %v2505
    %v2581 = vunpack.c.l.b16 %v2506
    %v2582 = vunpack.c.l.b16 %v2507
    %v2583 = vunpack.c.h.b16 %v2507
    %v2584 = vunpack.c.l.b16 %v2508
    %v2585 = vunpack.c.l.b16 %v2509
    %v2586 = vunpack.c.h.b16 %v2509
    %v2587 = vunpack.c.l.b16 %v2510
    %v2588 = vunpack.c.l.b16 %v2511
    %v2589 = vunpack.c.h.b16 %v2511
    %v2590 = vunpack.c.l.b16 %v2512
    %v2591 = vunpack.c.l.b16 %v2513
    %v2592 = vunpack.c.h.b16 %v2513
    %v2593 = vunpack.c.l.b16 %v2514
    %v2594 = vunpack.c.l.b16 %v2515
    %v2595 = vunpack.c.h.b16 %v2515
    %v2596 = vunpack.c.l.b16 %v2516
    %v2597 = vpack.c.b16 %v2552, %v2549
    %v2598 = vpack.c.b16 %v2553, %v2550
    %v2599 = vpack.c.b16 %v2554, %v2551
    %v2600 = vpack.c.b16 %v2558, %v2555
    %v2601 = vpack.c.b16 %v2559, %v2556
    %v2602 = vpack.c.b16 %v2560, %v2557
    %v2603 = vpack.c.b16 %v2564, %v2561
    %v2604 = vpack.c.b16 %v2565, %v2562
    %v2605 = vpack.c.b16 %v2566, %v2563
    %v2606 = vpack.c.b16 %v2570, %v2567
    %v2607 = vpack.c.b16 %v2571, %v2568
    %v2608 = vpack.c.b16 %v2572, %v2569
    %v2609 = vpack.c.b16 %v2576, %v2573
    %v2610 = vpack.c.b16 %v2577, %v2574
    %v2611 = vpack.c.b16 %v2578, %v2575
    %v2612 = vpack.c.b16 %v2582, %v2579
    %v2613 = vpack.c.b16 %v2583, %v2580
    %v2614 = vpack.c.b16 %v2584, %v2581
    %v2615 = vpack.c.b16 %v2588, %v2585
    %v2616 = vpack.c.b16 %v2589, %v2586
    %v2617 = vpack.c.b16 %v2590, %v2587
    %v2618 = vpack.c.b16 %v2594, %v2591
    %v2619 = vpack.c.b16 %v2595, %v2592
    %v2620 = vpack.c.b16 %v2596, %v2593
    %2645 = vmatprep.subr.bf16.mxu0 %v2598
    %2646 = vmatpush1.bf16.msra.mxu0 %v2597
    %2647 = vmatprep.subr.bf16.mxu0 %v2601
    %2648 = vmatpush1.bf16.msra.mxu0 %v2600
    %2649 = vmatprep.subr.bf16.mxu0 %v2604
    %2650 = vmatpush1.bf16.msra.mxu0 %v2603
    %2651 = vmatprep.subr.bf16.mxu0 %v2607
    %2652 = vmatpush1.bf16.msra.mxu0 %v2606
    %2653 = vmatprep.subr.bf16.mxu0 %v2610
    %2654 = vmatpush1.bf16.msra.mxu0 %v2609
    %2655 = vmatprep.subr.bf16.mxu0 %v2613
    %2656 = vmatpush1.bf16.msra.mxu0 %v2612
    %2657 = vmatprep.subr.bf16.mxu0 %v2616
    %2658 = vmatpush1.bf16.msra.mxu0 %v2615
    %2659 = vmatprep.subr.bf16.mxu0 %v2619
    %2660 = vmatpush1.bf16.msra.mxu0 %v2618
    %2661 = vmatprep.subr.bf16.mxu0 0
    %2662 = vmatpush1.bf16.msra.mxu0 0
    %2663 = vmatprep.subr.bf16.mxu0 0
    %2664 = vmatpush1.bf16.msra.mxu0 0
    %2665 = vmatprep.subr.bf16.mxu0 0
    %2666 = vmatpush1.bf16.msra.mxu0 0
    %2667 = vmatprep.subr.bf16.mxu0 0
    %2668 = vmatpush1.bf16.msra.mxu0 0
    %2669 = vmatprep.subr.bf16.mxu0 0
    %2670 = vmatpush1.bf16.msra.mxu0 0
    %2671 = vmatprep.subr.bf16.mxu0 0
    %2672 = vmatpush1.bf16.msra.mxu0 0
    %2673 = vmatprep.subr.bf16.mxu0 0
    %2674 = vmatpush1.bf16.msra.mxu0 0
    %2675 = vmatprep.subr.bf16.mxu0 0
    %2676 = vmatpush1.bf16.msra.mxu0 0
    %2677 = vmatprep.mubr.bf16.mxu0 0
    %2678 = vmatmul.mubr.bf16.gmra.mrb[0].mxu0 %v2484
    %v2679 = vpop.f32.mrb[0].mxu0
    %v2680 = vadd.f32 0.0, %v2679
    %v2681 = vpop.f32.mrb[0].mxu0
    %v2682 = vadd.f32 0.0, %v2681
    %v2683 = vpop.f32.mrb[0].mxu0
    %v2684 = vpop.f32.mrb[0].mxu0
    %2685 = vdwg.mxu0
    %2686 = vmatprep.subr.bf16.mxu0 0
    %2687 = vmatpush1.bf16.msra.mxu0 %v2599
    %2688 = vmatprep.subr.bf16.mxu0 0
    %2689 = vmatpush1.bf16.msra.mxu0 %v2602
    %2690 = vmatprep.subr.bf16.mxu0 0
    %2691 = vmatpush1.bf16.msra.mxu0 %v2605
    %2692 = vmatprep.subr.bf16.mxu0 0
    %2693 = vmatpush1.bf16.msra.mxu0 %v2608
    %2694 = vmatprep.subr.bf16.mxu0 0
    %2695 = vmatpush1.bf16.msra.mxu0 %v2611
    %2696 = vmatprep.subr.bf16.mxu0 0
    %2697 = vmatpush1.bf16.msra.mxu0 %v2614
    %2698 = vmatprep.subr.bf16.mxu0 0
    %2699 = vmatpush1.bf16.msra.mxu0 %v2617
    %2700 = vmatprep.subr.bf16.mxu0 0
    %2701 = vmatpush1.bf16.msra.mxu0 %v2620
    %2702 = vmatprep.subr.bf16.mxu0 0
    %2703 = vmatpush1.bf16.msra.mxu0 0
    %2704 = vmatprep.subr.bf16.mxu0 0
    %2705 = vmatpush1.bf16.msra.mxu0 0
    %2706 = vmatprep.subr.bf16.mxu0 0
    %2707 = vmatpush1.bf16.msra.mxu0 0
    %2708 = vmatprep.subr.bf16.mxu0 0
    %2709 = vmatpush1.bf16.msra.mxu0 0
    %2710 = vmatprep.subr.bf16.mxu0 0
    %2711 = vmatpush1.bf16.msra.mxu0 0
    %2712 = vmatprep.subr.bf16.mxu0 0
    %2713 = vmatpush1.bf16.msra.mxu0 0
    %2714 = vmatprep.subr.bf16.mxu0 0
    %2715 = vmatpush1.bf16.msra.mxu0 0
    %2716 = vmatprep.subr.bf16.mxu0 0
    %2717 = vmatpush1.bf16.msra.mxu0 0
    %2718 = vmatprep.mubr.bf16.mxu0 0
    %2719 = vmatmul.mubr.bf16.gmra.mrb[0].mxu0 %v2484
    %v2720 = vpop.f32.mrb[0].mxu0
    %v2721 = vadd.f32 0.0, %v2720
    %v2722 = vpop.f32.mrb[0].mxu0
    %v2723 = vpop.f32.mrb[0].mxu0
    %v2724 = vpop.f32.mrb[0].mxu0
    %2725 = vdwg.mxu0
    %v2726 = vadd.f32 %v2481, %v2680
    %v2727 = vxor.u32 %v2726, 2147483648
    %v2728 = vmul.f32 %v2727, 1.442695
    %v2729 = vpow.pop %v2728
    %v2730 = vadd.f32 %v2729, 1.0
    %v2731 = vrcp.pop %v2730
    %v2732 = vmul.f32 1.0, %v2731
    %v2733 = vadd.f32 %v2482, %v2682
    %v2734 = vxor.u32 %v2733, 2147483648
    %v2735 = vmul.f32 %v2734, 1.442695
    %v2736 = vpow.pop %v2735
    %v2737 = vadd.f32 %v2736, 1.0
    %v2738 = vrcp.pop %v2737
    %v2739 = vmul.f32 1.0, %v2738
    %v2740 = vadd.f32 %v2721, %v1107
    %v2741 = vmul.f32 %v2732, %v2740
    %v2742 = vadd.f32 %v2483, %v2741
    %v2743 = vtanh.pop %v2742
    %v2744 = vsub.f32 1.0, %v2739
    %v2745 = vmul.f32 %v2744, %v2743
    %v2746 = vmul.f32 %v2739, %v2475
    %v2747 = vadd.f32 %v2745, %v2746
    %s2748 = scalar_lea.vmem [#allocation3], 48
    %2749 = vst [vmem:[%s2748] sm:$0xff] %v2747
    %s2750 = smul.u32 7, 3
    %s2751 = smul.addr %s2750, 8
    %s2752 = scalar_lea.vmem [#allocation2], %s2751
    %v2753 = vld [vmem:[%s2752] sm:$0xff]
    %v2754 = vld [vmem:[%s2752 + $0x8] sm:$0xff]
    %v2755 = vld [vmem:[%s2752 + $0x10] sm:$0xff]
    %v2756 = vpack.c.bf16 %v2747, %v2747
    %v2757 = vld [vmem:[#allocation7] sm:$0xff]
    %v2758 = vld [vmem:[#allocation7 + $0x8] sm:$0xf]
    %v2759 = vld [vmem:[#allocation7 + $0xc] sm:$0xff]
    %v2760 = vld [vmem:[#allocation7 + $0x14] sm:$0xf]
    %v2761 = vld [vmem:[#allocation7 + $0x18] sm:$0xff]
    %v2762 = vld [vmem:[#allocation7 + $0x20] sm:$0xf]
    %v2763 = vld [vmem:[#allocation7 + $0x24] sm:$0xff]
    %v2764 = vld [vmem:[#allocation7 + $0x2c] sm:$0xf]
    %v2765 = vld [vmem:[#allocation7 + $0x30] sm:$0xff]
    %v2766 = vld [vmem:[#allocation7 + $0x38] sm:$0xf]
    %v2767 = vld [vmem:[#allocation7 + $0x3c] sm:$0xff]
    %v2768 = vld [vmem:[#allocation7 + $0x44] sm:$0xf]
    %v2769 = vld [vmem:[#allocation7 + $0x48] sm:$0xff]
    %v2770 = vld [vmem:[#allocation7 + $0x50] sm:$0xf]
    %v2771 = vld [vmem:[#allocation7 + $0x54] sm:$0xff]
    %v2772 = vld [vmem:[#allocation7 + $0x5c] sm:$0xf]
    %v2773 = vld [vmem:[#allocation7 + $0x60] sm:$0xff]
    %v2774 = vld [vmem:[#allocation7 + $0x68] sm:$0xf]
    %v2775 = vld [vmem:[#allocation7 + $0x6c] sm:$0xff]
    %v2776 = vld [vmem:[#allocation7 + $0x74] sm:$0xf]
    %v2777 = vld [vmem:[#allocation7 + $0x78] sm:$0xff]
    %v2778 = vld [vmem:[#allocation7 + $0x80] sm:$0xf]
    %v2779 = vld [vmem:[#allocation7 + $0x84] sm:$0xff]
    %v2780 = vld [vmem:[#allocation7 + $0x8c] sm:$0xf]
    %v2781 = vld [vmem:[#allocation7 + $0x90] sm:$0xff]
    %v2782 = vld [vmem:[#allocation7 + $0x98] sm:$0xf]
    %v2783 = vld [vmem:[#allocation7 + $0x9c] sm:$0xff]
    %v2784 = vld [vmem:[#allocation7 + $0xa4] sm:$0xf]
    %v2785 = vld [vmem:[#allocation7 + $0xa8] sm:$0xff]
    %v2786 = vld [vmem:[#allocation7 + $0xb0] sm:$0xf]
    %v2787 = vld [vmem:[#allocation7 + $0xb4] sm:$0xff]
    %v2788 = vld [vmem:[#allocation7 + $0xbc] sm:$0xf]
    %v2821 = vunpack.c.l.b16 %v2757
    %v2822 = vunpack.c.h.b16 %v2757
    %v2823 = vunpack.c.l.b16 %v2758
    %v2824 = vunpack.c.l.b16 %v2759
    %v2825 = vunpack.c.h.b16 %v2759
    %v2826 = vunpack.c.l.b16 %v2760
    %v2827 = vunpack.c.l.b16 %v2761
    %v2828 = vunpack.c.h.b16 %v2761
    %v2829 = vunpack.c.l.b16 %v2762
    %v2830 = vunpack.c.l.b16 %v2763
    %v2831 = vunpack.c.h.b16 %v2763
    %v2832 = vunpack.c.l.b16 %v2764
    %v2833 = vunpack.c.l.b16 %v2765
    %v2834 = vunpack.c.h.b16 %v2765
    %v2835 = vunpack.c.l.b16 %v2766
    %v2836 = vunpack.c.l.b16 %v2767
    %v2837 = vunpack.c.h.b16 %v2767
    %v2838 = vunpack.c.l.b16 %v2768
    %v2839 = vunpack.c.l.b16 %v2769
    %v2840 = vunpack.c.h.b16 %v2769
    %v2841 = vunpack.c.l.b16 %v2770
    %v2842 = vunpack.c.l.b16 %v2771
    %v2843 = vunpack.c.h.b16 %v2771
    %v2844 = vunpack.c.l.b16 %v2772
    %v2845 = vunpack.c.l.b16 %v2773
    %v2846 = vunpack.c.h.b16 %v2773
    %v2847 = vunpack.c.l.b16 %v2774
    %v2848 = vunpack.c.l.b16 %v2775
    %v2849 = vunpack.c.h.b16 %v2775
    %v2850 = vunpack.c.l.b16 %v2776
    %v2851 = vunpack.c.l.b16 %v2777
    %v2852 = vunpack.c.h.b16 %v2777
    %v2853 = vunpack.c.l.b16 %v2778
    %v2854 = vunpack.c.l.b16 %v2779
    %v2855 = vunpack.c.h.b16 %v2779
    %v2856 = vunpack.c.l.b16 %v2780
    %v2857 = vunpack.c.l.b16 %v2781
    %v2858 = vunpack.c.h.b16 %v2781
    %v2859 = vunpack.c.l.b16 %v2782
    %v2860 = vunpack.c.l.b16 %v2783
    %v2861 = vunpack.c.h.b16 %v2783
    %v2862 = vunpack.c.l.b16 %v2784
    %v2863 = vunpack.c.l.b16 %v2785
    %v2864 = vunpack.c.h.b16 %v2785
    %v2865 = vunpack.c.l.b16 %v2786
    %v2866 = vunpack.c.l.b16 %v2787
    %v2867 = vunpack.c.h.b16 %v2787
    %v2868 = vunpack.c.l.b16 %v2788
    %v2869 = vpack.c.b16 %v2824, %v2821
    %v2870 = vpack.c.b16 %v2825, %v2822
    %v2871 = vpack.c.b16 %v2826, %v2823
    %v2872 = vpack.c.b16 %v2830, %v2827
    %v2873 = vpack.c.b16 %v2831, %v2828
    %v2874 = vpack.c.b16 %v2832, %v2829
    %v2875 = vpack.c.b16 %v2836, %v2833
    %v2876 = vpack.c.b16 %v2837, %v2834
    %v2877 = vpack.c.b16 %v2838, %v2835
    %v2878 = vpack.c.b16 %v2842, %v2839
    %v2879 = vpack.c.b16 %v2843, %v2840
    %v2880 = vpack.c.b16 %v2844, %v2841
    %v2881 = vpack.c.b16 %v2848, %v2845
    %v2882 = vpack.c.b16 %v2849, %v2846
    %v2883 = vpack.c.b16 %v2850, %v2847
    %v2884 = vpack.c.b16 %v2854, %v2851
    %v2885 = vpack.c.b16 %v2855, %v2852
    %v2886 = vpack.c.b16 %v2856, %v2853
    %v2887 = vpack.c.b16 %v2860, %v2857
    %v2888 = vpack.c.b16 %v2861, %v2858
    %v2889 = vpack.c.b16 %v2862, %v2859
    %v2890 = vpack.c.b16 %v2866, %v2863
    %v2891 = vpack.c.b16 %v2867, %v2864
    %v2892 = vpack.c.b16 %v2868, %v2865
    %2917 = vmatprep.subr.bf16.mxu0 %v2870
    %2918 = vmatpush1.bf16.msra.mxu0 %v2869
    %2919 = vmatprep.subr.bf16.mxu0 %v2873
    %2920 = vmatpush1.bf16.msra.mxu0 %v2872
    %2921 = vmatprep.subr.bf16.mxu0 %v2876
    %2922 = vmatpush1.bf16.msra.mxu0 %v2875
    %2923 = vmatprep.subr.bf16.mxu0 %v2879
    %2924 = vmatpush1.bf16.msra.mxu0 %v2878
    %2925 = vmatprep.subr.bf16.mxu0 %v2882
    %2926 = vmatpush1.bf16.msra.mxu0 %v2881
    %2927 = vmatprep.subr.bf16.mxu0 %v2885
    %2928 = vmatpush1.bf16.msra.mxu0 %v2884
    %2929 = vmatprep.subr.bf16.mxu0 %v2888
    %2930 = vmatpush1.bf16.msra.mxu0 %v2887
    %2931 = vmatprep.subr.bf16.mxu0 %v2891
    %2932 = vmatpush1.bf16.msra.mxu0 %v2890
    %2933 = vmatprep.subr.bf16.mxu0 0
    %2934 = vmatpush1.bf16.msra.mxu0 0
    %2935 = vmatprep.subr.bf16.mxu0 0
    %2936 = vmatpush1.bf16.msra.mxu0 0
    %2937 = vmatprep.subr.bf16.mxu0 0
    %2938 = vmatpush1.bf16.msra.mxu0 0
    %2939 = vmatprep.subr.bf16.mxu0 0
    %2940 = vmatpush1.bf16.msra.mxu0 0
    %2941 = vmatprep.subr.bf16.mxu0 0
    %2942 = vmatpush1.bf16.msra.mxu0 0
    %2943 = vmatprep.subr.bf16.mxu0 0
    %2944 = vmatpush1.bf16.msra.mxu0 0
    %2945 = vmatprep.subr.bf16.mxu0 0
    %2946 = vmatpush1.bf16.msra.mxu0 0
    %2947 = vmatprep.subr.bf16.mxu0 0
    %2948 = vmatpush1.bf16.msra.mxu0 0
    %2949 = vmatprep.mubr.bf16.mxu0 0
    %2950 = vmatmul.mubr.bf16.gmra.mrb[0].mxu0 %v2756
    %v2951 = vpop.f32.mrb[0].mxu0
    %v2952 = vadd.f32 0.0, %v2951
    %v2953 = vpop.f32.mrb[0].mxu0
    %v2954 = vadd.f32 0.0, %v2953
    %v2955 = vpop.f32.mrb[0].mxu0
    %v2956 = vpop.f32.mrb[0].mxu0
    %2957 = vdwg.mxu0
    %2958 = vmatprep.subr.bf16.mxu0 0
    %2959 = vmatpush1.bf16.msra.mxu0 %v2871
    %2960 = vmatprep.subr.bf16.mxu0 0
    %2961 = vmatpush1.bf16.msra.mxu0 %v2874
    %2962 = vmatprep.subr.bf16.mxu0 0
    %2963 = vmatpush1.bf16.msra.mxu0 %v2877
    %2964 = vmatprep.subr.bf16.mxu0 0
    %2965 = vmatpush1.bf16.msra.mxu0 %v2880
    %2966 = vmatprep.subr.bf16.mxu0 0
    %2967 = vmatpush1.bf16.msra.mxu0 %v2883
    %2968 = vmatprep.subr.bf16.mxu0 0
    %2969 = vmatpush1.bf16.msra.mxu0 %v2886
    %2970 = vmatprep.subr.bf16.mxu0 0
    %2971 = vmatpush1.bf16.msra.mxu0 %v2889
    %2972 = vmatprep.subr.bf16.mxu0 0
    %2973 = vmatpush1.bf16.msra.mxu0 %v2892
    %2974 = vmatprep.subr.bf16.mxu0 0
    %2975 = vmatpush1.bf16.msra.mxu0 0
    %2976 = vmatprep.subr.bf16.mxu0 0
    %2977 = vmatpush1.bf16.msra.mxu0 0
    %2978 = vmatprep.subr.bf16.mxu0 0
    %2979 = vmatpush1.bf16.msra.mxu0 0
    %2980 = vmatprep.subr.bf16.mxu0 0
    %2981 = vmatpush1.bf16.msra.mxu0 0
    %2982 = vmatprep.subr.bf16.mxu0 0
    %2983 = vmatpush1.bf16.msra.mxu0 0
    %2984 = vmatprep.subr.bf16.mxu0 0
    %2985 = vmatpush1.bf16.msra.mxu0 0
    %2986 = vmatprep.subr.bf16.mxu0 0
    %2987 = vmatpush1.bf16.msra.mxu0 0
    %2988 = vmatprep.subr.bf16.mxu0 0
    %2989 = vmatpush1.bf16.msra.mxu0 0
    %2990 = vmatprep.mubr.bf16.mxu0 0
    %2991 = vmatmul.mubr.bf16.gmra.mrb[0].mxu0 %v2756
    %v2992 = vpop.f32.mrb[0].mxu0
    %v2993 = vadd.f32 0.0, %v2992
    %v2994 = vpop.f32.mrb[0].mxu0
    %v2995 = vpop.f32.mrb[0].mxu0
    %v2996 = vpop.f32.mrb[0].mxu0
    %2997 = vdwg.mxu0
    %v2998 = vadd.f32 %v2753, %v2952
    %v2999 = vxor.u32 %v2998, 2147483648
    %v3000 = vmul.f32 %v2999, 1.442695
    %v3001 = vpow.pop %v3000
    %v3002 = vadd.f32 %v3001, 1.0
    %v3003 = vrcp.pop %v3002
    %v3004 = vmul.f32 1.0, %v3003
    %v3005 = vadd.f32 %v2754, %v2954
    %v3006 = vxor.u32 %v3005, 2147483648
    %v3007 = vmul.f32 %v3006, 1.442695
    %v3008 = vpow.pop %v3007
    %v3009 = vadd.f32 %v3008, 1.0
    %v3010 = vrcp.pop %v3009
    %v3011 = vmul.f32 1.0, %v3010
    %v3012 = vadd.f32 %v2993, %v1107
    %v3013 = vmul.f32 %v3004, %v3012
    %v3014 = vadd.f32 %v2755, %v3013
    %v3015 = vtanh.pop %v3014
    %v3016 = vsub.f32 1.0, %v3011
    %v3017 = vmul.f32 %v3016, %v3015
    %v3018 = vmul.f32 %v3011, %v2747
    %v3019 = vadd.f32 %v3017, %v3018
    %s3020 = scalar_lea.vmem [#allocation3], 56
    %3021 = vst [vmem:[%s3020] sm:$0xff] %v3019
    %s3022 = smul.u32 8, 3
    %s3023 = smul.addr %s3022, 8
    %s3024 = scalar_lea.vmem [#allocation2], %s3023
    %v3025 = vld [vmem:[%s3024] sm:$0xff]
    %v3026 = vld [vmem:[%s3024 + $0x8] sm:$0xff]
    %v3027 = vld [vmem:[%s3024 + $0x10] sm:$0xff]
    %v3028 = vpack.c.bf16 %v3019, %v3019
    %v3029 = vld [vmem:[#allocation7] sm:$0xff]
    %v3030 = vld [vmem:[#allocation7 + $0x8] sm:$0xf]
    %v3031 = vld [vmem:[#allocation7 + $0xc] sm:$0xff]
    %v3032 = vld [vmem:[#allocation7 + $0x14] sm:$0xf]
    %v3033 = vld [vmem:[#allocation7 + $0x18] sm:$0xff]
    %v3034 = vld [vmem:[#allocation7 + $0x20] sm:$0xf]
    %v3035 = vld [vmem:[#allocation7 + $0x24] sm:$0xff]
    %v3036 = vld [vmem:[#allocation7 + $0x2c] sm:$0xf]
    %v3037 = vld [vmem:[#allocation7 + $0x30] sm:$0xff]
    %v3038 = vld [vmem:[#allocation7 + $0x38] sm:$0xf]
    %v3039 = vld [vmem:[#allocation7 + $0x3c] sm:$0xff]
    %v3040 = vld [vmem:[#allocation7 + $0x44] sm:$0xf]
    %v3041 = vld [vmem:[#allocation7 + $0x48] sm:$0xff]
    %v3042 = vld [vmem:[#allocation7 + $0x50] sm:$0xf]
    %v3043 = vld [vmem:[#allocation7 + $0x54] sm:$0xff]
    %v3044 = vld [vmem:[#allocation7 + $0x5c] sm:$0xf]
    %v3045 = vld [vmem:[#allocation7 + $0x60] sm:$0xff]
    %v3046 = vld [vmem:[#allocation7 + $0x68] sm:$0xf]
    %v3047 = vld [vmem:[#allocation7 + $0x6c] sm:$0xff]
    %v3048 = vld [vmem:[#allocation7 + $0x74] sm:$0xf]
    %v3049 = vld [vmem:[#allocation7 + $0x78] sm:$0xff]
    %v3050 = vld [vmem:[#allocation7 + $0x80] sm:$0xf]
    %v3051 = vld [vmem:[#allocation7 + $0x84] sm:$0xff]
    %v3052 = vld [vmem:[#allocation7 + $0x8c] sm:$0xf]
    %v3053 = vld [vmem:[#allocation7 + $0x90] sm:$0xff]
    %v3054 = vld [vmem:[#allocation7 + $0x98] sm:$0xf]
    %v3055 = vld [vmem:[#allocation7 + $0x9c] sm:$0xff]
    %v3056 = vld [vmem:[#allocation7 + $0xa4] sm:$0xf]
    %v3057 = vld [vmem:[#allocation7 + $0xa8] sm:$0xff]
    %v3058 = vld [vmem:[#allocation7 + $0xb0] sm:$0xf]
    %v3059 = vld [vmem:[#allocation7 + $0xb4] sm:$0xff]
    %v3060 = vld [vmem:[#allocation7 + $0xbc] sm:$0xf]
    %v3093 = vunpack.c.l.b16 %v3029
    %v3094 = vunpack.c.h.b16 %v3029
    %v3095 = vunpack.c.l.b16 %v3030
    %v3096 = vunpack.c.l.b16 %v3031
    %v3097 = vunpack.c.h.b16 %v3031
    %v3098 = vunpack.c.l.b16 %v3032
    %v3099 = vunpack.c.l.b16 %v3033
    %v3100 = vunpack.c.h.b16 %v3033
    %v3101 = vunpack.c.l.b16 %v3034
    %v3102 = vunpack.c.l.b16 %v3035
    %v3103 = vunpack.c.h.b16 %v3035
    %v3104 = vunpack.c.l.b16 %v3036
    %v3105 = vunpack.c.l.b16 %v3037
    %v3106 = vunpack.c.h.b16 %v3037
    %v3107 = vunpack.c.l.b16 %v3038
    %v3108 = vunpack.c.l.b16 %v3039
    %v3109 = vunpack.c.h.b16 %v3039
    %v3110 = vunpack.c.l.b16 %v3040
    %v3111 = vunpack.c.l.b16 %v3041
    %v3112 = vunpack.c.h.b16 %v3041
    %v3113 = vunpack.c.l.b16 %v3042
    %v3114 = vunpack.c.l.b16 %v3043
    %v3115 = vunpack.c.h.b16 %v3043
    %v3116 = vunpack.c.l.b16 %v3044
    %v3117 = vunpack.c.l.b16 %v3045
    %v3118 = vunpack.c.h.b16 %v3045
    %v3119 = vunpack.c.l.b16 %v3046
    %v3120 = vunpack.c.l.b16 %v3047
    %v3121 = vunpack.c.h.b16 %v3047
    %v3122 = vunpack.c.l.b16 %v3048
    %v3123 = vunpack.c.l.b16 %v3049
    %v3124 = vunpack.c.h.b16 %v3049
    %v3125 = vunpack.c.l.b16 %v3050
    %v3126 = vunpack.c.l.b16 %v3051
    %v3127 = vunpack.c.h.b16 %v3051
    %v3128 = vunpack.c.l.b16 %v3052
    %v3129 = vunpack.c.l.b16 %v3053
    %v3130 = vunpack.c.h.b16 %v3053
    %v3131 = vunpack.c.l.b16 %v3054
    %v3132 = vunpack.c.l.b16 %v3055
    %v3133 = vunpack.c.h.b16 %v3055
    %v3134 = vunpack.c.l.b16 %v3056
    %v3135 = vunpack.c.l.b16 %v3057
    %v3136 = vunpack.c.h.b16 %v3057
    %v3137 = vunpack.c.l.b16 %v3058
    %v3138 = vunpack.c.l.b16 %v3059
    %v3139 = vunpack.c.h.b16 %v3059
    %v3140 = vunpack.c.l.b16 %v3060
    %v3141 = vpack.c.b16 %v3096, %v3093
    %v3142 = vpack.c.b16 %v3097, %v3094
    %v3143 = vpack.c.b16 %v3098, %v3095
    %v3144 = vpack.c.b16 %v3102, %v3099
    %v3145 = vpack.c.b16 %v3103, %v3100
    %v3146 = vpack.c.b16 %v3104, %v3101
    %v3147 = vpack.c.b16 %v3108, %v3105
    %v3148 = vpack.c.b16 %v3109, %v3106
    %v3149 = vpack.c.b16 %v3110, %v3107
    %v3150 = vpack.c.b16 %v3114, %v3111
    %v3151 = vpack.c.b16 %v3115, %v3112
    %v3152 = vpack.c.b16 %v3116, %v3113
    %v3153 = vpack.c.b16 %v3120, %v3117
    %v3154 = vpack.c.b16 %v3121, %v3118
    %v3155 = vpack.c.b16 %v3122, %v3119
    %v3156 = vpack.c.b16 %v3126, %v3123
    %v3157 = vpack.c.b16 %v3127, %v3124
    %v3158 = vpack.c.b16 %v3128, %v3125
    %v3159 = vpack.c.b16 %v3132, %v3129
    %v3160 = vpack.c.b16 %v3133, %v3130
    %v3161 = vpack.c.b16 %v3134, %v3131
    %v3162 = vpack.c.b16 %v3138, %v3135
    %v3163 = vpack.c.b16 %v3139, %v3136
    %v3164 = vpack.c.b16 %v3140, %v3137
    %3189 = vmatprep.subr.bf16.mxu0 %v3142
    %3190 = vmatpush1.bf16.msra.mxu0 %v3141
    %3191 = vmatprep.subr.bf16.mxu0 %v3145
    %3192 = vmatpush1.bf16.msra.mxu0 %v3144
    %3193 = vmatprep.subr.bf16.mxu0 %v3148
    %3194 = vmatpush1.bf16.msra.mxu0 %v3147
    %3195 = vmatprep.subr.bf16.mxu0 %v3151
    %3196 = vmatpush1.bf16.msra.mxu0 %v3150
    %3197 = vmatprep.subr.bf16.mxu0 %v3154
    %3198 = vmatpush1.bf16.msra.mxu0 %v3153
    %3199 = vmatprep.subr.bf16.mxu0 %v3157
    %3200 = vmatpush1.bf16.msra.mxu0 %v3156
    %3201 = vmatprep.subr.bf16.mxu0 %v3160
    %3202 = vmatpush1.bf16.msra.mxu0 %v3159
    %3203 = vmatprep.subr.bf16.mxu0 %v3163
    %3204 = vmatpush1.bf16.msra.mxu0 %v3162
    %3205 = vmatprep.subr.bf16.mxu0 0
    %3206 = vmatpush1.bf16.msra.mxu0 0
    %3207 = vmatprep.subr.bf16.mxu0 0
    %3208 = vmatpush1.bf16.msra.mxu0 0
    %3209 = vmatprep.subr.bf16.mxu0 0
    %3210 = vmatpush1.bf16.msra.mxu0 0
    %3211 = vmatprep.subr.bf16.mxu0 0
    %3212 = vmatpush1.bf16.msra.mxu0 0
    %3213 = vmatprep.subr.bf16.mxu0 0
    %3214 = vmatpush1.bf16.msra.mxu0 0
    %3215 = vmatprep.subr.bf16.mxu0 0
    %3216 = vmatpush1.bf16.msra.mxu0 0
    %3217 = vmatprep.subr.bf16.mxu0 0
    %3218 = vmatpush1.bf16.msra.mxu0 0
    %3219 = vmatprep.subr.bf16.mxu0 0
    %3220 = vmatpush1.bf16.msra.mxu0 0
    %3221 = vmatprep.mubr.bf16.mxu0 0
    %3222 = vmatmul.mubr.bf16.gmra.mrb[0].mxu0 %v3028
    %v3223 = vpop.f32.mrb[0].mxu0
    %v3224 = vadd.f32 0.0, %v3223
    %v3225 = vpop.f32.mrb[0].mxu0
    %v3226 = vadd.f32 0.0, %v3225
    %v3227 = vpop.f32.mrb[0].mxu0
    %v3228 = vpop.f32.mrb[0].mxu0
    %3229 = vdwg.mxu0
    %3230 = vmatprep.subr.bf16.mxu0 0
    %3231 = vmatpush1.bf16.msra.mxu0 %v3143
    %3232 = vmatprep.subr.bf16.mxu0 0
    %3233 = vmatpush1.bf16.msra.mxu0 %v3146
    %3234 = vmatprep.subr.bf16.mxu0 0
    %3235 = vmatpush1.bf16.msra.mxu0 %v3149
    %3236 = vmatprep.subr.bf16.mxu0 0
    %3237 = vmatpush1.bf16.msra.mxu0 %v3152
    %3238 = vmatprep.subr.bf16.mxu0 0
    %3239 = vmatpush1.bf16.msra.mxu0 %v3155
    %3240 = vmatprep.subr.bf16.mxu0 0
    %3241 = vmatpush1.bf16.msra.mxu0 %v3158
    %3242 = vmatprep.subr.bf16.mxu0 0
    %3243 = vmatpush1.bf16.msra.mxu0 %v3161
    %3244 = vmatprep.subr.bf16.mxu0 0
    %3245 = vmatpush1.bf16.msra.mxu0 %v3164
    %3246 = vmatprep.subr.bf16.mxu0 0
    %3247 = vmatpush1.bf16.msra.mxu0 0
    %3248 = vmatprep.subr.bf16.mxu0 0
    %3249 = vmatpush1.bf16.msra.mxu0 0
    %3250 = vmatprep.subr.bf16.mxu0 0
    %3251 = vmatpush1.bf16.msra.mxu0 0
    %3252 = vmatprep.subr.bf16.mxu0 0
    %3253 = vmatpush1.bf16.msra.mxu0 0
    %3254 = vmatprep.subr.bf16.mxu0 0
    %3255 = vmatpush1.bf16.msra.mxu0 0
    %3256 = vmatprep.subr.bf16.mxu0 0
    %3257 = vmatpush1.bf16.msra.mxu0 0
    %3258 = vmatprep.subr.bf16.mxu0 0
    %3259 = vmatpush1.bf16.msra.mxu0 0
    %3260 = vmatprep.subr.bf16.mxu0 0
    %3261 = vmatpush1.bf16.msra.mxu0 0
    %3262 = vmatprep.mubr.bf16.mxu0 0
    %3263 = vmatmul.mubr.bf16.gmra.mrb[0].mxu0 %v3028
    %v3264 = vpop.f32.mrb[0].mxu0
    %v3265 = vadd.f32 0.0, %v3264
    %v3266 = vpop.f32.mrb[0].mxu0
    %v3267 = vpop.f32.mrb[0].mxu0
    %v3268 = vpop.f32.mrb[0].mxu0
    %3269 = vdwg.mxu0
    %v3270 = vadd.f32 %v3025, %v3224
    %v3271 = vxor.u32 %v3270, 2147483648
    %v3272 = vmul.f32 %v3271, 1.442695
    %v3273 = vpow.pop %v3272
    %v3274 = vadd.f32 %v3273, 1.0
    %v3275 = vrcp.pop %v3274
    %v3276 = vmul.f32 1.0, %v3275
    %v3277 = vadd.f32 %v3026, %v3226
    %v3278 = vxor.u32 %v3277, 2147483648
    %v3279 = vmul.f32 %v3278, 1.442695
    %v3280 = vpow.pop %v3279
    %v3281 = vadd.f32 %v3280, 1.0
    %v3282 = vrcp.pop %v3281
    %v3283 = vmul.f32 1.0, %v3282
    %v3284 = vadd.f32 %v3265, %v1107
    %v3285 = vmul.f32 %v3276, %v3284
    %v3286 = vadd.f32 %v3027, %v3285
    %v3287 = vtanh.pop %v3286
    %v3288 = vsub.f32 1.0, %v3283
    %v3289 = vmul.f32 %v3288, %v3287
    %v3290 = vmul.f32 %v3283, %v3019
    %v3291 = vadd.f32 %v3289, %v3290
    %s3292 = scalar_lea.vmem [#allocation3], 64
    %3293 = vst [vmem:[%s3292] sm:$0xff] %v3291
    %s3294 = smul.u32 9, 3
    %s3295 = smul.addr %s3294, 8
    %s3296 = scalar_lea.vmem [#allocation2], %s3295
    %v3297 = vld [vmem:[%s3296] sm:$0xff]
    %v3298 = vld [vmem:[%s3296 + $0x8] sm:$0xff]
    %v3299 = vld [vmem:[%s3296 + $0x10] sm:$0xff]
    %v3300 = vpack.c.bf16 %v3291, %v3291
    %v3301 = vld [vmem:[#allocation7] sm:$0xff]
    %v3302 = vld [vmem:[#allocation7 + $0x8] sm:$0xf]
    %v3303 = vld [vmem:[#allocation7 + $0xc] sm:$0xff]
    %v3304 = vld [vmem:[#allocation7 + $0x14] sm:$0xf]
    %v3305 = vld [vmem:[#allocation7 + $0x18] sm:$0xff]
    %v3306 = vld [vmem:[#allocation7 + $0x20] sm:$0xf]
    %v3307 = vld [vmem:[#allocation7 + $0x24] sm:$0xff]
    %v3308 = vld [vmem:[#allocation7 + $0x2c] sm:$0xf]
    %v3309 = vld [vmem:[#allocation7 + $0x30] sm:$0xff]
    %v3310 = vld [vmem:[#allocation7 + $0x38] sm:$0xf]
    %v3311 = vld [vmem:[#allocation7 + $0x3c] sm:$0xff]
    %v3312 = vld [vmem:[#allocation7 + $0x44] sm:$0xf]
    %v3313 = vld [vmem:[#allocation7 + $0x48] sm:$0xff]
    %v3314 = vld [vmem:[#allocation7 + $0x50] sm:$0xf]
    %v3315 = vld [vmem:[#allocation7 + $0x54] sm:$0xff]
    %v3316 = vld [vmem:[#allocation7 + $0x5c] sm:$0xf]
    %v3317 = vld [vmem:[#allocation7 + $0x60] sm:$0xff]
    %v3318 = vld [vmem:[#allocation7 + $0x68] sm:$0xf]
    %v3319 = vld [vmem:[#allocation7 + $0x6c] sm:$0xff]
    %v3320 = vld [vmem:[#allocation7 + $0x74] sm:$0xf]
    %v3321 = vld [vmem:[#allocation7 + $0x78] sm:$0xff]
    %v3322 = vld [vmem:[#allocation7 + $0x80] sm:$0xf]
    %v3323 = vld [vmem:[#allocation7 + $0x84] sm:$0xff]
    %v3324 = vld [vmem:[#allocation7 + $0x8c] sm:$0xf]
    %v3325 = vld [vmem:[#allocation7 + $0x90] sm:$0xff]
    %v3326 = vld [vmem:[#allocation7 + $0x98] sm:$0xf]
    %v3327 = vld [vmem:[#allocation7 + $0x9c] sm:$0xff]
    %v3328 = vld [vmem:[#allocation7 + $0xa4] sm:$0xf]
    %v3329 = vld [vmem:[#allocation7 + $0xa8] sm:$0xff]
    %v3330 = vld [vmem:[#allocation7 + $0xb0] sm:$0xf]
    %v3331 = vld [vmem:[#allocation7 + $0xb4] sm:$0xff]
    %v3332 = vld [vmem:[#allocation7 + $0xbc] sm:$0xf]
    %v3365 = vunpack.c.l.b16 %v3301
    %v3366 = vunpack.c.h.b16 %v3301
    %v3367 = vunpack.c.l.b16 %v3302
    %v3368 = vunpack.c.l.b16 %v3303
    %v3369 = vunpack.c.h.b16 %v3303
    %v3370 = vunpack.c.l.b16 %v3304
    %v3371 = vunpack.c.l.b16 %v3305
    %v3372 = vunpack.c.h.b16 %v3305
    %v3373 = vunpack.c.l.b16 %v3306
    %v3374 = vunpack.c.l.b16 %v3307
    %v3375 = vunpack.c.h.b16 %v3307
    %v3376 = vunpack.c.l.b16 %v3308
    %v3377 = vunpack.c.l.b16 %v3309
    %v3378 = vunpack.c.h.b16 %v3309
    %v3379 = vunpack.c.l.b16 %v3310
    %v3380 = vunpack.c.l.b16 %v3311
    %v3381 = vunpack.c.h.b16 %v3311
    %v3382 = vunpack.c.l.b16 %v3312
    %v3383 = vunpack.c.l.b16 %v3313
    %v3384 = vunpack.c.h.b16 %v3313
    %v3385 = vunpack.c.l.b16 %v3314
    %v3386 = vunpack.c.l.b16 %v3315
    %v3387 = vunpack.c.h.b16 %v3315
    %v3388 = vunpack.c.l.b16 %v3316
    %v3389 = vunpack.c.l.b16 %v3317
    %v3390 = vunpack.c.h.b16 %v3317
    %v3391 = vunpack.c.l.b16 %v3318
    %v3392 = vunpack.c.l.b16 %v3319
    %v3393 = vunpack.c.h.b16 %v3319
    %v3394 = vunpack.c.l.b16 %v3320
    %v3395 = vunpack.c.l.b16 %v3321
    %v3396 = vunpack.c.h.b16 %v3321
    %v3397 = vunpack.c.l.b16 %v3322
    %v3398 = vunpack.c.l.b16 %v3323
    %v3399 = vunpack.c.h.b16 %v3323
    %v3400 = vunpack.c.l.b16 %v3324
    %v3401 = vunpack.c.l.b16 %v3325
    %v3402 = vunpack.c.h.b16 %v3325
    %v3403 = vunpack.c.l.b16 %v3326
    %v3404 = vunpack.c.l.b16 %v3327
    %v3405 = vunpack.c.h.b16 %v3327
    %v3406 = vunpack.c.l.b16 %v3328
    %v3407 = vunpack.c.l.b16 %v3329
    %v3408 = vunpack.c.h.b16 %v3329
    %v3409 = vunpack.c.l.b16 %v3330
    %v3410 = vunpack.c.l.b16 %v3331
    %v3411 = vunpack.c.h.b16 %v3331
    %v3412 = vunpack.c.l.b16 %v3332
    %v3413 = vpack.c.b16 %v3368, %v3365
    %v3414 = vpack.c.b16 %v3369, %v3366
    %v3415 = vpack.c.b16 %v3370, %v3367
    %v3416 = vpack.c.b16 %v3374, %v3371
    %v3417 = vpack.c.b16 %v3375, %v3372
    %v3418 = vpack.c.b16 %v3376, %v3373
    %v3419 = vpack.c.b16 %v3380, %v3377
    %v3420 = vpack.c.b16 %v3381, %v3378
    %v3421 = vpack.c.b16 %v3382, %v3379
    %v3422 = vpack.c.b16 %v3386, %v3383
    %v3423 = vpack.c.b16 %v3387, %v3384
    %v3424 = vpack.c.b16 %v3388, %v3385
    %v3425 = vpack.c.b16 %v3392, %v3389
    %v3426 = vpack.c.b16 %v3393, %v3390
    %v3427 = vpack.c.b16 %v3394, %v3391
    %v3428 = vpack.c.b16 %v3398, %v3395
    %v3429 = vpack.c.b16 %v3399, %v3396
    %v3430 = vpack.c.b16 %v3400, %v3397
    %v3431 = vpack.c.b16 %v3404, %v3401
    %v3432 = vpack.c.b16 %v3405, %v3402
    %v3433 = vpack.c.b16 %v3406, %v3403
    %v3434 = vpack.c.b16 %v3410, %v3407
    %v3435 = vpack.c.b16 %v3411, %v3408
    %v3436 = vpack.c.b16 %v3412, %v3409
    %3461 = vmatprep.subr.bf16.mxu0 %v3414
    %3462 = vmatpush1.bf16.msra.mxu0 %v3413
    %3463 = vmatprep.subr.bf16.mxu0 %v3417
    %3464 = vmatpush1.bf16.msra.mxu0 %v3416
    %3465 = vmatprep.subr.bf16.mxu0 %v3420
    %3466 = vmatpush1.bf16.msra.mxu0 %v3419
    %3467 = vmatprep.subr.bf16.mxu0 %v3423
    %3468 = vmatpush1.bf16.msra.mxu0 %v3422
    %3469 = vmatprep.subr.bf16.mxu0 %v3426
    %3470 = vmatpush1.bf16.msra.mxu0 %v3425
    %3471 = vmatprep.subr.bf16.mxu0 %v3429
    %3472 = vmatpush1.bf16.msra.mxu0 %v3428
    %3473 = vmatprep.subr.bf16.mxu0 %v3432
    %3474 = vmatpush1.bf16.msra.mxu0 %v3431
    %3475 = vmatprep.subr.bf16.mxu0 %v3435
    %3476 = vmatpush1.bf16.msra.mxu0 %v3434
    %3477 = vmatprep.subr.bf16.mxu0 0
    %3478 = vmatpush1.bf16.msra.mxu0 0
    %3479 = vmatprep.subr.bf16.mxu0 0
    %3480 = vmatpush1.bf16.msra.mxu0 0
    %3481 = vmatprep.subr.bf16.mxu0 0
    %3482 = vmatpush1.bf16.msra.mxu0 0
    %3483 = vmatprep.subr.bf16.mxu0 0
    %3484 = vmatpush1.bf16.msra.mxu0 0
    %3485 = vmatprep.subr.bf16.mxu0 0
    %3486 = vmatpush1.bf16.msra.mxu0 0
    %3487 = vmatprep.subr.bf16.mxu0 0
    %3488 = vmatpush1.bf16.msra.mxu0 0
    %3489 = vmatprep.subr.bf16.mxu0 0
    %3490 = vmatpush1.bf16.msra.mxu0 0
    %3491 = vmatprep.subr.bf16.mxu0 0
    %3492 = vmatpush1.bf16.msra.mxu0 0
    %3493 = vmatprep.mubr.bf16.mxu0 0
    %3494 = vmatmul.mubr.bf16.gmra.mrb[0].mxu0 %v3300
    %v3495 = vpop.f32.mrb[0].mxu0
    %v3496 = vadd.f32 0.0, %v3495
    %v3497 = vpop.f32.mrb[0].mxu0
    %v3498 = vadd.f32 0.0, %v3497
    %v3499 = vpop.f32.mrb[0].mxu0
    %v3500 = vpop.f32.mrb[0].mxu0
    %3501 = vdwg.mxu0
    %3502 = vmatprep.subr.bf16.mxu0 0
    %3503 = vmatpush1.bf16.msra.mxu0 %v3415
    %3504 = vmatprep.subr.bf16.mxu0 0
    %3505 = vmatpush1.bf16.msra.mxu0 %v3418
    %3506 = vmatprep.subr.bf16.mxu0 0
    %3507 = vmatpush1.bf16.msra.mxu0 %v3421
    %3508 = vmatprep.subr.bf16.mxu0 0
    %3509 = vmatpush1.bf16.msra.mxu0 %v3424
    %3510 = vmatprep.subr.bf16.mxu0 0
    %3511 = vmatpush1.bf16.msra.mxu0 %v3427
    %3512 = vmatprep.subr.bf16.mxu0 0
    %3513 = vmatpush1.bf16.msra.mxu0 %v3430
    %3514 = vmatprep.subr.bf16.mxu0 0
    %3515 = vmatpush1.bf16.msra.mxu0 %v3433
    %3516 = vmatprep.subr.bf16.mxu0 0
    %3517 = vmatpush1.bf16.msra.mxu0 %v3436
    %3518 = vmatprep.subr.bf16.mxu0 0
    %3519 = vmatpush1.bf16.msra.mxu0 0
    %3520 = vmatprep.subr.bf16.mxu0 0
    %3521 = vmatpush1.bf16.msra.mxu0 0
    %3522 = vmatprep.subr.bf16.mxu0 0
    %3523 = vmatpush1.bf16.msra.mxu0 0
    %3524 = vmatprep.subr.bf16.mxu0 0
    %3525 = vmatpush1.bf16.msra.mxu0 0
    %3526 = vmatprep.subr.bf16.mxu0 0
    %3527 = vmatpush1.bf16.msra.mxu0 0
    %3528 = vmatprep.subr.bf16.mxu0 0
    %3529 = vmatpush1.bf16.msra.mxu0 0
    %3530 = vmatprep.subr.bf16.mxu0 0
    %3531 = vmatpush1.bf16.msra.mxu0 0
    %3532 = vmatprep.subr.bf16.mxu0 0
    %3533 = vmatpush1.bf16.msra.mxu0 0
    %3534 = vmatprep.mubr.bf16.mxu0 0
    %3535 = vmatmul.mubr.bf16.gmra.mrb[0].mxu0 %v3300
    %v3536 = vpop.f32.mrb[0].mxu0
    %v3537 = vadd.f32 0.0, %v3536
    %v3538 = vpop.f32.mrb[0].mxu0
    %v3539 = vpop.f32.mrb[0].mxu0
    %v3540 = vpop.f32.mrb[0].mxu0
    %3541 = vdwg.mxu0
    %v3542 = vadd.f32 %v3297, %v3496
    %v3543 = vxor.u32 %v3542, 2147483648
    %v3544 = vmul.f32 %v3543, 1.442695
    %v3545 = vpow.pop %v3544
    %v3546 = vadd.f32 %v3545, 1.0
    %v3547 = vrcp.pop %v3546
    %v3548 = vmul.f32 1.0, %v3547
    %v3549 = vadd.f32 %v3298, %v3498
    %v3550 = vxor.u32 %v3549, 2147483648
    %v3551 = vmul.f32 %v3550, 1.442695
    %v3552 = vpow.pop %v3551
    %v3553 = vadd.f32 %v3552, 1.0
    %v3554 = vrcp.pop %v3553
    %v3555 = vmul.f32 1.0, %v3554
    %v3556 = vadd.f32 %v3537, %v1107
    %v3557 = vmul.f32 %v3548, %v3556
    %v3558 = vadd.f32 %v3299, %v3557
    %v3559 = vtanh.pop %v3558
    %v3560 = vsub.f32 1.0, %v3555
    %v3561 = vmul.f32 %v3560, %v3559
    %v3562 = vmul.f32 %v3555, %v3291
    %v3563 = vadd.f32 %v3561, %v3562
    %s3564 = scalar_lea.vmem [#allocation3], 72
    %3565 = vst [vmem:[%s3564] sm:$0xff] %v3563
    %s3566 = smul.u32 10, 3
    %s3567 = smul.addr %s3566, 8
    %s3568 = scalar_lea.vmem [#allocation2], %s3567
    %v3569 = vld [vmem:[%s3568] sm:$0xff]
    %v3570 = vld [vmem:[%s3568 + $0x8] sm:$0xff]
    %v3571 = vld [vmem:[%s3568 + $0x10] sm:$0xff]
    %v3572 = vpack.c.bf16 %v3563, %v3563
    %v3573 = vld [vmem:[#allocation7] sm:$0xff]
    %v3574 = vld [vmem:[#allocation7 + $0x8] sm:$0xf]
    %v3575 = vld [vmem:[#allocation7 + $0xc] sm:$0xff]
    %v3576 = vld [vmem:[#allocation7 + $0x14] sm:$0xf]
    %v3577 = vld [vmem:[#allocation7 + $0x18] sm:$0xff]
    %v3578 = vld [vmem:[#allocation7 + $0x20] sm:$0xf]
    %v3579 = vld [vmem:[#allocation7 + $0x24] sm:$0xff]
    %v3580 = vld [vmem:[#allocation7 + $0x2c] sm:$0xf]
    %v3581 = vld [vmem:[#allocation7 + $0x30] sm:$0xff]
    %v3582 = vld [vmem:[#allocation7 + $0x38] sm:$0xf]
    %v3583 = vld [vmem:[#allocation7 + $0x3c] sm:$0xff]
    %v3584 = vld [vmem:[#allocation7 + $0x44] sm:$0xf]
    %v3585 = vld [vmem:[#allocation7 + $0x48] sm:$0xff]
    %v3586 = vld [vmem:[#allocation7 + $0x50] sm:$0xf]
    %v3587 = vld [vmem:[#allocation7 + $0x54] sm:$0xff]
    %v3588 = vld [vmem:[#allocation7 + $0x5c] sm:$0xf]
    %v3589 = vld [vmem:[#allocation7 + $0x60] sm:$0xff]
    %v3590 = vld [vmem:[#allocation7 + $0x68] sm:$0xf]
    %v3591 = vld [vmem:[#allocation7 + $0x6c] sm:$0xff]
    %v3592 = vld [vmem:[#allocation7 + $0x74] sm:$0xf]
    %v3593 = vld [vmem:[#allocation7 + $0x78] sm:$0xff]
    %v3594 = vld [vmem:[#allocation7 + $0x80] sm:$0xf]
    %v3595 = vld [vmem:[#allocation7 + $0x84] sm:$0xff]
    %v3596 = vld [vmem:[#allocation7 + $0x8c] sm:$0xf]
    %v3597 = vld [vmem:[#allocation7 + $0x90] sm:$0xff]
    %v3598 = vld [vmem:[#allocation7 + $0x98] sm:$0xf]
    %v3599 = vld [vmem:[#allocation7 + $0x9c] sm:$0xff]
    %v3600 = vld [vmem:[#allocation7 + $0xa4] sm:$0xf]
    %v3601 = vld [vmem:[#allocation7 + $0xa8] sm:$0xff]
    %v3602 = vld [vmem:[#allocation7 + $0xb0] sm:$0xf]
    %v3603 = vld [vmem:[#allocation7 + $0xb4] sm:$0xff]
    %v3604 = vld [vmem:[#allocation7 + $0xbc] sm:$0xf]
    %v3637 = vunpack.c.l.b16 %v3573
    %v3638 = vunpack.c.h.b16 %v3573
    %v3639 = vunpack.c.l.b16 %v3574
    %v3640 = vunpack.c.l.b16 %v3575
    %v3641 = vunpack.c.h.b16 %v3575
    %v3642 = vunpack.c.l.b16 %v3576
    %v3643 = vunpack.c.l.b16 %v3577
    %v3644 = vunpack.c.h.b16 %v3577
    %v3645 = vunpack.c.l.b16 %v3578
    %v3646 = vunpack.c.l.b16 %v3579
    %v3647 = vunpack.c.h.b16 %v3579
    %v3648 = vunpack.c.l.b16 %v3580
    %v3649 = vunpack.c.l.b16 %v3581
    %v3650 = vunpack.c.h.b16 %v3581
    %v3651 = vunpack.c.l.b16 %v3582
    %v3652 = vunpack.c.l.b16 %v3583
    %v3653 = vunpack.c.h.b16 %v3583
    %v3654 = vunpack.c.l.b16 %v3584
    %v3655 = vunpack.c.l.b16 %v3585
    %v3656 = vunpack.c.h.b16 %v3585
    %v3657 = vunpack.c.l.b16 %v3586
    %v3658 = vunpack.c.l.b16 %v3587
    %v3659 = vunpack.c.h.b16 %v3587
    %v3660 = vunpack.c.l.b16 %v3588
    %v3661 = vunpack.c.l.b16 %v3589
    %v3662 = vunpack.c.h.b16 %v3589
    %v3663 = vunpack.c.l.b16 %v3590
    %v3664 = vunpack.c.l.b16 %v3591
    %v3665 = vunpack.c.h.b16 %v3591
    %v3666 = vunpack.c.l.b16 %v3592
    %v3667 = vunpack.c.l.b16 %v3593
    %v3668 = vunpack.c.h.b16 %v3593
    %v3669 = vunpack.c.l.b16 %v3594
    %v3670 = vunpack.c.l.b16 %v3595
    %v3671 = vunpack.c.h.b16 %v3595
    %v3672 = vunpack.c.l.b16 %v3596
    %v3673 = vunpack.c.l.b16 %v3597
    %v3674 = vunpack.c.h.b16 %v3597
    %v3675 = vunpack.c.l.b16 %v3598
    %v3676 = vunpack.c.l.b16 %v3599
    %v3677 = vunpack.c.h.b16 %v3599
    %v3678 = vunpack.c.l.b16 %v3600
    %v3679 = vunpack.c.l.b16 %v3601
    %v3680 = vunpack.c.h.b16 %v3601
    %v3681 = vunpack.c.l.b16 %v3602
    %v3682 = vunpack.c.l.b16 %v3603
    %v3683 = vunpack.c.h.b16 %v3603
    %v3684 = vunpack.c.l.b16 %v3604
    %v3685 = vpack.c.b16 %v3640, %v3637
    %v3686 = vpack.c.b16 %v3641, %v3638
    %v3687 = vpack.c.b16 %v3642, %v3639
    %v3688 = vpack.c.b16 %v3646, %v3643
    %v3689 = vpack.c.b16 %v3647, %v3644
    %v3690 = vpack.c.b16 %v3648, %v3645
    %v3691 = vpack.c.b16 %v3652, %v3649
    %v3692 = vpack.c.b16 %v3653, %v3650
    %v3693 = vpack.c.b16 %v3654, %v3651
    %v3694 = vpack.c.b16 %v3658, %v3655
    %v3695 = vpack.c.b16 %v3659, %v3656
    %v3696 = vpack.c.b16 %v3660, %v3657
    %v3697 = vpack.c.b16 %v3664, %v3661
    %v3698 = vpack.c.b16 %v3665, %v3662
    %v3699 = vpack.c.b16 %v3666, %v3663
    %v3700 = vpack.c.b16 %v3670, %v3667
    %v3701 = vpack.c.b16 %v3671, %v3668
    %v3702 = vpack.c.b16 %v3672, %v3669
    %v3703 = vpack.c.b16 %v3676, %v3673
    %v3704 = vpack.c.b16 %v3677, %v3674
    %v3705 = vpack.c.b16 %v3678, %v3675
    %v3706 = vpack.c.b16 %v3682, %v3679
    %v3707 = vpack.c.b16 %v3683, %v3680
    %v3708 = vpack.c.b16 %v3684, %v3681
    %3733 = vmatprep.subr.bf16.mxu0 %v3686
    %3734 = vmatpush1.bf16.msra.mxu0 %v3685
    %3735 = vmatprep.subr.bf16.mxu0 %v3689
    %3736 = vmatpush1.bf16.msra.mxu0 %v3688
    %3737 = vmatprep.subr.bf16.mxu0 %v3692
    %3738 = vmatpush1.bf16.msra.mxu0 %v3691
    %3739 = vmatprep.subr.bf16.mxu0 %v3695
    %3740 = vmatpush1.bf16.msra.mxu0 %v3694
    %3741 = vmatprep.subr.bf16.mxu0 %v3698
    %3742 = vmatpush1.bf16.msra.mxu0 %v3697
    %3743 = vmatprep.subr.bf16.mxu0 %v3701
    %3744 = vmatpush1.bf16.msra.mxu0 %v3700
    %3745 = vmatprep.subr.bf16.mxu0 %v3704
    %3746 = vmatpush1.bf16.msra.mxu0 %v3703
    %3747 = vmatprep.subr.bf16.mxu0 %v3707
    %3748 = vmatpush1.bf16.msra.mxu0 %v3706
    %3749 = vmatprep.subr.bf16.mxu0 0
    %3750 = vmatpush1.bf16.msra.mxu0 0
    %3751 = vmatprep.subr.bf16.mxu0 0
    %3752 = vmatpush1.bf16.msra.mxu0 0
    %3753 = vmatprep.subr.bf16.mxu0 0
    %3754 = vmatpush1.bf16.msra.mxu0 0
    %3755 = vmatprep.subr.bf16.mxu0 0
    %3756 = vmatpush1.bf16.msra.mxu0 0
    %3757 = vmatprep.subr.bf16.mxu0 0
    %3758 = vmatpush1.bf16.msra.mxu0 0
    %3759 = vmatprep.subr.bf16.mxu0 0
    %3760 = vmatpush1.bf16.msra.mxu0 0
    %3761 = vmatprep.subr.bf16.mxu0 0
    %3762 = vmatpush1.bf16.msra.mxu0 0
    %3763 = vmatprep.subr.bf16.mxu0 0
    %3764 = vmatpush1.bf16.msra.mxu0 0
    %3765 = vmatprep.mubr.bf16.mxu0 0
    %3766 = vmatmul.mubr.bf16.gmra.mrb[0].mxu0 %v3572
    %v3767 = vpop.f32.mrb[0].mxu0
    %v3768 = vadd.f32 0.0, %v3767
    %v3769 = vpop.f32.mrb[0].mxu0
    %v3770 = vadd.f32 0.0, %v3769
    %v3771 = vpop.f32.mrb[0].mxu0
    %v3772 = vpop.f32.mrb[0].mxu0
    %3773 = vdwg.mxu0
    %3774 = vmatprep.subr.bf16.mxu0 0
    %3775 = vmatpush1.bf16.msra.mxu0 %v3687
    %3776 = vmatprep.subr.bf16.mxu0 0
    %3777 = vmatpush1.bf16.msra.mxu0 %v3690
    %3778 = vmatprep.subr.bf16.mxu0 0
    %3779 = vmatpush1.bf16.msra.mxu0 %v3693
    %3780 = vmatprep.subr.bf16.mxu0 0
    %3781 = vmatpush1.bf16.msra.mxu0 %v3696
    %3782 = vmatprep.subr.bf16.mxu0 0
    %3783 = vmatpush1.bf16.msra.mxu0 %v3699
    %3784 = vmatprep.subr.bf16.mxu0 0
    %3785 = vmatpush1.bf16.msra.mxu0 %v3702
    %3786 = vmatprep.subr.bf16.mxu0 0
    %3787 = vmatpush1.bf16.msra.mxu0 %v3705
    %3788 = vmatprep.subr.bf16.mxu0 0
    %3789 = vmatpush1.bf16.msra.mxu0 %v3708
    %3790 = vmatprep.subr.bf16.mxu0 0
    %3791 = vmatpush1.bf16.msra.mxu0 0
    %3792 = vmatprep.subr.bf16.mxu0 0
    %3793 = vmatpush1.bf16.msra.mxu0 0
    %3794 = vmatprep.subr.bf16.mxu0 0
    %3795 = vmatpush1.bf16.msra.mxu0 0
    %3796 = vmatprep.subr.bf16.mxu0 0
    %3797 = vmatpush1.bf16.msra.mxu0 0
    %3798 = vmatprep.subr.bf16.mxu0 0
    %3799 = vmatpush1.bf16.msra.mxu0 0
    %3800 = vmatprep.subr.bf16.mxu0 0
    %3801 = vmatpush1.bf16.msra.mxu0 0
    %3802 = vmatprep.subr.bf16.mxu0 0
    %3803 = vmatpush1.bf16.msra.mxu0 0
    %3804 = vmatprep.subr.bf16.mxu0 0
    %3805 = vmatpush1.bf16.msra.mxu0 0
    %3806 = vmatprep.mubr.bf16.mxu0 0
    %3807 = vmatmul.mubr.bf16.gmra.mrb[0].mxu0 %v3572
    %v3808 = vpop.f32.mrb[0].mxu0
    %v3809 = vadd.f32 0.0, %v3808
    %v3810 = vpop.f32.mrb[0].mxu0
    %v3811 = vpop.f32.mrb[0].mxu0
    %v3812 = vpop.f32.mrb[0].mxu0
    %3813 = vdwg.mxu0
    %v3814 = vadd.f32 %v3569, %v3768
    %v3815 = vxor.u32 %v3814, 2147483648
    %v3816 = vmul.f32 %v3815, 1.442695
    %v3817 = vpow.pop %v3816
    %v3818 = vadd.f32 %v3817, 1.0
    %v3819 = vrcp.pop %v3818
    %v3820 = vmul.f32 1.0, %v3819
    %v3821 = vadd.f32 %v3570, %v3770
    %v3822 = vxor.u32 %v3821, 2147483648
    %v3823 = vmul.f32 %v3822, 1.442695
    %v3824 = vpow.pop %v3823
    %v3825 = vadd.f32 %v3824, 1.0
    %v3826 = vrcp.pop %v3825
    %v3827 = vmul.f32 1.0, %v3826
    %v3828 = vadd.f32 %v3809, %v1107
    %v3829 = vmul.f32 %v3820, %v3828
    %v3830 = vadd.f32 %v3571, %v3829
    %v3831 = vtanh.pop %v3830
    %v3832 = vsub.f32 1.0, %v3827
    %v3833 = vmul.f32 %v3832, %v3831
    %v3834 = vmul.f32 %v3827, %v3563
    %v3835 = vadd.f32 %v3833, %v3834
    %s3836 = scalar_lea.vmem [#allocation3], 80
    %3837 = vst [vmem:[%s3836] sm:$0xff] %v3835
    %s3838 = smul.u32 11, 3
    %s3839 = smul.addr %s3838, 8
    %s3840 = scalar_lea.vmem [#allocation2], %s3839
    %v3841 = vld [vmem:[%s3840] sm:$0xff]
    %v3842 = vld [vmem:[%s3840 + $0x8] sm:$0xff]
    %v3843 = vld [vmem:[%s3840 + $0x10] sm:$0xff]
    %v3844 = vpack.c.bf16 %v3835, %v3835
    %v3845 = vld [vmem:[#allocation7] sm:$0xff]
    %v3846 = vld [vmem:[#allocation7 + $0x8] sm:$0xf]
    %v3847 = vld [vmem:[#allocation7 + $0xc] sm:$0xff]
    %v3848 = vld [vmem:[#allocation7 + $0x14] sm:$0xf]
    %v3849 = vld [vmem:[#allocation7 + $0x18] sm:$0xff]
    %v3850 = vld [vmem:[#allocation7 + $0x20] sm:$0xf]
    %v3851 = vld [vmem:[#allocation7 + $0x24] sm:$0xff]
    %v3852 = vld [vmem:[#allocation7 + $0x2c] sm:$0xf]
    %v3853 = vld [vmem:[#allocation7 + $0x30] sm:$0xff]
    %v3854 = vld [vmem:[#allocation7 + $0x38] sm:$0xf]
    %v3855 = vld [vmem:[#allocation7 + $0x3c] sm:$0xff]
    %v3856 = vld [vmem:[#allocation7 + $0x44] sm:$0xf]
    %v3857 = vld [vmem:[#allocation7 + $0x48] sm:$0xff]
    %v3858 = vld [vmem:[#allocation7 + $0x50] sm:$0xf]
    %v3859 = vld [vmem:[#allocation7 + $0x54] sm:$0xff]
    %v3860 = vld [vmem:[#allocation7 + $0x5c] sm:$0xf]
    %v3861 = vld [vmem:[#allocation7 + $0x60] sm:$0xff]
    %v3862 = vld [vmem:[#allocation7 + $0x68] sm:$0xf]
    %v3863 = vld [vmem:[#allocation7 + $0x6c] sm:$0xff]
    %v3864 = vld [vmem:[#allocation7 + $0x74] sm:$0xf]
    %v3865 = vld [vmem:[#allocation7 + $0x78] sm:$0xff]
    %v3866 = vld [vmem:[#allocation7 + $0x80] sm:$0xf]
    %v3867 = vld [vmem:[#allocation7 + $0x84] sm:$0xff]
    %v3868 = vld [vmem:[#allocation7 + $0x8c] sm:$0xf]
    %v3869 = vld [vmem:[#allocation7 + $0x90] sm:$0xff]
    %v3870 = vld [vmem:[#allocation7 + $0x98] sm:$0xf]
    %v3871 = vld [vmem:[#allocation7 + $0x9c] sm:$0xff]
    %v3872 = vld [vmem:[#allocation7 + $0xa4] sm:$0xf]
    %v3873 = vld [vmem:[#allocation7 + $0xa8] sm:$0xff]
    %v3874 = vld [vmem:[#allocation7 + $0xb0] sm:$0xf]
    %v3875 = vld [vmem:[#allocation7 + $0xb4] sm:$0xff]
    %v3876 = vld [vmem:[#allocation7 + $0xbc] sm:$0xf]
    %v3909 = vunpack.c.l.b16 %v3845
    %v3910 = vunpack.c.h.b16 %v3845
    %v3911 = vunpack.c.l.b16 %v3846
    %v3912 = vunpack.c.l.b16 %v3847
    %v3913 = vunpack.c.h.b16 %v3847
    %v3914 = vunpack.c.l.b16 %v3848
    %v3915 = vunpack.c.l.b16 %v3849
    %v3916 = vunpack.c.h.b16 %v3849
    %v3917 = vunpack.c.l.b16 %v3850
    %v3918 = vunpack.c.l.b16 %v3851
    %v3919 = vunpack.c.h.b16 %v3851
    %v3920 = vunpack.c.l.b16 %v3852
    %v3921 = vunpack.c.l.b16 %v3853
    %v3922 = vunpack.c.h.b16 %v3853
    %v3923 = vunpack.c.l.b16 %v3854
    %v3924 = vunpack.c.l.b16 %v3855
    %v3925 = vunpack.c.h.b16 %v3855
    %v3926 = vunpack.c.l.b16 %v3856
    %v3927 = vunpack.c.l.b16 %v3857
    %v3928 = vunpack.c.h.b16 %v3857
    %v3929 = vunpack.c.l.b16 %v3858
    %v3930 = vunpack.c.l.b16 %v3859
    %v3931 = vunpack.c.h.b16 %v3859
    %v3932 = vunpack.c.l.b16 %v3860
    %v3933 = vunpack.c.l.b16 %v3861
    %v3934 = vunpack.c.h.b16 %v3861
    %v3935 = vunpack.c.l.b16 %v3862
    %v3936 = vunpack.c.l.b16 %v3863
    %v3937 = vunpack.c.h.b16 %v3863
    %v3938 = vunpack.c.l.b16 %v3864
    %v3939 = vunpack.c.l.b16 %v3865
    %v3940 = vunpack.c.h.b16 %v3865
    %v3941 = vunpack.c.l.b16 %v3866
    %v3942 = vunpack.c.l.b16 %v3867
    %v3943 = vunpack.c.h.b16 %v3867
    %v3944 = vunpack.c.l.b16 %v3868
    %v3945 = vunpack.c.l.b16 %v3869
    %v3946 = vunpack.c.h.b16 %v3869
    %v3947 = vunpack.c.l.b16 %v3870
    %v3948 = vunpack.c.l.b16 %v3871
    %v3949 = vunpack.c.h.b16 %v3871
    %v3950 = vunpack.c.l.b16 %v3872
    %v3951 = vunpack.c.l.b16 %v3873
    %v3952 = vunpack.c.h.b16 %v3873
    %v3953 = vunpack.c.l.b16 %v3874
    %v3954 = vunpack.c.l.b16 %v3875
    %v3955 = vunpack.c.h.b16 %v3875
    %v3956 = vunpack.c.l.b16 %v3876
    %v3957 = vpack.c.b16 %v3912, %v3909
    %v3958 = vpack.c.b16 %v3913, %v3910
    %v3959 = vpack.c.b16 %v3914, %v3911
    %v3960 = vpack.c.b16 %v3918, %v3915
    %v3961 = vpack.c.b16 %v3919, %v3916
    %v3962 = vpack.c.b16 %v3920, %v3917
    %v3963 = vpack.c.b16 %v3924, %v3921
    %v3964 = vpack.c.b16 %v3925, %v3922
    %v3965 = vpack.c.b16 %v3926, %v3923
    %v3966 = vpack.c.b16 %v3930, %v3927
    %v3967 = vpack.c.b16 %v3931, %v3928
    %v3968 = vpack.c.b16 %v3932, %v3929
    %v3969 = vpack.c.b16 %v3936, %v3933
    %v3970 = vpack.c.b16 %v3937, %v3934
    %v3971 = vpack.c.b16 %v3938, %v3935
    %v3972 = vpack.c.b16 %v3942, %v3939
    %v3973 = vpack.c.b16 %v3943, %v3940
    %v3974 = vpack.c.b16 %v3944, %v3941
    %v3975 = vpack.c.b16 %v3948, %v3945
    %v3976 = vpack.c.b16 %v3949, %v3946
    %v3977 = vpack.c.b16 %v3950, %v3947
    %v3978 = vpack.c.b16 %v3954, %v3951
    %v3979 = vpack.c.b16 %v3955, %v3952
    %v3980 = vpack.c.b16 %v3956, %v3953
    %4005 = vmatprep.subr.bf16.mxu0 %v3958
    %4006 = vmatpush1.bf16.msra.mxu0 %v3957
    %4007 = vmatprep.subr.bf16.mxu0 %v3961
    %4008 = vmatpush1.bf16.msra.mxu0 %v3960
    %4009 = vmatprep.subr.bf16.mxu0 %v3964
    %4010 = vmatpush1.bf16.msra.mxu0 %v3963
    %4011 = vmatprep.subr.bf16.mxu0 %v3967
    %4012 = vmatpush1.bf16.msra.mxu0 %v3966
    %4013 = vmatprep.subr.bf16.mxu0 %v3970
    %4014 = vmatpush1.bf16.msra.mxu0 %v3969
    %4015 = vmatprep.subr.bf16.mxu0 %v3973
    %4016 = vmatpush1.bf16.msra.mxu0 %v3972
    %4017 = vmatprep.subr.bf16.mxu0 %v3976
    %4018 = vmatpush1.bf16.msra.mxu0 %v3975
    %4019 = vmatprep.subr.bf16.mxu0 %v3979
    %4020 = vmatpush1.bf16.msra.mxu0 %v3978
    %4021 = vmatprep.subr.bf16.mxu0 0
    %4022 = vmatpush1.bf16.msra.mxu0 0
    %4023 = vmatprep.subr.bf16.mxu0 0
    %4024 = vmatpush1.bf16.msra.mxu0 0
    %4025 = vmatprep.subr.bf16.mxu0 0
    %4026 = vmatpush1.bf16.msra.mxu0 0
    %4027 = vmatprep.subr.bf16.mxu0 0
    %4028 = vmatpush1.bf16.msra.mxu0 0
    %4029 = vmatprep.subr.bf16.mxu0 0
    %4030 = vmatpush1.bf16.msra.mxu0 0
    %4031 = vmatprep.subr.bf16.mxu0 0
    %4032 = vmatpush1.bf16.msra.mxu0 0
    %4033 = vmatprep.subr.bf16.mxu0 0
    %4034 = vmatpush1.bf16.msra.mxu0 0
    %4035 = vmatprep.subr.bf16.mxu0 0
    %4036 = vmatpush1.bf16.msra.mxu0 0
    %4037 = vmatprep.mubr.bf16.mxu0 0
    %4038 = vmatmul.mubr.bf16.gmra.mrb[0].mxu0 %v3844
    %v4039 = vpop.f32.mrb[0].mxu0
    %v4040 = vadd.f32 0.0, %v4039
    %v4041 = vpop.f32.mrb[0].mxu0
    %v4042 = vadd.f32 0.0, %v4041
    %v4043 = vpop.f32.mrb[0].mxu0
    %v4044 = vpop.f32.mrb[0].mxu0
    %4045 = vdwg.mxu0
    %4046 = vmatprep.subr.bf16.mxu0 0
    %4047 = vmatpush1.bf16.msra.mxu0 %v3959
    %4048 = vmatprep.subr.bf16.mxu0 0
    %4049 = vmatpush1.bf16.msra.mxu0 %v3962
    %4050 = vmatprep.subr.bf16.mxu0 0
    %4051 = vmatpush1.bf16.msra.mxu0 %v3965
    %4052 = vmatprep.subr.bf16.mxu0 0
    %4053 = vmatpush1.bf16.msra.mxu0 %v3968
    %4054 = vmatprep.subr.bf16.mxu0 0
    %4055 = vmatpush1.bf16.msra.mxu0 %v3971
    %4056 = vmatprep.subr.bf16.mxu0 0
    %4057 = vmatpush1.bf16.msra.mxu0 %v3974
    %4058 = vmatprep.subr.bf16.mxu0 0
    %4059 = vmatpush1.bf16.msra.mxu0 %v3977
    %4060 = vmatprep.subr.bf16.mxu0 0
    %4061 = vmatpush1.bf16.msra.mxu0 %v3980
    %4062 = vmatprep.subr.bf16.mxu0 0
    %4063 = vmatpush1.bf16.msra.mxu0 0
    %4064 = vmatprep.subr.bf16.mxu0 0
    %4065 = vmatpush1.bf16.msra.mxu0 0
    %4066 = vmatprep.subr.bf16.mxu0 0
    %4067 = vmatpush1.bf16.msra.mxu0 0
    %4068 = vmatprep.subr.bf16.mxu0 0
    %4069 = vmatpush1.bf16.msra.mxu0 0
    %4070 = vmatprep.subr.bf16.mxu0 0
    %4071 = vmatpush1.bf16.msra.mxu0 0
    %4072 = vmatprep.subr.bf16.mxu0 0
    %4073 = vmatpush1.bf16.msra.mxu0 0
    %4074 = vmatprep.subr.bf16.mxu0 0
    %4075 = vmatpush1.bf16.msra.mxu0 0
    %4076 = vmatprep.subr.bf16.mxu0 0
    %4077 = vmatpush1.bf16.msra.mxu0 0
    %4078 = vmatprep.mubr.bf16.mxu0 0
    %4079 = vmatmul.mubr.bf16.gmra.mrb[0].mxu0 %v3844
    %v4080 = vpop.f32.mrb[0].mxu0
    %v4081 = vadd.f32 0.0, %v4080
    %v4082 = vpop.f32.mrb[0].mxu0
    %v4083 = vpop.f32.mrb[0].mxu0
    %v4084 = vpop.f32.mrb[0].mxu0
    %4085 = vdwg.mxu0
    %v4086 = vadd.f32 %v3841, %v4040
    %v4087 = vxor.u32 %v4086, 2147483648
    %v4088 = vmul.f32 %v4087, 1.442695
    %v4089 = vpow.pop %v4088
    %v4090 = vadd.f32 %v4089, 1.0
    %v4091 = vrcp.pop %v4090
    %v4092 = vmul.f32 1.0, %v4091
    %v4093 = vadd.f32 %v3842, %v4042
    %v4094 = vxor.u32 %v4093, 2147483648
    %v4095 = vmul.f32 %v4094, 1.442695
    %v4096 = vpow.pop %v4095
    %v4097 = vadd.f32 %v4096, 1.0
    %v4098 = vrcp.pop %v4097
    %v4099 = vmul.f32 1.0, %v4098
    %v4100 = vadd.f32 %v4081, %v1107
    %v4101 = vmul.f32 %v4092, %v4100
    %v4102 = vadd.f32 %v3843, %v4101
    %v4103 = vtanh.pop %v4102
    %v4104 = vsub.f32 1.0, %v4099
    %v4105 = vmul.f32 %v4104, %v4103
    %v4106 = vmul.f32 %v4099, %v3835
    %v4107 = vadd.f32 %v4105, %v4106
    %s4108 = scalar_lea.vmem [#allocation3], 88
    %4109 = vst [vmem:[%s4108] sm:$0xff] %v4107
    %s4110 = smul.u32 12, 3
    %s4111 = smul.addr %s4110, 8
    %s4112 = scalar_lea.vmem [#allocation2], %s4111
    %v4113 = vld [vmem:[%s4112] sm:$0xff]
    %v4114 = vld [vmem:[%s4112 + $0x8] sm:$0xff]
    %v4115 = vld [vmem:[%s4112 + $0x10] sm:$0xff]
    %v4116 = vpack.c.bf16 %v4107, %v4107
    %v4117 = vld [vmem:[#allocation7] sm:$0xff]
    %v4118 = vld [vmem:[#allocation7 + $0x8] sm:$0xf]
    %v4119 = vld [vmem:[#allocation7 + $0xc] sm:$0xff]
    %v4120 = vld [vmem:[#allocation7 + $0x14] sm:$0xf]
    %v4121 = vld [vmem:[#allocation7 + $0x18] sm:$0xff]
    %v4122 = vld [vmem:[#allocation7 + $0x20] sm:$0xf]
    %v4123 = vld [vmem:[#allocation7 + $0x24] sm:$0xff]
    %v4124 = vld [vmem:[#allocation7 + $0x2c] sm:$0xf]
    %v4125 = vld [vmem:[#allocation7 + $0x30] sm:$0xff]
    %v4126 = vld [vmem:[#allocation7 + $0x38] sm:$0xf]
    %v4127 = vld [vmem:[#allocation7 + $0x3c] sm:$0xff]
    %v4128 = vld [vmem:[#allocation7 + $0x44] sm:$0xf]
    %v4129 = vld [vmem:[#allocation7 + $0x48] sm:$0xff]
    %v4130 = vld [vmem:[#allocation7 + $0x50] sm:$0xf]
    %v4131 = vld [vmem:[#allocation7 + $0x54] sm:$0xff]
    %v4132 = vld [vmem:[#allocation7 + $0x5c] sm:$0xf]
    %v4133 = vld [vmem:[#allocation7 + $0x60] sm:$0xff]
    %v4134 = vld [vmem:[#allocation7 + $0x68] sm:$0xf]
    %v4135 = vld [vmem:[#allocation7 + $0x6c] sm:$0xff]
    %v4136 = vld [vmem:[#allocation7 + $0x74] sm:$0xf]
    %v4137 = vld [vmem:[#allocation7 + $0x78] sm:$0xff]
    %v4138 = vld [vmem:[#allocation7 + $0x80] sm:$0xf]
    %v4139 = vld [vmem:[#allocation7 + $0x84] sm:$0xff]
    %v4140 = vld [vmem:[#allocation7 + $0x8c] sm:$0xf]
    %v4141 = vld [vmem:[#allocation7 + $0x90] sm:$0xff]
    %v4142 = vld [vmem:[#allocation7 + $0x98] sm:$0xf]
    %v4143 = vld [vmem:[#allocation7 + $0x9c] sm:$0xff]
    %v4144 = vld [vmem:[#allocation7 + $0xa4] sm:$0xf]
    %v4145 = vld [vmem:[#allocation7 + $0xa8] sm:$0xff]
    %v4146 = vld [vmem:[#allocation7 + $0xb0] sm:$0xf]
    %v4147 = vld [vmem:[#allocation7 + $0xb4] sm:$0xff]
    %v4148 = vld [vmem:[#allocation7 + $0xbc] sm:$0xf]
    %v4181 = vunpack.c.l.b16 %v4117
    %v4182 = vunpack.c.h.b16 %v4117
    %v4183 = vunpack.c.l.b16 %v4118
    %v4184 = vunpack.c.l.b16 %v4119
    %v4185 = vunpack.c.h.b16 %v4119
    %v4186 = vunpack.c.l.b16 %v4120
    %v4187 = vunpack.c.l.b16 %v4121
    %v4188 = vunpack.c.h.b16 %v4121
    %v4189 = vunpack.c.l.b16 %v4122
    %v4190 = vunpack.c.l.b16 %v4123
    %v4191 = vunpack.c.h.b16 %v4123
    %v4192 = vunpack.c.l.b16 %v4124
    %v4193 = vunpack.c.l.b16 %v4125
    %v4194 = vunpack.c.h.b16 %v4125
    %v4195 = vunpack.c.l.b16 %v4126
    %v4196 = vunpack.c.l.b16 %v4127
    %v4197 = vunpack.c.h.b16 %v4127
    %v4198 = vunpack.c.l.b16 %v4128
    %v4199 = vunpack.c.l.b16 %v4129
    %v4200 = vunpack.c.h.b16 %v4129
    %v4201 = vunpack.c.l.b16 %v4130
    %v4202 = vunpack.c.l.b16 %v4131
    %v4203 = vunpack.c.h.b16 %v4131
    %v4204 = vunpack.c.l.b16 %v4132
    %v4205 = vunpack.c.l.b16 %v4133
    %v4206 = vunpack.c.h.b16 %v4133
    %v4207 = vunpack.c.l.b16 %v4134
    %v4208 = vunpack.c.l.b16 %v4135
    %v4209 = vunpack.c.h.b16 %v4135
    %v4210 = vunpack.c.l.b16 %v4136
    %v4211 = vunpack.c.l.b16 %v4137
    %v4212 = vunpack.c.h.b16 %v4137
    %v4213 = vunpack.c.l.b16 %v4138
    %v4214 = vunpack.c.l.b16 %v4139
    %v4215 = vunpack.c.h.b16 %v4139
    %v4216 = vunpack.c.l.b16 %v4140
    %v4217 = vunpack.c.l.b16 %v4141
    %v4218 = vunpack.c.h.b16 %v4141
    %v4219 = vunpack.c.l.b16 %v4142
    %v4220 = vunpack.c.l.b16 %v4143
    %v4221 = vunpack.c.h.b16 %v4143
    %v4222 = vunpack.c.l.b16 %v4144
    %v4223 = vunpack.c.l.b16 %v4145
    %v4224 = vunpack.c.h.b16 %v4145
    %v4225 = vunpack.c.l.b16 %v4146
    %v4226 = vunpack.c.l.b16 %v4147
    %v4227 = vunpack.c.h.b16 %v4147
    %v4228 = vunpack.c.l.b16 %v4148
    %v4229 = vpack.c.b16 %v4184, %v4181
    %v4230 = vpack.c.b16 %v4185, %v4182
    %v4231 = vpack.c.b16 %v4186, %v4183
    %v4232 = vpack.c.b16 %v4190, %v4187
    %v4233 = vpack.c.b16 %v4191, %v4188
    %v4234 = vpack.c.b16 %v4192, %v4189
    %v4235 = vpack.c.b16 %v4196, %v4193
    %v4236 = vpack.c.b16 %v4197, %v4194
    %v4237 = vpack.c.b16 %v4198, %v4195
    %v4238 = vpack.c.b16 %v4202, %v4199
    %v4239 = vpack.c.b16 %v4203, %v4200
    %v4240 = vpack.c.b16 %v4204, %v4201
    %v4241 = vpack.c.b16 %v4208, %v4205
    %v4242 = vpack.c.b16 %v4209, %v4206
    %v4243 = vpack.c.b16 %v4210, %v4207
    %v4244 = vpack.c.b16 %v4214, %v4211
    %v4245 = vpack.c.b16 %v4215, %v4212
    %v4246 = vpack.c.b16 %v4216, %v4213
    %v4247 = vpack.c.b16 %v4220, %v4217
    %v4248 = vpack.c.b16 %v4221, %v4218
    %v4249 = vpack.c.b16 %v4222, %v4219
    %v4250 = vpack.c.b16 %v4226, %v4223
    %v4251 = vpack.c.b16 %v4227, %v4224
    %v4252 = vpack.c.b16 %v4228, %v4225
    %4277 = vmatprep.subr.bf16.mxu0 %v4230
    %4278 = vmatpush1.bf16.msra.mxu0 %v4229
    %4279 = vmatprep.subr.bf16.mxu0 %v4233
    %4280 = vmatpush1.bf16.msra.mxu0 %v4232
    %4281 = vmatprep.subr.bf16.mxu0 %v4236
    %4282 = vmatpush1.bf16.msra.mxu0 %v4235
    %4283 = vmatprep.subr.bf16.mxu0 %v4239
    %4284 = vmatpush1.bf16.msra.mxu0 %v4238
    %4285 = vmatprep.subr.bf16.mxu0 %v4242
    %4286 = vmatpush1.bf16.msra.mxu0 %v4241
    %4287 = vmatprep.subr.bf16.mxu0 %v4245
    %4288 = vmatpush1.bf16.msra.mxu0 %v4244
    %4289 = vmatprep.subr.bf16.mxu0 %v4248
    %4290 = vmatpush1.bf16.msra.mxu0 %v4247
    %4291 = vmatprep.subr.bf16.mxu0 %v4251
    %4292 = vmatpush1.bf16.msra.mxu0 %v4250
    %4293 = vmatprep.subr.bf16.mxu0 0
    %4294 = vmatpush1.bf16.msra.mxu0 0
    %4295 = vmatprep.subr.bf16.mxu0 0
    %4296 = vmatpush1.bf16.msra.mxu0 0
    %4297 = vmatprep.subr.bf16.mxu0 0
    %4298 = vmatpush1.bf16.msra.mxu0 0
    %4299 = vmatprep.subr.bf16.mxu0 0
    %4300 = vmatpush1.bf16.msra.mxu0 0
    %4301 = vmatprep.subr.bf16.mxu0 0
    %4302 = vmatpush1.bf16.msra.mxu0 0
    %4303 = vmatprep.subr.bf16.mxu0 0
    %4304 = vmatpush1.bf16.msra.mxu0 0
    %4305 = vmatprep.subr.bf16.mxu0 0
    %4306 = vmatpush1.bf16.msra.mxu0 0
    %4307 = vmatprep.subr.bf16.mxu0 0
    %4308 = vmatpush1.bf16.msra.mxu0 0
    %4309 = vmatprep.mubr.bf16.mxu0 0
    %4310 = vmatmul.mubr.bf16.gmra.mrb[0].mxu0 %v4116
    %v4311 = vpop.f32.mrb[0].mxu0
    %v4312 = vadd.f32 0.0, %v4311
    %v4313 = vpop.f32.mrb[0].mxu0
    %v4314 = vadd.f32 0.0, %v4313
    %v4315 = vpop.f32.mrb[0].mxu0
    %v4316 = vpop.f32.mrb[0].mxu0
    %4317 = vdwg.mxu0
    %4318 = vmatprep.subr.bf16.mxu0 0
    %4319 = vmatpush1.bf16.msra.mxu0 %v4231
    %4320 = vmatprep.subr.bf16.mxu0 0
    %4321 = vmatpush1.bf16.msra.mxu0 %v4234
    %4322 = vmatprep.subr.bf16.mxu0 0
    %4323 = vmatpush1.bf16.msra.mxu0 %v4237
    %4324 = vmatprep.subr.bf16.mxu0 0
    %4325 = vmatpush1.bf16.msra.mxu0 %v4240
    %4326 = vmatprep.subr.bf16.mxu0 0
    %4327 = vmatpush1.bf16.msra.mxu0 %v4243
    %4328 = vmatprep.subr.bf16.mxu0 0
    %4329 = vmatpush1.bf16.msra.mxu0 %v4246
    %4330 = vmatprep.subr.bf16.mxu0 0
    %4331 = vmatpush1.bf16.msra.mxu0 %v4249
    %4332 = vmatprep.subr.bf16.mxu0 0
    %4333 = vmatpush1.bf16.msra.mxu0 %v4252
    %4334 = vmatprep.subr.bf16.mxu0 0
    %4335 = vmatpush1.bf16.msra.mxu0 0
    %4336 = vmatprep.subr.bf16.mxu0 0
    %4337 = vmatpush1.bf16.msra.mxu0 0
    %4338 = vmatprep.subr.bf16.mxu0 0
    %4339 = vmatpush1.bf16.msra.mxu0 0
    %4340 = vmatprep.subr.bf16.mxu0 0
    %4341 = vmatpush1.bf16.msra.mxu0 0
    %4342 = vmatprep.subr.bf16.mxu0 0
    %4343 = vmatpush1.bf16.msra.mxu0 0
    %4344 = vmatprep.subr.bf16.mxu0 0
    %4345 = vmatpush1.bf16.msra.mxu0 0
    %4346 = vmatprep.subr.bf16.mxu0 0
    %4347 = vmatpush1.bf16.msra.mxu0 0
    %4348 = vmatprep.subr.bf16.mxu0 0
    %4349 = vmatpush1.bf16.msra.mxu0 0
    %4350 = vmatprep.mubr.bf16.mxu0 0
    %4351 = vmatmul.mubr.bf16.gmra.mrb[0].mxu0 %v4116
    %v4352 = vpop.f32.mrb[0].mxu0
    %v4353 = vadd.f32 0.0, %v4352
    %v4354 = vpop.f32.mrb[0].mxu0
    %v4355 = vpop.f32.mrb[0].mxu0
    %v4356 = vpop.f32.mrb[0].mxu0
    %4357 = vdwg.mxu0
    %v4358 = vadd.f32 %v4113, %v4312
    %v4359 = vxor.u32 %v4358, 2147483648
    %v4360 = vmul.f32 %v4359, 1.442695
    %v4361 = vpow.pop %v4360
    %v4362 = vadd.f32 %v4361, 1.0
    %v4363 = vrcp.pop %v4362
    %v4364 = vmul.f32 1.0, %v4363
    %v4365 = vadd.f32 %v4114, %v4314
    %v4366 = vxor.u32 %v4365, 2147483648
    %v4367 = vmul.f32 %v4366, 1.442695
    %v4368 = vpow.pop %v4367
    %v4369 = vadd.f32 %v4368, 1.0
    %v4370 = vrcp.pop %v4369
    %v4371 = vmul.f32 1.0, %v4370
    %v4372 = vadd.f32 %v4353, %v1107
    %v4373 = vmul.f32 %v4364, %v4372
    %v4374 = vadd.f32 %v4115, %v4373
    %v4375 = vtanh.pop %v4374
    %v4376 = vsub.f32 1.0, %v4371
    %v4377 = vmul.f32 %v4376, %v4375
    %v4378 = vmul.f32 %v4371, %v4107
    %v4379 = vadd.f32 %v4377, %v4378
    %s4380 = scalar_lea.vmem [#allocation3], 96
    %4381 = vst [vmem:[%s4380] sm:$0xff] %v4379
    %s4382 = smul.u32 13, 3
    %s4383 = smul.addr %s4382, 8
    %s4384 = scalar_lea.vmem [#allocation2], %s4383
    %v4385 = vld [vmem:[%s4384] sm:$0xff]
    %v4386 = vld [vmem:[%s4384 + $0x8] sm:$0xff]
    %v4387 = vld [vmem:[%s4384 + $0x10] sm:$0xff]
    %v4388 = vpack.c.bf16 %v4379, %v4379
    %v4389 = vld [vmem:[#allocation7] sm:$0xff]
    %v4390 = vld [vmem:[#allocation7 + $0x8] sm:$0xf]
    %v4391 = vld [vmem:[#allocation7 + $0xc] sm:$0xff]
    %v4392 = vld [vmem:[#allocation7 + $0x14] sm:$0xf]
    %v4393 = vld [vmem:[#allocation7 + $0x18] sm:$0xff]
    %v4394 = vld [vmem:[#allocation7 + $0x20] sm:$0xf]
    %v4395 = vld [vmem:[#allocation7 + $0x24] sm:$0xff]
    %v4396 = vld [vmem:[#allocation7 + $0x2c] sm:$0xf]
    %v4397 = vld [vmem:[#allocation7 + $0x30] sm:$0xff]
    %v4398 = vld [vmem:[#allocation7 + $0x38] sm:$0xf]
    %v4399 = vld [vmem:[#allocation7 + $0x3c] sm:$0xff]
    %v4400 = vld [vmem:[#allocation7 + $0x44] sm:$0xf]
    %v4401 = vld [vmem:[#allocation7 + $0x48] sm:$0xff]
    %v4402 = vld [vmem:[#allocation7 + $0x50] sm:$0xf]
    %v4403 = vld [vmem:[#allocation7 + $0x54] sm:$0xff]
    %v4404 = vld [vmem:[#allocation7 + $0x5c] sm:$0xf]
    %v4405 = vld [vmem:[#allocation7 + $0x60] sm:$0xff]
    %v4406 = vld [vmem:[#allocation7 + $0x68] sm:$0xf]
    %v4407 = vld [vmem:[#allocation7 + $0x6c] sm:$0xff]
    %v4408 = vld [vmem:[#allocation7 + $0x74] sm:$0xf]
    %v4409 = vld [vmem:[#allocation7 + $0x78] sm:$0xff]
    %v4410 = vld [vmem:[#allocation7 + $0x80] sm:$0xf]
    %v4411 = vld [vmem:[#allocation7 + $0x84] sm:$0xff]
    %v4412 = vld [vmem:[#allocation7 + $0x8c] sm:$0xf]
    %v4413 = vld [vmem:[#allocation7 + $0x90] sm:$0xff]
    %v4414 = vld [vmem:[#allocation7 + $0x98] sm:$0xf]
    %v4415 = vld [vmem:[#allocation7 + $0x9c] sm:$0xff]
    %v4416 = vld [vmem:[#allocation7 + $0xa4] sm:$0xf]
    %v4417 = vld [vmem:[#allocation7 + $0xa8] sm:$0xff]
    %v4418 = vld [vmem:[#allocation7 + $0xb0] sm:$0xf]
    %v4419 = vld [vmem:[#allocation7 + $0xb4] sm:$0xff]
    %v4420 = vld [vmem:[#allocation7 + $0xbc] sm:$0xf]
    %v4453 = vunpack.c.l.b16 %v4389
    %v4454 = vunpack.c.h.b16 %v4389
    %v4455 = vunpack.c.l.b16 %v4390
    %v4456 = vunpack.c.l.b16 %v4391
    %v4457 = vunpack.c.h.b16 %v4391
    %v4458 = vunpack.c.l.b16 %v4392
    %v4459 = vunpack.c.l.b16 %v4393
    %v4460 = vunpack.c.h.b16 %v4393
    %v4461 = vunpack.c.l.b16 %v4394
    %v4462 = vunpack.c.l.b16 %v4395
    %v4463 = vunpack.c.h.b16 %v4395
    %v4464 = vunpack.c.l.b16 %v4396
    %v4465 = vunpack.c.l.b16 %v4397
    %v4466 = vunpack.c.h.b16 %v4397
    %v4467 = vunpack.c.l.b16 %v4398
    %v4468 = vunpack.c.l.b16 %v4399
    %v4469 = vunpack.c.h.b16 %v4399
    %v4470 = vunpack.c.l.b16 %v4400
    %v4471 = vunpack.c.l.b16 %v4401
    %v4472 = vunpack.c.h.b16 %v4401
    %v4473 = vunpack.c.l.b16 %v4402
    %v4474 = vunpack.c.l.b16 %v4403
    %v4475 = vunpack.c.h.b16 %v4403
    %v4476 = vunpack.c.l.b16 %v4404
    %v4477 = vunpack.c.l.b16 %v4405
    %v4478 = vunpack.c.h.b16 %v4405
    %v4479 = vunpack.c.l.b16 %v4406
    %v4480 = vunpack.c.l.b16 %v4407
    %v4481 = vunpack.c.h.b16 %v4407
    %v4482 = vunpack.c.l.b16 %v4408
    %v4483 = vunpack.c.l.b16 %v4409
    %v4484 = vunpack.c.h.b16 %v4409
    %v4485 = vunpack.c.l.b16 %v4410
    %v4486 = vunpack.c.l.b16 %v4411
    %v4487 = vunpack.c.h.b16 %v4411
    %v4488 = vunpack.c.l.b16 %v4412
    %v4489 = vunpack.c.l.b16 %v4413
    %v4490 = vunpack.c.h.b16 %v4413
    %v4491 = vunpack.c.l.b16 %v4414
    %v4492 = vunpack.c.l.b16 %v4415
    %v4493 = vunpack.c.h.b16 %v4415
    %v4494 = vunpack.c.l.b16 %v4416
    %v4495 = vunpack.c.l.b16 %v4417
    %v4496 = vunpack.c.h.b16 %v4417
    %v4497 = vunpack.c.l.b16 %v4418
    %v4498 = vunpack.c.l.b16 %v4419
    %v4499 = vunpack.c.h.b16 %v4419
    %v4500 = vunpack.c.l.b16 %v4420
    %v4501 = vpack.c.b16 %v4456, %v4453
    %v4502 = vpack.c.b16 %v4457, %v4454
    %v4503 = vpack.c.b16 %v4458, %v4455
    %v4504 = vpack.c.b16 %v4462, %v4459
    %v4505 = vpack.c.b16 %v4463, %v4460
    %v4506 = vpack.c.b16 %v4464, %v4461
    %v4507 = vpack.c.b16 %v4468, %v4465
    %v4508 = vpack.c.b16 %v4469, %v4466
    %v4509 = vpack.c.b16 %v4470, %v4467
    %v4510 = vpack.c.b16 %v4474, %v4471
    %v4511 = vpack.c.b16 %v4475, %v4472
    %v4512 = vpack.c.b16 %v4476, %v4473
    %v4513 = vpack.c.b16 %v4480, %v4477
    %v4514 = vpack.c.b16 %v4481, %v4478
    %v4515 = vpack.c.b16 %v4482, %v4479
    %v4516 = vpack.c.b16 %v4486, %v4483
    %v4517 = vpack.c.b16 %v4487, %v4484
    %v4518 = vpack.c.b16 %v4488, %v4485
    %v4519 = vpack.c.b16 %v4492, %v4489
    %v4520 = vpack.c.b16 %v4493, %v4490
    %v4521 = vpack.c.b16 %v4494, %v4491
    %v4522 = vpack.c.b16 %v4498, %v4495
    %v4523 = vpack.c.b16 %v4499, %v4496
    %v4524 = vpack.c.b16 %v4500, %v4497
    %4549 = vmatprep.subr.bf16.mxu0 %v4502
    %4550 = vmatpush1.bf16.msra.mxu0 %v4501
    %4551 = vmatprep.subr.bf16.mxu0 %v4505
    %4552 = vmatpush1.bf16.msra.mxu0 %v4504
    %4553 = vmatprep.subr.bf16.mxu0 %v4508
    %4554 = vmatpush1.bf16.msra.mxu0 %v4507
    %4555 = vmatprep.subr.bf16.mxu0 %v4511
    %4556 = vmatpush1.bf16.msra.mxu0 %v4510
    %4557 = vmatprep.subr.bf16.mxu0 %v4514
    %4558 = vmatpush1.bf16.msra.mxu0 %v4513
    %4559 = vmatprep.subr.bf16.mxu0 %v4517
    %4560 = vmatpush1.bf16.msra.mxu0 %v4516
    %4561 = vmatprep.subr.bf16.mxu0 %v4520
    %4562 = vmatpush1.bf16.msra.mxu0 %v4519
    %4563 = vmatprep.subr.bf16.mxu0 %v4523
    %4564 = vmatpush1.bf16.msra.mxu0 %v4522
    %4565 = vmatprep.subr.bf16.mxu0 0
    %4566 = vmatpush1.bf16.msra.mxu0 0
    %4567 = vmatprep.subr.bf16.mxu0 0
    %4568 = vmatpush1.bf16.msra.mxu0 0
    %4569 = vmatprep.subr.bf16.mxu0 0
    %4570 = vmatpush1.bf16.msra.mxu0 0
    %4571 = vmatprep.subr.bf16.mxu0 0
    %4572 = vmatpush1.bf16.msra.mxu0 0
    %4573 = vmatprep.subr.bf16.mxu0 0
    %4574 = vmatpush1.bf16.msra.mxu0 0
    %4575 = vmatprep.subr.bf16.mxu0 0
    %4576 = vmatpush1.bf16.msra.mxu0 0
    %4577 = vmatprep.subr.bf16.mxu0 0
    %4578 = vmatpush1.bf16.msra.mxu0 0
    %4579 = vmatprep.subr.bf16.mxu0 0
    %4580 = vmatpush1.bf16.msra.mxu0 0
    %4581 = vmatprep.mubr.bf16.mxu0 0
    %4582 = vmatmul.mubr.bf16.gmra.mrb[0].mxu0 %v4388
    %v4583 = vpop.f32.mrb[0].mxu0
    %v4584 = vadd.f32 0.0, %v4583
    %v4585 = vpop.f32.mrb[0].mxu0
    %v4586 = vadd.f32 0.0, %v4585
    %v4587 = vpop.f32.mrb[0].mxu0
    %v4588 = vpop.f32.mrb[0].mxu0
    %4589 = vdwg.mxu0
    %4590 = vmatprep.subr.bf16.mxu0 0
    %4591 = vmatpush1.bf16.msra.mxu0 %v4503
    %4592 = vmatprep.subr.bf16.mxu0 0
    %4593 = vmatpush1.bf16.msra.mxu0 %v4506
    %4594 = vmatprep.subr.bf16.mxu0 0
    %4595 = vmatpush1.bf16.msra.mxu0 %v4509
    %4596 = vmatprep.subr.bf16.mxu0 0
    %4597 = vmatpush1.bf16.msra.mxu0 %v4512
    %4598 = vmatprep.subr.bf16.mxu0 0
    %4599 = vmatpush1.bf16.msra.mxu0 %v4515
    %4600 = vmatprep.subr.bf16.mxu0 0
    %4601 = vmatpush1.bf16.msra.mxu0 %v4518
    %4602 = vmatprep.subr.bf16.mxu0 0
    %4603 = vmatpush1.bf16.msra.mxu0 %v4521
    %4604 = vmatprep.subr.bf16.mxu0 0
    %4605 = vmatpush1.bf16.msra.mxu0 %v4524
    %4606 = vmatprep.subr.bf16.mxu0 0
    %4607 = vmatpush1.bf16.msra.mxu0 0
    %4608 = vmatprep.subr.bf16.mxu0 0
    %4609 = vmatpush1.bf16.msra.mxu0 0
    %4610 = vmatprep.subr.bf16.mxu0 0
    %4611 = vmatpush1.bf16.msra.mxu0 0
    %4612 = vmatprep.subr.bf16.mxu0 0
    %4613 = vmatpush1.bf16.msra.mxu0 0
    %4614 = vmatprep.subr.bf16.mxu0 0
    %4615 = vmatpush1.bf16.msra.mxu0 0
    %4616 = vmatprep.subr.bf16.mxu0 0
    %4617 = vmatpush1.bf16.msra.mxu0 0
    %4618 = vmatprep.subr.bf16.mxu0 0
    %4619 = vmatpush1.bf16.msra.mxu0 0
    %4620 = vmatprep.subr.bf16.mxu0 0
    %4621 = vmatpush1.bf16.msra.mxu0 0
    %4622 = vmatprep.mubr.bf16.mxu0 0
    %4623 = vmatmul.mubr.bf16.gmra.mrb[0].mxu0 %v4388
    %v4624 = vpop.f32.mrb[0].mxu0
    %v4625 = vadd.f32 0.0, %v4624
    %v4626 = vpop.f32.mrb[0].mxu0
    %v4627 = vpop.f32.mrb[0].mxu0
    %v4628 = vpop.f32.mrb[0].mxu0
    %4629 = vdwg.mxu0
    %v4630 = vadd.f32 %v4385, %v4584
    %v4631 = vxor.u32 %v4630, 2147483648
    %v4632 = vmul.f32 %v4631, 1.442695
    %v4633 = vpow.pop %v4632
    %v4634 = vadd.f32 %v4633, 1.0
    %v4635 = vrcp.pop %v4634
    %v4636 = vmul.f32 1.0, %v4635
    %v4637 = vadd.f32 %v4386, %v4586
    %v4638 = vxor.u32 %v4637, 2147483648
    %v4639 = vmul.f32 %v4638, 1.442695
    %v4640 = vpow.pop %v4639
    %v4641 = vadd.f32 %v4640, 1.0
    %v4642 = vrcp.pop %v4641
    %v4643 = vmul.f32 1.0, %v4642
    %v4644 = vadd.f32 %v4625, %v1107
    %v4645 = vmul.f32 %v4636, %v4644
    %v4646 = vadd.f32 %v4387, %v4645
    %v4647 = vtanh.pop %v4646
    %v4648 = vsub.f32 1.0, %v4643
    %v4649 = vmul.f32 %v4648, %v4647
    %v4650 = vmul.f32 %v4643, %v4379
    %v4651 = vadd.f32 %v4649, %v4650
    %s4652 = scalar_lea.vmem [#allocation3], 104
    %4653 = vst [vmem:[%s4652] sm:$0xff] %v4651
    %v4654 = vld [vmem:[#allocation3] sm:$0xff]
    %v4655 = vld [vmem:[#allocation3 + $0x8] sm:$0xff]
    %v4656 = vld [vmem:[#allocation3 + $0x10] sm:$0xff]
    %v4657 = vld [vmem:[#allocation3 + $0x18] sm:$0xff]
    %v4658 = vld [vmem:[#allocation3 + $0x20] sm:$0xff]
    %v4659 = vld [vmem:[#allocation3 + $0x28] sm:$0xff]
    %v4660 = vld [vmem:[#allocation3 + $0x30] sm:$0xff]
    %v4661 = vld [vmem:[#allocation3 + $0x38] sm:$0xff]
    %v4662 = vld [vmem:[#allocation3 + $0x40] sm:$0xff]
    %v4663 = vld [vmem:[#allocation3 + $0x48] sm:$0xff]
    %v4664 = vld [vmem:[#allocation3 + $0x50] sm:$0xff]
    %v4665 = vld [vmem:[#allocation3 + $0x58] sm:$0xff]
    %v4666 = vld [vmem:[#allocation3 + $0x60] sm:$0xff]
    %v4667 = vld [vmem:[#allocation3 + $0x68] sm:$0xff]
    %v4668 = vpack.c.bf16 %v4655, %v4654
    %v4669 = vpack.c.bf16 %v4657, %v4656
    %v4670 = vpack.c.bf16 %v4659, %v4658
    %v4671 = vpack.c.bf16 %v4661, %v4660
    %v4672 = vpack.c.bf16 %v4663, %v4662
    %v4673 = vpack.c.bf16 %v4665, %v4664
    %v4674 = vpack.c.bf16 %v4667, %v4666
    %v4675 = vld [vmem:[#allocation9] sm:$0xff]
    %v4676 = vld [vmem:[#allocation9 + $0x8] sm:$0xf]
    %v4677 = vld [vmem:[#allocation9 + $0xc] sm:$0xff]
    %v4678 = vld [vmem:[#allocation9 + $0x14] sm:$0xf]
    %v4679 = vld [vmem:[#allocation9 + $0x18] sm:$0xff]
    %v4680 = vld [vmem:[#allocation9 + $0x20] sm:$0xf]
    %v4681 = vld [vmem:[#allocation9 + $0x24] sm:$0xff]
    %v4682 = vld [vmem:[#allocation9 + $0x2c] sm:$0xf]
    %v4683 = vld [vmem:[#allocation9 + $0x30] sm:$0xff]
    %v4684 = vld [vmem:[#allocation9 + $0x38] sm:$0xf]
    %v4685 = vld [vmem:[#allocation9 + $0x3c] sm:$0xff]
    %v4686 = vld [vmem:[#allocation9 + $0x44] sm:$0xf]
    %v4687 = vld [vmem:[#allocation9 + $0x48] sm:$0xff]
    %v4688 = vld [vmem:[#allocation9 + $0x50] sm:$0xf]
    %v4689 = vld [vmem:[#allocation9 + $0x54] sm:$0xff]
    %v4690 = vld [vmem:[#allocation9 + $0x5c] sm:$0xf]
    %v4691 = vld [vmem:[#allocation9 + $0x60] sm:$0xff]
    %v4692 = vld [vmem:[#allocation9 + $0x68] sm:$0xf]
    %v4693 = vld [vmem:[#allocation9 + $0x6c] sm:$0xff]
    %v4694 = vld [vmem:[#allocation9 + $0x74] sm:$0xf]
    %v4695 = vld [vmem:[#allocation9 + $0x78] sm:$0xff]
    %v4696 = vld [vmem:[#allocation9 + $0x80] sm:$0xf]
    %v4697 = vld [vmem:[#allocation9 + $0x84] sm:$0xff]
    %v4698 = vld [vmem:[#allocation9 + $0x8c] sm:$0xf]
    %v4699 = vld [vmem:[#allocation9 + $0x90] sm:$0xff]
    %v4700 = vld [vmem:[#allocation9 + $0x98] sm:$0xf]
    %v4701 = vld [vmem:[#allocation9 + $0x9c] sm:$0xff]
    %v4702 = vld [vmem:[#allocation9 + $0xa4] sm:$0xf]
    %v4703 = vld [vmem:[#allocation9 + $0xa8] sm:$0xff]
    %v4704 = vld [vmem:[#allocation9 + $0xb0] sm:$0xf]
    %v4705 = vld [vmem:[#allocation9 + $0xb4] sm:$0xff]
    %v4706 = vld [vmem:[#allocation9 + $0xbc] sm:$0xf]
    %v4707 = vld [vmem:[%s11] sm:$0x7]
    %v4709 = vlaneseq
    %v4710 = vshrl.u32 %v4709, 7
    %v4711 = vsub.s32 0, %v4710
    %v4712 = vrot.slane %v4707, %v4711
    %v4713 = vlaneseq
    %v4714 = vshrl.u32 %v4713, 7
    %v4715 = vsub.s32 1, %v4714
    %v4716 = vrot.slane %v4707, %v4715
    %v4717 = vlaneseq
    %v4718 = vshrl.u32 %v4717, 7
    %v4719 = vsub.s32 2, %v4718
    %v4720 = vrot.slane %v4707, %v4719
    %v4756 = vunpack.c.l.b16 %v4675
    %v4757 = vunpack.c.h.b16 %v4675
    %v4758 = vunpack.c.l.b16 %v4676
    %v4759 = vunpack.c.l.b16 %v4677
    %v4760 = vunpack.c.h.b16 %v4677
    %v4761 = vunpack.c.l.b16 %v4678
    %v4762 = vunpack.c.l.b16 %v4679
    %v4763 = vunpack.c.h.b16 %v4679
    %v4764 = vunpack.c.l.b16 %v4680
    %v4765 = vunpack.c.l.b16 %v4681
    %v4766 = vunpack.c.h.b16 %v4681
    %v4767 = vunpack.c.l.b16 %v4682
    %v4768 = vunpack.c.l.b16 %v4683
    %v4769 = vunpack.c.h.b16 %v4683
    %v4770 = vunpack.c.l.b16 %v4684
    %v4771 = vunpack.c.l.b16 %v4685
    %v4772 = vunpack.c.h.b16 %v4685
    %v4773 = vunpack.c.l.b16 %v4686
    %v4774 = vunpack.c.l.b16 %v4687
    %v4775 = vunpack.c.h.b16 %v4687
    %v4776 = vunpack.c.l.b16 %v4688
    %v4777 = vunpack.c.l.b16 %v4689
    %v4778 = vunpack.c.h.b16 %v4689
    %v4779 = vunpack.c.l.b16 %v4690
    %v4780 = vunpack.c.l.b16 %v4691
    %v4781 = vunpack.c.h.b16 %v4691
    %v4782 = vunpack.c.l.b16 %v4692
    %v4783 = vunpack.c.l.b16 %v4693
    %v4784 = vunpack.c.h.b16 %v4693
    %v4785 = vunpack.c.l.b16 %v4694
    %v4786 = vunpack.c.l.b16 %v4695
    %v4787 = vunpack.c.h.b16 %v4695
    %v4788 = vunpack.c.l.b16 %v4696
    %v4789 = vunpack.c.l.b16 %v4697
    %v4790 = vunpack.c.h.b16 %v4697
    %v4791 = vunpack.c.l.b16 %v4698
    %v4792 = vunpack.c.l.b16 %v4699
    %v4793 = vunpack.c.h.b16 %v4699
    %v4794 = vunpack.c.l.b16 %v4700
    %v4795 = vunpack.c.l.b16 %v4701
    %v4796 = vunpack.c.h.b16 %v4701
    %v4797 = vunpack.c.l.b16 %v4702
    %v4798 = vunpack.c.l.b16 %v4703
    %v4799 = vunpack.c.h.b16 %v4703
    %v4800 = vunpack.c.l.b16 %v4704
    %v4801 = vunpack.c.l.b16 %v4705
    %v4802 = vunpack.c.h.b16 %v4705
    %v4803 = vunpack.c.l.b16 %v4706
    %v4804 = vpack.c.b16 %v4759, %v4756
    %v4805 = vpack.c.b16 %v4760, %v4757
    %v4806 = vpack.c.b16 %v4761, %v4758
    %v4807 = vpack.c.b16 %v4765, %v4762
    %v4808 = vpack.c.b16 %v4766, %v4763
    %v4809 = vpack.c.b16 %v4767, %v4764
    %v4810 = vpack.c.b16 %v4771, %v4768
    %v4811 = vpack.c.b16 %v4772, %v4769
    %v4812 = vpack.c.b16 %v4773, %v4770
    %v4813 = vpack.c.b16 %v4777, %v4774
    %v4814 = vpack.c.b16 %v4778, %v4775
    %v4815 = vpack.c.b16 %v4779, %v4776
    %v4816 = vpack.c.b16 %v4783, %v4780
    %v4817 = vpack.c.b16 %v4784, %v4781
    %v4818 = vpack.c.b16 %v4785, %v4782
    %v4819 = vpack.c.b16 %v4789, %v4786
    %v4820 = vpack.c.b16 %v4790, %v4787
    %v4821 = vpack.c.b16 %v4791, %v4788
    %v4822 = vpack.c.b16 %v4795, %v4792
    %v4823 = vpack.c.b16 %v4796, %v4793
    %v4824 = vpack.c.b16 %v4797, %v4794
    %v4825 = vpack.c.b16 %v4801, %v4798
    %v4826 = vpack.c.b16 %v4802, %v4799
    %v4827 = vpack.c.b16 %v4803, %v4800
    %4852 = vmatprep.subr.bf16.mxu0 %v4805
    %4853 = vmatpush1.bf16.msra.mxu0 %v4804
    %4854 = vmatprep.subr.bf16.mxu0 %v4808
    %4855 = vmatpush1.bf16.msra.mxu0 %v4807
    %4856 = vmatprep.subr.bf16.mxu0 %v4811
    %4857 = vmatpush1.bf16.msra.mxu0 %v4810
    %4858 = vmatprep.subr.bf16.mxu0 %v4814
    %4859 = vmatpush1.bf16.msra.mxu0 %v4813
    %4860 = vmatprep.subr.bf16.mxu0 %v4817
    %4861 = vmatpush1.bf16.msra.mxu0 %v4816
    %4862 = vmatprep.subr.bf16.mxu0 %v4820
    %4863 = vmatpush1.bf16.msra.mxu0 %v4819
    %4864 = vmatprep.subr.bf16.mxu0 %v4823
    %4865 = vmatpush1.bf16.msra.mxu0 %v4822
    %4866 = vmatprep.subr.bf16.mxu0 %v4826
    %4867 = vmatpush1.bf16.msra.mxu0 %v4825
    %4868 = vmatprep.subr.bf16.mxu0 0
    %4869 = vmatpush1.bf16.msra.mxu0 0
    %4870 = vmatprep.subr.bf16.mxu0 0
    %4871 = vmatpush1.bf16.msra.mxu0 0
    %4872 = vmatprep.subr.bf16.mxu0 0
    %4873 = vmatpush1.bf16.msra.mxu0 0
    %4874 = vmatprep.subr.bf16.mxu0 0
    %4875 = vmatpush1.bf16.msra.mxu0 0
    %4876 = vmatprep.subr.bf16.mxu0 0
    %4877 = vmatpush1.bf16.msra.mxu0 0
    %4878 = vmatprep.subr.bf16.mxu0 0
    %4879 = vmatpush1.bf16.msra.mxu0 0
    %4880 = vmatprep.subr.bf16.mxu0 0
    %4881 = vmatpush1.bf16.msra.mxu0 0
    %4882 = vmatprep.subr.bf16.mxu0 0
    %4883 = vmatpush1.bf16.msra.mxu0 0
    %4884 = vmatprep.mubr.bf16.mxu0 0
    %4885 = vmatmul.mubr.bf16.gmra.mrb[0].mxu0 %v4668
    %v4886 = vpop.f32.mrb[0].mxu0
    %v4887 = vadd.f32 %v4712, %v4886
    %v4888 = vpop.f32.mrb[0].mxu0
    %v4889 = vadd.f32 %v4716, %v4888
    %v4890 = vpop.f32.mrb[0].mxu0
    %v4891 = vadd.f32 %v4712, %v4890
    %v4892 = vpop.f32.mrb[0].mxu0
    %v4893 = vadd.f32 %v4716, %v4892
    %4894 = vmatprep.mubr.bf16.mxu0 0
    %4895 = vmatmul.mubr.bf16.gmra.mrb[0].mxu0 %v4669
    %v4896 = vpop.f32.mrb[0].mxu0
    %v4897 = vadd.f32 %v4712, %v4896
    %v4898 = vpop.f32.mrb[0].mxu0
    %v4899 = vadd.f32 %v4716, %v4898
    %v4900 = vpop.f32.mrb[0].mxu0
    %v4901 = vadd.f32 %v4712, %v4900
    %v4902 = vpop.f32.mrb[0].mxu0
    %v4903 = vadd.f32 %v4716, %v4902
    %4904 = vmatprep.mubr.bf16.mxu0 0
    %4905 = vmatmul.mubr.bf16.gmra.mrb[0].mxu0 %v4670
    %v4906 = vpop.f32.mrb[0].mxu0
    %v4907 = vadd.f32 %v4712, %v4906
    %v4908 = vpop.f32.mrb[0].mxu0
    %v4909 = vadd.f32 %v4716, %v4908
    %v4910 = vpop.f32.mrb[0].mxu0
    %v4911 = vadd.f32 %v4712, %v4910
    %v4912 = vpop.f32.mrb[0].mxu0
    %v4913 = vadd.f32 %v4716, %v4912
    %4914 = vmatprep.mubr.bf16.mxu0 0
    %4915 = vmatmul.mubr.bf16.gmra.mrb[0].mxu0 %v4671
    %v4916 = vpop.f32.mrb[0].mxu0
    %v4917 = vadd.f32 %v4712, %v4916
    %v4918 = vpop.f32.mrb[0].mxu0
    %v4919 = vadd.f32 %v4716, %v4918
    %v4920 = vpop.f32.mrb[0].mxu0
    %v4921 = vadd.f32 %v4712, %v4920
    %v4922 = vpop.f32.mrb[0].mxu0
    %v4923 = vadd.f32 %v4716, %v4922
    %4924 = vmatprep.mubr.bf16.mxu0 0
    %4925 = vmatmul.mubr.bf16.gmra.mrb[0].mxu0 %v4672
    %v4926 = vpop.f32.mrb[0].mxu0
    %v4927 = vadd.f32 %v4712, %v4926
    %v4928 = vpop.f32.mrb[0].mxu0
    %v4929 = vadd.f32 %v4716, %v4928
    %v4930 = vpop.f32.mrb[0].mxu0
    %v4931 = vadd.f32 %v4712, %v4930
    %v4932 = vpop.f32.mrb[0].mxu0
    %v4933 = vadd.f32 %v4716, %v4932
    %4934 = vmatprep.mubr.bf16.mxu0 0
    %4935 = vmatmul.mubr.bf16.gmra.mrb[0].mxu0 %v4673
    %v4936 = vpop.f32.mrb[0].mxu0
    %v4937 = vadd.f32 %v4712, %v4936
    %v4938 = vpop.f32.mrb[0].mxu0
    %v4939 = vadd.f32 %v4716, %v4938
    %v4940 = vpop.f32.mrb[0].mxu0
    %v4941 = vadd.f32 %v4712, %v4940
    %v4942 = vpop.f32.mrb[0].mxu0
    %v4943 = vadd.f32 %v4716, %v4942
    %4944 = vmatprep.mubr.bf16.mxu0 0
    %4945 = vmatmul.mubr.bf16.gmra.mrb[0].mxu0 %v4674
    %v4946 = vpop.f32.mrb[0].mxu0
    %v4947 = vadd.f32 %v4712, %v4946
    %v4948 = vpop.f32.mrb[0].mxu0
    %v4949 = vadd.f32 %v4716, %v4948
    %v4950 = vpop.f32.mrb[0].mxu0
    %v4951 = vadd.f32 %v4712, %v4950
    %v4952 = vpop.f32.mrb[0].mxu0
    %v4953 = vadd.f32 %v4716, %v4952
    %4954 = vdwg.mxu0
    %4955 = vmatprep.subr.bf16.mxu0 0
    %4956 = vmatpush1.bf16.msra.mxu0 %v4806
    %4957 = vmatprep.subr.bf16.mxu0 0
    %4958 = vmatpush1.bf16.msra.mxu0 %v4809
    %4959 = vmatprep.subr.bf16.mxu0 0
    %4960 = vmatpush1.bf16.msra.mxu0 %v4812
    %4961 = vmatprep.subr.bf16.mxu0 0
    %4962 = vmatpush1.bf16.msra.mxu0 %v4815
    %4963 = vmatprep.subr.bf16.mxu0 0
    %4964 = vmatpush1.bf16.msra.mxu0 %v4818
    %4965 = vmatprep.subr.bf16.mxu0 0
    %4966 = vmatpush1.bf16.msra.mxu0 %v4821
    %4967 = vmatprep.subr.bf16.mxu0 0
    %4968 = vmatpush1.bf16.msra.mxu0 %v4824
    %4969 = vmatprep.subr.bf16.mxu0 0
    %4970 = vmatpush1.bf16.msra.mxu0 %v4827
    %4971 = vmatprep.subr.bf16.mxu0 0
    %4972 = vmatpush1.bf16.msra.mxu0 0
    %4973 = vmatprep.subr.bf16.mxu0 0
    %4974 = vmatpush1.bf16.msra.mxu0 0
    %4975 = vmatprep.subr.bf16.mxu0 0
    %4976 = vmatpush1.bf16.msra.mxu0 0
    %4977 = vmatprep.subr.bf16.mxu0 0
    %4978 = vmatpush1.bf16.msra.mxu0 0
    %4979 = vmatprep.subr.bf16.mxu0 0
    %4980 = vmatpush1.bf16.msra.mxu0 0
    %4981 = vmatprep.subr.bf16.mxu0 0
    %4982 = vmatpush1.bf16.msra.mxu0 0
    %4983 = vmatprep.subr.bf16.mxu0 0
    %4984 = vmatpush1.bf16.msra.mxu0 0
    %4985 = vmatprep.subr.bf16.mxu0 0
    %4986 = vmatpush1.bf16.msra.mxu0 0
    %4987 = vmatprep.mubr.bf16.mxu0 0
    %4988 = vmatmul.mubr.bf16.gmra.mrb[0].mxu0 %v4668
    %v4989 = vpop.f32.mrb[0].mxu0
    %v4990 = vadd.f32 %v4720, %v4989
    %v4991 = vpop.f32.mrb[0].mxu0
    %v4992 = vpop.f32.mrb[0].mxu0
    %v4993 = vadd.f32 %v4720, %v4992
    %v4994 = vpop.f32.mrb[0].mxu0
    %4995 = vmatprep.mubr.bf16.mxu0 0
    %4996 = vmatmul.mubr.bf16.gmra.mrb[0].mxu0 %v4669
    %v4997 = vpop.f32.mrb[0].mxu0
    %v4998 = vadd.f32 %v4720, %v4997
    %v4999 = vpop.f32.mrb[0].mxu0
    %v5000 = vpop.f32.mrb[0].mxu0
    %v5001 = vadd.f32 %v4720, %v5000
    %v5002 = vpop.f32.mrb[0].mxu0
    %5003 = vmatprep.mubr.bf16.mxu0 0
    %5004 = vmatmul.mubr.bf16.gmra.mrb[0].mxu0 %v4670
    %v5005 = vpop.f32.mrb[0].mxu0
    %v5006 = vadd.f32 %v4720, %v5005
    %v5007 = vpop.f32.mrb[0].mxu0
    %v5008 = vpop.f32.mrb[0].mxu0
    %v5009 = vadd.f32 %v4720, %v5008
    %v5010 = vpop.f32.mrb[0].mxu0
    %5011 = vmatprep.mubr.bf16.mxu0 0
    %5012 = vmatmul.mubr.bf16.gmra.mrb[0].mxu0 %v4671
    %v5013 = vpop.f32.mrb[0].mxu0
    %v5014 = vadd.f32 %v4720, %v5013
    %v5015 = vpop.f32.mrb[0].mxu0
    %v5016 = vpop.f32.mrb[0].mxu0
    %v5017 = vadd.f32 %v4720, %v5016
    %v5018 = vpop.f32.mrb[0].mxu0
    %5019 = vmatprep.mubr.bf16.mxu0 0
    %5020 = vmatmul.mubr.bf16.gmra.mrb[0].mxu0 %v4672
    %v5021 = vpop.f32.mrb[0].mxu0
    %v5022 = vadd.f32 %v4720, %v5021
    %v5023 = vpop.f32.mrb[0].mxu0
    %v5024 = vpop.f32.mrb[0].mxu0
    %v5025 = vadd.f32 %v4720, %v5024
    %v5026 = vpop.f32.mrb[0].mxu0
    %5027 = vmatprep.mubr.bf16.mxu0 0
    %5028 = vmatmul.mubr.bf16.gmra.mrb[0].mxu0 %v4673
    %v5029 = vpop.f32.mrb[0].mxu0
    %v5030 = vadd.f32 %v4720, %v5029
    %v5031 = vpop.f32.mrb[0].mxu0
    %v5032 = vpop.f32.mrb[0].mxu0
    %v5033 = vadd.f32 %v4720, %v5032
    %v5034 = vpop.f32.mrb[0].mxu0
    %5035 = vmatprep.mubr.bf16.mxu0 0
    %5036 = vmatmul.mubr.bf16.gmra.mrb[0].mxu0 %v4674
    %v5037 = vpop.f32.mrb[0].mxu0
    %v5038 = vadd.f32 %v4720, %v5037
    %v5039 = vpop.f32.mrb[0].mxu0
    %v5040 = vpop.f32.mrb[0].mxu0
    %v5041 = vadd.f32 %v4720, %v5040
    %v5042 = vpop.f32.mrb[0].mxu0
    %5043 = vdwg.mxu0
    %5044 = vst [vmem:[#allocation2] sm:$0xff] %v4887
    %5045 = vst [vmem:[#allocation2 + $0x8] sm:$0xff] %v4889
    %5046 = vst [vmem:[#allocation2 + $0x10] sm:$0xff] %v4990
    %5047 = vst [vmem:[#allocation2 + $0x18] sm:$0xff] %v4891
    %5048 = vst [vmem:[#allocation2 + $0x20] sm:$0xff] %v4893
    %5049 = vst [vmem:[#allocation2 + $0x28] sm:$0xff] %v4993
    %5050 = vst [vmem:[#allocation2 + $0x30] sm:$0xff] %v4897
    %5051 = vst [vmem:[#allocation2 + $0x38] sm:$0xff] %v4899
    %5052 = vst [vmem:[#allocation2 + $0x40] sm:$0xff] %v4998
    %5053 = vst [vmem:[#allocation2 + $0x48] sm:$0xff] %v4901
    %5054 = vst [vmem:[#allocation2 + $0x50] sm:$0xff] %v4903
    %5055 = vst [vmem:[#allocation2 + $0x58] sm:$0xff] %v5001
    %5056 = vst [vmem:[#allocation2 + $0x60] sm:$0xff] %v4907
    %5057 = vst [vmem:[#allocation2 + $0x68] sm:$0xff] %v4909
    %5058 = vst [vmem:[#allocation2 + $0x70] sm:$0xff] %v5006
    %5059 = vst [vmem:[#allocation2 + $0x78] sm:$0xff] %v4911
    %5060 = vst [vmem:[#allocation2 + $0x80] sm:$0xff] %v4913
    %5061 = vst [vmem:[#allocation2 + $0x88] sm:$0xff] %v5009
    %5062 = vst [vmem:[#allocation2 + $0x90] sm:$0xff] %v4917
    %5063 = vst [vmem:[#allocation2 + $0x98] sm:$0xff] %v4919
    %5064 = vst [vmem:[#allocation2 + $0xa0] sm:$0xff] %v5014
    %5065 = vst [vmem:[#allocation2 + $0xa8] sm:$0xff] %v4921
    %5066 = vst [vmem:[#allocation2 + $0xb0] sm:$0xff] %v4923
    %5067 = vst [vmem:[#allocation2 + $0xb8] sm:$0xff] %v5017
    %5068 = vst [vmem:[#allocation2 + $0xc0] sm:$0xff] %v4927
    %5069 = vst [vmem:[#allocation2 + $0xc8] sm:$0xff] %v4929
    %5070 = vst [vmem:[#allocation2 + $0xd0] sm:$0xff] %v5022
    %5071 = vst [vmem:[#allocation2 + $0xd8] sm:$0xff] %v4931
    %5072 = vst [vmem:[#allocation2 + $0xe0] sm:$0xff] %v4933
    %5073 = vst [vmem:[#allocation2 + $0xe8] sm:$0xff] %v5025
    %5074 = vst [vmem:[#allocation2 + $0xf0] sm:$0xff] %v4937
    %5075 = vst [vmem:[#allocation2 + $0xf8] sm:$0xff] %v4939
    %5076 = vst [vmem:[#allocation2 + $0x100] sm:$0xff] %v5030
    %5077 = vst [vmem:[#allocation2 + $0x108] sm:$0xff] %v4941
    %5078 = vst [vmem:[#allocation2 + $0x110] sm:$0xff] %v4943
    %5079 = vst [vmem:[#allocation2 + $0x118] sm:$0xff] %v5033
    %5080 = vst [vmem:[#allocation2 + $0x120] sm:$0xff] %v4947
    %5081 = vst [vmem:[#allocation2 + $0x128] sm:$0xff] %v4949
    %5082 = vst [vmem:[#allocation2 + $0x130] sm:$0xff] %v5038
    %5083 = vst [vmem:[#allocation2 + $0x138] sm:$0xff] %v4951
    %5084 = vst [vmem:[#allocation2 + $0x140] sm:$0xff] %v4953
    %5085 = vst [vmem:[#allocation2 + $0x148] sm:$0xff] %v5041
    %v5086 = vld [vmem:[%s12] sm:$0x1]
    %s5087 = scalar_lea.vmem %s4, 8
    %v5088 = vld [vmem:[%s5087] sm:$0xff]
    %v5089 = vld [vmem:[%s843] sm:$0xff]
    %v5090 = vld [vmem:[%s843 + $0x8] sm:$0xff]
    %v5091 = vld [vmem:[%s843 + $0x10] sm:$0xff]
    %v5092 = vpack.c.bf16 %v5088, %v5088
    %v5093 = vld [vmem:[#allocation10] sm:$0xff]
    %v5094 = vld [vmem:[#allocation10 + $0x8] sm:$0xf]
    %v5095 = vld [vmem:[#allocation10 + $0xc] sm:$0xff]
    %v5096 = vld [vmem:[#allocation10 + $0x14] sm:$0xf]
    %v5097 = vld [vmem:[#allocation10 + $0x18] sm:$0xff]
    %v5098 = vld [vmem:[#allocation10 + $0x20] sm:$0xf]
    %v5099 = vld [vmem:[#allocation10 + $0x24] sm:$0xff]
    %v5100 = vld [vmem:[#allocation10 + $0x2c] sm:$0xf]
    %v5101 = vld [vmem:[#allocation10 + $0x30] sm:$0xff]
    %v5102 = vld [vmem:[#allocation10 + $0x38] sm:$0xf]
    %v5103 = vld [vmem:[#allocation10 + $0x3c] sm:$0xff]
    %v5104 = vld [vmem:[#allocation10 + $0x44] sm:$0xf]
    %v5105 = vld [vmem:[#allocation10 + $0x48] sm:$0xff]
    %v5106 = vld [vmem:[#allocation10 + $0x50] sm:$0xf]
    %v5107 = vld [vmem:[#allocation10 + $0x54] sm:$0xff]
    %v5108 = vld [vmem:[#allocation10 + $0x5c] sm:$0xf]
    %v5109 = vld [vmem:[#allocation10 + $0x60] sm:$0xff]
    %v5110 = vld [vmem:[#allocation10 + $0x68] sm:$0xf]
    %v5111 = vld [vmem:[#allocation10 + $0x6c] sm:$0xff]
    %v5112 = vld [vmem:[#allocation10 + $0x74] sm:$0xf]
    %v5113 = vld [vmem:[#allocation10 + $0x78] sm:$0xff]
    %v5114 = vld [vmem:[#allocation10 + $0x80] sm:$0xf]
    %v5115 = vld [vmem:[#allocation10 + $0x84] sm:$0xff]
    %v5116 = vld [vmem:[#allocation10 + $0x8c] sm:$0xf]
    %v5117 = vld [vmem:[#allocation10 + $0x90] sm:$0xff]
    %v5118 = vld [vmem:[#allocation10 + $0x98] sm:$0xf]
    %v5119 = vld [vmem:[#allocation10 + $0x9c] sm:$0xff]
    %v5120 = vld [vmem:[#allocation10 + $0xa4] sm:$0xf]
    %v5121 = vld [vmem:[#allocation10 + $0xa8] sm:$0xff]
    %v5122 = vld [vmem:[#allocation10 + $0xb0] sm:$0xf]
    %v5123 = vld [vmem:[#allocation10 + $0xb4] sm:$0xff]
    %v5124 = vld [vmem:[#allocation10 + $0xbc] sm:$0xf]
    %v5157 = vunpack.c.l.b16 %v5093
    %v5158 = vunpack.c.h.b16 %v5093
    %v5159 = vunpack.c.l.b16 %v5094
    %v5160 = vunpack.c.l.b16 %v5095
    %v5161 = vunpack.c.h.b16 %v5095
    %v5162 = vunpack.c.l.b16 %v5096
    %v5163 = vunpack.c.l.b16 %v5097
    %v5164 = vunpack.c.h.b16 %v5097
    %v5165 = vunpack.c.l.b16 %v5098
    %v5166 = vunpack.c.l.b16 %v5099
    %v5167 = vunpack.c.h.b16 %v5099
    %v5168 = vunpack.c.l.b16 %v5100
    %v5169 = vunpack.c.l.b16 %v5101
    %v5170 = vunpack.c.h.b16 %v5101
    %v5171 = vunpack.c.l.b16 %v5102
    %v5172 = vunpack.c.l.b16 %v5103
    %v5173 = vunpack.c.h.b16 %v5103
    %v5174 = vunpack.c.l.b16 %v5104
    %v5175 = vunpack.c.l.b16 %v5105
    %v5176 = vunpack.c.h.b16 %v5105
    %v5177 = vunpack.c.l.b16 %v5106
    %v5178 = vunpack.c.l.b16 %v5107
    %v5179 = vunpack.c.h.b16 %v5107
    %v5180 = vunpack.c.l.b16 %v5108
    %v5181 = vunpack.c.l.b16 %v5109
    %v5182 = vunpack.c.h.b16 %v5109
    %v5183 = vunpack.c.l.b16 %v5110
    %v5184 = vunpack.c.l.b16 %v5111
    %v5185 = vunpack.c.h.b16 %v5111
    %v5186 = vunpack.c.l.b16 %v5112
    %v5187 = vunpack.c.l.b16 %v5113
    %v5188 = vunpack.c.h.b16 %v5113
    %v5189 = vunpack.c.l.b16 %v5114
    %v5190 = vunpack.c.l.b16 %v5115
    %v5191 = vunpack.c.h.b16 %v5115
    %v5192 = vunpack.c.l.b16 %v5116
    %v5193 = vunpack.c.l.b16 %v5117
    %v5194 = vunpack.c.h.b16 %v5117
    %v5195 = vunpack.c.l.b16 %v5118
    %v5196 = vunpack.c.l.b16 %v5119
    %v5197 = vunpack.c.h.b16 %v5119
    %v5198 = vunpack.c.l.b16 %v5120
    %v5199 = vunpack.c.l.b16 %v5121
    %v5200 = vunpack.c.h.b16 %v5121
    %v5201 = vunpack.c.l.b16 %v5122
    %v5202 = vunpack.c.l.b16 %v5123
    %v5203 = vunpack.c.h.b16 %v5123
    %v5204 = vunpack.c.l.b16 %v5124
    %v5205 = vpack.c.b16 %v5160, %v5157
    %v5206 = vpack.c.b16 %v5161, %v5158
    %v5207 = vpack.c.b16 %v5162, %v5159
    %v5208 = vpack.c.b16 %v5166, %v5163
    %v5209 = vpack.c.b16 %v5167, %v5164
    %v5210 = vpack.c.b16 %v5168, %v5165
    %v5211 = vpack.c.b16 %v5172, %v5169
    %v5212 = vpack.c.b16 %v5173, %v5170
    %v5213 = vpack.c.b16 %v5174, %v5171
    %v5214 = vpack.c.b16 %v5178, %v5175
    %v5215 = vpack.c.b16 %v5179, %v5176
    %v5216 = vpack.c.b16 %v5180, %v5177
    %v5217 = vpack.c.b16 %v5184, %v5181
    %v5218 = vpack.c.b16 %v5185, %v5182
    %v5219 = vpack.c.b16 %v5186, %v5183
    %v5220 = vpack.c.b16 %v5190, %v5187
    %v5221 = vpack.c.b16 %v5191, %v5188
    %v5222 = vpack.c.b16 %v5192, %v5189
    %v5223 = vpack.c.b16 %v5196, %v5193
    %v5224 = vpack.c.b16 %v5197, %v5194
    %v5225 = vpack.c.b16 %v5198, %v5195
    %v5226 = vpack.c.b16 %v5202, %v5199
    %v5227 = vpack.c.b16 %v5203, %v5200
    %v5228 = vpack.c.b16 %v5204, %v5201
    %5253 = vmatprep.subr.bf16.mxu0 %v5206
    %5254 = vmatpush1.bf16.msra.mxu0 %v5205
    %5255 = vmatprep.subr.bf16.mxu0 %v5209
    %5256 = vmatpush1.bf16.msra.mxu0 %v5208
    %5257 = vmatprep.subr.bf16.mxu0 %v5212
    %5258 = vmatpush1.bf16.msra.mxu0 %v5211
    %5259 = vmatprep.subr.bf16.mxu0 %v5215
    %5260 = vmatpush1.bf16.msra.mxu0 %v5214
    %5261 = vmatprep.subr.bf16.mxu0 %v5218
    %5262 = vmatpush1.bf16.msra.mxu0 %v5217
    %5263 = vmatprep.subr.bf16.mxu0 %v5221
    %5264 = vmatpush1.bf16.msra.mxu0 %v5220
    %5265 = vmatprep.subr.bf16.mxu0 %v5224
    %5266 = vmatpush1.bf16.msra.mxu0 %v5223
    %5267 = vmatprep.subr.bf16.mxu0 %v5227
    %5268 = vmatpush1.bf16.msra.mxu0 %v5226
    %5269 = vmatprep.subr.bf16.mxu0 0
    %5270 = vmatpush1.bf16.msra.mxu0 0
    %5271 = vmatprep.subr.bf16.mxu0 0
    %5272 = vmatpush1.bf16.msra.mxu0 0
    %5273 = vmatprep.subr.bf16.mxu0 0
    %5274 = vmatpush1.bf16.msra.mxu0 0
    %5275 = vmatprep.subr.bf16.mxu0 0
    %5276 = vmatpush1.bf16.msra.mxu0 0
    %5277 = vmatprep.subr.bf16.mxu0 0
    %5278 = vmatpush1.bf16.msra.mxu0 0
    %5279 = vmatprep.subr.bf16.mxu0 0
    %5280 = vmatpush1.bf16.msra.mxu0 0
    %5281 = vmatprep.subr.bf16.mxu0 0
    %5282 = vmatpush1.bf16.msra.mxu0 0
    %5283 = vmatprep.subr.bf16.mxu0 0
    %5284 = vmatpush1.bf16.msra.mxu0 0
    %5285 = vmatprep.mubr.bf16.mxu0 0
    %5286 = vmatmul.mubr.bf16.gmra.mrb[0].mxu0 %v5092
    %v5287 = vpop.f32.mrb[0].mxu0
    %v5288 = vadd.f32 0.0, %v5287
    %v5289 = vpop.f32.mrb[0].mxu0
    %v5290 = vadd.f32 0.0, %v5289
    %v5291 = vpop.f32.mrb[0].mxu0
    %v5292 = vpop.f32.mrb[0].mxu0
    %5293 = vdwg.mxu0
    %5294 = vmatprep.subr.bf16.mxu0 0
    %5295 = vmatpush1.bf16.msra.mxu0 %v5207
    %5296 = vmatprep.subr.bf16.mxu0 0
    %5297 = vmatpush1.bf16.msra.mxu0 %v5210
    %5298 = vmatprep.subr.bf16.mxu0 0
    %5299 = vmatpush1.bf16.msra.mxu0 %v5213
    %5300 = vmatprep.subr.bf16.mxu0 0
    %5301 = vmatpush1.bf16.msra.mxu0 %v5216
    %5302 = vmatprep.subr.bf16.mxu0 0
    %5303 = vmatpush1.bf16.msra.mxu0 %v5219
    %5304 = vmatprep.subr.bf16.mxu0 0
    %5305 = vmatpush1.bf16.msra.mxu0 %v5222
    %5306 = vmatprep.subr.bf16.mxu0 0
    %5307 = vmatpush1.bf16.msra.mxu0 %v5225
    %5308 = vmatprep.subr.bf16.mxu0 0
    %5309 = vmatpush1.bf16.msra.mxu0 %v5228
    %5310 = vmatprep.subr.bf16.mxu0 0
    %5311 = vmatpush1.bf16.msra.mxu0 0
    %5312 = vmatprep.subr.bf16.mxu0 0
    %5313 = vmatpush1.bf16.msra.mxu0 0
    %5314 = vmatprep.subr.bf16.mxu0 0
    %5315 = vmatpush1.bf16.msra.mxu0 0
    %5316 = vmatprep.subr.bf16.mxu0 0
    %5317 = vmatpush1.bf16.msra.mxu0 0
    %5318 = vmatprep.subr.bf16.mxu0 0
    %5319 = vmatpush1.bf16.msra.mxu0 0
    %5320 = vmatprep.subr.bf16.mxu0 0
    %5321 = vmatpush1.bf16.msra.mxu0 0
    %5322 = vmatprep.subr.bf16.mxu0 0
    %5323 = vmatpush1.bf16.msra.mxu0 0
    %5324 = vmatprep.subr.bf16.mxu0 0
    %5325 = vmatpush1.bf16.msra.mxu0 0
    %5326 = vmatprep.mubr.bf16.mxu0 0
    %5327 = vmatmul.mubr.bf16.gmra.mrb[0].mxu0 %v5092
    %v5328 = vpop.f32.mrb[0].mxu0
    %v5329 = vadd.f32 0.0, %v5328
    %v5330 = vpop.f32.mrb[0].mxu0
    %v5331 = vpop.f32.mrb[0].mxu0
    %v5332 = vpop.f32.mrb[0].mxu0
    %5333 = vdwg.mxu0
    %v5334 = vadd.f32 %v5089, %v5288
    %v5335 = vxor.u32 %v5334, 2147483648
    %v5336 = vmul.f32 %v5335, 1.442695
    %v5337 = vpow.pop %v5336
    %v5338 = vadd.f32 %v5337, 1.0
    %v5339 = vrcp.pop %v5338
    %v5340 = vmul.f32 1.0, %v5339
    %v5341 = vadd.f32 %v5090, %v5290
    %v5342 = vxor.u32 %v5341, 2147483648
    %v5343 = vmul.f32 %v5342, 1.442695
    %v5344 = vpow.pop %v5343
    %v5345 = vadd.f32 %v5344, 1.0
    %v5346 = vrcp.pop %v5345
    %v5347 = vmul.f32 1.0, %v5346
    %v5349 = vlaneseq
    %v5350 = vshrl.u32 %v5349, 7
    %v5351 = vsub.s32 0, %v5350
    %v5352 = vrot.slane %v5086, %v5351
    %v5354 = vadd.f32 %v5329, %v5352
    %v5355 = vmul.f32 %v5340, %v5354
    %v5356 = vadd.f32 %v5091, %v5355
    %v5357 = vtanh.pop %v5356
    %v5358 = vsub.f32 1.0, %v5347
    %v5359 = vmul.f32 %v5358, %v5357
    %v5360 = vmul.f32 %v5347, %v5088
    %v5361 = vadd.f32 %v5359, %v5360
    %v5362 = vld [vmem:[%s1120] sm:$0xff]
    %v5363 = vld [vmem:[%s1120 + $0x8] sm:$0xff]
    %v5364 = vld [vmem:[%s1120 + $0x10] sm:$0xff]
    %v5365 = vpack.c.bf16 %v5361, %v5361
    %5366 = vmatprep.subr.bf16.mxu0 %v5206
    %5367 = vmatpush1.bf16.msra.mxu0 %v5205
    %5368 = vmatprep.subr.bf16.mxu0 %v5209
    %5369 = vmatpush1.bf16.msra.mxu0 %v5208
    %5370 = vmatprep.subr.bf16.mxu0 %v5212
    %5371 = vmatpush1.bf16.msra.mxu0 %v5211
    %5372 = vmatprep.subr.bf16.mxu0 %v5215
    %5373 = vmatpush1.bf16.msra.mxu0 %v5214
    %5374 = vmatprep.subr.bf16.mxu0 %v5218
    %5375 = vmatpush1.bf16.msra.mxu0 %v5217
    %5376 = vmatprep.subr.bf16.mxu0 %v5221
    %5377 = vmatpush1.bf16.msra.mxu0 %v5220
    %5378 = vmatprep.subr.bf16.mxu0 %v5224
    %5379 = vmatpush1.bf16.msra.mxu0 %v5223
    %5380 = vmatprep.subr.bf16.mxu0 %v5227
    %5381 = vmatpush1.bf16.msra.mxu0 %v5226
    %5382 = vmatprep.subr.bf16.mxu0 0
    %5383 = vmatpush1.bf16.msra.mxu0 0
    %5384 = vmatprep.subr.bf16.mxu0 0
    %5385 = vmatpush1.bf16.msra.mxu0 0
    %5386 = vmatprep.subr.bf16.mxu0 0
    %5387 = vmatpush1.bf16.msra.mxu0 0
    %5388 = vmatprep.subr.bf16.mxu0 0
    %5389 = vmatpush1.bf16.msra.mxu0 0
    %5390 = vmatprep.subr.bf16.mxu0 0
    %5391 = vmatpush1.bf16.msra.mxu0 0
    %5392 = vmatprep.subr.bf16.mxu0 0
    %5393 = vmatpush1.bf16.msra.mxu0 0
    %5394 = vmatprep.subr.bf16.mxu0 0
    %5395 = vmatpush1.bf16.msra.mxu0 0
    %5396 = vmatprep.subr.bf16.mxu0 0
    %5397 = vmatpush1.bf16.msra.mxu0 0
    %5398 = vmatprep.mubr.bf16.mxu0 0
    %5399 = vmatmul.mubr.bf16.gmra.mrb[0].mxu0 %v5365
    %v5400 = vpop.f32.mrb[0].mxu0
    %v5401 = vadd.f32 0.0, %v5400
    %v5402 = vpop.f32.mrb[0].mxu0
    %v5403 = vadd.f32 0.0, %v5402
    %v5404 = vpop.f32.mrb[0].mxu0
    %v5405 = vpop.f32.mrb[0].mxu0
    %5406 = vdwg.mxu0
    %5407 = vmatprep.subr.bf16.mxu0 0
    %5408 = vmatpush1.bf16.msra.mxu0 %v5207
    %5409 = vmatprep.subr.bf16.mxu0 0
    %5410 = vmatpush1.bf16.msra.mxu0 %v5210
    %5411 = vmatprep.subr.bf16.mxu0 0
    %5412 = vmatpush1.bf16.msra.mxu0 %v5213
    %5413 = vmatprep.subr.bf16.mxu0 0
    %5414 = vmatpush1.bf16.msra.mxu0 %v5216
    %5415 = vmatprep.subr.bf16.mxu0 0
    %5416 = vmatpush1.bf16.msra.mxu0 %v5219
    %5417 = vmatprep.subr.bf16.mxu0 0
    %5418 = vmatpush1.bf16.msra.mxu0 %v5222
    %5419 = vmatprep.subr.bf16.mxu0 0
    %5420 = vmatpush1.bf16.msra.mxu0 %v5225
    %5421 = vmatprep.subr.bf16.mxu0 0
    %5422 = vmatpush1.bf16.msra.mxu0 %v5228
    %5423 = vmatprep.subr.bf16.mxu0 0
    %5424 = vmatpush1.bf16.msra.mxu0 0
    %5425 = vmatprep.subr.bf16.mxu0 0
    %5426 = vmatpush1.bf16.msra.mxu0 0
    %5427 = vmatprep.subr.bf16.mxu0 0
    %5428 = vmatpush1.bf16.msra.mxu0 0
    %5429 = vmatprep.subr.bf16.mxu0 0
    %5430 = vmatpush1.bf16.msra.mxu0 0
    %5431 = vmatprep.subr.bf16.mxu0 0
    %5432 = vmatpush1.bf16.msra.mxu0 0
    %5433 = vmatprep.subr.bf16.mxu0 0
    %5434 = vmatpush1.bf16.msra.mxu0 0
    %5435 = vmatprep.subr.bf16.mxu0 0
    %5436 = vmatpush1.bf16.msra.mxu0 0
    %5437 = vmatprep.subr.bf16.mxu0 0
    %5438 = vmatpush1.bf16.msra.mxu0 0
    %5439 = vmatprep.mubr.bf16.mxu0 0
    %5440 = vmatmul.mubr.bf16.gmra.mrb[0].mxu0 %v5365
    %v5441 = vpop.f32.mrb[0].mxu0
    %v5442 = vadd.f32 0.0, %v5441
    %v5443 = vpop.f32.mrb[0].mxu0
    %v5444 = vpop.f32.mrb[0].mxu0
    %v5445 = vpop.f32.mrb[0].mxu0
    %5446 = vdwg.mxu0
    %v5447 = vadd.f32 %v5362, %v5401
    %v5448 = vxor.u32 %v5447, 2147483648
    %v5449 = vmul.f32 %v5448, 1.442695
    %v5450 = vpow.pop %v5449
    %v5451 = vadd.f32 %v5450, 1.0
    %v5452 = vrcp.pop %v5451
    %v5453 = vmul.f32 1.0, %v5452
    %v5454 = vadd.f32 %v5363, %v5403
    %v5455 = vxor.u32 %v5454, 2147483648
    %v5456 = vmul.f32 %v5455, 1.442695
    %v5457 = vpow.pop %v5456
    %v5458 = vadd.f32 %v5457, 1.0
    %v5459 = vrcp.pop %v5458
    %v5460 = vmul.f32 1.0, %v5459
    %v5461 = vadd.f32 %v5442, %v5352
    %v5462 = vmul.f32 %v5453, %v5461
    %v5463 = vadd.f32 %v5364, %v5462
    %v5464 = vtanh.pop %v5463
    %v5465 = vsub.f32 1.0, %v5460
    %v5466 = vmul.f32 %v5465, %v5464
    %v5467 = vmul.f32 %v5460, %v5361
    %v5468 = vadd.f32 %v5466, %v5467
    %v5469 = vld [vmem:[%s1392] sm:$0xff]
    %v5470 = vld [vmem:[%s1392 + $0x8] sm:$0xff]
    %v5471 = vld [vmem:[%s1392 + $0x10] sm:$0xff]
    %v5472 = vpack.c.bf16 %v5468, %v5468
    %5473 = vmatprep.subr.bf16.mxu0 %v5206
    %5474 = vmatpush1.bf16.msra.mxu0 %v5205
    %5475 = vmatprep.subr.bf16.mxu0 %v5209
    %5476 = vmatpush1.bf16.msra.mxu0 %v5208
    %5477 = vmatprep.subr.bf16.mxu0 %v5212
    %5478 = vmatpush1.bf16.msra.mxu0 %v5211
    %5479 = vmatprep.subr.bf16.mxu0 %v5215
    %5480 = vmatpush1.bf16.msra.mxu0 %v5214
    %5481 = vmatprep.subr.bf16.mxu0 %v5218
    %5482 = vmatpush1.bf16.msra.mxu0 %v5217
    %5483 = vmatprep.subr.bf16.mxu0 %v5221
    %5484 = vmatpush1.bf16.msra.mxu0 %v5220
    %5485 = vmatprep.subr.bf16.mxu0 %v5224
    %5486 = vmatpush1.bf16.msra.mxu0 %v5223
    %5487 = vmatprep.subr.bf16.mxu0 %v5227
    %5488 = vmatpush1.bf16.msra.mxu0 %v5226
    %5489 = vmatprep.subr.bf16.mxu0 0
    %5490 = vmatpush1.bf16.msra.mxu0 0
    %5491 = vmatprep.subr.bf16.mxu0 0
    %5492 = vmatpush1.bf16.msra.mxu0 0
    %5493 = vmatprep.subr.bf16.mxu0 0
    %5494 = vmatpush1.bf16.msra.mxu0 0
    %5495 = vmatprep.subr.bf16.mxu0 0
    %5496 = vmatpush1.bf16.msra.mxu0 0
    %5497 = vmatprep.subr.bf16.mxu0 0
    %5498 = vmatpush1.bf16.msra.mxu0 0
    %5499 = vmatprep.subr.bf16.mxu0 0
    %5500 = vmatpush1.bf16.msra.mxu0 0
    %5501 = vmatprep.subr.bf16.mxu0 0
    %5502 = vmatpush1.bf16.msra.mxu0 0
    %5503 = vmatprep.subr.bf16.mxu0 0
    %5504 = vmatpush1.bf16.msra.mxu0 0
    %5505 = vmatprep.mubr.bf16.mxu0 0
    %5506 = vmatmul.mubr.bf16.gmra.mrb[0].mxu0 %v5472
    %v5507 = vpop.f32.mrb[0].mxu0
    %v5508 = vadd.f32 0.0, %v5507
    %v5509 = vpop.f32.mrb[0].mxu0
    %v5510 = vadd.f32 0.0, %v5509
    %v5511 = vpop.f32.mrb[0].mxu0
    %v5512 = vpop.f32.mrb[0].mxu0
    %5513 = vdwg.mxu0
    %5514 = vmatprep.subr.bf16.mxu0 0
    %5515 = vmatpush1.bf16.msra.mxu0 %v5207
    %5516 = vmatprep.subr.bf16.mxu0 0
    %5517 = vmatpush1.bf16.msra.mxu0 %v5210
    %5518 = vmatprep.subr.bf16.mxu0 0
    %5519 = vmatpush1.bf16.msra.mxu0 %v5213
    %5520 = vmatprep.subr.bf16.mxu0 0
    %5521 = vmatpush1.bf16.msra.mxu0 %v5216
    %5522 = vmatprep.subr.bf16.mxu0 0
    %5523 = vmatpush1.bf16.msra.mxu0 %v5219
    %5524 = vmatprep.subr.bf16.mxu0 0
    %5525 = vmatpush1.bf16.msra.mxu0 %v5222
    %5526 = vmatprep.subr.bf16.mxu0 0
    %5527 = vmatpush1.bf16.msra.mxu0 %v5225
    %5528 = vmatprep.subr.bf16.mxu0 0
    %5529 = vmatpush1.bf16.msra.mxu0 %v5228
    %5530 = vmatprep.subr.bf16.mxu0 0
    %5531 = vmatpush1.bf16.msra.mxu0 0
    %5532 = vmatprep.subr.bf16.mxu0 0
    %5533 = vmatpush1.bf16.msra.mxu0 0
    %5534 = vmatprep.subr.bf16.mxu0 0
    %5535 = vmatpush1.bf16.msra.mxu0 0
    %5536 = vmatprep.subr.bf16.mxu0 0
    %5537 = vmatpush1.bf16.msra.mxu0 0
    %5538 = vmatprep.subr.bf16.mxu0 0
    %5539 = vmatpush1.bf16.msra.mxu0 0
    %5540 = vmatprep.subr.bf16.mxu0 0
    %5541 = vmatpush1.bf16.msra.mxu0 0
    %5542 = vmatprep.subr.bf16.mxu0 0
    %5543 = vmatpush1.bf16.msra.mxu0 0
    %5544 = vmatprep.subr.bf16.mxu0 0
    %5545 = vmatpush1.bf16.msra.mxu0 0
    %5546 = vmatprep.mubr.bf16.mxu0 0
    %5547 = vmatmul.mubr.bf16.gmra.mrb[0].mxu0 %v5472
    %v5548 = vpop.f32.mrb[0].mxu0
    %v5549 = vadd.f32 0.0, %v5548
    %v5550 = vpop.f32.mrb[0].mxu0
    %v5551 = vpop.f32.mrb[0].mxu0
    %v5552 = vpop.f32.mrb[0].mxu0
    %5553 = vdwg.mxu0
    %v5554 = vadd.f32 %v5469, %v5508
    %v5555 = vxor.u32 %v5554, 2147483648
    %v5556 = vmul.f32 %v5555, 1.442695
    %v5557 = vpow.pop %v5556
    %v5558 = vadd.f32 %v5557, 1.0
    %v5559 = vrcp.pop %v5558
    %v5560 = vmul.f32 1.0, %v5559
    %v5561 = vadd.f32 %v5470, %v5510
    %v5562 = vxor.u32 %v5561, 2147483648
    %v5563 = vmul.f32 %v5562, 1.442695
    %v5564 = vpow.pop %v5563
    %v5565 = vadd.f32 %v5564, 1.0
    %v5566 = vrcp.pop %v5565
    %v5567 = vmul.f32 1.0, %v5566
    %v5568 = vadd.f32 %v5549, %v5352
    %v5569 = vmul.f32 %v5560, %v5568
    %v5570 = vadd.f32 %v5471, %v5569
    %v5571 = vtanh.pop %v5570
    %v5572 = vsub.f32 1.0, %v5567
    %v5573 = vmul.f32 %v5572, %v5571
    %v5574 = vmul.f32 %v5567, %v5468
    %v5575 = vadd.f32 %v5573, %v5574
    %v5576 = vld [vmem:[%s1664] sm:$0xff]
    %v5577 = vld [vmem:[%s1664 + $0x8] sm:$0xff]
    %v5578 = vld [vmem:[%s1664 + $0x10] sm:$0xff]
    %v5579 = vpack.c.bf16 %v5575, %v5575
    %5580 = vmatprep.subr.bf16.mxu0 %v5206
    %5581 = vmatpush1.bf16.msra.mxu0 %v5205
    %5582 = vmatprep.subr.bf16.mxu0 %v5209
    %5583 = vmatpush1.bf16.msra.mxu0 %v5208
    %5584 = vmatprep.subr.bf16.mxu0 %v5212
    %5585 = vmatpush1.bf16.msra.mxu0 %v5211
    %5586 = vmatprep.subr.bf16.mxu0 %v5215
    %5587 = vmatpush1.bf16.msra.mxu0 %v5214
    %5588 = vmatprep.subr.bf16.mxu0 %v5218
    %5589 = vmatpush1.bf16.msra.mxu0 %v5217
    %5590 = vmatprep.subr.bf16.mxu0 %v5221
    %5591 = vmatpush1.bf16.msra.mxu0 %v5220
    %5592 = vmatprep.subr.bf16.mxu0 %v5224
    %5593 = vmatpush1.bf16.msra.mxu0 %v5223
    %5594 = vmatprep.subr.bf16.mxu0 %v5227
    %5595 = vmatpush1.bf16.msra.mxu0 %v5226
    %5596 = vmatprep.subr.bf16.mxu0 0
    %5597 = vmatpush1.bf16.msra.mxu0 0
    %5598 = vmatprep.subr.bf16.mxu0 0
    %5599 = vmatpush1.bf16.msra.mxu0 0
    %5600 = vmatprep.subr.bf16.mxu0 0
    %5601 = vmatpush1.bf16.msra.mxu0 0
    %5602 = vmatprep.subr.bf16.mxu0 0
    %5603 = vmatpush1.bf16.msra.mxu0 0
    %5604 = vmatprep.subr.bf16.mxu0 0
    %5605 = vmatpush1.bf16.msra.mxu0 0
    %5606 = vmatprep.subr.bf16.mxu0 0
    %5607 = vmatpush1.bf16.msra.mxu0 0
    %5608 = vmatprep.subr.bf16.mxu0 0
    %5609 = vmatpush1.bf16.msra.mxu0 0
    %5610 = vmatprep.subr.bf16.mxu0 0
    %5611 = vmatpush1.bf16.msra.mxu0 0
    %5612 = vmatprep.mubr.bf16.mxu0 0
    %5613 = vmatmul.mubr.bf16.gmra.mrb[0].mxu0 %v5579
    %v5614 = vpop.f32.mrb[0].mxu0
    %v5615 = vadd.f32 0.0, %v5614
    %v5616 = vpop.f32.mrb[0].mxu0
    %v5617 = vadd.f32 0.0, %v5616
    %v5618 = vpop.f32.mrb[0].mxu0
    %v5619 = vpop.f32.mrb[0].mxu0
    %5620 = vdwg.mxu0
    %5621 = vmatprep.subr.bf16.mxu0 0
    %5622 = vmatpush1.bf16.msra.mxu0 %v5207
    %5623 = vmatprep.subr.bf16.mxu0 0
    %5624 = vmatpush1.bf16.msra.mxu0 %v5210
    %5625 = vmatprep.subr.bf16.mxu0 0
    %5626 = vmatpush1.bf16.msra.mxu0 %v5213
    %5627 = vmatprep.subr.bf16.mxu0 0
    %5628 = vmatpush1.bf16.msra.mxu0 %v5216
    %5629 = vmatprep.subr.bf16.mxu0 0
    %5630 = vmatpush1.bf16.msra.mxu0 %v5219
    %5631 = vmatprep.subr.bf16.mxu0 0
    %5632 = vmatpush1.bf16.msra.mxu0 %v5222
    %5633 = vmatprep.subr.bf16.mxu0 0
    %5634 = vmatpush1.bf16.msra.mxu0 %v5225
    %5635 = vmatprep.subr.bf16.mxu0 0
    %5636 = vmatpush1.bf16.msra.mxu0 %v5228
    %5637 = vmatprep.subr.bf16.mxu0 0
    %5638 = vmatpush1.bf16.msra.mxu0 0
    %5639 = vmatprep.subr.bf16.mxu0 0
    %5640 = vmatpush1.bf16.msra.mxu0 0
    %5641 = vmatprep.subr.bf16.mxu0 0
    %5642 = vmatpush1.bf16.msra.mxu0 0
    %5643 = vmatprep.subr.bf16.mxu0 0
    %5644 = vmatpush1.bf16.msra.mxu0 0
    %5645 = vmatprep.subr.bf16.mxu0 0
    %5646 = vmatpush1.bf16.msra.mxu0 0
    %5647 = vmatprep.subr.bf16.mxu0 0
    %5648 = vmatpush1.bf16.msra.mxu0 0
    %5649 = vmatprep.subr.bf16.mxu0 0
    %5650 = vmatpush1.bf16.msra.mxu0 0
    %5651 = vmatprep.subr.bf16.mxu0 0
    %5652 = vmatpush1.bf16.msra.mxu0 0
    %5653 = vmatprep.mubr.bf16.mxu0 0
    %5654 = vmatmul.mubr.bf16.gmra.mrb[0].mxu0 %v5579
    %v5655 = vpop.f32.mrb[0].mxu0
    %v5656 = vadd.f32 0.0, %v5655
    %v5657 = vpop.f32.mrb[0].mxu0
    %v5658 = vpop.f32.mrb[0].mxu0
    %v5659 = vpop.f32.mrb[0].mxu0
    %5660 = vdwg.mxu0
    %v5661 = vadd.f32 %v5576, %v5615
    %v5662 = vxor.u32 %v5661, 2147483648
    %v5663 = vmul.f32 %v5662, 1.442695
    %v5664 = vpow.pop %v5663
    %v5665 = vadd.f32 %v5664, 1.0
    %v5666 = vrcp.pop %v5665
    %v5667 = vmul.f32 1.0, %v5666
    %v5668 = vadd.f32 %v5577, %v5617
    %v5669 = vxor.u32 %v5668, 2147483648
    %v5670 = vmul.f32 %v5669, 1.442695
    %v5671 = vpow.pop %v5670
    %v5672 = vadd.f32 %v5671, 1.0
    %v5673 = vrcp.pop %v5672
    %v5674 = vmul.f32 1.0, %v5673
    %v5675 = vadd.f32 %v5656, %v5352
    %v5676 = vmul.f32 %v5667, %v5675
    %v5677 = vadd.f32 %v5578, %v5676
    %v5678 = vtanh.pop %v5677
    %v5679 = vsub.f32 1.0, %v5674
    %v5680 = vmul.f32 %v5679, %v5678
    %v5681 = vmul.f32 %v5674, %v5575
    %v5682 = vadd.f32 %v5680, %v5681
    %v5683 = vld [vmem:[%s1936] sm:$0xff]
    %v5684 = vld [vmem:[%s1936 + $0x8] sm:$0xff]
    %v5685 = vld [vmem:[%s1936 + $0x10] sm:$0xff]
    %v5686 = vpack.c.bf16 %v5682, %v5682
    %5687 = vmatprep.subr.bf16.mxu0 %v5206
    %5688 = vmatpush1.bf16.msra.mxu0 %v5205
    %5689 = vmatprep.subr.bf16.mxu0 %v5209
    %5690 = vmatpush1.bf16.msra.mxu0 %v5208
    %5691 = vmatprep.subr.bf16.mxu0 %v5212
    %5692 = vmatpush1.bf16.msra.mxu0 %v5211
    %5693 = vmatprep.subr.bf16.mxu0 %v5215
    %5694 = vmatpush1.bf16.msra.mxu0 %v5214
    %5695 = vmatprep.subr.bf16.mxu0 %v5218
    %5696 = vmatpush1.bf16.msra.mxu0 %v5217
    %5697 = vmatprep.subr.bf16.mxu0 %v5221
    %5698 = vmatpush1.bf16.msra.mxu0 %v5220
    %5699 = vmatprep.subr.bf16.mxu0 %v5224
    %5700 = vmatpush1.bf16.msra.mxu0 %v5223
    %5701 = vmatprep.subr.bf16.mxu0 %v5227
    %5702 = vmatpush1.bf16.msra.mxu0 %v5226
    %5703 = vmatprep.subr.bf16.mxu0 0
    %5704 = vmatpush1.bf16.msra.mxu0 0
    %5705 = vmatprep.subr.bf16.mxu0 0
    %5706 = vmatpush1.bf16.msra.mxu0 0
    %5707 = vmatprep.subr.bf16.mxu0 0
    %5708 = vmatpush1.bf16.msra.mxu0 0
    %5709 = vmatprep.subr.bf16.mxu0 0
    %5710 = vmatpush1.bf16.msra.mxu0 0
    %5711 = vmatprep.subr.bf16.mxu0 0
    %5712 = vmatpush1.bf16.msra.mxu0 0
    %5713 = vmatprep.subr.bf16.mxu0 0
    %5714 = vmatpush1.bf16.msra.mxu0 0
    %5715 = vmatprep.subr.bf16.mxu0 0
    %5716 = vmatpush1.bf16.msra.mxu0 0
    %5717 = vmatprep.subr.bf16.mxu0 0
    %5718 = vmatpush1.bf16.msra.mxu0 0
    %5719 = vmatprep.mubr.bf16.mxu0 0
    %5720 = vmatmul.mubr.bf16.gmra.mrb[0].mxu0 %v5686
    %v5721 = vpop.f32.mrb[0].mxu0
    %v5722 = vadd.f32 0.0, %v5721
    %v5723 = vpop.f32.mrb[0].mxu0
    %v5724 = vadd.f32 0.0, %v5723
    %v5725 = vpop.f32.mrb[0].mxu0
    %v5726 = vpop.f32.mrb[0].mxu0
    %5727 = vdwg.mxu0
    %5728 = vmatprep.subr.bf16.mxu0 0
    %5729 = vmatpush1.bf16.msra.mxu0 %v5207
    %5730 = vmatprep.subr.bf16.mxu0 0
    %5731 = vmatpush1.bf16.msra.mxu0 %v5210
    %5732 = vmatprep.subr.bf16.mxu0 0
    %5733 = vmatpush1.bf16.msra.mxu0 %v5213
    %5734 = vmatprep.subr.bf16.mxu0 0
    %5735 = vmatpush1.bf16.msra.mxu0 %v5216
    %5736 = vmatprep.subr.bf16.mxu0 0
    %5737 = vmatpush1.bf16.msra.mxu0 %v5219
    %5738 = vmatprep.subr.bf16.mxu0 0
    %5739 = vmatpush1.bf16.msra.mxu0 %v5222
    %5740 = vmatprep.subr.bf16.mxu0 0
    %5741 = vmatpush1.bf16.msra.mxu0 %v5225
    %5742 = vmatprep.subr.bf16.mxu0 0
    %5743 = vmatpush1.bf16.msra.mxu0 %v5228
    %5744 = vmatprep.subr.bf16.mxu0 0
    %5745 = vmatpush1.bf16.msra.mxu0 0
    %5746 = vmatprep.subr.bf16.mxu0 0
    %5747 = vmatpush1.bf16.msra.mxu0 0
    %5748 = vmatprep.subr.bf16.mxu0 0
    %5749 = vmatpush1.bf16.msra.mxu0 0
    %5750 = vmatprep.subr.bf16.mxu0 0
    %5751 = vmatpush1.bf16.msra.mxu0 0
    %5752 = vmatprep.subr.bf16.mxu0 0
    %5753 = vmatpush1.bf16.msra.mxu0 0
    %5754 = vmatprep.subr.bf16.mxu0 0
    %5755 = vmatpush1.bf16.msra.mxu0 0
    %5756 = vmatprep.subr.bf16.mxu0 0
    %5757 = vmatpush1.bf16.msra.mxu0 0
    %5758 = vmatprep.subr.bf16.mxu0 0
    %5759 = vmatpush1.bf16.msra.mxu0 0
    %5760 = vmatprep.mubr.bf16.mxu0 0
    %5761 = vmatmul.mubr.bf16.gmra.mrb[0].mxu0 %v5686
    %v5762 = vpop.f32.mrb[0].mxu0
    %v5763 = vadd.f32 0.0, %v5762
    %v5764 = vpop.f32.mrb[0].mxu0
    %v5765 = vpop.f32.mrb[0].mxu0
    %v5766 = vpop.f32.mrb[0].mxu0
    %5767 = vdwg.mxu0
    %v5768 = vadd.f32 %v5683, %v5722
    %v5769 = vxor.u32 %v5768, 2147483648
    %v5770 = vmul.f32 %v5769, 1.442695
    %v5771 = vpow.pop %v5770
    %v5772 = vadd.f32 %v5771, 1.0
    %v5773 = vrcp.pop %v5772
    %v5774 = vmul.f32 1.0, %v5773
    %v5775 = vadd.f32 %v5684, %v5724
    %v5776 = vxor.u32 %v5775, 2147483648
    %v5777 = vmul.f32 %v5776, 1.442695
    %v5778 = vpow.pop %v5777
    %v5779 = vadd.f32 %v5778, 1.0
    %v5780 = vrcp.pop %v5779
    %v5781 = vmul.f32 1.0, %v5780
    %v5782 = vadd.f32 %v5763, %v5352
    %v5783 = vmul.f32 %v5774, %v5782
    %v5784 = vadd.f32 %v5685, %v5783
    %v5785 = vtanh.pop %v5784
    %v5786 = vsub.f32 1.0, %v5781
    %v5787 = vmul.f32 %v5786, %v5785
    %v5788 = vmul.f32 %v5781, %v5682
    %v5789 = vadd.f32 %v5787, %v5788
    %v5790 = vld [vmem:[%s2208] sm:$0xff]
    %v5791 = vld [vmem:[%s2208 + $0x8] sm:$0xff]
    %v5792 = vld [vmem:[%s2208 + $0x10] sm:$0xff]
    %v5793 = vpack.c.bf16 %v5789, %v5789
    %5794 = vmatprep.subr.bf16.mxu0 %v5206
    %5795 = vmatpush1.bf16.msra.mxu0 %v5205
    %5796 = vmatprep.subr.bf16.mxu0 %v5209
    %5797 = vmatpush1.bf16.msra.mxu0 %v5208
    %5798 = vmatprep.subr.bf16.mxu0 %v5212
    %5799 = vmatpush1.bf16.msra.mxu0 %v5211
    %5800 = vmatprep.subr.bf16.mxu0 %v5215
    %5801 = vmatpush1.bf16.msra.mxu0 %v5214
    %5802 = vmatprep.subr.bf16.mxu0 %v5218
    %5803 = vmatpush1.bf16.msra.mxu0 %v5217
    %5804 = vmatprep.subr.bf16.mxu0 %v5221
    %5805 = vmatpush1.bf16.msra.mxu0 %v5220
    %5806 = vmatprep.subr.bf16.mxu0 %v5224
    %5807 = vmatpush1.bf16.msra.mxu0 %v5223
    %5808 = vmatprep.subr.bf16.mxu0 %v5227
    %5809 = vmatpush1.bf16.msra.mxu0 %v5226
    %5810 = vmatprep.subr.bf16.mxu0 0
    %5811 = vmatpush1.bf16.msra.mxu0 0
    %5812 = vmatprep.subr.bf16.mxu0 0
    %5813 = vmatpush1.bf16.msra.mxu0 0
    %5814 = vmatprep.subr.bf16.mxu0 0
    %5815 = vmatpush1.bf16.msra.mxu0 0
    %5816 = vmatprep.subr.bf16.mxu0 0
    %5817 = vmatpush1.bf16.msra.mxu0 0
    %5818 = vmatprep.subr.bf16.mxu0 0
    %5819 = vmatpush1.bf16.msra.mxu0 0
    %5820 = vmatprep.subr.bf16.mxu0 0
    %5821 = vmatpush1.bf16.msra.mxu0 0
    %5822 = vmatprep.subr.bf16.mxu0 0
    %5823 = vmatpush1.bf16.msra.mxu0 0
    %5824 = vmatprep.subr.bf16.mxu0 0
    %5825 = vmatpush1.bf16.msra.mxu0 0
    %5826 = vmatprep.mubr.bf16.mxu0 0
    %5827 = vmatmul.mubr.bf16.gmra.mrb[0].mxu0 %v5793
    %v5828 = vpop.f32.mrb[0].mxu0
    %v5829 = vadd.f32 0.0, %v5828
    %v5830 = vpop.f32.mrb[0].mxu0
    %v5831 = vadd.f32 0.0, %v5830
    %v5832 = vpop.f32.mrb[0].mxu0
    %v5833 = vpop.f32.mrb[0].mxu0
    %5834 = vdwg.mxu0
    %5835 = vmatprep.subr.bf16.mxu0 0
    %5836 = vmatpush1.bf16.msra.mxu0 %v5207
    %5837 = vmatprep.subr.bf16.mxu0 0
    %5838 = vmatpush1.bf16.msra.mxu0 %v5210
    %5839 = vmatprep.subr.bf16.mxu0 0
    %5840 = vmatpush1.bf16.msra.mxu0 %v5213
    %5841 = vmatprep.subr.bf16.mxu0 0
    %5842 = vmatpush1.bf16.msra.mxu0 %v5216
    %5843 = vmatprep.subr.bf16.mxu0 0
    %5844 = vmatpush1.bf16.msra.mxu0 %v5219
    %5845 = vmatprep.subr.bf16.mxu0 0
    %5846 = vmatpush1.bf16.msra.mxu0 %v5222
    %5847 = vmatprep.subr.bf16.mxu0 0
    %5848 = vmatpush1.bf16.msra.mxu0 %v5225
    %5849 = vmatprep.subr.bf16.mxu0 0
    %5850 = vmatpush1.bf16.msra.mxu0 %v5228
    %5851 = vmatprep.subr.bf16.mxu0 0
    %5852 = vmatpush1.bf16.msra.mxu0 0
    %5853 = vmatprep.subr.bf16.mxu0 0
    %5854 = vmatpush1.bf16.msra.mxu0 0
    %5855 = vmatprep.subr.bf16.mxu0 0
    %5856 = vmatpush1.bf16.msra.mxu0 0
    %5857 = vmatprep.subr.bf16.mxu0 0
    %5858 = vmatpush1.bf16.msra.mxu0 0
    %5859 = vmatprep.subr.bf16.mxu0 0
    %5860 = vmatpush1.bf16.msra.mxu0 0
    %5861 = vmatprep.subr.bf16.mxu0 0
    %5862 = vmatpush1.bf16.msra.mxu0 0
    %5863 = vmatprep.subr.bf16.mxu0 0
    %5864 = vmatpush1.bf16.msra.mxu0 0
    %5865 = vmatprep.subr.bf16.mxu0 0
    %5866 = vmatpush1.bf16.msra.mxu0 0
    %5867 = vmatprep.mubr.bf16.mxu0 0
    %5868 = vmatmul.mubr.bf16.gmra.mrb[0].mxu0 %v5793
    %v5869 = vpop.f32.mrb[0].mxu0
    %v5870 = vadd.f32 0.0, %v5869
    %v5871 = vpop.f32.mrb[0].mxu0
    %v5872 = vpop.f32.mrb[0].mxu0
    %v5873 = vpop.f32.mrb[0].mxu0
    %5874 = vdwg.mxu0
    %v5875 = vadd.f32 %v5790, %v5829
    %v5876 = vxor.u32 %v5875, 2147483648
    %v5877 = vmul.f32 %v5876, 1.442695
    %v5878 = vpow.pop %v5877
    %v5879 = vadd.f32 %v5878, 1.0
    %v5880 = vrcp.pop %v5879
    %v5881 = vmul.f32 1.0, %v5880
    %v5882 = vadd.f32 %v5791, %v5831
    %v5883 = vxor.u32 %v5882, 2147483648
    %v5884 = vmul.f32 %v5883, 1.442695
    %v5885 = vpow.pop %v5884
    %v5886 = vadd.f32 %v5885, 1.0
    %v5887 = vrcp.pop %v5886
    %v5888 = vmul.f32 1.0, %v5887
    %v5889 = vadd.f32 %v5870, %v5352
    %v5890 = vmul.f32 %v5881, %v5889
    %v5891 = vadd.f32 %v5792, %v5890
    %v5892 = vtanh.pop %v5891
    %v5893 = vsub.f32 1.0, %v5888
    %v5894 = vmul.f32 %v5893, %v5892
    %v5895 = vmul.f32 %v5888, %v5789
    %v5896 = vadd.f32 %v5894, %v5895
    %v5897 = vld [vmem:[%s2480] sm:$0xff]
    %v5898 = vld [vmem:[%s2480 + $0x8] sm:$0xff]
    %v5899 = vld [vmem:[%s2480 + $0x10] sm:$0xff]
    %v5900 = vpack.c.bf16 %v5896, %v5896
    %5901 = vmatprep.subr.bf16.mxu0 %v5206
    %5902 = vmatpush1.bf16.msra.mxu0 %v5205
    %5903 = vmatprep.subr.bf16.mxu0 %v5209
    %5904 = vmatpush1.bf16.msra.mxu0 %v5208
    %5905 = vmatprep.subr.bf16.mxu0 %v5212
    %5906 = vmatpush1.bf16.msra.mxu0 %v5211
    %5907 = vmatprep.subr.bf16.mxu0 %v5215
    %5908 = vmatpush1.bf16.msra.mxu0 %v5214
    %5909 = vmatprep.subr.bf16.mxu0 %v5218
    %5910 = vmatpush1.bf16.msra.mxu0 %v5217
    %5911 = vmatprep.subr.bf16.mxu0 %v5221
    %5912 = vmatpush1.bf16.msra.mxu0 %v5220
    %5913 = vmatprep.subr.bf16.mxu0 %v5224
    %5914 = vmatpush1.bf16.msra.mxu0 %v5223
    %5915 = vmatprep.subr.bf16.mxu0 %v5227
    %5916 = vmatpush1.bf16.msra.mxu0 %v5226
    %5917 = vmatprep.subr.bf16.mxu0 0
    %5918 = vmatpush1.bf16.msra.mxu0 0
    %5919 = vmatprep.subr.bf16.mxu0 0
    %5920 = vmatpush1.bf16.msra.mxu0 0
    %5921 = vmatprep.subr.bf16.mxu0 0
    %5922 = vmatpush1.bf16.msra.mxu0 0
    %5923 = vmatprep.subr.bf16.mxu0 0
    %5924 = vmatpush1.bf16.msra.mxu0 0
    %5925 = vmatprep.subr.bf16.mxu0 0
    %5926 = vmatpush1.bf16.msra.mxu0 0
    %5927 = vmatprep.subr.bf16.mxu0 0
    %5928 = vmatpush1.bf16.msra.mxu0 0
    %5929 = vmatprep.subr.bf16.mxu0 0
    %5930 = vmatpush1.bf16.msra.mxu0 0
    %5931 = vmatprep.subr.bf16.mxu0 0
    %5932 = vmatpush1.bf16.msra.mxu0 0
    %5933 = vmatprep.mubr.bf16.mxu0 0
    %5934 = vmatmul.mubr.bf16.gmra.mrb[0].mxu0 %v5900
    %v5935 = vpop.f32.mrb[0].mxu0
    %v5936 = vadd.f32 0.0, %v5935
    %v5937 = vpop.f32.mrb[0].mxu0
    %v5938 = vadd.f32 0.0, %v5937
    %v5939 = vpop.f32.mrb[0].mxu0
    %v5940 = vpop.f32.mrb[0].mxu0
    %5941 = vdwg.mxu0
    %5942 = vmatprep.subr.bf16.mxu0 0
    %5943 = vmatpush1.bf16.msra.mxu0 %v5207
    %5944 = vmatprep.subr.bf16.mxu0 0
    %5945 = vmatpush1.bf16.msra.mxu0 %v5210
    %5946 = vmatprep.subr.bf16.mxu0 0
    %5947 = vmatpush1.bf16.msra.mxu0 %v5213
    %5948 = vmatprep.subr.bf16.mxu0 0
    %5949 = vmatpush1.bf16.msra.mxu0 %v5216
    %5950 = vmatprep.subr.bf16.mxu0 0
    %5951 = vmatpush1.bf16.msra.mxu0 %v5219
    %5952 = vmatprep.subr.bf16.mxu0 0
    %5953 = vmatpush1.bf16.msra.mxu0 %v5222
    %5954 = vmatprep.subr.bf16.mxu0 0
    %5955 = vmatpush1.bf16.msra.mxu0 %v5225
    %5956 = vmatprep.subr.bf16.mxu0 0
    %5957 = vmatpush1.bf16.msra.mxu0 %v5228
    %5958 = vmatprep.subr.bf16.mxu0 0
    %5959 = vmatpush1.bf16.msra.mxu0 0
    %5960 = vmatprep.subr.bf16.mxu0 0
    %5961 = vmatpush1.bf16.msra.mxu0 0
    %5962 = vmatprep.subr.bf16.mxu0 0
    %5963 = vmatpush1.bf16.msra.mxu0 0
    %5964 = vmatprep.subr.bf16.mxu0 0
    %5965 = vmatpush1.bf16.msra.mxu0 0
    %5966 = vmatprep.subr.bf16.mxu0 0
    %5967 = vmatpush1.bf16.msra.mxu0 0
    %5968 = vmatprep.subr.bf16.mxu0 0
    %5969 = vmatpush1.bf16.msra.mxu0 0
    %5970 = vmatprep.subr.bf16.mxu0 0
    %5971 = vmatpush1.bf16.msra.mxu0 0
    %5972 = vmatprep.subr.bf16.mxu0 0
    %5973 = vmatpush1.bf16.msra.mxu0 0
    %5974 = vmatprep.mubr.bf16.mxu0 0
    %5975 = vmatmul.mubr.bf16.gmra.mrb[0].mxu0 %v5900
    %v5976 = vpop.f32.mrb[0].mxu0
    %v5977 = vadd.f32 0.0, %v5976
    %v5978 = vpop.f32.mrb[0].mxu0
    %v5979 = vpop.f32.mrb[0].mxu0
    %v5980 = vpop.f32.mrb[0].mxu0
    %5981 = vdwg.mxu0
    %v5982 = vadd.f32 %v5897, %v5936
    %v5983 = vxor.u32 %v5982, 2147483648
    %v5984 = vmul.f32 %v5983, 1.442695
    %v5985 = vpow.pop %v5984
    %v5986 = vadd.f32 %v5985, 1.0
    %v5987 = vrcp.pop %v5986
    %v5988 = vmul.f32 1.0, %v5987
    %v5989 = vadd.f32 %v5898, %v5938
    %v5990 = vxor.u32 %v5989, 2147483648
    %v5991 = vmul.f32 %v5990, 1.442695
    %v5992 = vpow.pop %v5991
    %v5993 = vadd.f32 %v5992, 1.0
    %v5994 = vrcp.pop %v5993
    %v5995 = vmul.f32 1.0, %v5994
    %v5996 = vadd.f32 %v5977, %v5352
    %v5997 = vmul.f32 %v5988, %v5996
    %v5998 = vadd.f32 %v5899, %v5997
    %v5999 = vtanh.pop %v5998
    %v6000 = vsub.f32 1.0, %v5995
    %v6001 = vmul.f32 %v6000, %v5999
    %v6002 = vmul.f32 %v5995, %v5896
    %v6003 = vadd.f32 %v6001, %v6002
    %v6004 = vld [vmem:[%s2752] sm:$0xff]
    %v6005 = vld [vmem:[%s2752 + $0x8] sm:$0xff]
    %v6006 = vld [vmem:[%s2752 + $0x10] sm:$0xff]
    %v6007 = vpack.c.bf16 %v6003, %v6003
    %6008 = vmatprep.subr.bf16.mxu0 %v5206
    %6009 = vmatpush1.bf16.msra.mxu0 %v5205
    %6010 = vmatprep.subr.bf16.mxu0 %v5209
    %6011 = vmatpush1.bf16.msra.mxu0 %v5208
    %6012 = vmatprep.subr.bf16.mxu0 %v5212
    %6013 = vmatpush1.bf16.msra.mxu0 %v5211
    %6014 = vmatprep.subr.bf16.mxu0 %v5215
    %6015 = vmatpush1.bf16.msra.mxu0 %v5214
    %6016 = vmatprep.subr.bf16.mxu0 %v5218
    %6017 = vmatpush1.bf16.msra.mxu0 %v5217
    %6018 = vmatprep.subr.bf16.mxu0 %v5221
    %6019 = vmatpush1.bf16.msra.mxu0 %v5220
    %6020 = vmatprep.subr.bf16.mxu0 %v5224
    %6021 = vmatpush1.bf16.msra.mxu0 %v5223
    %6022 = vmatprep.subr.bf16.mxu0 %v5227
    %6023 = vmatpush1.bf16.msra.mxu0 %v5226
    %6024 = vmatprep.subr.bf16.mxu0 0
    %6025 = vmatpush1.bf16.msra.mxu0 0
    %6026 = vmatprep.subr.bf16.mxu0 0
    %6027 = vmatpush1.bf16.msra.mxu0 0
    %6028 = vmatprep.subr.bf16.mxu0 0
    %6029 = vmatpush1.bf16.msra.mxu0 0
    %6030 = vmatprep.subr.bf16.mxu0 0
    %6031 = vmatpush1.bf16.msra.mxu0 0
    %6032 = vmatprep.subr.bf16.mxu0 0
    %6033 = vmatpush1.bf16.msra.mxu0 0
    %6034 = vmatprep.subr.bf16.mxu0 0
    %6035 = vmatpush1.bf16.msra.mxu0 0
    %6036 = vmatprep.subr.bf16.mxu0 0
    %6037 = vmatpush1.bf16.msra.mxu0 0
    %6038 = vmatprep.subr.bf16.mxu0 0
    %6039 = vmatpush1.bf16.msra.mxu0 0
    %6040 = vmatprep.mubr.bf16.mxu0 0
    %6041 = vmatmul.mubr.bf16.gmra.mrb[0].mxu0 %v6007
    %v6042 = vpop.f32.mrb[0].mxu0
    %v6043 = vadd.f32 0.0, %v6042
    %v6044 = vpop.f32.mrb[0].mxu0
    %v6045 = vadd.f32 0.0, %v6044
    %v6046 = vpop.f32.mrb[0].mxu0
    %v6047 = vpop.f32.mrb[0].mxu0
    %6048 = vdwg.mxu0
    %6049 = vmatprep.subr.bf16.mxu0 0
    %6050 = vmatpush1.bf16.msra.mxu0 %v5207
    %6051 = vmatprep.subr.bf16.mxu0 0
    %6052 = vmatpush1.bf16.msra.mxu0 %v5210
    %6053 = vmatprep.subr.bf16.mxu0 0
    %6054 = vmatpush1.bf16.msra.mxu0 %v5213
    %6055 = vmatprep.subr.bf16.mxu0 0
    %6056 = vmatpush1.bf16.msra.mxu0 %v5216
    %6057 = vmatprep.subr.bf16.mxu0 0
    %6058 = vmatpush1.bf16.msra.mxu0 %v5219
    %6059 = vmatprep.subr.bf16.mxu0 0
    %6060 = vmatpush1.bf16.msra.mxu0 %v5222
    %6061 = vmatprep.subr.bf16.mxu0 0
    %6062 = vmatpush1.bf16.msra.mxu0 %v5225
    %6063 = vmatprep.subr.bf16.mxu0 0
    %6064 = vmatpush1.bf16.msra.mxu0 %v5228
    %6065 = vmatprep.subr.bf16.mxu0 0
    %6066 = vmatpush1.bf16.msra.mxu0 0
    %6067 = vmatprep.subr.bf16.mxu0 0
    %6068 = vmatpush1.bf16.msra.mxu0 0
    %6069 = vmatprep.subr.bf16.mxu0 0
    %6070 = vmatpush1.bf16.msra.mxu0 0
    %6071 = vmatprep.subr.bf16.mxu0 0
    %6072 = vmatpush1.bf16.msra.mxu0 0
    %6073 = vmatprep.subr.bf16.mxu0 0
    %6074 = vmatpush1.bf16.msra.mxu0 0
    %6075 = vmatprep.subr.bf16.mxu0 0
    %6076 = vmatpush1.bf16.msra.mxu0 0
    %6077 = vmatprep.subr.bf16.mxu0 0
    %6078 = vmatpush1.bf16.msra.mxu0 0
    %6079 = vmatprep.subr.bf16.mxu0 0
    %6080 = vmatpush1.bf16.msra.mxu0 0
    %6081 = vmatprep.mubr.bf16.mxu0 0
    %6082 = vmatmul.mubr.bf16.gmra.mrb[0].mxu0 %v6007
    %v6083 = vpop.f32.mrb[0].mxu0
    %v6084 = vadd.f32 0.0, %v6083
    %v6085 = vpop.f32.mrb[0].mxu0
    %v6086 = vpop.f32.mrb[0].mxu0
    %v6087 = vpop.f32.mrb[0].mxu0
    %6088 = vdwg.mxu0
    %v6089 = vadd.f32 %v6004, %v6043
    %v6090 = vxor.u32 %v6089, 2147483648
    %v6091 = vmul.f32 %v6090, 1.442695
    %v6092 = vpow.pop %v6091
    %v6093 = vadd.f32 %v6092, 1.0
    %v6094 = vrcp.pop %v6093
    %v6095 = vmul.f32 1.0, %v6094
    %v6096 = vadd.f32 %v6005, %v6045
    %v6097 = vxor.u32 %v6096, 2147483648
    %v6098 = vmul.f32 %v6097, 1.442695
    %v6099 = vpow.pop %v6098
    %v6100 = vadd.f32 %v6099, 1.0
    %v6101 = vrcp.pop %v6100
    %v6102 = vmul.f32 1.0, %v6101
    %v6103 = vadd.f32 %v6084, %v5352
    %v6104 = vmul.f32 %v6095, %v6103
    %v6105 = vadd.f32 %v6006, %v6104
    %v6106 = vtanh.pop %v6105
    %v6107 = vsub.f32 1.0, %v6102
    %v6108 = vmul.f32 %v6107, %v6106
    %v6109 = vmul.f32 %v6102, %v6003
    %v6110 = vadd.f32 %v6108, %v6109
    %v6111 = vld [vmem:[%s3024] sm:$0xff]
    %v6112 = vld [vmem:[%s3024 + $0x8] sm:$0xff]
    %v6113 = vld [vmem:[%s3024 + $0x10] sm:$0xff]
    %v6114 = vpack.c.bf16 %v6110, %v6110
    %6115 = vmatprep.subr.bf16.mxu0 %v5206
    %6116 = vmatpush1.bf16.msra.mxu0 %v5205
    %6117 = vmatprep.subr.bf16.mxu0 %v5209
    %6118 = vmatpush1.bf16.msra.mxu0 %v5208
    %6119 = vmatprep.subr.bf16.mxu0 %v5212
    %6120 = vmatpush1.bf16.msra.mxu0 %v5211
    %6121 = vmatprep.subr.bf16.mxu0 %v5215
    %6122 = vmatpush1.bf16.msra.mxu0 %v5214
    %6123 = vmatprep.subr.bf16.mxu0 %v5218
    %6124 = vmatpush1.bf16.msra.mxu0 %v5217
    %6125 = vmatprep.subr.bf16.mxu0 %v5221
    %6126 = vmatpush1.bf16.msra.mxu0 %v5220
    %6127 = vmatprep.subr.bf16.mxu0 %v5224
    %6128 = vmatpush1.bf16.msra.mxu0 %v5223
    %6129 = vmatprep.subr.bf16.mxu0 %v5227
    %6130 = vmatpush1.bf16.msra.mxu0 %v5226
    %6131 = vmatprep.subr.bf16.mxu0 0
    %6132 = vmatpush1.bf16.msra.mxu0 0
    %6133 = vmatprep.subr.bf16.mxu0 0
    %6134 = vmatpush1.bf16.msra.mxu0 0
    %6135 = vmatprep.subr.bf16.mxu0 0
    %6136 = vmatpush1.bf16.msra.mxu0 0
    %6137 = vmatprep.subr.bf16.mxu0 0
    %6138 = vmatpush1.bf16.msra.mxu0 0
    %6139 = vmatprep.subr.bf16.mxu0 0
    %6140 = vmatpush1.bf16.msra.mxu0 0
    %6141 = vmatprep.subr.bf16.mxu0 0
    %6142 = vmatpush1.bf16.msra.mxu0 0
    %6143 = vmatprep.subr.bf16.mxu0 0
    %6144 = vmatpush1.bf16.msra.mxu0 0
    %6145 = vmatprep.subr.bf16.mxu0 0
    %6146 = vmatpush1.bf16.msra.mxu0 0
    %6147 = vmatprep.mubr.bf16.mxu0 0
    %6148 = vmatmul.mubr.bf16.gmra.mrb[0].mxu0 %v6114
    %v6149 = vpop.f32.mrb[0].mxu0
    %v6150 = vadd.f32 0.0, %v6149
    %v6151 = vpop.f32.mrb[0].mxu0
    %v6152 = vadd.f32 0.0, %v6151
    %v6153 = vpop.f32.mrb[0].mxu0
    %v6154 = vpop.f32.mrb[0].mxu0
    %6155 = vdwg.mxu0
    %6156 = vmatprep.subr.bf16.mxu0 0
    %6157 = vmatpush1.bf16.msra.mxu0 %v5207
    %6158 = vmatprep.subr.bf16.mxu0 0
    %6159 = vmatpush1.bf16.msra.mxu0 %v5210
    %6160 = vmatprep.subr.bf16.mxu0 0
    %6161 = vmatpush1.bf16.msra.mxu0 %v5213
    %6162 = vmatprep.subr.bf16.mxu0 0
    %6163 = vmatpush1.bf16.msra.mxu0 %v5216
    %6164 = vmatprep.subr.bf16.mxu0 0
    %6165 = vmatpush1.bf16.msra.mxu0 %v5219
    %6166 = vmatprep.subr.bf16.mxu0 0
    %6167 = vmatpush1.bf16.msra.mxu0 %v5222
    %6168 = vmatprep.subr.bf16.mxu0 0
    %6169 = vmatpush1.bf16.msra.mxu0 %v5225
    %6170 = vmatprep.subr.bf16.mxu0 0
    %6171 = vmatpush1.bf16.msra.mxu0 %v5228
    %6172 = vmatprep.subr.bf16.mxu0 0
    %6173 = vmatpush1.bf16.msra.mxu0 0
    %6174 = vmatprep.subr.bf16.mxu0 0
    %6175 = vmatpush1.bf16.msra.mxu0 0
    %6176 = vmatprep.subr.bf16.mxu0 0
    %6177 = vmatpush1.bf16.msra.mxu0 0
    %6178 = vmatprep.subr.bf16.mxu0 0
    %6179 = vmatpush1.bf16.msra.mxu0 0
    %6180 = vmatprep.subr.bf16.mxu0 0
    %6181 = vmatpush1.bf16.msra.mxu0 0
    %6182 = vmatprep.subr.bf16.mxu0 0
    %6183 = vmatpush1.bf16.msra.mxu0 0
    %6184 = vmatprep.subr.bf16.mxu0 0
    %6185 = vmatpush1.bf16.msra.mxu0 0
    %6186 = vmatprep.subr.bf16.mxu0 0
    %6187 = vmatpush1.bf16.msra.mxu0 0
    %6188 = vmatprep.mubr.bf16.mxu0 0
    %6189 = vmatmul.mubr.bf16.gmra.mrb[0].mxu0 %v6114
    %v6190 = vpop.f32.mrb[0].mxu0
    %v6191 = vadd.f32 0.0, %v6190
    %v6192 = vpop.f32.mrb[0].mxu0
    %v6193 = vpop.f32.mrb[0].mxu0
    %v6194 = vpop.f32.mrb[0].mxu0
    %6195 = vdwg.mxu0
    %v6196 = vadd.f32 %v6111, %v6150
    %v6197 = vxor.u32 %v6196, 2147483648
    %v6198 = vmul.f32 %v6197, 1.442695
    %v6199 = vpow.pop %v6198
    %v6200 = vadd.f32 %v6199, 1.0
    %v6201 = vrcp.pop %v6200
    %v6202 = vmul.f32 1.0, %v6201
    %v6203 = vadd.f32 %v6112, %v6152
    %v6204 = vxor.u32 %v6203, 2147483648
    %v6205 = vmul.f32 %v6204, 1.442695
    %v6206 = vpow.pop %v6205
    %v6207 = vadd.f32 %v6206, 1.0
    %v6208 = vrcp.pop %v6207
    %v6209 = vmul.f32 1.0, %v6208
    %v6210 = vadd.f32 %v6191, %v5352
    %v6211 = vmul.f32 %v6202, %v6210
    %v6212 = vadd.f32 %v6113, %v6211
    %v6213 = vtanh.pop %v6212
    %v6214 = vsub.f32 1.0, %v6209
    %v6215 = vmul.f32 %v6214, %v6213
    %v6216 = vmul.f32 %v6209, %v6110
    %v6217 = vadd.f32 %v6215, %v6216
    %v6218 = vld [vmem:[%s3296] sm:$0xff]
    %v6219 = vld [vmem:[%s3296 + $0x8] sm:$0xff]
    %v6220 = vld [vmem:[%s3296 + $0x10] sm:$0xff]
    %v6221 = vpack.c.bf16 %v6217, %v6217
    %6222 = vmatprep.subr.bf16.mxu0 %v5206
    %6223 = vmatpush1.bf16.msra.mxu0 %v5205
    %6224 = vmatprep.subr.bf16.mxu0 %v5209
    %6225 = vmatpush1.bf16.msra.mxu0 %v5208
    %6226 = vmatprep.subr.bf16.mxu0 %v5212
    %6227 = vmatpush1.bf16.msra.mxu0 %v5211
    %6228 = vmatprep.subr.bf16.mxu0 %v5215
    %6229 = vmatpush1.bf16.msra.mxu0 %v5214
    %6230 = vmatprep.subr.bf16.mxu0 %v5218
    %6231 = vmatpush1.bf16.msra.mxu0 %v5217
    %6232 = vmatprep.subr.bf16.mxu0 %v5221
    %6233 = vmatpush1.bf16.msra.mxu0 %v5220
    %6234 = vmatprep.subr.bf16.mxu0 %v5224
    %6235 = vmatpush1.bf16.msra.mxu0 %v5223
    %6236 = vmatprep.subr.bf16.mxu0 %v5227
    %6237 = vmatpush1.bf16.msra.mxu0 %v5226
    %6238 = vmatprep.subr.bf16.mxu0 0
    %6239 = vmatpush1.bf16.msra.mxu0 0
    %6240 = vmatprep.subr.bf16.mxu0 0
    %6241 = vmatpush1.bf16.msra.mxu0 0
    %6242 = vmatprep.subr.bf16.mxu0 0
    %6243 = vmatpush1.bf16.msra.mxu0 0
    %6244 = vmatprep.subr.bf16.mxu0 0
    %6245 = vmatpush1.bf16.msra.mxu0 0
    %6246 = vmatprep.subr.bf16.mxu0 0
    %6247 = vmatpush1.bf16.msra.mxu0 0
    %6248 = vmatprep.subr.bf16.mxu0 0
    %6249 = vmatpush1.bf16.msra.mxu0 0
    %6250 = vmatprep.subr.bf16.mxu0 0
    %6251 = vmatpush1.bf16.msra.mxu0 0
    %6252 = vmatprep.subr.bf16.mxu0 0
    %6253 = vmatpush1.bf16.msra.mxu0 0
    %6254 = vmatprep.mubr.bf16.mxu0 0
    %6255 = vmatmul.mubr.bf16.gmra.mrb[0].mxu0 %v6221
    %v6256 = vpop.f32.mrb[0].mxu0
    %v6257 = vadd.f32 0.0, %v6256
    %v6258 = vpop.f32.mrb[0].mxu0
    %v6259 = vadd.f32 0.0, %v6258
    %v6260 = vpop.f32.mrb[0].mxu0
    %v6261 = vpop.f32.mrb[0].mxu0
    %6262 = vdwg.mxu0
    %6263 = vmatprep.subr.bf16.mxu0 0
    %6264 = vmatpush1.bf16.msra.mxu0 %v5207
    %6265 = vmatprep.subr.bf16.mxu0 0
    %6266 = vmatpush1.bf16.msra.mxu0 %v5210
    %6267 = vmatprep.subr.bf16.mxu0 0
    %6268 = vmatpush1.bf16.msra.mxu0 %v5213
    %6269 = vmatprep.subr.bf16.mxu0 0
    %6270 = vmatpush1.bf16.msra.mxu0 %v5216
    %6271 = vmatprep.subr.bf16.mxu0 0
    %6272 = vmatpush1.bf16.msra.mxu0 %v5219
    %6273 = vmatprep.subr.bf16.mxu0 0
    %6274 = vmatpush1.bf16.msra.mxu0 %v5222
    %6275 = vmatprep.subr.bf16.mxu0 0
    %6276 = vmatpush1.bf16.msra.mxu0 %v5225
    %6277 = vmatprep.subr.bf16.mxu0 0
    %6278 = vmatpush1.bf16.msra.mxu0 %v5228
    %6279 = vmatprep.subr.bf16.mxu0 0
    %6280 = vmatpush1.bf16.msra.mxu0 0
    %6281 = vmatprep.subr.bf16.mxu0 0
    %6282 = vmatpush1.bf16.msra.mxu0 0
    %6283 = vmatprep.subr.bf16.mxu0 0
    %6284 = vmatpush1.bf16.msra.mxu0 0
    %6285 = vmatprep.subr.bf16.mxu0 0
    %6286 = vmatpush1.bf16.msra.mxu0 0
    %6287 = vmatprep.subr.bf16.mxu0 0
    %6288 = vmatpush1.bf16.msra.mxu0 0
    %6289 = vmatprep.subr.bf16.mxu0 0
    %6290 = vmatpush1.bf16.msra.mxu0 0
    %6291 = vmatprep.subr.bf16.mxu0 0
    %6292 = vmatpush1.bf16.msra.mxu0 0
    %6293 = vmatprep.subr.bf16.mxu0 0
    %6294 = vmatpush1.bf16.msra.mxu0 0
    %6295 = vmatprep.mubr.bf16.mxu0 0
    %6296 = vmatmul.mubr.bf16.gmra.mrb[0].mxu0 %v6221
    %v6297 = vpop.f32.mrb[0].mxu0
    %v6298 = vadd.f32 0.0, %v6297
    %v6299 = vpop.f32.mrb[0].mxu0
    %v6300 = vpop.f32.mrb[0].mxu0
    %v6301 = vpop.f32.mrb[0].mxu0
    %6302 = vdwg.mxu0
    %v6303 = vadd.f32 %v6218, %v6257
    %v6304 = vxor.u32 %v6303, 2147483648
    %v6305 = vmul.f32 %v6304, 1.442695
    %v6306 = vpow.pop %v6305
    %v6307 = vadd.f32 %v6306, 1.0
    %v6308 = vrcp.pop %v6307
    %v6309 = vmul.f32 1.0, %v6308
    %v6310 = vadd.f32 %v6219, %v6259
    %v6311 = vxor.u32 %v6310, 2147483648
    %v6312 = vmul.f32 %v6311, 1.442695
    %v6313 = vpow.pop %v6312
    %v6314 = vadd.f32 %v6313, 1.0
    %v6315 = vrcp.pop %v6314
    %v6316 = vmul.f32 1.0, %v6315
    %v6317 = vadd.f32 %v6298, %v5352
    %v6318 = vmul.f32 %v6309, %v6317
    %v6319 = vadd.f32 %v6220, %v6318
    %v6320 = vtanh.pop %v6319
    %v6321 = vsub.f32 1.0, %v6316
    %v6322 = vmul.f32 %v6321, %v6320
    %v6323 = vmul.f32 %v6316, %v6217
    %v6324 = vadd.f32 %v6322, %v6323
    %v6325 = vld [vmem:[%s3568] sm:$0xff]
    %v6326 = vld [vmem:[%s3568 + $0x8] sm:$0xff]
    %v6327 = vld [vmem:[%s3568 + $0x10] sm:$0xff]
    %v6328 = vpack.c.bf16 %v6324, %v6324
    %6329 = vmatprep.subr.bf16.mxu0 %v5206
    %6330 = vmatpush1.bf16.msra.mxu0 %v5205
    %6331 = vmatprep.subr.bf16.mxu0 %v5209
    %6332 = vmatpush1.bf16.msra.mxu0 %v5208
    %6333 = vmatprep.subr.bf16.mxu0 %v5212
    %6334 = vmatpush1.bf16.msra.mxu0 %v5211
    %6335 = vmatprep.subr.bf16.mxu0 %v5215
    %6336 = vmatpush1.bf16.msra.mxu0 %v5214
    %6337 = vmatprep.subr.bf16.mxu0 %v5218
    %6338 = vmatpush1.bf16.msra.mxu0 %v5217
    %6339 = vmatprep.subr.bf16.mxu0 %v5221
    %6340 = vmatpush1.bf16.msra.mxu0 %v5220
    %6341 = vmatprep.subr.bf16.mxu0 %v5224
    %6342 = vmatpush1.bf16.msra.mxu0 %v5223
    %6343 = vmatprep.subr.bf16.mxu0 %v5227
    %6344 = vmatpush1.bf16.msra.mxu0 %v5226
    %6345 = vmatprep.subr.bf16.mxu0 0
    %6346 = vmatpush1.bf16.msra.mxu0 0
    %6347 = vmatprep.subr.bf16.mxu0 0
    %6348 = vmatpush1.bf16.msra.mxu0 0
    %6349 = vmatprep.subr.bf16.mxu0 0
    %6350 = vmatpush1.bf16.msra.mxu0 0
    %6351 = vmatprep.subr.bf16.mxu0 0
    %6352 = vmatpush1.bf16.msra.mxu0 0
    %6353 = vmatprep.subr.bf16.mxu0 0
    %6354 = vmatpush1.bf16.msra.mxu0 0
    %6355 = vmatprep.subr.bf16.mxu0 0
    %6356 = vmatpush1.bf16.msra.mxu0 0
    %6357 = vmatprep.subr.bf16.mxu0 0
    %6358 = vmatpush1.bf16.msra.mxu0 0
    %6359 = vmatprep.subr.bf16.mxu0 0
    %6360 = vmatpush1.bf16.msra.mxu0 0
    %6361 = vmatprep.mubr.bf16.mxu0 0
    %6362 = vmatmul.mubr.bf16.gmra.mrb[0].mxu0 %v6328
    %v6363 = vpop.f32.mrb[0].mxu0
    %v6364 = vadd.f32 0.0, %v6363
    %v6365 = vpop.f32.mrb[0].mxu0
    %v6366 = vadd.f32 0.0, %v6365
    %v6367 = vpop.f32.mrb[0].mxu0
    %v6368 = vpop.f32.mrb[0].mxu0
    %6369 = vdwg.mxu0
    %6370 = vmatprep.subr.bf16.mxu0 0
    %6371 = vmatpush1.bf16.msra.mxu0 %v5207
    %6372 = vmatprep.subr.bf16.mxu0 0
    %6373 = vmatpush1.bf16.msra.mxu0 %v5210
    %6374 = vmatprep.subr.bf16.mxu0 0
    %6375 = vmatpush1.bf16.msra.mxu0 %v5213
    %6376 = vmatprep.subr.bf16.mxu0 0
    %6377 = vmatpush1.bf16.msra.mxu0 %v5216
    %6378 = vmatprep.subr.bf16.mxu0 0
    %6379 = vmatpush1.bf16.msra.mxu0 %v5219
    %6380 = vmatprep.subr.bf16.mxu0 0
    %6381 = vmatpush1.bf16.msra.mxu0 %v5222
    %6382 = vmatprep.subr.bf16.mxu0 0
    %6383 = vmatpush1.bf16.msra.mxu0 %v5225
    %6384 = vmatprep.subr.bf16.mxu0 0
    %6385 = vmatpush1.bf16.msra.mxu0 %v5228
    %6386 = vmatprep.subr.bf16.mxu0 0
    %6387 = vmatpush1.bf16.msra.mxu0 0
    %6388 = vmatprep.subr.bf16.mxu0 0
    %6389 = vmatpush1.bf16.msra.mxu0 0
    %6390 = vmatprep.subr.bf16.mxu0 0
    %6391 = vmatpush1.bf16.msra.mxu0 0
    %6392 = vmatprep.subr.bf16.mxu0 0
    %6393 = vmatpush1.bf16.msra.mxu0 0
    %6394 = vmatprep.subr.bf16.mxu0 0
    %6395 = vmatpush1.bf16.msra.mxu0 0
    %6396 = vmatprep.subr.bf16.mxu0 0
    %6397 = vmatpush1.bf16.msra.mxu0 0
    %6398 = vmatprep.subr.bf16.mxu0 0
    %6399 = vmatpush1.bf16.msra.mxu0 0
    %6400 = vmatprep.subr.bf16.mxu0 0
    %6401 = vmatpush1.bf16.msra.mxu0 0
    %6402 = vmatprep.mubr.bf16.mxu0 0
    %6403 = vmatmul.mubr.bf16.gmra.mrb[0].mxu0 %v6328
    %v6404 = vpop.f32.mrb[0].mxu0
    %v6405 = vadd.f32 0.0, %v6404
    %v6406 = vpop.f32.mrb[0].mxu0
    %v6407 = vpop.f32.mrb[0].mxu0
    %v6408 = vpop.f32.mrb[0].mxu0
    %6409 = vdwg.mxu0
    %v6410 = vadd.f32 %v6325, %v6364
    %v6411 = vxor.u32 %v6410, 2147483648
    %v6412 = vmul.f32 %v6411, 1.442695
    %v6413 = vpow.pop %v6412
    %v6414 = vadd.f32 %v6413, 1.0
    %v6415 = vrcp.pop %v6414
    %v6416 = vmul.f32 1.0, %v6415
    %v6417 = vadd.f32 %v6326, %v6366
    %v6418 = vxor.u32 %v6417, 2147483648
    %v6419 = vmul.f32 %v6418, 1.442695
    %v6420 = vpow.pop %v6419
    %v6421 = vadd.f32 %v6420, 1.0
    %v6422 = vrcp.pop %v6421
    %v6423 = vmul.f32 1.0, %v6422
    %v6424 = vadd.f32 %v6405, %v5352
    %v6425 = vmul.f32 %v6416, %v6424
    %v6426 = vadd.f32 %v6327, %v6425
    %v6427 = vtanh.pop %v6426
    %v6428 = vsub.f32 1.0, %v6423
    %v6429 = vmul.f32 %v6428, %v6427
    %v6430 = vmul.f32 %v6423, %v6324
    %v6431 = vadd.f32 %v6429, %v6430
    %v6432 = vld [vmem:[%s3840] sm:$0xff]
    %v6433 = vld [vmem:[%s3840 + $0x8] sm:$0xff]
    %v6434 = vld [vmem:[%s3840 + $0x10] sm:$0xff]
    %v6435 = vpack.c.bf16 %v6431, %v6431
    %6436 = vmatprep.subr.bf16.mxu0 %v5206
    %6437 = vmatpush1.bf16.msra.mxu0 %v5205
    %6438 = vmatprep.subr.bf16.mxu0 %v5209
    %6439 = vmatpush1.bf16.msra.mxu0 %v5208
    %6440 = vmatprep.subr.bf16.mxu0 %v5212
    %6441 = vmatpush1.bf16.msra.mxu0 %v5211
    %6442 = vmatprep.subr.bf16.mxu0 %v5215
    %6443 = vmatpush1.bf16.msra.mxu0 %v5214
    %6444 = vmatprep.subr.bf16.mxu0 %v5218
    %6445 = vmatpush1.bf16.msra.mxu0 %v5217
    %6446 = vmatprep.subr.bf16.mxu0 %v5221
    %6447 = vmatpush1.bf16.msra.mxu0 %v5220
    %6448 = vmatprep.subr.bf16.mxu0 %v5224
    %6449 = vmatpush1.bf16.msra.mxu0 %v5223
    %6450 = vmatprep.subr.bf16.mxu0 %v5227
    %6451 = vmatpush1.bf16.msra.mxu0 %v5226
    %6452 = vmatprep.subr.bf16.mxu0 0
    %6453 = vmatpush1.bf16.msra.mxu0 0
    %6454 = vmatprep.subr.bf16.mxu0 0
    %6455 = vmatpush1.bf16.msra.mxu0 0
    %6456 = vmatprep.subr.bf16.mxu0 0
    %6457 = vmatpush1.bf16.msra.mxu0 0
    %6458 = vmatprep.subr.bf16.mxu0 0
    %6459 = vmatpush1.bf16.msra.mxu0 0
    %6460 = vmatprep.subr.bf16.mxu0 0
    %6461 = vmatpush1.bf16.msra.mxu0 0
    %6462 = vmatprep.subr.bf16.mxu0 0
    %6463 = vmatpush1.bf16.msra.mxu0 0
    %6464 = vmatprep.subr.bf16.mxu0 0
    %6465 = vmatpush1.bf16.msra.mxu0 0
    %6466 = vmatprep.subr.bf16.mxu0 0
    %6467 = vmatpush1.bf16.msra.mxu0 0
    %6468 = vmatprep.mubr.bf16.mxu0 0
    %6469 = vmatmul.mubr.bf16.gmra.mrb[0].mxu0 %v6435
    %v6470 = vpop.f32.mrb[0].mxu0
    %v6471 = vadd.f32 0.0, %v6470
    %v6472 = vpop.f32.mrb[0].mxu0
    %v6473 = vadd.f32 0.0, %v6472
    %v6474 = vpop.f32.mrb[0].mxu0
    %v6475 = vpop.f32.mrb[0].mxu0
    %6476 = vdwg.mxu0
    %6477 = vmatprep.subr.bf16.mxu0 0
    %6478 = vmatpush1.bf16.msra.mxu0 %v5207
    %6479 = vmatprep.subr.bf16.mxu0 0
    %6480 = vmatpush1.bf16.msra.mxu0 %v5210
    %6481 = vmatprep.subr.bf16.mxu0 0
    %6482 = vmatpush1.bf16.msra.mxu0 %v5213
    %6483 = vmatprep.subr.bf16.mxu0 0
    %6484 = vmatpush1.bf16.msra.mxu0 %v5216
    %6485 = vmatprep.subr.bf16.mxu0 0
    %6486 = vmatpush1.bf16.msra.mxu0 %v5219
    %6487 = vmatprep.subr.bf16.mxu0 0
    %6488 = vmatpush1.bf16.msra.mxu0 %v5222
    %6489 = vmatprep.subr.bf16.mxu0 0
    %6490 = vmatpush1.bf16.msra.mxu0 %v5225
    %6491 = vmatprep.subr.bf16.mxu0 0
    %6492 = vmatpush1.bf16.msra.mxu0 %v5228
    %6493 = vmatprep.subr.bf16.mxu0 0
    %6494 = vmatpush1.bf16.msra.mxu0 0
    %6495 = vmatprep.subr.bf16.mxu0 0
    %6496 = vmatpush1.bf16.msra.mxu0 0
    %6497 = vmatprep.subr.bf16.mxu0 0
    %6498 = vmatpush1.bf16.msra.mxu0 0
    %6499 = vmatprep.subr.bf16.mxu0 0
    %6500 = vmatpush1.bf16.msra.mxu0 0
    %6501 = vmatprep.subr.bf16.mxu0 0
    %6502 = vmatpush1.bf16.msra.mxu0 0
    %6503 = vmatprep.subr.bf16.mxu0 0
    %6504 = vmatpush1.bf16.msra.mxu0 0
    %6505 = vmatprep.subr.bf16.mxu0 0
    %6506 = vmatpush1.bf16.msra.mxu0 0
    %6507 = vmatprep.subr.bf16.mxu0 0
    %6508 = vmatpush1.bf16.msra.mxu0 0
    %6509 = vmatprep.mubr.bf16.mxu0 0
    %6510 = vmatmul.mubr.bf16.gmra.mrb[0].mxu0 %v6435
    %v6511 = vpop.f32.mrb[0].mxu0
    %v6512 = vadd.f32 0.0, %v6511
    %v6513 = vpop.f32.mrb[0].mxu0
    %v6514 = vpop.f32.mrb[0].mxu0
    %v6515 = vpop.f32.mrb[0].mxu0
    %6516 = vdwg.mxu0
    %v6517 = vadd.f32 %v6432, %v6471
    %v6518 = vxor.u32 %v6517, 2147483648
    %v6519 = vmul.f32 %v6518, 1.442695
    %v6520 = vpow.pop %v6519
    %v6521 = vadd.f32 %v6520, 1.0
    %v6522 = vrcp.pop %v6521
    %v6523 = vmul.f32 1.0, %v6522
    %v6524 = vadd.f32 %v6433, %v6473
    %v6525 = vxor.u32 %v6524, 2147483648
    %v6526 = vmul.f32 %v6525, 1.442695
    %v6527 = vpow.pop %v6526
    %v6528 = vadd.f32 %v6527, 1.0
    %v6529 = vrcp.pop %v6528
    %v6530 = vmul.f32 1.0, %v6529
    %v6531 = vadd.f32 %v6512, %v5352
    %v6532 = vmul.f32 %v6523, %v6531
    %v6533 = vadd.f32 %v6434, %v6532
    %v6534 = vtanh.pop %v6533
    %v6535 = vsub.f32 1.0, %v6530
    %v6536 = vmul.f32 %v6535, %v6534
    %v6537 = vmul.f32 %v6530, %v6431
    %v6538 = vadd.f32 %v6536, %v6537
    %v6539 = vld [vmem:[%s4112] sm:$0xff]
    %v6540 = vld [vmem:[%s4112 + $0x8] sm:$0xff]
    %v6541 = vld [vmem:[%s4112 + $0x10] sm:$0xff]
    %v6542 = vpack.c.bf16 %v6538, %v6538
    %6543 = vmatprep.subr.bf16.mxu0 %v5206
    %6544 = vmatpush1.bf16.msra.mxu0 %v5205
    %6545 = vmatprep.subr.bf16.mxu0 %v5209
    %6546 = vmatpush1.bf16.msra.mxu0 %v5208
    %6547 = vmatprep.subr.bf16.mxu0 %v5212
    %6548 = vmatpush1.bf16.msra.mxu0 %v5211
    %6549 = vmatprep.subr.bf16.mxu0 %v5215
    %6550 = vmatpush1.bf16.msra.mxu0 %v5214
    %6551 = vmatprep.subr.bf16.mxu0 %v5218
    %6552 = vmatpush1.bf16.msra.mxu0 %v5217
    %6553 = vmatprep.subr.bf16.mxu0 %v5221
    %6554 = vmatpush1.bf16.msra.mxu0 %v5220
    %6555 = vmatprep.subr.bf16.mxu0 %v5224
    %6556 = vmatpush1.bf16.msra.mxu0 %v5223
    %6557 = vmatprep.subr.bf16.mxu0 %v5227
    %6558 = vmatpush1.bf16.msra.mxu0 %v5226
    %6559 = vmatprep.subr.bf16.mxu0 0
    %6560 = vmatpush1.bf16.msra.mxu0 0
    %6561 = vmatprep.subr.bf16.mxu0 0
    %6562 = vmatpush1.bf16.msra.mxu0 0
    %6563 = vmatprep.subr.bf16.mxu0 0
    %6564 = vmatpush1.bf16.msra.mxu0 0
    %6565 = vmatprep.subr.bf16.mxu0 0
    %6566 = vmatpush1.bf16.msra.mxu0 0
    %6567 = vmatprep.subr.bf16.mxu0 0
    %6568 = vmatpush1.bf16.msra.mxu0 0
    %6569 = vmatprep.subr.bf16.mxu0 0
    %6570 = vmatpush1.bf16.msra.mxu0 0
    %6571 = vmatprep.subr.bf16.mxu0 0
    %6572 = vmatpush1.bf16.msra.mxu0 0
    %6573 = vmatprep.subr.bf16.mxu0 0
    %6574 = vmatpush1.bf16.msra.mxu0 0
    %6575 = vmatprep.mubr.bf16.mxu0 0
    %6576 = vmatmul.mubr.bf16.gmra.mrb[0].mxu0 %v6542
    %v6577 = vpop.f32.mrb[0].mxu0
    %v6578 = vadd.f32 0.0, %v6577
    %v6579 = vpop.f32.mrb[0].mxu0
    %v6580 = vadd.f32 0.0, %v6579
    %v6581 = vpop.f32.mrb[0].mxu0
    %v6582 = vpop.f32.mrb[0].mxu0
    %6583 = vdwg.mxu0
    %6584 = vmatprep.subr.bf16.mxu0 0
    %6585 = vmatpush1.bf16.msra.mxu0 %v5207
    %6586 = vmatprep.subr.bf16.mxu0 0
    %6587 = vmatpush1.bf16.msra.mxu0 %v5210
    %6588 = vmatprep.subr.bf16.mxu0 0
    %6589 = vmatpush1.bf16.msra.mxu0 %v5213
    %6590 = vmatprep.subr.bf16.mxu0 0
    %6591 = vmatpush1.bf16.msra.mxu0 %v5216
    %6592 = vmatprep.subr.bf16.mxu0 0
    %6593 = vmatpush1.bf16.msra.mxu0 %v5219
    %6594 = vmatprep.subr.bf16.mxu0 0
    %6595 = vmatpush1.bf16.msra.mxu0 %v5222
    %6596 = vmatprep.subr.bf16.mxu0 0
    %6597 = vmatpush1.bf16.msra.mxu0 %v5225
    %6598 = vmatprep.subr.bf16.mxu0 0
    %6599 = vmatpush1.bf16.msra.mxu0 %v5228
    %6600 = vmatprep.subr.bf16.mxu0 0
    %6601 = vmatpush1.bf16.msra.mxu0 0
    %6602 = vmatprep.subr.bf16.mxu0 0
    %6603 = vmatpush1.bf16.msra.mxu0 0
    %6604 = vmatprep.subr.bf16.mxu0 0
    %6605 = vmatpush1.bf16.msra.mxu0 0
    %6606 = vmatprep.subr.bf16.mxu0 0
    %6607 = vmatpush1.bf16.msra.mxu0 0
    %6608 = vmatprep.subr.bf16.mxu0 0
    %6609 = vmatpush1.bf16.msra.mxu0 0
    %6610 = vmatprep.subr.bf16.mxu0 0
    %6611 = vmatpush1.bf16.msra.mxu0 0
    %6612 = vmatprep.subr.bf16.mxu0 0
    %6613 = vmatpush1.bf16.msra.mxu0 0
    %6614 = vmatprep.subr.bf16.mxu0 0
    %6615 = vmatpush1.bf16.msra.mxu0 0
    %6616 = vmatprep.mubr.bf16.mxu0 0
    %6617 = vmatmul.mubr.bf16.gmra.mrb[0].mxu0 %v6542
    %v6618 = vpop.f32.mrb[0].mxu0
    %v6619 = vadd.f32 0.0, %v6618
    %v6620 = vpop.f32.mrb[0].mxu0
    %v6621 = vpop.f32.mrb[0].mxu0
    %v6622 = vpop.f32.mrb[0].mxu0
    %6623 = vdwg.mxu0
    %v6624 = vadd.f32 %v6539, %v6578
    %v6625 = vxor.u32 %v6624, 2147483648
    %v6626 = vmul.f32 %v6625, 1.442695
    %v6627 = vpow.pop %v6626
    %v6628 = vadd.f32 %v6627, 1.0
    %v6629 = vrcp.pop %v6628
    %v6630 = vmul.f32 1.0, %v6629
    %v6631 = vadd.f32 %v6540, %v6580
    %v6632 = vxor.u32 %v6631, 2147483648
    %v6633 = vmul.f32 %v6632, 1.442695
    %v6634 = vpow.pop %v6633
    %v6635 = vadd.f32 %v6634, 1.0
    %v6636 = vrcp.pop %v6635
    %v6637 = vmul.f32 1.0, %v6636
    %v6638 = vadd.f32 %v6619, %v5352
    %v6639 = vmul.f32 %v6630, %v6638
    %v6640 = vadd.f32 %v6541, %v6639
    %v6641 = vtanh.pop %v6640
    %v6642 = vsub.f32 1.0, %v6637
    %v6643 = vmul.f32 %v6642, %v6641
    %v6644 = vmul.f32 %v6637, %v6538
    %v6645 = vadd.f32 %v6643, %v6644
    %v6646 = vld [vmem:[%s4384] sm:$0xff]
    %v6647 = vld [vmem:[%s4384 + $0x8] sm:$0xff]
    %v6648 = vld [vmem:[%s4384 + $0x10] sm:$0xff]
    %v6649 = vpack.c.bf16 %v6645, %v6645
    %6650 = vmatprep.subr.bf16.mxu0 %v5206
    %6651 = vmatpush1.bf16.msra.mxu0 %v5205
    %6652 = vmatprep.subr.bf16.mxu0 %v5209
    %6653 = vmatpush1.bf16.msra.mxu0 %v5208
    %6654 = vmatprep.subr.bf16.mxu0 %v5212
    %6655 = vmatpush1.bf16.msra.mxu0 %v5211
    %6656 = vmatprep.subr.bf16.mxu0 %v5215
    %6657 = vmatpush1.bf16.msra.mxu0 %v5214
    %6658 = vmatprep.subr.bf16.mxu0 %v5218
    %6659 = vmatpush1.bf16.msra.mxu0 %v5217
    %6660 = vmatprep.subr.bf16.mxu0 %v5221
    %6661 = vmatpush1.bf16.msra.mxu0 %v5220
    %6662 = vmatprep.subr.bf16.mxu0 %v5224
    %6663 = vmatpush1.bf16.msra.mxu0 %v5223
    %6664 = vmatprep.subr.bf16.mxu0 %v5227
    %6665 = vmatpush1.bf16.msra.mxu0 %v5226
    %6666 = vmatprep.subr.bf16.mxu0 0
    %6667 = vmatpush1.bf16.msra.mxu0 0
    %6668 = vmatprep.subr.bf16.mxu0 0
    %6669 = vmatpush1.bf16.msra.mxu0 0
    %6670 = vmatprep.subr.bf16.mxu0 0
    %6671 = vmatpush1.bf16.msra.mxu0 0
    %6672 = vmatprep.subr.bf16.mxu0 0
    %6673 = vmatpush1.bf16.msra.mxu0 0
    %6674 = vmatprep.subr.bf16.mxu0 0
    %6675 = vmatpush1.bf16.msra.mxu0 0
    %6676 = vmatprep.subr.bf16.mxu0 0
    %6677 = vmatpush1.bf16.msra.mxu0 0
    %6678 = vmatprep.subr.bf16.mxu0 0
    %6679 = vmatpush1.bf16.msra.mxu0 0
    %6680 = vmatprep.subr.bf16.mxu0 0
    %6681 = vmatpush1.bf16.msra.mxu0 0
    %6682 = vmatprep.mubr.bf16.mxu0 0
    %6683 = vmatmul.mubr.bf16.gmra.mrb[0].mxu0 %v6649
    %v6684 = vpop.f32.mrb[0].mxu0
    %v6685 = vadd.f32 0.0, %v6684
    %v6686 = vpop.f32.mrb[0].mxu0
    %v6687 = vadd.f32 0.0, %v6686
    %v6688 = vpop.f32.mrb[0].mxu0
    %v6689 = vpop.f32.mrb[0].mxu0
    %6690 = vdwg.mxu0
    %6691 = vmatprep.subr.bf16.mxu0 0
    %6692 = vmatpush1.bf16.msra.mxu0 %v5207
    %6693 = vmatprep.subr.bf16.mxu0 0
    %6694 = vmatpush1.bf16.msra.mxu0 %v5210
    %6695 = vmatprep.subr.bf16.mxu0 0
    %6696 = vmatpush1.bf16.msra.mxu0 %v5213
    %6697 = vmatprep.subr.bf16.mxu0 0
    %6698 = vmatpush1.bf16.msra.mxu0 %v5216
    %6699 = vmatprep.subr.bf16.mxu0 0
    %6700 = vmatpush1.bf16.msra.mxu0 %v5219
    %6701 = vmatprep.subr.bf16.mxu0 0
    %6702 = vmatpush1.bf16.msra.mxu0 %v5222
    %6703 = vmatprep.subr.bf16.mxu0 0
    %6704 = vmatpush1.bf16.msra.mxu0 %v5225
    %6705 = vmatprep.subr.bf16.mxu0 0
    %6706 = vmatpush1.bf16.msra.mxu0 %v5228
    %6707 = vmatprep.subr.bf16.mxu0 0
    %6708 = vmatpush1.bf16.msra.mxu0 0
    %6709 = vmatprep.subr.bf16.mxu0 0
    %6710 = vmatpush1.bf16.msra.mxu0 0
    %6711 = vmatprep.subr.bf16.mxu0 0
    %6712 = vmatpush1.bf16.msra.mxu0 0
    %6713 = vmatprep.subr.bf16.mxu0 0
    %6714 = vmatpush1.bf16.msra.mxu0 0
    %6715 = vmatprep.subr.bf16.mxu0 0
    %6716 = vmatpush1.bf16.msra.mxu0 0
    %6717 = vmatprep.subr.bf16.mxu0 0
    %6718 = vmatpush1.bf16.msra.mxu0 0
    %6719 = vmatprep.subr.bf16.mxu0 0
    %6720 = vmatpush1.bf16.msra.mxu0 0
    %6721 = vmatprep.subr.bf16.mxu0 0
    %6722 = vmatpush1.bf16.msra.mxu0 0
    %6723 = vmatprep.mubr.bf16.mxu0 0
    %6724 = vmatmul.mubr.bf16.gmra.mrb[0].mxu0 %v6649
    %v6725 = vpop.f32.mrb[0].mxu0
    %v6726 = vadd.f32 0.0, %v6725
    %v6727 = vpop.f32.mrb[0].mxu0
    %v6728 = vpop.f32.mrb[0].mxu0
    %v6729 = vpop.f32.mrb[0].mxu0
    %6730 = vdwg.mxu0
    %v6731 = vadd.f32 %v6646, %v6685
    %v6732 = vxor.u32 %v6731, 2147483648
    %v6733 = vmul.f32 %v6732, 1.442695
    %v6734 = vpow.pop %v6733
    %v6735 = vadd.f32 %v6734, 1.0
    %v6736 = vrcp.pop %v6735
    %v6737 = vmul.f32 1.0, %v6736
    %v6738 = vadd.f32 %v6647, %v6687
    %v6739 = vxor.u32 %v6738, 2147483648
    %v6740 = vmul.f32 %v6739, 1.442695
    %v6741 = vpow.pop %v6740
    %v6742 = vadd.f32 %v6741, 1.0
    %v6743 = vrcp.pop %v6742
    %v6744 = vmul.f32 1.0, %v6743
    %v6745 = vadd.f32 %v6726, %v5352
    %v6746 = vmul.f32 %v6737, %v6745
    %v6747 = vadd.f32 %v6648, %v6746
    %v6748 = vtanh.pop %v6747
    %v6749 = vsub.f32 1.0, %v6744
    %v6750 = vmul.f32 %v6749, %v6748
    %v6751 = vmul.f32 %v6744, %v6645
    %v6752 = vadd.f32 %v6750, %v6751
    %v6753 = vld [vmem:[%s13] sm:$0x1]
    %v6755 = vlaneseq
    %v6756 = vshrl.u32 %v6755, 7
    %v6757 = vsub.s32 0, %v6756
    %v6758 = vrot.slane %v6753, %v6757
    %v6760 = vmul.f32 %v6752, %v6758
    %6761 = vadd.xlane.f32.xlu0 %v6760
    %v6762 = vpop.xlane.xlu0 %6761
    %v6763 = vld [vmem:[#allocation4] sm:$0x1]
    %v6765 = vlaneseq
    %v6766 = vshrl.u32 %v6765, 7
    %v6767 = vsub.s32 0, %v6766
    %v6768 = vrot.slane %v6763, %v6767
    %v6770 = vadd.f32 %v6762, %v6768
    %v6771 = vxor.u32 %v6770, 2147483648
    %v6772 = vmul.f32 %v6771, 1.442695
    %v6773 = vpow.pop %v6772
    %v6774 = vadd.f32 %v6773, 1.0
    %v6775 = vrcp.pop %v6774
    %v6776 = vmul.f32 1.0, %v6775
    %vm6777 = vcmask 1024
    %6778 = vst.msk [vmem:[%s15] sm:$0x3] %vm6777, %v6776
    // Predicated region
    $region78: #{_lambda_.1} parent=1 // pred_check
      _
    $region79: #{_lambda_.1} parent=1 // pred_check_branch
      %6780 = sbr.rel (0) target = $region81
    $region80: #{_lambda_.1} parent=1 // pred_region
      _
    $region81: #{_lambda_.1} parent=1 // pred_fallthru
      _
    // Predicated region
    $region82: #{_lambda_.1} parent=1 // pred_check
      _
    $region83: #{_lambda_.1} parent=1 // pred_check_branch
      %6782 = sbr.rel (0) target = $region85
    $region84: #{_lambda_.1} parent=1 // pred_region
      _
    $region85: #{_lambda_.1} parent=1 // pred_fallthru
      _
    %6783 = vsyncpa [#allocation6], 1
    %6784 = vsyncpa [#allocation8], 1
    %6785 = vsyncpa [#allocation11], 1

</llo_original>
